<compile_context>
chip_gen: v6e
topology: v6e:2x2x1
jax: 0.10.0
libtpu: 0.0.40
codegen_flags: <defaults>
</compile_context>

<pallas_src>
import numpy as np
import jax
import jax.numpy as jnp
from jax import lax
from jax.experimental import pallas as pl
from jax.experimental.pallas import tpu as pltpu

FILTER_SIZES = (5, 10, 15, 20)
EMB_DIM = 768
POOL_K = 3                   # F.max_pool1d(kernel_size=3) -> stride defaults to 3
SEQ_LEN = 260
LIN_IN = 330
LIN_OUT = 100

NUM_F = len(FILTER_SIZES)
GROUPS = max(FILTER_SIZES)                   # 20 tap rows
GROUP = 8                                    # sublane-aligned group height (4 filters + 4 pad)
STACK_ROWS = GROUPS * GROUP                  # 160
CONV_W = SEQ_LEN - min(FILTER_SIZES) + 1     # 256: widest valid-conv length
POOL_W = CONV_W - (POOL_K - 1)               # 254: widest sliding-max length
PROJ_W = SEQ_LEN + GROUPS                    # 280 >= 255 + 19 + 1 (max column touched)
OUT_PAD = 128                                # lane-dense output / per-filter weight block
TB_MAX = 8                                   # examples per grid step (cap)


def _conv_out_len(L, s):
    return L - s + 1


def _pool_len(n):
    return (n - POOL_K) // POOL_K + 1


def _pick_tb(B):
    """Examples per grid step: cap at TB_MAX, keep >= 2 grid steps when possible."""
    tb = min(TB_MAX, max(1, B))
    while tb > 1 and (B + tb - 1) // tb < 2:
        tb //= 2
    return tb


def _textcnn_kernel(x_ref,        # (TB, L, D)          VMEM  bf16
                    w_all_ref,    # (160, D)            VMEM  bf16 stacked conv weights
                    bconv_ref,    # (8, 1)              VMEM  f32 conv biases (rows 0..3)
                    wcat_ref,     # (254, 512)          VMEM  f32 fused pool-pick + linear
                    blin_ref,     # (1, 128)            VMEM  f32 padded linear bias
                    o_ref,        # (TB, 1, 128)        VMEM  f32
                    proj_ref):    # (2, 160, 280)       VMEM  f32 ping-pong scratch
    TB = x_ref.shape[0]

    # Keep the tail columns finite once per grid step: the matmul below only
    # writes columns [0, SEQ_LEN); columns [SEQ_LEN, PROJ_W) are read by the
    # grouped shift-add for positions whose fused weights are exactly zero.
    for slot in range(2):
        proj_ref[slot, :, pl.ds(SEQ_LEN, PROJ_W - SEQ_LEN)] = jnp.zeros(
            (STACK_ROWS, PROJ_W - SEQ_LEN), jnp.float32)

    m_rows = []
    for tb in range(TB):
        slot = tb % 2
        # 1) One stacked conv matmul per example (bf16 MXU, f32 accumulate),
        #    NT form (no transpose materialized): proj[g, t] = W_all[g,:].x[tb,t,:]
        proj_ref[slot, :, pl.ds(0, SEQ_LEN)] = lax.dot_general(
            w_all_ref[...], x_ref[tb], (((1,), (1,)), ((), ())),
            preferred_element_type=jnp.float32)

        # 2) Grouped shift-and-add: conv[f, t] = sum_i w_f[i] . x[t + i]
        #    (rows 4..7 of each group are zero weights -> contribute exact zeros).
        conv = proj_ref[slot, pl.ds(0, GROUP), pl.ds(0, CONV_W)]
        for i in range(1, GROUPS):
            conv = conv + proj_ref[slot, pl.ds(GROUP * i, GROUP), pl.ds(i, CONV_W)]

        # 3) Bias + ReLU + sliding max-of-3 on the whole (8, 256) block.
        h = jnp.maximum(conv + bconv_ref[...], 0.0)                      # (8, 256)
        m = jnp.maximum(jnp.maximum(h[:, 0:POOL_W], h[:, 1:POOL_W + 1]),
                        h[:, 2:POOL_W + 2])                              # (8, 254)
        m_rows.append(m)

    # 4) Fused stride-3 pick + Linear(330, 100): one block-diagonal matmul for
    #    the whole TB block, then 4 lane-aligned 128-wide row slices/example.
    mcat = jnp.concatenate(m_rows, axis=0) if TB > 1 else m_rows[0]      # (TB*8, 254)
    y = jnp.dot(mcat, wcat_ref[...], preferred_element_type=jnp.float32)  # (TB*8, 512)

    for tb in range(TB):
        out_row = blin_ref[...]                                          # (1, 128)
        for f in range(NUM_F):
            r = GROUP * tb + f
            out_row = out_row + y[r:r + 1, OUT_PAD * f:OUT_PAD * (f + 1)]
        o_ref[tb] = out_row


def textcnn_pallas(x, conv_ws, conv_bs, lin_w, lin_b, *, tb=None):
    B, L, D = x.shape
    assert L == SEQ_LEN and D == EMB_DIM
    out_lens = [_conv_out_len(L, s) for s in FILTER_SIZES]
    pool_lens = [_pool_len(n) for n in out_lens]
    assert sum(pool_lens) == LIN_IN
    offs = np.concatenate([[0], np.cumsum(pool_lens)])

    if tb is None:
        tb = _pick_tb(B)
    Bp = ((B + tb - 1) // tb) * tb

    # bf16 x: halves the only per-step HBM stream; accumulation stays f32.
    x_in = x.astype(jnp.bfloat16)
    if Bp != B:
        x_in = jnp.pad(x_in, ((0, Bp - B), (0, 0), (0, 0)))

    # Stacked conv weights: row 8*i + f = tap i of filter f (zero if i >= s_f).
    w_all = np.zeros((STACK_ROWS, EMB_DIM), np.float32)
    for f, s in enumerate(FILTER_SIZES):
        wf = np.asarray(conv_ws[f], np.float32)
        for i in range(s):
            w_all[GROUP * i + f, :] = wf[i]

    bconv = np.zeros((GROUP, 1), np.float32)
    for f in range(NUM_F):
        bconv[f, 0] = float(conv_bs[f])

    # Fused (stride-3 pool pick) @ (Linear weights), block-diagonal per filter:
    # Wcat[3p, 128f : 128f+100] = W_lin[:, off_f + p], zeros elsewhere.
    lin_w_np = np.asarray(lin_w, np.float32)
    wcat = np.zeros((POOL_W, NUM_F * OUT_PAD), np.float32)
    for f in range(NUM_F):
        for p in range(pool_lens[f]):
            wcat[POOL_K * p, OUT_PAD * f:OUT_PAD * f + LIN_OUT] = lin_w_np[:, offs[f] + p]

    blin = np.zeros((1, OUT_PAD), np.float32)
    blin[0, :LIN_OUT] = np.asarray(lin_b, np.float32)

    flops = Bp * (2 * STACK_ROWS * EMB_DIM * SEQ_LEN
                  + 2 * GROUP * POOL_W * NUM_F * OUT_PAD)
    bytes_accessed = (x_in.size * 2 + w_all.size * 2 + wcat.size * 4
                      + Bp * OUT_PAD * 4 + 4096)
    cost = pl.CostEstimate(flops=flops, transcendentals=0,
                           bytes_accessed=bytes_accessed)

    out = pl.pallas_call(
        _textcnn_kernel,
        out_shape=jax.ShapeDtypeStruct((Bp, 1, OUT_PAD), jnp.float32),
        grid=(Bp // tb,),
        in_specs=[
            pl.BlockSpec((tb, SEQ_LEN, EMB_DIM), lambda b: (b, 0, 0)),   # x (bf16)
            pl.BlockSpec((STACK_ROWS, EMB_DIM), lambda b: (0, 0)),       # stacked conv W
            pl.BlockSpec((GROUP, 1), lambda b: (0, 0)),                  # conv biases
            pl.BlockSpec((POOL_W, NUM_F * OUT_PAD), lambda b: (0, 0)),   # fused linear W
            pl.BlockSpec((1, OUT_PAD), lambda b: (0, 0)),                # linear bias
        ],
        out_specs=pl.BlockSpec((tb, 1, OUT_PAD), lambda b: (b, 0, 0)),
        scratch_shapes=[pltpu.VMEM((2, STACK_ROWS, PROJ_W), jnp.float32)],
        compiler_params=pltpu.CompilerParams(dimension_semantics=("parallel",)),
        cost_estimate=cost,
    )(x_in, jnp.asarray(w_all, jnp.bfloat16), jnp.asarray(bconv),
      jnp.asarray(wcat), jnp.asarray(blin))
    return out[:B, 0, :LIN_OUT]


def textcnn_ref(x, conv_ws, conv_bs, lin_w, lin_b):
    """Pure-JAX reference matching the PyTorch forward."""
    B, L, D = x.shape
    pooled = []
    for w, b in zip(conv_ws, conv_bs):
        s = w.shape[0]
        out_len = _conv_out_len(L, s)
        conv = jnp.zeros((B, out_len), jnp.float32)
        for i in range(s):
            conv = conv + jnp.einsum('bld,d->bl', x[:, i:i + out_len, :], w[i],
                                     precision=lax.Precision.HIGHEST)
        h = jnp.maximum(conv + b, 0.0)
        plen = _pool_len(out_len)
        h = h[:, :plen * POOL_K].reshape(B, plen, POOL_K).max(axis=-1)
        pooled.append(h)
    hp = jnp.concatenate(pooled, axis=1)                # (B, 330)
    return jnp.dot(hp, lin_w.T, precision=lax.Precision.HIGHEST) + lin_b


if __name__ == "__main__":
    key = jax.random.PRNGKey(0)
    keys = jax.random.split(key, 12)
    B = 8   # exercises the TB-batched path (TB=4, grid=2)

    x = jax.random.normal(keys[0], (B, SEQ_LEN, EMB_DIM), jnp.float32)

    # Deterministic synthetic parameters (shapes from TextCNN.__init__):
    #   Conv2d(1, 1, (s, 768)).weight -> (1, 1, s, 768), flattened here to (s, 768)
    #   Conv2d bias -> scalar (num_filters = 1)
    #   Linear(330, 100): W (100, 330), b (100,)
    conv_ws, conv_bs = [], []
    for i, s in enumerate(FILTER_SIZES):
        conv_ws.append(0.02 * jax.random.normal(keys[1 + i], (s, EMB_DIM), jnp.float32))
        conv_bs.append(jnp.float32(0.01 * (i + 1)))
    lin_w = 0.05 * jax.random.normal(keys[9], (LIN_OUT, LIN_IN), jnp.float32)
    lin_b = 0.05 * jax.random.normal(keys[10], (LIN_OUT,), jnp.float32)

    out = textcnn_pallas(x, conv_ws, conv_bs, lin_w, lin_b)
    out = jax.block_until_ready(out)

    ref = textcnn_ref(x, conv_ws, conv_bs, lin_w, lin_b)
    assert out.shape == (B, LIN_OUT)
    np.testing.assert_allclose(np.asarray(out), np.asarray(ref), rtol=5e-2, atol=5e-2)

    print("KERNEL_OK")
</pallas_src>

<mosaic_0001>
module attributes {stable_mosaic.version = 11 : i64} {
  func.func @_textcnn_kernel(%arg0: i32, %arg1: memref<4x260x768xbf16, #tpu.memory_space<vmem>>, %arg2: memref<160x768xbf16, #tpu.memory_space<vmem>>, %arg3: memref<8x1xf32, #tpu.memory_space<vmem>>, %arg4: memref<254x512xf32, #tpu.memory_space<vmem>>, %arg5: memref<1x128xf32, #tpu.memory_space<vmem>>, %arg6: memref<4x1x128xf32, #tpu.memory_space<vmem>>, %arg7: memref<2x160x280xf32, #tpu.memory_space<vmem>>) attributes {dimension_semantics = [#tpu.dimension_semantics<parallel>], iteration_bounds = array<i64: 2>, scalar_prefetch = 0 : i64, scratch_operands = 1 : i64, tpu.core_type = #tpu.core_type<tc>, window_params = [{transform_indices = @transform_0, window_bounds = array<i64: 4, 260, 768>}, {pipeline_mode = #tpu.pipeline_mode<synchronous>, transform_indices = @transform_1, window_bounds = array<i64: 160, 768>}, {pipeline_mode = #tpu.pipeline_mode<synchronous>, transform_indices = @transform_2, window_bounds = array<i64: 8, 1>}, {pipeline_mode = #tpu.pipeline_mode<synchronous>, transform_indices = @transform_3, window_bounds = array<i64: 254, 512>}, {pipeline_mode = #tpu.pipeline_mode<synchronous>, transform_indices = @transform_4, window_bounds = array<i64: 1, 128>}, {transform_indices = @transform_5, window_bounds = array<i64: 4, 1, 128>}]} {
    %cst = arith.constant 0.000000e+00 : f32
    %0 = vector.broadcast %cst : f32 to vector<160x20xf32>
    %c0 = arith.constant 0 : index
    %c0_0 = arith.constant 0 : index
    %c260 = arith.constant 260 : index
    %1 = vector.load %arg7[%c0, %c0_0, %c260] : memref<2x160x280xf32, #tpu.memory_space<vmem>>, vector<1x160x20xf32>
    %2 = vector.shape_cast %1 : vector<1x160x20xf32> to vector<160x20xf32>
    %3 = vector.shape_cast %0 : vector<160x20xf32> to vector<1x160x20xf32>
    tpu.vector_store %arg7[%c0, %c0_0, %c260], %3 {strides = array<i32>} : memref<2x160x280xf32, #tpu.memory_space<vmem>>, vector<1x160x20xf32>,
    %cst_1 = arith.constant 0.000000e+00 : f32
    %4 = vector.broadcast %cst_1 : f32 to vector<160x20xf32>
    %c1 = arith.constant 1 : index
    %c0_2 = arith.constant 0 : index
    %c260_3 = arith.constant 260 : index
    %5 = vector.load %arg7[%c1, %c0_2, %c260_3] : memref<2x160x280xf32, #tpu.memory_space<vmem>>, vector<1x160x20xf32>
    %6 = vector.shape_cast %5 : vector<1x160x20xf32> to vector<160x20xf32>
    %7 = vector.shape_cast %4 : vector<160x20xf32> to vector<1x160x20xf32>
    tpu.vector_store %arg7[%c1, %c0_2, %c260_3], %7 {strides = array<i32>} : memref<2x160x280xf32, #tpu.memory_space<vmem>>, vector<1x160x20xf32>,
    %c0_4 = arith.constant 0 : index
    %c0_5 = arith.constant 0 : index
    %8 = vector.load %arg2[%c0_4, %c0_5] : memref<160x768xbf16, #tpu.memory_space<vmem>>, vector<160x768xbf16>
    %c0_6 = arith.constant 0 : index
    %c0_7 = arith.constant 0 : index
    %c0_8 = arith.constant 0 : index
    %9 = vector.load %arg1[%c0_6, %c0_7, %c0_8] : memref<4x260x768xbf16, #tpu.memory_space<vmem>>, vector<1x260x768xbf16>
    %10 = vector.shape_cast %9 : vector<1x260x768xbf16> to vector<260x768xbf16>
    %cst_9 = arith.constant dense<0.000000e+00> : vector<160x260xf32>
    %11 = tpu.matmul %8, %10, %cst_9 {dimension_numbers = #tpu.dot_dimension_numbers<[1], [1], [0], [0], [0, 0, 1, 0], [], []>} : vector<160x768xbf16>, vector<260x768xbf16>, vector<160x260xf32> -> vector<160x260xf32>
    %c0_10 = arith.constant 0 : index
    %c0_11 = arith.constant 0 : index
    %c0_12 = arith.constant 0 : index
    %12 = vector.load %arg7[%c0_10, %c0_11, %c0_12] : memref<2x160x280xf32, #tpu.memory_space<vmem>>, vector<1x160x260xf32>
    %13 = vector.shape_cast %12 : vector<1x160x260xf32> to vector<160x260xf32>
    %14 = vector.shape_cast %11 : vector<160x260xf32> to vector<1x160x260xf32>
    tpu.vector_store %arg7[%c0_10, %c0_11, %c0_12], %14 {strides = array<i32>} : memref<2x160x280xf32, #tpu.memory_space<vmem>>, vector<1x160x260xf32>,
    %c0_13 = arith.constant 0 : index
    %c0_14 = arith.constant 0 : index
    %c0_15 = arith.constant 0 : index
    %15 = vector.load %arg7[%c0_13, %c0_14, %c0_15] : memref<2x160x280xf32, #tpu.memory_space<vmem>>, vector<1x8x256xf32>
    %16 = vector.shape_cast %15 : vector<1x8x256xf32> to vector<8x256xf32>
    %c0_16 = arith.constant 0 : index
    %c8 = arith.constant 8 : index
    %c1_17 = arith.constant 1 : index
    %17 = vector.load %arg7[%c0_16, %c8, %c1_17] : memref<2x160x280xf32, #tpu.memory_space<vmem>>, vector<1x8x256xf32>
    %18 = vector.shape_cast %17 : vector<1x8x256xf32> to vector<8x256xf32>
    %19 = arith.addf %16, %18 : vector<8x256xf32>
    %c0_18 = arith.constant 0 : index
    %c16 = arith.constant 16 : index
    %c2 = arith.constant 2 : index
    %20 = vector.load %arg7[%c0_18, %c16, %c2] : memref<2x160x280xf32, #tpu.memory_space<vmem>>, vector<1x8x256xf32>
    %21 = vector.shape_cast %20 : vector<1x8x256xf32> to vector<8x256xf32>
    %22 = arith.addf %19, %21 : vector<8x256xf32>
    %c0_19 = arith.constant 0 : index
    %c24 = arith.constant 24 : index
    %c3 = arith.constant 3 : index
    %23 = vector.load %arg7[%c0_19, %c24, %c3] : memref<2x160x280xf32, #tpu.memory_space<vmem>>, vector<1x8x256xf32>
    %24 = vector.shape_cast %23 : vector<1x8x256xf32> to vector<8x256xf32>
    %25 = arith.addf %22, %24 : vector<8x256xf32>
    %c0_20 = arith.constant 0 : index
    %c32 = arith.constant 32 : index
    %c4 = arith.constant 4 : index
    %26 = vector.load %arg7[%c0_20, %c32, %c4] : memref<2x160x280xf32, #tpu.memory_space<vmem>>, vector<1x8x256xf32>
    %27 = vector.shape_cast %26 : vector<1x8x256xf32> to vector<8x256xf32>
    %28 = arith.addf %25, %27 : vector<8x256xf32>
    %c0_21 = arith.constant 0 : index
    %c40 = arith.constant 40 : index
    %c5 = arith.constant 5 : index
    %29 = vector.load %arg7[%c0_21, %c40, %c5] : memref<2x160x280xf32, #tpu.memory_space<vmem>>, vector<1x8x256xf32>
    %30 = vector.shape_cast %29 : vector<1x8x256xf32> to vector<8x256xf32>
    %31 = arith.addf %28, %30 : vector<8x256xf32>
    %c0_22 = arith.constant 0 : index
    %c48 = arith.constant 48 : index
    %c6 = arith.constant 6 : index
    %32 = vector.load %arg7[%c0_22, %c48, %c6] : memref<2x160x280xf32, #tpu.memory_space<vmem>>, vector<1x8x256xf32>
    %33 = vector.shape_cast %32 : vector<1x8x256xf32> to vector<8x256xf32>
    %34 = arith.addf %31, %33 : vector<8x256xf32>
    %c0_23 = arith.constant 0 : index
    %c56 = arith.constant 56 : index
    %c7 = arith.constant 7 : index
    %35 = vector.load %arg7[%c0_23, %c56, %c7] : memref<2x160x280xf32, #tpu.memory_space<vmem>>, vector<1x8x256xf32>
    %36 = vector.shape_cast %35 : vector<1x8x256xf32> to vector<8x256xf32>
    %37 = arith.addf %34, %36 : vector<8x256xf32>
    %c0_24 = arith.constant 0 : index
    %c64 = arith.constant 64 : index
    %c8_25 = arith.constant 8 : index
    %38 = vector.load %arg7[%c0_24, %c64, %c8_25] : memref<2x160x280xf32, #tpu.memory_space<vmem>>, vector<1x8x256xf32>
    %39 = vector.shape_cast %38 : vector<1x8x256xf32> to vector<8x256xf32>
    %40 = arith.addf %37, %39 : vector<8x256xf32>
    %c0_26 = arith.constant 0 : index
    %c72 = arith.constant 72 : index
    %c9 = arith.constant 9 : index
    %41 = vector.load %arg7[%c0_26, %c72, %c9] : memref<2x160x280xf32, #tpu.memory_space<vmem>>, vector<1x8x256xf32>
    %42 = vector.shape_cast %41 : vector<1x8x256xf32> to vector<8x256xf32>
    %43 = arith.addf %40, %42 : vector<8x256xf32>
    %c0_27 = arith.constant 0 : index
    %c80 = arith.constant 80 : index
    %c10 = arith.constant 10 : index
    %44 = vector.load %arg7[%c0_27, %c80, %c10] : memref<2x160x280xf32, #tpu.memory_space<vmem>>, vector<1x8x256xf32>
    %45 = vector.shape_cast %44 : vector<1x8x256xf32> to vector<8x256xf32>
    %46 = arith.addf %43, %45 : vector<8x256xf32>
    %c0_28 = arith.constant 0 : index
    %c88 = arith.constant 88 : index
    %c11 = arith.constant 11 : index
    %47 = vector.load %arg7[%c0_28, %c88, %c11] : memref<2x160x280xf32, #tpu.memory_space<vmem>>, vector<1x8x256xf32>
    %48 = vector.shape_cast %47 : vector<1x8x256xf32> to vector<8x256xf32>
    %49 = arith.addf %46, %48 : vector<8x256xf32>
    %c0_29 = arith.constant 0 : index
    %c96 = arith.constant 96 : index
    %c12 = arith.constant 12 : index
    %50 = vector.load %arg7[%c0_29, %c96, %c12] : memref<2x160x280xf32, #tpu.memory_space<vmem>>, vector<1x8x256xf32>
    %51 = vector.shape_cast %50 : vector<1x8x256xf32> to vector<8x256xf32>
    %52 = arith.addf %49, %51 : vector<8x256xf32>
    %c0_30 = arith.constant 0 : index
    %c104 = arith.constant 104 : index
    %c13 = arith.constant 13 : index
    %53 = vector.load %arg7[%c0_30, %c104, %c13] : memref<2x160x280xf32, #tpu.memory_space<vmem>>, vector<1x8x256xf32>
    %54 = vector.shape_cast %53 : vector<1x8x256xf32> to vector<8x256xf32>
    %55 = arith.addf %52, %54 : vector<8x256xf32>
    %c0_31 = arith.constant 0 : index
    %c112 = arith.constant 112 : index
    %c14 = arith.constant 14 : index
    %56 = vector.load %arg7[%c0_31, %c112, %c14] : memref<2x160x280xf32, #tpu.memory_space<vmem>>, vector<1x8x256xf32>
    %57 = vector.shape_cast %56 : vector<1x8x256xf32> to vector<8x256xf32>
    %58 = arith.addf %55, %57 : vector<8x256xf32>
    %c0_32 = arith.constant 0 : index
    %c120 = arith.constant 120 : index
    %c15 = arith.constant 15 : index
    %59 = vector.load %arg7[%c0_32, %c120, %c15] : memref<2x160x280xf32, #tpu.memory_space<vmem>>, vector<1x8x256xf32>
    %60 = vector.shape_cast %59 : vector<1x8x256xf32> to vector<8x256xf32>
    %61 = arith.addf %58, %60 : vector<8x256xf32>
    %c0_33 = arith.constant 0 : index
    %c128 = arith.constant 128 : index
    %c16_34 = arith.constant 16 : index
    %62 = vector.load %arg7[%c0_33, %c128, %c16_34] : memref<2x160x280xf32, #tpu.memory_space<vmem>>, vector<1x8x256xf32>
    %63 = vector.shape_cast %62 : vector<1x8x256xf32> to vector<8x256xf32>
    %64 = arith.addf %61, %63 : vector<8x256xf32>
    %c0_35 = arith.constant 0 : index
    %c136 = arith.constant 136 : index
    %c17 = arith.constant 17 : index
    %65 = vector.load %arg7[%c0_35, %c136, %c17] : memref<2x160x280xf32, #tpu.memory_space<vmem>>, vector<1x8x256xf32>
    %66 = vector.shape_cast %65 : vector<1x8x256xf32> to vector<8x256xf32>
    %67 = arith.addf %64, %66 : vector<8x256xf32>
    %c0_36 = arith.constant 0 : index
    %c144 = arith.constant 144 : index
    %c18 = arith.constant 18 : index
    %68 = vector.load %arg7[%c0_36, %c144, %c18] : memref<2x160x280xf32, #tpu.memory_space<vmem>>, vector<1x8x256xf32>
    %69 = vector.shape_cast %68 : vector<1x8x256xf32> to vector<8x256xf32>
    %70 = arith.addf %67, %69 : vector<8x256xf32>
    %c0_37 = arith.constant 0 : index
    %c152 = arith.constant 152 : index
    %c19 = arith.constant 19 : index
    %71 = vector.load %arg7[%c0_37, %c152, %c19] : memref<2x160x280xf32, #tpu.memory_space<vmem>>, vector<1x8x256xf32>
    %72 = vector.shape_cast %71 : vector<1x8x256xf32> to vector<8x256xf32>
    %73 = arith.addf %70, %72 : vector<8x256xf32>
    %c0_38 = arith.constant 0 : index
    %c0_39 = arith.constant 0 : index
    %74 = vector.load %arg3[%c0_38, %c0_39] : memref<8x1xf32, #tpu.memory_space<vmem>>, vector<8x1xf32>
    %75 = vector.broadcast %74 : vector<8x1xf32> to vector<8x256xf32>
    %76 = arith.addf %73, %75 : vector<8x256xf32>
    %cst_40 = arith.constant 0.000000e+00 : f32
    %77 = vector.broadcast %cst_40 : f32 to vector<8x256xf32>
    %78 = arith.maximumf %76, %77 : vector<8x256xf32>
    %79 = vector.extract_strided_slice %78 {offsets = [0, 0], sizes = [8, 254], strides = [1, 1]} : vector<8x256xf32> to vector<8x254xf32>
    %80 = vector.extract_strided_slice %78 {offsets = [0, 1], sizes = [8, 254], strides = [1, 1]} : vector<8x256xf32> to vector<8x254xf32>
    %81 = arith.maximumf %79, %80 : vector<8x254xf32>
    %82 = vector.extract_strided_slice %78 {offsets = [0, 2], sizes = [8, 254], strides = [1, 1]} : vector<8x256xf32> to vector<8x254xf32>
    %83 = arith.maximumf %81, %82 : vector<8x254xf32>
    %c0_41 = arith.constant 0 : index
    %c0_42 = arith.constant 0 : index
    %84 = vector.load %arg2[%c0_41, %c0_42] : memref<160x768xbf16, #tpu.memory_space<vmem>>, vector<160x768xbf16>
    %c1_43 = arith.constant 1 : index
    %c0_44 = arith.constant 0 : index
    %c0_45 = arith.constant 0 : index
    %85 = vector.load %arg1[%c1_43, %c0_44, %c0_45] : memref<4x260x768xbf16, #tpu.memory_space<vmem>>, vector<1x260x768xbf16>
    %86 = vector.shape_cast %85 : vector<1x260x768xbf16> to vector<260x768xbf16>
    %cst_46 = arith.constant dense<0.000000e+00> : vector<160x260xf32>
    %87 = tpu.matmul %84, %86, %cst_46 {dimension_numbers = #tpu.dot_dimension_numbers<[1], [1], [0], [0], [0, 0, 1, 0], [], []>} : vector<160x768xbf16>, vector<260x768xbf16>, vector<160x260xf32> -> vector<160x260xf32>
    %c1_47 = arith.constant 1 : index
    %c0_48 = arith.constant 0 : index
    %c0_49 = arith.constant 0 : index
    %88 = vector.load %arg7[%c1_47, %c0_48, %c0_49] : memref<2x160x280xf32, #tpu.memory_space<vmem>>, vector<1x160x260xf32>
    %89 = vector.shape_cast %88 : vector<1x160x260xf32> to vector<160x260xf32>
    %90 = vector.shape_cast %87 : vector<160x260xf32> to vector<1x160x260xf32>
    tpu.vector_store %arg7[%c1_47, %c0_48, %c0_49], %90 {strides = array<i32>} : memref<2x160x280xf32, #tpu.memory_space<vmem>>, vector<1x160x260xf32>,
    %c1_50 = arith.constant 1 : index
    %c0_51 = arith.constant 0 : index
    %c0_52 = arith.constant 0 : index
    %91 = vector.load %arg7[%c1_50, %c0_51, %c0_52] : memref<2x160x280xf32, #tpu.memory_space<vmem>>, vector<1x8x256xf32>
    %92 = vector.shape_cast %91 : vector<1x8x256xf32> to vector<8x256xf32>
    %c1_53 = arith.constant 1 : index
    %c8_54 = arith.constant 8 : index
    %c1_55 = arith.constant 1 : index
    %93 = vector.load %arg7[%c1_53, %c8_54, %c1_55] : memref<2x160x280xf32, #tpu.memory_space<vmem>>, vector<1x8x256xf32>
    %94 = vector.shape_cast %93 : vector<1x8x256xf32> to vector<8x256xf32>
    %95 = arith.addf %92, %94 : vector<8x256xf32>
    %c1_56 = arith.constant 1 : index
    %c16_57 = arith.constant 16 : index
    %c2_58 = arith.constant 2 : index
    %96 = vector.load %arg7[%c1_56, %c16_57, %c2_58] : memref<2x160x280xf32, #tpu.memory_space<vmem>>, vector<1x8x256xf32>
    %97 = vector.shape_cast %96 : vector<1x8x256xf32> to vector<8x256xf32>
    %98 = arith.addf %95, %97 : vector<8x256xf32>
    %c1_59 = arith.constant 1 : index
    %c24_60 = arith.constant 24 : index
    %c3_61 = arith.constant 3 : index
    %99 = vector.load %arg7[%c1_59, %c24_60, %c3_61] : memref<2x160x280xf32, #tpu.memory_space<vmem>>, vector<1x8x256xf32>
    %100 = vector.shape_cast %99 : vector<1x8x256xf32> to vector<8x256xf32>
    %101 = arith.addf %98, %100 : vector<8x256xf32>
    %c1_62 = arith.constant 1 : index
    %c32_63 = arith.constant 32 : index
    %c4_64 = arith.constant 4 : index
    %102 = vector.load %arg7[%c1_62, %c32_63, %c4_64] : memref<2x160x280xf32, #tpu.memory_space<vmem>>, vector<1x8x256xf32>
    %103 = vector.shape_cast %102 : vector<1x8x256xf32> to vector<8x256xf32>
    %104 = arith.addf %101, %103 : vector<8x256xf32>
    %c1_65 = arith.constant 1 : index
    %c40_66 = arith.constant 40 : index
    %c5_67 = arith.constant 5 : index
    %105 = vector.load %arg7[%c1_65, %c40_66, %c5_67] : memref<2x160x280xf32, #tpu.memory_space<vmem>>, vector<1x8x256xf32>
    %106 = vector.shape_cast %105 : vector<1x8x256xf32> to vector<8x256xf32>
    %107 = arith.addf %104, %106 : vector<8x256xf32>
    %c1_68 = arith.constant 1 : index
    %c48_69 = arith.constant 48 : index
    %c6_70 = arith.constant 6 : index
    %108 = vector.load %arg7[%c1_68, %c48_69, %c6_70] : memref<2x160x280xf32, #tpu.memory_space<vmem>>, vector<1x8x256xf32>
    %109 = vector.shape_cast %108 : vector<1x8x256xf32> to vector<8x256xf32>
    %110 = arith.addf %107, %109 : vector<8x256xf32>
    %c1_71 = arith.constant 1 : index
    %c56_72 = arith.constant 56 : index
    %c7_73 = arith.constant 7 : index
    %111 = vector.load %arg7[%c1_71, %c56_72, %c7_73] : memref<2x160x280xf32, #tpu.memory_space<vmem>>, vector<1x8x256xf32>
    %112 = vector.shape_cast %111 : vector<1x8x256xf32> to vector<8x256xf32>
    %113 = arith.addf %110, %112 : vector<8x256xf32>
    %c1_74 = arith.constant 1 : index
    %c64_75 = arith.constant 64 : index
    %c8_76 = arith.constant 8 : index
    %114 = vector.load %arg7[%c1_74, %c64_75, %c8_76] : memref<2x160x280xf32, #tpu.memory_space<vmem>>, vector<1x8x256xf32>
    %115 = vector.shape_cast %114 : vector<1x8x256xf32> to vector<8x256xf32>
    %116 = arith.addf %113, %115 : vector<8x256xf32>
    %c1_77 = arith.constant 1 : index
    %c72_78 = arith.constant 72 : index
    %c9_79 = arith.constant 9 : index
    %117 = vector.load %arg7[%c1_77, %c72_78, %c9_79] : memref<2x160x280xf32, #tpu.memory_space<vmem>>, vector<1x8x256xf32>
    %118 = vector.shape_cast %117 : vector<1x8x256xf32> to vector<8x256xf32>
    %119 = arith.addf %116, %118 : vector<8x256xf32>
    %c1_80 = arith.constant 1 : index
    %c80_81 = arith.constant 80 : index
    %c10_82 = arith.constant 10 : index
    %120 = vector.load %arg7[%c1_80, %c80_81, %c10_82] : memref<2x160x280xf32, #tpu.memory_space<vmem>>, vector<1x8x256xf32>
    %121 = vector.shape_cast %120 : vector<1x8x256xf32> to vector<8x256xf32>
    %122 = arith.addf %119, %121 : vector<8x256xf32>
    %c1_83 = arith.constant 1 : index
    %c88_84 = arith.constant 88 : index
    %c11_85 = arith.constant 11 : index
    %123 = vector.load %arg7[%c1_83, %c88_84, %c11_85] : memref<2x160x280xf32, #tpu.memory_space<vmem>>, vector<1x8x256xf32>
    %124 = vector.shape_cast %123 : vector<1x8x256xf32> to vector<8x256xf32>
    %125 = arith.addf %122, %124 : vector<8x256xf32>
    %c1_86 = arith.constant 1 : index
    %c96_87 = arith.constant 96 : index
    %c12_88 = arith.constant 12 : index
    %126 = vector.load %arg7[%c1_86, %c96_87, %c12_88] : memref<2x160x280xf32, #tpu.memory_space<vmem>>, vector<1x8x256xf32>
    %127 = vector.shape_cast %126 : vector<1x8x256xf32> to vector<8x256xf32>
    %128 = arith.addf %125, %127 : vector<8x256xf32>
    %c1_89 = arith.constant 1 : index
    %c104_90 = arith.constant 104 : index
    %c13_91 = arith.constant 13 : index
    %129 = vector.load %arg7[%c1_89, %c104_90, %c13_91] : memref<2x160x280xf32, #tpu.memory_space<vmem>>, vector<1x8x256xf32>
    %130 = vector.shape_cast %129 : vector<1x8x256xf32> to vector<8x256xf32>
    %131 = arith.addf %128, %130 : vector<8x256xf32>
    %c1_92 = arith.constant 1 : index
    %c112_93 = arith.constant 112 : index
    %c14_94 = arith.constant 14 : index
    %132 = vector.load %arg7[%c1_92, %c112_93, %c14_94] : memref<2x160x280xf32, #tpu.memory_space<vmem>>, vector<1x8x256xf32>
    %133 = vector.shape_cast %132 : vector<1x8x256xf32> to vector<8x256xf32>
    %134 = arith.addf %131, %133 : vector<8x256xf32>
    %c1_95 = arith.constant 1 : index
    %c120_96 = arith.constant 120 : index
    %c15_97 = arith.constant 15 : index
    %135 = vector.load %arg7[%c1_95, %c120_96, %c15_97] : memref<2x160x280xf32, #tpu.memory_space<vmem>>, vector<1x8x256xf32>
    %136 = vector.shape_cast %135 : vector<1x8x256xf32> to vector<8x256xf32>
    %137 = arith.addf %134, %136 : vector<8x256xf32>
    %c1_98 = arith.constant 1 : index
    %c128_99 = arith.constant 128 : index
    %c16_100 = arith.constant 16 : index
    %138 = vector.load %arg7[%c1_98, %c128_99, %c16_100] : memref<2x160x280xf32, #tpu.memory_space<vmem>>, vector<1x8x256xf32>
    %139 = vector.shape_cast %138 : vector<1x8x256xf32> to vector<8x256xf32>
    %140 = arith.addf %137, %139 : vector<8x256xf32>
    %c1_101 = arith.constant 1 : index
    %c136_102 = arith.constant 136 : index
    %c17_103 = arith.constant 17 : index
    %141 = vector.load %arg7[%c1_101, %c136_102, %c17_103] : memref<2x160x280xf32, #tpu.memory_space<vmem>>, vector<1x8x256xf32>
    %142 = vector.shape_cast %141 : vector<1x8x256xf32> to vector<8x256xf32>
    %143 = arith.addf %140, %142 : vector<8x256xf32>
    %c1_104 = arith.constant 1 : index
    %c144_105 = arith.constant 144 : index
    %c18_106 = arith.constant 18 : index
    %144 = vector.load %arg7[%c1_104, %c144_105, %c18_106] : memref<2x160x280xf32, #tpu.memory_space<vmem>>, vector<1x8x256xf32>
    %145 = vector.shape_cast %144 : vector<1x8x256xf32> to vector<8x256xf32>
    %146 = arith.addf %143, %145 : vector<8x256xf32>
    %c1_107 = arith.constant 1 : index
    %c152_108 = arith.constant 152 : index
    %c19_109 = arith.constant 19 : index
    %147 = vector.load %arg7[%c1_107, %c152_108, %c19_109] : memref<2x160x280xf32, #tpu.memory_space<vmem>>, vector<1x8x256xf32>
    %148 = vector.shape_cast %147 : vector<1x8x256xf32> to vector<8x256xf32>
    %149 = arith.addf %146, %148 : vector<8x256xf32>
    %c0_110 = arith.constant 0 : index
    %c0_111 = arith.constant 0 : index
    %150 = vector.load %arg3[%c0_110, %c0_111] : memref<8x1xf32, #tpu.memory_space<vmem>>, vector<8x1xf32>
    %151 = vector.broadcast %150 : vector<8x1xf32> to vector<8x256xf32>
    %152 = arith.addf %149, %151 : vector<8x256xf32>
    %cst_112 = arith.constant 0.000000e+00 : f32
    %153 = vector.broadcast %cst_112 : f32 to vector<8x256xf32>
    %154 = arith.maximumf %152, %153 : vector<8x256xf32>
    %155 = vector.extract_strided_slice %154 {offsets = [0, 0], sizes = [8, 254], strides = [1, 1]} : vector<8x256xf32> to vector<8x254xf32>
    %156 = vector.extract_strided_slice %154 {offsets = [0, 1], sizes = [8, 254], strides = [1, 1]} : vector<8x256xf32> to vector<8x254xf32>
    %157 = arith.maximumf %155, %156 : vector<8x254xf32>
    %158 = vector.extract_strided_slice %154 {offsets = [0, 2], sizes = [8, 254], strides = [1, 1]} : vector<8x256xf32> to vector<8x254xf32>
    %159 = arith.maximumf %157, %158 : vector<8x254xf32>
    %c0_113 = arith.constant 0 : index
    %c0_114 = arith.constant 0 : index
    %160 = vector.load %arg2[%c0_113, %c0_114] : memref<160x768xbf16, #tpu.memory_space<vmem>>, vector<160x768xbf16>
    %c2_115 = arith.constant 2 : index
    %c0_116 = arith.constant 0 : index
    %c0_117 = arith.constant 0 : index
    %161 = vector.load %arg1[%c2_115, %c0_116, %c0_117] : memref<4x260x768xbf16, #tpu.memory_space<vmem>>, vector<1x260x768xbf16>
    %162 = vector.shape_cast %161 : vector<1x260x768xbf16> to vector<260x768xbf16>
    %cst_118 = arith.constant dense<0.000000e+00> : vector<160x260xf32>
    %163 = tpu.matmul %160, %162, %cst_118 {dimension_numbers = #tpu.dot_dimension_numbers<[1], [1], [0], [0], [0, 0, 1, 0], [], []>} : vector<160x768xbf16>, vector<260x768xbf16>, vector<160x260xf32> -> vector<160x260xf32>
    %c0_119 = arith.constant 0 : index
    %c0_120 = arith.constant 0 : index
    %c0_121 = arith.constant 0 : index
    %164 = vector.load %arg7[%c0_119, %c0_120, %c0_121] : memref<2x160x280xf32, #tpu.memory_space<vmem>>, vector<1x160x260xf32>
    %165 = vector.shape_cast %164 : vector<1x160x260xf32> to vector<160x260xf32>
    %166 = vector.shape_cast %163 : vector<160x260xf32> to vector<1x160x260xf32>
    tpu.vector_store %arg7[%c0_119, %c0_120, %c0_121], %166 {strides = array<i32>} : memref<2x160x280xf32, #tpu.memory_space<vmem>>, vector<1x160x260xf32>,
    %c0_122 = arith.constant 0 : index
    %c0_123 = arith.constant 0 : index
    %c0_124 = arith.constant 0 : index
    %167 = vector.load %arg7[%c0_122, %c0_123, %c0_124] : memref<2x160x280xf32, #tpu.memory_space<vmem>>, vector<1x8x256xf32>
    %168 = vector.shape_cast %167 : vector<1x8x256xf32> to vector<8x256xf32>
    %c0_125 = arith.constant 0 : index
    %c8_126 = arith.constant 8 : index
    %c1_127 = arith.constant 1 : index
    %169 = vector.load %arg7[%c0_125, %c8_126, %c1_127] : memref<2x160x280xf32, #tpu.memory_space<vmem>>, vector<1x8x256xf32>
    %170 = vector.shape_cast %169 : vector<1x8x256xf32> to vector<8x256xf32>
    %171 = arith.addf %168, %170 : vector<8x256xf32>
    %c0_128 = arith.constant 0 : index
    %c16_129 = arith.constant 16 : index
    %c2_130 = arith.constant 2 : index
    %172 = vector.load %arg7[%c0_128, %c16_129, %c2_130] : memref<2x160x280xf32, #tpu.memory_space<vmem>>, vector<1x8x256xf32>
    %173 = vector.shape_cast %172 : vector<1x8x256xf32> to vector<8x256xf32>
    %174 = arith.addf %171, %173 : vector<8x256xf32>
    %c0_131 = arith.constant 0 : index
    %c24_132 = arith.constant 24 : index
    %c3_133 = arith.constant 3 : index
    %175 = vector.load %arg7[%c0_131, %c24_132, %c3_133] : memref<2x160x280xf32, #tpu.memory_space<vmem>>, vector<1x8x256xf32>
    %176 = vector.shape_cast %175 : vector<1x8x256xf32> to vector<8x256xf32>
    %177 = arith.addf %174, %176 : vector<8x256xf32>
    %c0_134 = arith.constant 0 : index
    %c32_135 = arith.constant 32 : index
    %c4_136 = arith.constant 4 : index
    %178 = vector.load %arg7[%c0_134, %c32_135, %c4_136] : memref<2x160x280xf32, #tpu.memory_space<vmem>>, vector<1x8x256xf32>
    %179 = vector.shape_cast %178 : vector<1x8x256xf32> to vector<8x256xf32>
    %180 = arith.addf %177, %179 : vector<8x256xf32>
    %c0_137 = arith.constant 0 : index
    %c40_138 = arith.constant 40 : index
    %c5_139 = arith.constant 5 : index
    %181 = vector.load %arg7[%c0_137, %c40_138, %c5_139] : memref<2x160x280xf32, #tpu.memory_space<vmem>>, vector<1x8x256xf32>
    %182 = vector.shape_cast %181 : vector<1x8x256xf32> to vector<8x256xf32>
    %183 = arith.addf %180, %182 : vector<8x256xf32>
    %c0_140 = arith.constant 0 : index
    %c48_141 = arith.constant 48 : index
    %c6_142 = arith.constant 6 : index
    %184 = vector.load %arg7[%c0_140, %c48_141, %c6_142] : memref<2x160x280xf32, #tpu.memory_space<vmem>>, vector<1x8x256xf32>
    %185 = vector.shape_cast %184 : vector<1x8x256xf32> to vector<8x256xf32>
    %186 = arith.addf %183, %185 : vector<8x256xf32>
    %c0_143 = arith.constant 0 : index
    %c56_144 = arith.constant 56 : index
    %c7_145 = arith.constant 7 : index
    %187 = vector.load %arg7[%c0_143, %c56_144, %c7_145] : memref<2x160x280xf32, #tpu.memory_space<vmem>>, vector<1x8x256xf32>
    %188 = vector.shape_cast %187 : vector<1x8x256xf32> to vector<8x256xf32>
    %189 = arith.addf %186, %188 : vector<8x256xf32>
    %c0_146 = arith.constant 0 : index
    %c64_147 = arith.constant 64 : index
    %c8_148 = arith.constant 8 : index
    %190 = vector.load %arg7[%c0_146, %c64_147, %c8_148] : memref<2x160x280xf32, #tpu.memory_space<vmem>>, vector<1x8x256xf32>
    %191 = vector.shape_cast %190 : vector<1x8x256xf32> to vector<8x256xf32>
    %192 = arith.addf %189, %191 : vector<8x256xf32>
    %c0_149 = arith.constant 0 : index
    %c72_150 = arith.constant 72 : index
    %c9_151 = arith.constant 9 : index
    %193 = vector.load %arg7[%c0_149, %c72_150, %c9_151] : memref<2x160x280xf32, #tpu.memory_space<vmem>>, vector<1x8x256xf32>
    %194 = vector.shape_cast %193 : vector<1x8x256xf32> to vector<8x256xf32>
    %195 = arith.addf %192, %194 : vector<8x256xf32>
    %c0_152 = arith.constant 0 : index
    %c80_153 = arith.constant 80 : index
    %c10_154 = arith.constant 10 : index
    %196 = vector.load %arg7[%c0_152, %c80_153, %c10_154] : memref<2x160x280xf32, #tpu.memory_space<vmem>>, vector<1x8x256xf32>
    %197 = vector.shape_cast %196 : vector<1x8x256xf32> to vector<8x256xf32>
    %198 = arith.addf %195, %197 : vector<8x256xf32>
    %c0_155 = arith.constant 0 : index
    %c88_156 = arith.constant 88 : index
    %c11_157 = arith.constant 11 : index
    %199 = vector.load %arg7[%c0_155, %c88_156, %c11_157] : memref<2x160x280xf32, #tpu.memory_space<vmem>>, vector<1x8x256xf32>
    %200 = vector.shape_cast %199 : vector<1x8x256xf32> to vector<8x256xf32>
    %201 = arith.addf %198, %200 : vector<8x256xf32>
    %c0_158 = arith.constant 0 : index
    %c96_159 = arith.constant 96 : index
    %c12_160 = arith.constant 12 : index
    %202 = vector.load %arg7[%c0_158, %c96_159, %c12_160] : memref<2x160x280xf32, #tpu.memory_space<vmem>>, vector<1x8x256xf32>
    %203 = vector.shape_cast %202 : vector<1x8x256xf32> to vector<8x256xf32>
    %204 = arith.addf %201, %203 : vector<8x256xf32>
    %c0_161 = arith.constant 0 : index
    %c104_162 = arith.constant 104 : index
    %c13_163 = arith.constant 13 : index
    %205 = vector.load %arg7[%c0_161, %c104_162, %c13_163] : memref<2x160x280xf32, #tpu.memory_space<vmem>>, vector<1x8x256xf32>
    %206 = vector.shape_cast %205 : vector<1x8x256xf32> to vector<8x256xf32>
    %207 = arith.addf %204, %206 : vector<8x256xf32>
    %c0_164 = arith.constant 0 : index
    %c112_165 = arith.constant 112 : index
    %c14_166 = arith.constant 14 : index
    %208 = vector.load %arg7[%c0_164, %c112_165, %c14_166] : memref<2x160x280xf32, #tpu.memory_space<vmem>>, vector<1x8x256xf32>
    %209 = vector.shape_cast %208 : vector<1x8x256xf32> to vector<8x256xf32>
    %210 = arith.addf %207, %209 : vector<8x256xf32>
    %c0_167 = arith.constant 0 : index
    %c120_168 = arith.constant 120 : index
    %c15_169 = arith.constant 15 : index
    %211 = vector.load %arg7[%c0_167, %c120_168, %c15_169] : memref<2x160x280xf32, #tpu.memory_space<vmem>>, vector<1x8x256xf32>
    %212 = vector.shape_cast %211 : vector<1x8x256xf32> to vector<8x256xf32>
    %213 = arith.addf %210, %212 : vector<8x256xf32>
    %c0_170 = arith.constant 0 : index
    %c128_171 = arith.constant 128 : index
    %c16_172 = arith.constant 16 : index
    %214 = vector.load %arg7[%c0_170, %c128_171, %c16_172] : memref<2x160x280xf32, #tpu.memory_space<vmem>>, vector<1x8x256xf32>
    %215 = vector.shape_cast %214 : vector<1x8x256xf32> to vector<8x256xf32>
    %216 = arith.addf %213, %215 : vector<8x256xf32>
    %c0_173 = arith.constant 0 : index
    %c136_174 = arith.constant 136 : index
    %c17_175 = arith.constant 17 : index
    %217 = vector.load %arg7[%c0_173, %c136_174, %c17_175] : memref<2x160x280xf32, #tpu.memory_space<vmem>>, vector<1x8x256xf32>
    %218 = vector.shape_cast %217 : vector<1x8x256xf32> to vector<8x256xf32>
    %219 = arith.addf %216, %218 : vector<8x256xf32>
    %c0_176 = arith.constant 0 : index
    %c144_177 = arith.constant 144 : index
    %c18_178 = arith.constant 18 : index
    %220 = vector.load %arg7[%c0_176, %c144_177, %c18_178] : memref<2x160x280xf32, #tpu.memory_space<vmem>>, vector<1x8x256xf32>
    %221 = vector.shape_cast %220 : vector<1x8x256xf32> to vector<8x256xf32>
    %222 = arith.addf %219, %221 : vector<8x256xf32>
    %c0_179 = arith.constant 0 : index
    %c152_180 = arith.constant 152 : index
    %c19_181 = arith.constant 19 : index
    %223 = vector.load %arg7[%c0_179, %c152_180, %c19_181] : memref<2x160x280xf32, #tpu.memory_space<vmem>>, vector<1x8x256xf32>
    %224 = vector.shape_cast %223 : vector<1x8x256xf32> to vector<8x256xf32>
    %225 = arith.addf %222, %224 : vector<8x256xf32>
    %c0_182 = arith.constant 0 : index
    %c0_183 = arith.constant 0 : index
    %226 = vector.load %arg3[%c0_182, %c0_183] : memref<8x1xf32, #tpu.memory_space<vmem>>, vector<8x1xf32>
    %227 = vector.broadcast %226 : vector<8x1xf32> to vector<8x256xf32>
    %228 = arith.addf %225, %227 : vector<8x256xf32>
    %cst_184 = arith.constant 0.000000e+00 : f32
    %229 = vector.broadcast %cst_184 : f32 to vector<8x256xf32>
    %230 = arith.maximumf %228, %229 : vector<8x256xf32>
    %231 = vector.extract_strided_slice %230 {offsets = [0, 0], sizes = [8, 254], strides = [1, 1]} : vector<8x256xf32> to vector<8x254xf32>
    %232 = vector.extract_strided_slice %230 {offsets = [0, 1], sizes = [8, 254], strides = [1, 1]} : vector<8x256xf32> to vector<8x254xf32>
    %233 = arith.maximumf %231, %232 : vector<8x254xf32>
    %234 = vector.extract_strided_slice %230 {offsets = [0, 2], sizes = [8, 254], strides = [1, 1]} : vector<8x256xf32> to vector<8x254xf32>
    %235 = arith.maximumf %233, %234 : vector<8x254xf32>
    %c0_185 = arith.constant 0 : index
    %c0_186 = arith.constant 0 : index
    %236 = vector.load %arg2[%c0_185, %c0_186] : memref<160x768xbf16, #tpu.memory_space<vmem>>, vector<160x768xbf16>
    %c3_187 = arith.constant 3 : index
    %c0_188 = arith.constant 0 : index
    %c0_189 = arith.constant 0 : index
    %237 = vector.load %arg1[%c3_187, %c0_188, %c0_189] : memref<4x260x768xbf16, #tpu.memory_space<vmem>>, vector<1x260x768xbf16>
    %238 = vector.shape_cast %237 : vector<1x260x768xbf16> to vector<260x768xbf16>
    %cst_190 = arith.constant dense<0.000000e+00> : vector<160x260xf32>
    %239 = tpu.matmul %236, %238, %cst_190 {dimension_numbers = #tpu.dot_dimension_numbers<[1], [1], [0], [0], [0, 0, 1, 0], [], []>} : vector<160x768xbf16>, vector<260x768xbf16>, vector<160x260xf32> -> vector<160x260xf32>
    %c1_191 = arith.constant 1 : index
    %c0_192 = arith.constant 0 : index
    %c0_193 = arith.constant 0 : index
    %240 = vector.load %arg7[%c1_191, %c0_192, %c0_193] : memref<2x160x280xf32, #tpu.memory_space<vmem>>, vector<1x160x260xf32>
    %241 = vector.shape_cast %240 : vector<1x160x260xf32> to vector<160x260xf32>
    %242 = vector.shape_cast %239 : vector<160x260xf32> to vector<1x160x260xf32>
    tpu.vector_store %arg7[%c1_191, %c0_192, %c0_193], %242 {strides = array<i32>} : memref<2x160x280xf32, #tpu.memory_space<vmem>>, vector<1x160x260xf32>,
    %c1_194 = arith.constant 1 : index
    %c0_195 = arith.constant 0 : index
    %c0_196 = arith.constant 0 : index
    %243 = vector.load %arg7[%c1_194, %c0_195, %c0_196] : memref<2x160x280xf32, #tpu.memory_space<vmem>>, vector<1x8x256xf32>
    %244 = vector.shape_cast %243 : vector<1x8x256xf32> to vector<8x256xf32>
    %c1_197 = arith.constant 1 : index
    %c8_198 = arith.constant 8 : index
    %c1_199 = arith.constant 1 : index
    %245 = vector.load %arg7[%c1_197, %c8_198, %c1_199] : memref<2x160x280xf32, #tpu.memory_space<vmem>>, vector<1x8x256xf32>
    %246 = vector.shape_cast %245 : vector<1x8x256xf32> to vector<8x256xf32>
    %247 = arith.addf %244, %246 : vector<8x256xf32>
    %c1_200 = arith.constant 1 : index
    %c16_201 = arith.constant 16 : index
    %c2_202 = arith.constant 2 : index
    %248 = vector.load %arg7[%c1_200, %c16_201, %c2_202] : memref<2x160x280xf32, #tpu.memory_space<vmem>>, vector<1x8x256xf32>
    %249 = vector.shape_cast %248 : vector<1x8x256xf32> to vector<8x256xf32>
    %250 = arith.addf %247, %249 : vector<8x256xf32>
    %c1_203 = arith.constant 1 : index
    %c24_204 = arith.constant 24 : index
    %c3_205 = arith.constant 3 : index
    %251 = vector.load %arg7[%c1_203, %c24_204, %c3_205] : memref<2x160x280xf32, #tpu.memory_space<vmem>>, vector<1x8x256xf32>
    %252 = vector.shape_cast %251 : vector<1x8x256xf32> to vector<8x256xf32>
    %253 = arith.addf %250, %252 : vector<8x256xf32>
    %c1_206 = arith.constant 1 : index
    %c32_207 = arith.constant 32 : index
    %c4_208 = arith.constant 4 : index
    %254 = vector.load %arg7[%c1_206, %c32_207, %c4_208] : memref<2x160x280xf32, #tpu.memory_space<vmem>>, vector<1x8x256xf32>
    %255 = vector.shape_cast %254 : vector<1x8x256xf32> to vector<8x256xf32>
    %256 = arith.addf %253, %255 : vector<8x256xf32>
    %c1_209 = arith.constant 1 : index
    %c40_210 = arith.constant 40 : index
    %c5_211 = arith.constant 5 : index
    %257 = vector.load %arg7[%c1_209, %c40_210, %c5_211] : memref<2x160x280xf32, #tpu.memory_space<vmem>>, vector<1x8x256xf32>
    %258 = vector.shape_cast %257 : vector<1x8x256xf32> to vector<8x256xf32>
    %259 = arith.addf %256, %258 : vector<8x256xf32>
    %c1_212 = arith.constant 1 : index
    %c48_213 = arith.constant 48 : index
    %c6_214 = arith.constant 6 : index
    %260 = vector.load %arg7[%c1_212, %c48_213, %c6_214] : memref<2x160x280xf32, #tpu.memory_space<vmem>>, vector<1x8x256xf32>
    %261 = vector.shape_cast %260 : vector<1x8x256xf32> to vector<8x256xf32>
    %262 = arith.addf %259, %261 : vector<8x256xf32>
    %c1_215 = arith.constant 1 : index
    %c56_216 = arith.constant 56 : index
    %c7_217 = arith.constant 7 : index
    %263 = vector.load %arg7[%c1_215, %c56_216, %c7_217] : memref<2x160x280xf32, #tpu.memory_space<vmem>>, vector<1x8x256xf32>
    %264 = vector.shape_cast %263 : vector<1x8x256xf32> to vector<8x256xf32>
    %265 = arith.addf %262, %264 : vector<8x256xf32>
    %c1_218 = arith.constant 1 : index
    %c64_219 = arith.constant 64 : index
    %c8_220 = arith.constant 8 : index
    %266 = vector.load %arg7[%c1_218, %c64_219, %c8_220] : memref<2x160x280xf32, #tpu.memory_space<vmem>>, vector<1x8x256xf32>
    %267 = vector.shape_cast %266 : vector<1x8x256xf32> to vector<8x256xf32>
    %268 = arith.addf %265, %267 : vector<8x256xf32>
    %c1_221 = arith.constant 1 : index
    %c72_222 = arith.constant 72 : index
    %c9_223 = arith.constant 9 : index
    %269 = vector.load %arg7[%c1_221, %c72_222, %c9_223] : memref<2x160x280xf32, #tpu.memory_space<vmem>>, vector<1x8x256xf32>
    %270 = vector.shape_cast %269 : vector<1x8x256xf32> to vector<8x256xf32>
    %271 = arith.addf %268, %270 : vector<8x256xf32>
    %c1_224 = arith.constant 1 : index
    %c80_225 = arith.constant 80 : index
    %c10_226 = arith.constant 10 : index
    %272 = vector.load %arg7[%c1_224, %c80_225, %c10_226] : memref<2x160x280xf32, #tpu.memory_space<vmem>>, vector<1x8x256xf32>
    %273 = vector.shape_cast %272 : vector<1x8x256xf32> to vector<8x256xf32>
    %274 = arith.addf %271, %273 : vector<8x256xf32>
    %c1_227 = arith.constant 1 : index
    %c88_228 = arith.constant 88 : index
    %c11_229 = arith.constant 11 : index
    %275 = vector.load %arg7[%c1_227, %c88_228, %c11_229] : memref<2x160x280xf32, #tpu.memory_space<vmem>>, vector<1x8x256xf32>
    %276 = vector.shape_cast %275 : vector<1x8x256xf32> to vector<8x256xf32>
    %277 = arith.addf %274, %276 : vector<8x256xf32>
    %c1_230 = arith.constant 1 : index
    %c96_231 = arith.constant 96 : index
    %c12_232 = arith.constant 12 : index
    %278 = vector.load %arg7[%c1_230, %c96_231, %c12_232] : memref<2x160x280xf32, #tpu.memory_space<vmem>>, vector<1x8x256xf32>
    %279 = vector.shape_cast %278 : vector<1x8x256xf32> to vector<8x256xf32>
    %280 = arith.addf %277, %279 : vector<8x256xf32>
    %c1_233 = arith.constant 1 : index
    %c104_234 = arith.constant 104 : index
    %c13_235 = arith.constant 13 : index
    %281 = vector.load %arg7[%c1_233, %c104_234, %c13_235] : memref<2x160x280xf32, #tpu.memory_space<vmem>>, vector<1x8x256xf32>
    %282 = vector.shape_cast %281 : vector<1x8x256xf32> to vector<8x256xf32>
    %283 = arith.addf %280, %282 : vector<8x256xf32>
    %c1_236 = arith.constant 1 : index
    %c112_237 = arith.constant 112 : index
    %c14_238 = arith.constant 14 : index
    %284 = vector.load %arg7[%c1_236, %c112_237, %c14_238] : memref<2x160x280xf32, #tpu.memory_space<vmem>>, vector<1x8x256xf32>
    %285 = vector.shape_cast %284 : vector<1x8x256xf32> to vector<8x256xf32>
    %286 = arith.addf %283, %285 : vector<8x256xf32>
    %c1_239 = arith.constant 1 : index
    %c120_240 = arith.constant 120 : index
    %c15_241 = arith.constant 15 : index
    %287 = vector.load %arg7[%c1_239, %c120_240, %c15_241] : memref<2x160x280xf32, #tpu.memory_space<vmem>>, vector<1x8x256xf32>
    %288 = vector.shape_cast %287 : vector<1x8x256xf32> to vector<8x256xf32>
    %289 = arith.addf %286, %288 : vector<8x256xf32>
    %c1_242 = arith.constant 1 : index
    %c128_243 = arith.constant 128 : index
    %c16_244 = arith.constant 16 : index
    %290 = vector.load %arg7[%c1_242, %c128_243, %c16_244] : memref<2x160x280xf32, #tpu.memory_space<vmem>>, vector<1x8x256xf32>
    %291 = vector.shape_cast %290 : vector<1x8x256xf32> to vector<8x256xf32>
    %292 = arith.addf %289, %291 : vector<8x256xf32>
    %c1_245 = arith.constant 1 : index
    %c136_246 = arith.constant 136 : index
    %c17_247 = arith.constant 17 : index
    %293 = vector.load %arg7[%c1_245, %c136_246, %c17_247] : memref<2x160x280xf32, #tpu.memory_space<vmem>>, vector<1x8x256xf32>
    %294 = vector.shape_cast %293 : vector<1x8x256xf32> to vector<8x256xf32>
    %295 = arith.addf %292, %294 : vector<8x256xf32>
    %c1_248 = arith.constant 1 : index
    %c144_249 = arith.constant 144 : index
    %c18_250 = arith.constant 18 : index
    %296 = vector.load %arg7[%c1_248, %c144_249, %c18_250] : memref<2x160x280xf32, #tpu.memory_space<vmem>>, vector<1x8x256xf32>
    %297 = vector.shape_cast %296 : vector<1x8x256xf32> to vector<8x256xf32>
    %298 = arith.addf %295, %297 : vector<8x256xf32>
    %c1_251 = arith.constant 1 : index
    %c152_252 = arith.constant 152 : index
    %c19_253 = arith.constant 19 : index
    %299 = vector.load %arg7[%c1_251, %c152_252, %c19_253] : memref<2x160x280xf32, #tpu.memory_space<vmem>>, vector<1x8x256xf32>
    %300 = vector.shape_cast %299 : vector<1x8x256xf32> to vector<8x256xf32>
    %301 = arith.addf %298, %300 : vector<8x256xf32>
    %c0_254 = arith.constant 0 : index
    %c0_255 = arith.constant 0 : index
    %302 = vector.load %arg3[%c0_254, %c0_255] : memref<8x1xf32, #tpu.memory_space<vmem>>, vector<8x1xf32>
    %303 = vector.broadcast %302 : vector<8x1xf32> to vector<8x256xf32>
    %304 = arith.addf %301, %303 : vector<8x256xf32>
    %cst_256 = arith.constant 0.000000e+00 : f32
    %305 = vector.broadcast %cst_256 : f32 to vector<8x256xf32>
    %306 = arith.maximumf %304, %305 : vector<8x256xf32>
    %307 = vector.extract_strided_slice %306 {offsets = [0, 0], sizes = [8, 254], strides = [1, 1]} : vector<8x256xf32> to vector<8x254xf32>
    %308 = vector.extract_strided_slice %306 {offsets = [0, 1], sizes = [8, 254], strides = [1, 1]} : vector<8x256xf32> to vector<8x254xf32>
    %309 = arith.maximumf %307, %308 : vector<8x254xf32>
    %310 = vector.extract_strided_slice %306 {offsets = [0, 2], sizes = [8, 254], strides = [1, 1]} : vector<8x256xf32> to vector<8x254xf32>
    %311 = arith.maximumf %309, %310 : vector<8x254xf32>
    %312 = tpu.concatenate %83, %159, %235, %311 in 0 : vector<8x254xf32>, vector<8x254xf32>, vector<8x254xf32>, vector<8x254xf32> -> vector<32x254xf32>
    %c0_257 = arith.constant 0 : index
    %c0_258 = arith.constant 0 : index
    %313 = vector.load %arg4[%c0_257, %c0_258] : memref<254x512xf32, #tpu.memory_space<vmem>>, vector<254x512xf32>
    %cst_259 = arith.constant dense<0.000000e+00> : vector<32x512xf32>
    %314 = tpu.matmul %312, %313, %cst_259 {dimension_numbers = #tpu.dot_dimension_numbers<[1], [0], [0], [1], [0, 0, 1, 1], [], []>} : vector<32x254xf32>, vector<254x512xf32>, vector<32x512xf32> -> vector<32x512xf32>
    %c0_260 = arith.constant 0 : index
    %c0_261 = arith.constant 0 : index
    %315 = vector.load %arg5[%c0_260, %c0_261] : memref<1x128xf32, #tpu.memory_space<vmem>>, vector<1x128xf32>
    %316 = vector.extract_strided_slice %314 {offsets = [0, 0], sizes = [1, 128], strides = [1, 1]} : vector<32x512xf32> to vector<1x128xf32>
    %317 = arith.addf %315, %316 : vector<1x128xf32>
    %318 = vector.extract_strided_slice %314 {offsets = [1, 128], sizes = [1, 128], strides = [1, 1]} : vector<32x512xf32> to vector<1x128xf32>
    %319 = arith.addf %317, %318 : vector<1x128xf32>
    %320 = vector.extract_strided_slice %314 {offsets = [2, 256], sizes = [1, 128], strides = [1, 1]} : vector<32x512xf32> to vector<1x128xf32>
    %321 = arith.addf %319, %320 : vector<1x128xf32>
    %322 = vector.extract_strided_slice %314 {offsets = [3, 384], sizes = [1, 128], strides = [1, 1]} : vector<32x512xf32> to vector<1x128xf32>
    %323 = arith.addf %321, %322 : vector<1x128xf32>
    %c0_262 = arith.constant 0 : index
    %c0_263 = arith.constant 0 : index
    %c0_264 = arith.constant 0 : index
    %324 = vector.load %arg6[%c0_262, %c0_263, %c0_264] : memref<4x1x128xf32, #tpu.memory_space<vmem>>, vector<1x1x128xf32>
    %325 = vector.shape_cast %324 : vector<1x1x128xf32> to vector<1x128xf32>
    %326 = vector.shape_cast %323 : vector<1x128xf32> to vector<1x1x128xf32>
    tpu.vector_store %arg6[%c0_262, %c0_263, %c0_264], %326 {strides = array<i32>} : memref<4x1x128xf32, #tpu.memory_space<vmem>>, vector<1x1x128xf32>,
    %c0_265 = arith.constant 0 : index
    %c0_266 = arith.constant 0 : index
    %327 = vector.load %arg5[%c0_265, %c0_266] : memref<1x128xf32, #tpu.memory_space<vmem>>, vector<1x128xf32>
    %328 = vector.extract_strided_slice %314 {offsets = [8, 0], sizes = [1, 128], strides = [1, 1]} : vector<32x512xf32> to vector<1x128xf32>
    %329 = arith.addf %327, %328 : vector<1x128xf32>
    %330 = vector.extract_strided_slice %314 {offsets = [9, 128], sizes = [1, 128], strides = [1, 1]} : vector<32x512xf32> to vector<1x128xf32>
    %331 = arith.addf %329, %330 : vector<1x128xf32>
    %332 = vector.extract_strided_slice %314 {offsets = [10, 256], sizes = [1, 128], strides = [1, 1]} : vector<32x512xf32> to vector<1x128xf32>
    %333 = arith.addf %331, %332 : vector<1x128xf32>
    %334 = vector.extract_strided_slice %314 {offsets = [11, 384], sizes = [1, 128], strides = [1, 1]} : vector<32x512xf32> to vector<1x128xf32>
    %335 = arith.addf %333, %334 : vector<1x128xf32>
    %c1_267 = arith.constant 1 : index
    %c0_268 = arith.constant 0 : index
    %c0_269 = arith.constant 0 : index
    %336 = vector.load %arg6[%c1_267, %c0_268, %c0_269] : memref<4x1x128xf32, #tpu.memory_space<vmem>>, vector<1x1x128xf32>
    %337 = vector.shape_cast %336 : vector<1x1x128xf32> to vector<1x128xf32>
    %338 = vector.shape_cast %335 : vector<1x128xf32> to vector<1x1x128xf32>
    tpu.vector_store %arg6[%c1_267, %c0_268, %c0_269], %338 {strides = array<i32>} : memref<4x1x128xf32, #tpu.memory_space<vmem>>, vector<1x1x128xf32>,
    %c0_270 = arith.constant 0 : index
    %c0_271 = arith.constant 0 : index
    %339 = vector.load %arg5[%c0_270, %c0_271] : memref<1x128xf32, #tpu.memory_space<vmem>>, vector<1x128xf32>
    %340 = vector.extract_strided_slice %314 {offsets = [16, 0], sizes = [1, 128], strides = [1, 1]} : vector<32x512xf32> to vector<1x128xf32>
    %341 = arith.addf %339, %340 : vector<1x128xf32>
    %342 = vector.extract_strided_slice %314 {offsets = [17, 128], sizes = [1, 128], strides = [1, 1]} : vector<32x512xf32> to vector<1x128xf32>
    %343 = arith.addf %341, %342 : vector<1x128xf32>
    %344 = vector.extract_strided_slice %314 {offsets = [18, 256], sizes = [1, 128], strides = [1, 1]} : vector<32x512xf32> to vector<1x128xf32>
    %345 = arith.addf %343, %344 : vector<1x128xf32>
    %346 = vector.extract_strided_slice %314 {offsets = [19, 384], sizes = [1, 128], strides = [1, 1]} : vector<32x512xf32> to vector<1x128xf32>
    %347 = arith.addf %345, %346 : vector<1x128xf32>
    %c2_272 = arith.constant 2 : index
    %c0_273 = arith.constant 0 : index
    %c0_274 = arith.constant 0 : index
    %348 = vector.load %arg6[%c2_272, %c0_273, %c0_274] : memref<4x1x128xf32, #tpu.memory_space<vmem>>, vector<1x1x128xf32>
    %349 = vector.shape_cast %348 : vector<1x1x128xf32> to vector<1x128xf32>
    %350 = vector.shape_cast %347 : vector<1x128xf32> to vector<1x1x128xf32>
    tpu.vector_store %arg6[%c2_272, %c0_273, %c0_274], %350 {strides = array<i32>} : memref<4x1x128xf32, #tpu.memory_space<vmem>>, vector<1x1x128xf32>,
    %c0_275 = arith.constant 0 : index
    %c0_276 = arith.constant 0 : index
    %351 = vector.load %arg5[%c0_275, %c0_276] : memref<1x128xf32, #tpu.memory_space<vmem>>, vector<1x128xf32>
    %352 = vector.extract_strided_slice %314 {offsets = [24, 0], sizes = [1, 128], strides = [1, 1]} : vector<32x512xf32> to vector<1x128xf32>
    %353 = arith.addf %351, %352 : vector<1x128xf32>
    %354 = vector.extract_strided_slice %314 {offsets = [25, 128], sizes = [1, 128], strides = [1, 1]} : vector<32x512xf32> to vector<1x128xf32>
    %355 = arith.addf %353, %354 : vector<1x128xf32>
    %356 = vector.extract_strided_slice %314 {offsets = [26, 256], sizes = [1, 128], strides = [1, 1]} : vector<32x512xf32> to vector<1x128xf32>
    %357 = arith.addf %355, %356 : vector<1x128xf32>
    %358 = vector.extract_strided_slice %314 {offsets = [27, 384], sizes = [1, 128], strides = [1, 1]} : vector<32x512xf32> to vector<1x128xf32>
    %359 = arith.addf %357, %358 : vector<1x128xf32>
    %c3_277 = arith.constant 3 : index
    %c0_278 = arith.constant 0 : index
    %c0_279 = arith.constant 0 : index
    %360 = vector.load %arg6[%c3_277, %c0_278, %c0_279] : memref<4x1x128xf32, #tpu.memory_space<vmem>>, vector<1x1x128xf32>
    %361 = vector.shape_cast %360 : vector<1x1x128xf32> to vector<1x128xf32>
    %362 = vector.shape_cast %359 : vector<1x128xf32> to vector<1x1x128xf32>
    tpu.vector_store %arg6[%c3_277, %c0_278, %c0_279], %362 {strides = array<i32>} : memref<4x1x128xf32, #tpu.memory_space<vmem>>, vector<1x1x128xf32>,
    return
  }
  func.func @transform_0(%arg0: i32) -> (i32, i32, i32) {
    %c0_i32 = arith.constant 0 : i32
    %c0_i32_0 = arith.constant 0 : i32
    %c0_i32_1 = arith.constant 0 : i32
    return %arg0, %c0_i32, %c0_i32_0 : i32, i32, i32
  }
  func.func @transform_1(%arg0: i32) -> (i32, i32) {
    %c0_i32 = arith.constant 0 : i32
    %c0_i32_0 = arith.constant 0 : i32
    %c0_i32_1 = arith.constant 0 : i32
    return %c0_i32, %c0_i32_0 : i32, i32
  }
  func.func @transform_2(%arg0: i32) -> (i32, i32) {
    %c0_i32 = arith.constant 0 : i32
    %c0_i32_0 = arith.constant 0 : i32
    %c0_i32_1 = arith.constant 0 : i32
    return %c0_i32, %c0_i32_0 : i32, i32
  }
  func.func @transform_3(%arg0: i32) -> (i32, i32) {
    %c0_i32 = arith.constant 0 : i32
    %c0_i32_0 = arith.constant 0 : i32
    %c0_i32_1 = arith.constant 0 : i32
    return %c0_i32, %c0_i32_0 : i32, i32
  }
  func.func @transform_4(%arg0: i32) -> (i32, i32) {
    %c0_i32 = arith.constant 0 : i32
    %c0_i32_0 = arith.constant 0 : i32
    %c0_i32_1 = arith.constant 0 : i32
    return %c0_i32, %c0_i32_0 : i32, i32
  }
  func.func @transform_5(%arg0: i32) -> (i32, i32, i32) {
    %c0_i32 = arith.constant 0 : i32
    %c0_i32_0 = arith.constant 0 : i32
    %c0_i32_1 = arith.constant 0 : i32
    return %arg0, %c0_i32, %c0_i32_0 : i32, i32, i32
  }
}

</mosaic_0001>

<llo_original>
// kernel: tpu_custom_call.1
$region0: #{tpu_custom_call.1}
  #allocation0 [shape = 'u32[]', space=smem, size = 0x4, offset = 0x4, fixed_abs, tag = 'smem constant byte address 0x4 - core index']
  #allocation1 [shape = 'u32[144,128]{1,0:T(1,128)}', space=vmem, size = 0x12000, scoped, tag = 'internal scratch']
  #allocation2 [shape = 'f32[2,160,280]{2,1,0:T(8,128)}', space=vmem, size = 0x78000, scoped, tag = 'scratch operand']
  %s0 = inlined_call_operand.vmem [shape: bf16[8,260,768], index: 0, kind: input, shape index: {}]
  %s1 = inlined_call_operand.vmem [shape: bf16[160,768], index: 1, kind: input, shape index: {}]
  %s2 = inlined_call_operand.vmem [shape: f32[8,1], index: 2, kind: input, shape index: {}]
  %s3 = inlined_call_operand.vmem [shape: f32[254,512], index: 3, kind: input, shape index: {}]
  %s4 = inlined_call_operand.vmem [shape: f32[1,128], index: 4, kind: input, shape index: {}]
  %s5 = inlined_call_operand.hbm [shape: f32[8,1,128], index: 5, kind: output, shape index: {}]
  %s6 = sld [smem:[#allocation0]]
  $region53: #{tpu_custom_call.1} parent=0
    _
  %s8 = ssub.s32 1, %s6
  %s9 = scalar_select 0, %s8, %s6
  $region1: #{tpu_custom_call.1} parent=0
    #allocation3 [shape = 'u8[4096]{0}', space=vmem, size = 0x1000, scoped, tag = 'output window, operand 0']
    #allocation4 [shape = 's32[2]{0}', space=sflag, size = 0x8, scoped, tag = 'scoped memory for tpu_custom_call.1']
    %10 = vsyncpa [#allocation4], 0
    %s11 = scalar_lea.sflag [#allocation4], 1
    %12 = vsyncpa %s11, 0
    loop: start=0, step=1, limit=4
    $region2: #{tpu_custom_call.1} parent=1 // loop_pre_header
      _
    $region3: #{tpu_custom_call.1} parent=1 // loop_header
      %s14 = sphi 0, %s18
      %p15 = scmp.ge.s32.totalorder %s14, 4
      %s24 = sphi 0, %s26
      %s27 = sphi 0, %s24
      %s28 = sphi 0, %s27
      %s44 = sphi 0, %s28
      %s48 = sphi 0, %s48
      %s50 = sphi 0, %s48
      %s51 = sphi 0, %s50
      %s65 = sphi 0, %s51
      %s69 = sphi 0, %s69
      %s71 = sphi 0, %s69
      %s72 = sphi 0, %s71
      %s86 = sphi 0, %s72
      %s90 = sphi 0, %s90
      %s92 = sphi 0, %s90
      %s93 = sphi 0, %s92
      %s107 = sphi 0, %s93
      %s111 = sphi 0, %s111
      %s113 = sphi 0, %s111
      %s114 = sphi 0, %s113
      %s128 = sphi 0, %s114
      %s134 = sphi 0, %s136
      %s137 = sphi 0, %s134
      %s138 = sphi 0, %s137
      %s154 = sphi 0, %s138
    $region4: #{tpu_custom_call.1} parent=1 // loop_header_branch
      %17 = sbr.rel (%p15) target = $region8
    $region5: #{tpu_custom_call.1} parent=1 // loop_body
      %s19 = ssub.s32 %s14, 1
      %s20 = ssub.s32 %s14, 2
      %s21 = sadd.s32 %s14, 1
      %s22 = ssub.s32 %s14, %s21
      %p23 = scmp.eq.s32.totalorder %s22, 0
      %s25 = sadd.s32 %s24, 1
      %s26 = scalar_select %p23, %s24, %s25
      %p29 = pneg %p23
      %p30 = scmp.eq.s32.totalorder %s14, 1
      %p31 = por %p29, %p30
      %p32 = scmp.ne.s32.totalorder %s24, %s27
      %p33 = scmp.eq.s32.totalorder %s14, 0
      %p34 = por %p32, %p33
      %p35 = scmp.ne.s32.totalorder %s24, %s27
      %p36 = scmp.eq.s32.totalorder %s19, 1
      %p37 = por %p35, %p36
      %p38 = scmp.ne.s32.totalorder %s27, %s28
      %p39 = scmp.eq.s32.totalorder %s19, 0
      %p40 = por %p38, %p39
      %p41 = scmp.ne.s32.totalorder %s27, %s28
      %p42 = scmp.eq.s32.totalorder %s20, 1
      %p43 = por %p41, %p42
      %p45 = scmp.ne.s32.totalorder %s28, %s44
      %p46 = scmp.eq.s32.totalorder %s20, 0
      %p47 = por %p45, %p46
      %s49 = sadd.s32 %s48, 1
      %p52 = scmp.eq.s32.totalorder %s14, 1
      %p53 = scmp.ne.s32.totalorder %s48, %s50
      %p54 = scmp.eq.s32.totalorder %s14, 0
      %p55 = por %p53, %p54
      %p56 = scmp.ne.s32.totalorder %s48, %s50
      %p57 = scmp.eq.s32.totalorder %s19, 1
      %p58 = por %p56, %p57
      %p59 = scmp.ne.s32.totalorder %s50, %s51
      %p60 = scmp.eq.s32.totalorder %s19, 0
      %p61 = por %p59, %p60
      %p62 = scmp.ne.s32.totalorder %s50, %s51
      %p63 = scmp.eq.s32.totalorder %s20, 1
      %p64 = por %p62, %p63
      %p66 = scmp.ne.s32.totalorder %s51, %s65
      %p67 = scmp.eq.s32.totalorder %s20, 0
      %p68 = por %p66, %p67
      %s70 = sadd.s32 %s69, 1
      %p73 = scmp.eq.s32.totalorder %s14, 1
      %p74 = scmp.ne.s32.totalorder %s69, %s71
      %p75 = scmp.eq.s32.totalorder %s14, 0
      %p76 = por %p74, %p75
      %p77 = scmp.ne.s32.totalorder %s69, %s71
      %p78 = scmp.eq.s32.totalorder %s19, 1
      %p79 = por %p77, %p78
      %p80 = scmp.ne.s32.totalorder %s71, %s72
      %p81 = scmp.eq.s32.totalorder %s19, 0
      %p82 = por %p80, %p81
      %p83 = scmp.ne.s32.totalorder %s71, %s72
      %p84 = scmp.eq.s32.totalorder %s20, 1
      %p85 = por %p83, %p84
      %p87 = scmp.ne.s32.totalorder %s72, %s86
      %p88 = scmp.eq.s32.totalorder %s20, 0
      %p89 = por %p87, %p88
      %s91 = sadd.s32 %s90, 1
      %p94 = scmp.eq.s32.totalorder %s14, 1
      %p95 = scmp.ne.s32.totalorder %s90, %s92
      %p96 = scmp.eq.s32.totalorder %s14, 0
      %p97 = por %p95, %p96
      %p98 = scmp.ne.s32.totalorder %s90, %s92
      %p99 = scmp.eq.s32.totalorder %s19, 1
      %p100 = por %p98, %p99
      %p101 = scmp.ne.s32.totalorder %s92, %s93
      %p102 = scmp.eq.s32.totalorder %s19, 0
      %p103 = por %p101, %p102
      %p104 = scmp.ne.s32.totalorder %s92, %s93
      %p105 = scmp.eq.s32.totalorder %s20, 1
      %p106 = por %p104, %p105
      %p108 = scmp.ne.s32.totalorder %s93, %s107
      %p109 = scmp.eq.s32.totalorder %s20, 0
      %p110 = por %p108, %p109
      %s112 = sadd.s32 %s111, 1
      %p115 = scmp.eq.s32.totalorder %s14, 1
      %p116 = scmp.ne.s32.totalorder %s111, %s113
      %p117 = scmp.eq.s32.totalorder %s14, 0
      %p118 = por %p116, %p117
      %p119 = scmp.ne.s32.totalorder %s111, %s113
      %p120 = scmp.eq.s32.totalorder %s19, 1
      %p121 = por %p119, %p120
      %p122 = scmp.ne.s32.totalorder %s113, %s114
      %p123 = scmp.eq.s32.totalorder %s19, 0
      %p124 = por %p122, %p123
      %p125 = scmp.ne.s32.totalorder %s113, %s114
      %p126 = scmp.eq.s32.totalorder %s20, 1
      %p127 = por %p125, %p126
      %p129 = scmp.ne.s32.totalorder %s114, %s128
      %p130 = scmp.eq.s32.totalorder %s20, 0
      %p131 = por %p129, %p130
      %s132 = ssub.s32 %s14, %s21
      %p133 = scmp.eq.s32.totalorder %s132, 0
      %s135 = sadd.s32 %s134, 1
      %s136 = scalar_select %p133, %s134, %s135
      %p139 = pneg %p133
      %p140 = scmp.eq.s32.totalorder %s14, 1
      %p141 = por %p139, %p140
      %p142 = scmp.ne.s32.totalorder %s134, %s137
      %p143 = scmp.eq.s32.totalorder %s14, 0
      %p144 = por %p142, %p143
      %p145 = scmp.ne.s32.totalorder %s134, %s137
      %p146 = scmp.eq.s32.totalorder %s19, 1
      %p147 = por %p145, %p146
      %p148 = scmp.ne.s32.totalorder %s137, %s138
      %p149 = scmp.eq.s32.totalorder %s19, 0
      %p150 = por %p148, %p149
      %p151 = scmp.ne.s32.totalorder %s137, %s138
      %p152 = scmp.eq.s32.totalorder %s20, 1
      %p153 = por %p151, %p152
      %p155 = scmp.ne.s32.totalorder %s138, %s154
      %p156 = scmp.eq.s32.totalorder %s20, 0
      %p157 = por %p155, %p156
      %p158 = scmp.le.s32.totalorder 1, %s14
      %p159 = scmp.lt.s32.totalorder %s14, 3
      %p160 = pnand %p158, %p159
      %p161 = pneg %p160
      // Predicated region
      $region9: #{tpu_custom_call.1} parent=5 // pred_check
        _
      $region10: #{tpu_custom_call.1} parent=5 // pred_check_branch
        %163 = sbr.rel (%p160) target = $region12
      $region11: #{tpu_custom_call.1} parent=5 // pred_region
        %s164 = ssub.s32 %s14, 1
        // Predicated region
        $region13: #{tpu_custom_call.1} parent=11 // pred_check
          %p165 = pneg %p61
        $region14: #{tpu_custom_call.1} parent=11 // pred_check_branch
          %167 = sbr.rel (%p165) target = $region16
        $region15: #{tpu_custom_call.1} parent=11 // pred_region
          _
        $region16: #{tpu_custom_call.1} parent=11 // pred_fallthru
          _
        // Predicated region
        $region17: #{tpu_custom_call.1} parent=11 // pred_check
          %p168 = pneg %p82
        $region18: #{tpu_custom_call.1} parent=11 // pred_check_branch
          %170 = sbr.rel (%p168) target = $region20
        $region19: #{tpu_custom_call.1} parent=11 // pred_region
          _
        $region20: #{tpu_custom_call.1} parent=11 // pred_fallthru
          _
        // Predicated region
        $region21: #{tpu_custom_call.1} parent=11 // pred_check
          %p171 = pneg %p103
        $region22: #{tpu_custom_call.1} parent=11 // pred_check_branch
          %173 = sbr.rel (%p171) target = $region24
        $region23: #{tpu_custom_call.1} parent=11 // pred_region
          _
        $region24: #{tpu_custom_call.1} parent=11 // pred_fallthru
          _
        // Predicated region
        $region25: #{tpu_custom_call.1} parent=11 // pred_check
          %p174 = pneg %p124
        $region26: #{tpu_custom_call.1} parent=11 // pred_check_branch
          %176 = sbr.rel (%p174) target = $region28
        $region27: #{tpu_custom_call.1} parent=11 // pred_region
          _
        $region28: #{tpu_custom_call.1} parent=11 // pred_fallthru
          _
      $region12: #{tpu_custom_call.1} parent=5 // pred_fallthru
        _
      %p177 = scmp.lt.s32.totalorder %s14, 2
      // Predicated region
      $region29: #{tpu_custom_call.1} parent=5 // pred_check
        %p178 = pneg %p177
      $region30: #{tpu_custom_call.1} parent=5 // pred_check_branch
        %180 = sbr.rel (%p178) target = $region32
      $region31: #{tpu_custom_call.1} parent=5 // pred_region
        // Predicated region
        $region33: #{tpu_custom_call.1} parent=31 // pred_check
          %p181 = pneg %p34
        $region34: #{tpu_custom_call.1} parent=31 // pred_check_branch
          %183 = sbr.rel (%p181) target = $region36
        $region35: #{tpu_custom_call.1} parent=31 // pred_region
          %s184 = smul.u32 4, %s14
          %p185 = scmp.lt.s32.totalorder %s184, 7
          %s186 = scalar_select %p185, %s184, 7
          %s187 = smul.addr %s186, 198
          %s188 = smul.addr %s187, 4
          %s189 = scalar_lea.vmem %s0, %s188
          %s190 = smul.u32 4, %s14
        $region36: #{tpu_custom_call.1} parent=31 // pred_fallthru
          _
      $region32: #{tpu_custom_call.1} parent=5 // pred_fallthru
        _
      %p191 = scmp.le.s32.totalorder 1, %s14
      %p192 = scmp.lt.s32.totalorder %s14, 3
      %p193 = pnand %p191, %p192
      %p194 = pneg %p193
      // Predicated region
      $region37: #{tpu_custom_call.1} parent=5 // pred_check
        _
      $region38: #{tpu_custom_call.1} parent=5 // pred_check_branch
        %196 = sbr.rel (%p193) target = $region40
      $region39: #{tpu_custom_call.1} parent=5 // pred_region
        %s197 = ssub.s32 %s14, 1
        %s198 = smul.u32 4, %s19
        %p199 = scmp.lt.s32.totalorder %s198, 7
        %s200 = scalar_select %p199, %s198, 7
        %s201 = smul.addr %s200, 198
        %s202 = smul.addr %s201, 4
        %s203 = scalar_lea.vmem %s0, %s202
        %p204 = pneg %p40
        %p205 = pneg %p37
        %p206 = pneg %p61
        %p207 = pneg %p58
        %p208 = pneg %p82
        %p209 = pneg %p79
        %p210 = pneg %p103
        %p211 = pneg %p100
        %p212 = pneg %p124
        %p213 = pneg %p121
        %p214 = pneg %p150
        %p215 = pneg %p147
        %s216 = sand.u32 %s137, 1
        %s217 = scalar_lea.sflag [#allocation4], %s216
        %s218 = sand.u32 %s137, 1
        %s219 = smul.addr %s218, 4
        %s220 = scalar_lea.vmem [#allocation3], %s219
        %s221 = smul.u32 4, %s19
        %p222 = scmp.lt.s32.totalorder %s221, 7
        %s223 = scalar_select %p222, %s221, 7
        %s224 = smul.addr %s223, 198
        %s225 = smul.addr %s224, 4
        %s226 = scalar_lea.vmem %s0, %s225
        %s227 = smul.u32 4, %s19
        %s228 = smul.u32 4, %s19
        %vm230 = vcmask 195616
        %231 = vst.msk [vmem:[#allocation2 + $0x10] sm:$0xff] %vm230, 0.0
        %232 = vst.msk [vmem:[#allocation2 + $0x28] sm:$0xff] %vm230, 0.0
        %233 = vst.msk [vmem:[#allocation2 + $0x40] sm:$0xff] %vm230, 0.0
        %234 = vst.msk [vmem:[#allocation2 + $0x58] sm:$0xff] %vm230, 0.0
        %235 = vst.msk [vmem:[#allocation2 + $0x70] sm:$0xff] %vm230, 0.0
        %236 = vst.msk [vmem:[#allocation2 + $0x88] sm:$0xff] %vm230, 0.0
        %237 = vst.msk [vmem:[#allocation2 + $0xa0] sm:$0xff] %vm230, 0.0
        %238 = vst.msk [vmem:[#allocation2 + $0xb8] sm:$0xff] %vm230, 0.0
        %239 = vst.msk [vmem:[#allocation2 + $0xd0] sm:$0xff] %vm230, 0.0
        %240 = vst.msk [vmem:[#allocation2 + $0xe8] sm:$0xff] %vm230, 0.0
        %241 = vst.msk [vmem:[#allocation2 + $0x100] sm:$0xff] %vm230, 0.0
        %242 = vst.msk [vmem:[#allocation2 + $0x118] sm:$0xff] %vm230, 0.0
        %243 = vst.msk [vmem:[#allocation2 + $0x130] sm:$0xff] %vm230, 0.0
        %244 = vst.msk [vmem:[#allocation2 + $0x148] sm:$0xff] %vm230, 0.0
        %245 = vst.msk [vmem:[#allocation2 + $0x160] sm:$0xff] %vm230, 0.0
        %246 = vst.msk [vmem:[#allocation2 + $0x178] sm:$0xff] %vm230, 0.0
        %247 = vst.msk [vmem:[#allocation2 + $0x190] sm:$0xff] %vm230, 0.0
        %248 = vst.msk [vmem:[#allocation2 + $0x1a8] sm:$0xff] %vm230, 0.0
        %249 = vst.msk [vmem:[#allocation2 + $0x1c0] sm:$0xff] %vm230, 0.0
        %250 = vst.msk [vmem:[#allocation2 + $0x1d8] sm:$0xff] %vm230, 0.0
        %s251 = scalar_lea.vmem [#allocation2], 480
        %252 = vst.msk [vmem:[%s251 + $0x10] sm:$0xff] %vm230, 0.0
        %253 = vst.msk [vmem:[%s251 + $0x28] sm:$0xff] %vm230, 0.0
        %254 = vst.msk [vmem:[%s251 + $0x40] sm:$0xff] %vm230, 0.0
        %255 = vst.msk [vmem:[%s251 + $0x58] sm:$0xff] %vm230, 0.0
        %256 = vst.msk [vmem:[%s251 + $0x70] sm:$0xff] %vm230, 0.0
        %257 = vst.msk [vmem:[%s251 + $0x88] sm:$0xff] %vm230, 0.0
        %258 = vst.msk [vmem:[%s251 + $0xa0] sm:$0xff] %vm230, 0.0
        %259 = vst.msk [vmem:[%s251 + $0xb8] sm:$0xff] %vm230, 0.0
        %260 = vst.msk [vmem:[%s251 + $0xd0] sm:$0xff] %vm230, 0.0
        %261 = vst.msk [vmem:[%s251 + $0xe8] sm:$0xff] %vm230, 0.0
        %262 = vst.msk [vmem:[%s251 + $0x100] sm:$0xff] %vm230, 0.0
        %263 = vst.msk [vmem:[%s251 + $0x118] sm:$0xff] %vm230, 0.0
        %264 = vst.msk [vmem:[%s251 + $0x130] sm:$0xff] %vm230, 0.0
        %265 = vst.msk [vmem:[%s251 + $0x148] sm:$0xff] %vm230, 0.0
        %266 = vst.msk [vmem:[%s251 + $0x160] sm:$0xff] %vm230, 0.0
        %267 = vst.msk [vmem:[%s251 + $0x178] sm:$0xff] %vm230, 0.0
        %268 = vst.msk [vmem:[%s251 + $0x190] sm:$0xff] %vm230, 0.0
        %269 = vst.msk [vmem:[%s251 + $0x1a8] sm:$0xff] %vm230, 0.0
        %270 = vst.msk [vmem:[%s251 + $0x1c0] sm:$0xff] %vm230, 0.0
        %271 = vst.msk [vmem:[%s251 + $0x1d8] sm:$0xff] %vm230, 0.0
        %v272 = vld [vmem:[%s1] sm:$0xff]
        %v273 = vld [vmem:[%s1 + $0x8] sm:$0xff]
        %v274 = vld [vmem:[%s1 + $0x10] sm:$0xff]
        %v275 = vld [vmem:[%s1 + $0x18] sm:$0xff]
        %v276 = vld [vmem:[%s1 + $0x20] sm:$0xff]
        %v277 = vld [vmem:[%s1 + $0x28] sm:$0xff]
        %v278 = vld [vmem:[%s1 + $0x30] sm:$0xff]
        %v279 = vld [vmem:[%s1 + $0x38] sm:$0xff]
        %v280 = vld [vmem:[%s1 + $0x40] sm:$0xff]
        %v281 = vld [vmem:[%s1 + $0x48] sm:$0xff]
        %v282 = vld [vmem:[%s1 + $0x50] sm:$0xff]
        %v283 = vld [vmem:[%s1 + $0x58] sm:$0xff]
        %v284 = vld [vmem:[%s1 + $0x60] sm:$0xff]
        %v285 = vld [vmem:[%s1 + $0x68] sm:$0xff]
        %v286 = vld [vmem:[%s1 + $0x70] sm:$0xff]
        %v287 = vld [vmem:[%s1 + $0x78] sm:$0xff]
        %v288 = vld [vmem:[%s1 + $0x80] sm:$0xff]
        %v289 = vld [vmem:[%s1 + $0x88] sm:$0xff]
        %v290 = vld [vmem:[%s1 + $0x90] sm:$0xff]
        %v291 = vld [vmem:[%s1 + $0x98] sm:$0xff]
        %v292 = vld [vmem:[%s1 + $0xa0] sm:$0xff]
        %v293 = vld [vmem:[%s1 + $0xa8] sm:$0xff]
        %v294 = vld [vmem:[%s1 + $0xb0] sm:$0xff]
        %v295 = vld [vmem:[%s1 + $0xb8] sm:$0xff]
        %v296 = vld [vmem:[%s1 + $0xc0] sm:$0xff]
        %v297 = vld [vmem:[%s1 + $0xc8] sm:$0xff]
        %v298 = vld [vmem:[%s1 + $0xd0] sm:$0xff]
        %v299 = vld [vmem:[%s1 + $0xd8] sm:$0xff]
        %v300 = vld [vmem:[%s1 + $0xe0] sm:$0xff]
        %v301 = vld [vmem:[%s1 + $0xe8] sm:$0xff]
        %v302 = vld [vmem:[%s1 + $0xf0] sm:$0xff]
        %v303 = vld [vmem:[%s1 + $0xf8] sm:$0xff]
        %v304 = vld [vmem:[%s1 + $0x100] sm:$0xff]
        %v305 = vld [vmem:[%s1 + $0x108] sm:$0xff]
        %v306 = vld [vmem:[%s1 + $0x110] sm:$0xff]
        %v307 = vld [vmem:[%s1 + $0x118] sm:$0xff]
        %v308 = vld [vmem:[%s1 + $0x120] sm:$0xff]
        %v309 = vld [vmem:[%s1 + $0x128] sm:$0xff]
        %v310 = vld [vmem:[%s1 + $0x130] sm:$0xff]
        %v311 = vld [vmem:[%s1 + $0x138] sm:$0xff]
        %v312 = vld [vmem:[%s1 + $0x140] sm:$0xff]
        %v313 = vld [vmem:[%s1 + $0x148] sm:$0xff]
        %v314 = vld [vmem:[%s1 + $0x150] sm:$0xff]
        %v315 = vld [vmem:[%s1 + $0x158] sm:$0xff]
        %v316 = vld [vmem:[%s1 + $0x160] sm:$0xff]
        %v317 = vld [vmem:[%s1 + $0x168] sm:$0xff]
        %v318 = vld [vmem:[%s1 + $0x170] sm:$0xff]
        %v319 = vld [vmem:[%s1 + $0x178] sm:$0xff]
        %v320 = vld [vmem:[%s1 + $0x180] sm:$0xff]
        %v321 = vld [vmem:[%s1 + $0x188] sm:$0xff]
        %v322 = vld [vmem:[%s1 + $0x190] sm:$0xff]
        %v323 = vld [vmem:[%s1 + $0x198] sm:$0xff]
        %v324 = vld [vmem:[%s1 + $0x1a0] sm:$0xff]
        %v325 = vld [vmem:[%s1 + $0x1a8] sm:$0xff]
        %v326 = vld [vmem:[%s1 + $0x1b0] sm:$0xff]
        %v327 = vld [vmem:[%s1 + $0x1b8] sm:$0xff]
        %v328 = vld [vmem:[%s1 + $0x1c0] sm:$0xff]
        %v329 = vld [vmem:[%s1 + $0x1c8] sm:$0xff]
        %v330 = vld [vmem:[%s1 + $0x1d0] sm:$0xff]
        %v331 = vld [vmem:[%s1 + $0x1d8] sm:$0xff]
        %v332 = vld [vmem:[%s226] sm:$0xff]
        %v333 = vld [vmem:[%s226 + $0x8] sm:$0xff]
        %v334 = vld [vmem:[%s226 + $0x10] sm:$0xff]
        %v335 = vld [vmem:[%s226 + $0x18] sm:$0xff]
        %v336 = vld [vmem:[%s226 + $0x20] sm:$0xff]
        %v337 = vld [vmem:[%s226 + $0x28] sm:$0xff]
        %v338 = vld [vmem:[%s226 + $0x30] sm:$0xff]
        %v339 = vld [vmem:[%s226 + $0x38] sm:$0xff]
        %v340 = vld [vmem:[%s226 + $0x40] sm:$0xff]
        %v341 = vld [vmem:[%s226 + $0x48] sm:$0xff]
        %v342 = vld [vmem:[%s226 + $0x50] sm:$0xff]
        %v343 = vld [vmem:[%s226 + $0x58] sm:$0xff]
        %v344 = vld [vmem:[%s226 + $0x60] sm:$0xff]
        %v345 = vld [vmem:[%s226 + $0x68] sm:$0xff]
        %v346 = vld [vmem:[%s226 + $0x70] sm:$0xff]
        %v347 = vld [vmem:[%s226 + $0x78] sm:$0xff]
        %v348 = vld [vmem:[%s226 + $0x80] sm:$0xff]
        %v349 = vld [vmem:[%s226 + $0x88] sm:$0xff]
        %v350 = vld [vmem:[%s226 + $0x90] sm:$0xff]
        %v351 = vld [vmem:[%s226 + $0x98] sm:$0xff]
        %v352 = vld [vmem:[%s226 + $0xa0] sm:$0xff]
        %v353 = vld [vmem:[%s226 + $0xa8] sm:$0xff]
        %v354 = vld [vmem:[%s226 + $0xb0] sm:$0xff]
        %v355 = vld [vmem:[%s226 + $0xb8] sm:$0xff]
        %v356 = vld [vmem:[%s226 + $0xc0] sm:$0xff]
        %v357 = vld [vmem:[%s226 + $0xc8] sm:$0xff]
        %v358 = vld [vmem:[%s226 + $0xd0] sm:$0xff]
        %v359 = vld [vmem:[%s226 + $0xd8] sm:$0xff]
        %v360 = vld [vmem:[%s226 + $0xe0] sm:$0xff]
        %v361 = vld [vmem:[%s226 + $0xe8] sm:$0xff]
        %v362 = vld [vmem:[%s226 + $0xf0] sm:$0xff]
        %v363 = vld [vmem:[%s226 + $0xf8] sm:$0xff]
        %v364 = vld [vmem:[%s226 + $0x100] sm:$0xff]
        %v365 = vld [vmem:[%s226 + $0x108] sm:$0xff]
        %v366 = vld [vmem:[%s226 + $0x110] sm:$0xff]
        %v367 = vld [vmem:[%s226 + $0x118] sm:$0xff]
        %v368 = vld [vmem:[%s226 + $0x120] sm:$0xff]
        %v369 = vld [vmem:[%s226 + $0x128] sm:$0xff]
        %v370 = vld [vmem:[%s226 + $0x130] sm:$0xff]
        %v371 = vld [vmem:[%s226 + $0x138] sm:$0xff]
        %v372 = vld [vmem:[%s226 + $0x140] sm:$0xff]
        %v373 = vld [vmem:[%s226 + $0x148] sm:$0xff]
        %v374 = vld [vmem:[%s226 + $0x150] sm:$0xff]
        %v375 = vld [vmem:[%s226 + $0x158] sm:$0xff]
        %v376 = vld [vmem:[%s226 + $0x160] sm:$0xff]
        %v377 = vld [vmem:[%s226 + $0x168] sm:$0xff]
        %v378 = vld [vmem:[%s226 + $0x170] sm:$0xff]
        %v379 = vld [vmem:[%s226 + $0x178] sm:$0xff]
        %v380 = vld [vmem:[%s226 + $0x180] sm:$0xff]
        %v381 = vld [vmem:[%s226 + $0x188] sm:$0xff]
        %v382 = vld [vmem:[%s226 + $0x190] sm:$0xff]
        %v383 = vld [vmem:[%s226 + $0x198] sm:$0xff]
        %v384 = vld [vmem:[%s226 + $0x1a0] sm:$0xff]
        %v385 = vld [vmem:[%s226 + $0x1a8] sm:$0xff]
        %v386 = vld [vmem:[%s226 + $0x1b0] sm:$0xff]
        %v387 = vld [vmem:[%s226 + $0x1b8] sm:$0xff]
        %v388 = vld [vmem:[%s226 + $0x1c0] sm:$0xff]
        %v389 = vld [vmem:[%s226 + $0x1c8] sm:$0xff]
        %v390 = vld [vmem:[%s226 + $0x1d0] sm:$0xff]
        %v391 = vld [vmem:[%s226 + $0x1d8] sm:$0xff]
        %v392 = vld [vmem:[%s226 + $0x1e0] sm:$0xff]
        %v393 = vld [vmem:[%s226 + $0x1e8] sm:$0xff]
        %v394 = vld [vmem:[%s226 + $0x1f0] sm:$0xff]
        %v395 = vld [vmem:[%s226 + $0x1f8] sm:$0xff]
        %v396 = vld [vmem:[%s226 + $0x200] sm:$0xff]
        %v397 = vld [vmem:[%s226 + $0x208] sm:$0xff]
        %v398 = vld [vmem:[%s226 + $0x210] sm:$0xff]
        %v399 = vld [vmem:[%s226 + $0x218] sm:$0xff]
        %v400 = vld [vmem:[%s226 + $0x220] sm:$0xff]
        %v401 = vld [vmem:[%s226 + $0x228] sm:$0xff]
        %v402 = vld [vmem:[%s226 + $0x230] sm:$0xff]
        %v403 = vld [vmem:[%s226 + $0x238] sm:$0xff]
        %v404 = vld [vmem:[%s226 + $0x240] sm:$0xff]
        %v405 = vld [vmem:[%s226 + $0x248] sm:$0xff]
        %v406 = vld [vmem:[%s226 + $0x250] sm:$0xff]
        %v407 = vld [vmem:[%s226 + $0x258] sm:$0xff]
        %v408 = vld [vmem:[%s226 + $0x260] sm:$0xff]
        %v409 = vld [vmem:[%s226 + $0x268] sm:$0xff]
        %v410 = vld [vmem:[%s226 + $0x270] sm:$0xff]
        %v411 = vld [vmem:[%s226 + $0x278] sm:$0xff]
        %v412 = vld [vmem:[%s226 + $0x280] sm:$0xff]
        %v413 = vld [vmem:[%s226 + $0x288] sm:$0xff]
        %v414 = vld [vmem:[%s226 + $0x290] sm:$0xff]
        %v415 = vld [vmem:[%s226 + $0x298] sm:$0xff]
        %v416 = vld [vmem:[%s226 + $0x2a0] sm:$0xff]
        %v417 = vld [vmem:[%s226 + $0x2a8] sm:$0xff]
        %v418 = vld [vmem:[%s226 + $0x2b0] sm:$0xff]
        %v419 = vld [vmem:[%s226 + $0x2b8] sm:$0xff]
        %v420 = vld [vmem:[%s226 + $0x2c0] sm:$0xff]
        %v421 = vld [vmem:[%s226 + $0x2c8] sm:$0xff]
        %v422 = vld [vmem:[%s226 + $0x2d0] sm:$0xff]
        %v423 = vld [vmem:[%s226 + $0x2d8] sm:$0xff]
        %v424 = vld [vmem:[%s226 + $0x2e0] sm:$0xff]
        %v425 = vld [vmem:[%s226 + $0x2e8] sm:$0xff]
        %v426 = vld [vmem:[%s226 + $0x2f0] sm:$0xff]
        %v427 = vld [vmem:[%s226 + $0x2f8] sm:$0xff]
        %v428 = vld [vmem:[%s226 + $0x300] sm:$0x33]
        %v429 = vld [vmem:[%s226 + $0x308] sm:$0x33]
        %v430 = vld [vmem:[%s226 + $0x310] sm:$0x33]
        %v491 = vunpack.c.l.b16 %v272
        %v492 = vunpack.c.h.b16 %v272
        %v493 = vunpack.c.l.b16 %v273
        %v494 = vunpack.c.h.b16 %v273
        %v495 = vunpack.c.l.b16 %v274
        %v496 = vunpack.c.h.b16 %v274
        %v497 = vunpack.c.l.b16 %v275
        %v498 = vunpack.c.h.b16 %v275
        %v499 = vunpack.c.l.b16 %v276
        %v500 = vunpack.c.h.b16 %v276
        %v501 = vunpack.c.l.b16 %v277
        %v502 = vunpack.c.h.b16 %v277
        %v503 = vunpack.c.l.b16 %v278
        %v504 = vunpack.c.h.b16 %v278
        %v505 = vunpack.c.l.b16 %v279
        %v506 = vunpack.c.h.b16 %v279
        %v507 = vunpack.c.l.b16 %v280
        %v508 = vunpack.c.h.b16 %v280
        %v509 = vunpack.c.l.b16 %v281
        %v510 = vunpack.c.h.b16 %v281
        %v511 = vunpack.c.l.b16 %v282
        %v512 = vunpack.c.h.b16 %v282
        %v513 = vunpack.c.l.b16 %v283
        %v514 = vunpack.c.h.b16 %v283
        %v515 = vunpack.c.l.b16 %v284
        %v516 = vunpack.c.h.b16 %v284
        %v517 = vunpack.c.l.b16 %v285
        %v518 = vunpack.c.h.b16 %v285
        %v519 = vunpack.c.l.b16 %v286
        %v520 = vunpack.c.h.b16 %v286
        %v521 = vunpack.c.l.b16 %v287
        %v522 = vunpack.c.h.b16 %v287
        %v523 = vunpack.c.l.b16 %v288
        %v524 = vunpack.c.h.b16 %v288
        %v525 = vunpack.c.l.b16 %v289
        %v526 = vunpack.c.h.b16 %v289
        %v527 = vunpack.c.l.b16 %v290
        %v528 = vunpack.c.h.b16 %v290
        %v529 = vunpack.c.l.b16 %v291
        %v530 = vunpack.c.h.b16 %v291
        %v531 = vunpack.c.l.b16 %v292
        %v532 = vunpack.c.h.b16 %v292
        %v533 = vunpack.c.l.b16 %v293
        %v534 = vunpack.c.h.b16 %v293
        %v535 = vunpack.c.l.b16 %v294
        %v536 = vunpack.c.h.b16 %v294
        %v537 = vunpack.c.l.b16 %v295
        %v538 = vunpack.c.h.b16 %v295
        %v539 = vunpack.c.l.b16 %v296
        %v540 = vunpack.c.h.b16 %v296
        %v541 = vunpack.c.l.b16 %v297
        %v542 = vunpack.c.h.b16 %v297
        %v543 = vunpack.c.l.b16 %v298
        %v544 = vunpack.c.h.b16 %v298
        %v545 = vunpack.c.l.b16 %v299
        %v546 = vunpack.c.h.b16 %v299
        %v547 = vunpack.c.l.b16 %v300
        %v548 = vunpack.c.h.b16 %v300
        %v549 = vunpack.c.l.b16 %v301
        %v550 = vunpack.c.h.b16 %v301
        %v551 = vunpack.c.l.b16 %v302
        %v552 = vunpack.c.h.b16 %v302
        %v553 = vunpack.c.l.b16 %v303
        %v554 = vunpack.c.h.b16 %v303
        %v555 = vunpack.c.l.b16 %v304
        %v556 = vunpack.c.h.b16 %v304
        %v557 = vunpack.c.l.b16 %v305
        %v558 = vunpack.c.h.b16 %v305
        %v559 = vunpack.c.l.b16 %v306
        %v560 = vunpack.c.h.b16 %v306
        %v561 = vunpack.c.l.b16 %v307
        %v562 = vunpack.c.h.b16 %v307
        %v563 = vunpack.c.l.b16 %v308
        %v564 = vunpack.c.h.b16 %v308
        %v565 = vunpack.c.l.b16 %v309
        %v566 = vunpack.c.h.b16 %v309
        %v567 = vunpack.c.l.b16 %v310
        %v568 = vunpack.c.h.b16 %v310
        %v569 = vunpack.c.l.b16 %v311
        %v570 = vunpack.c.h.b16 %v311
        %v571 = vunpack.c.l.b16 %v312
        %v572 = vunpack.c.h.b16 %v312
        %v573 = vunpack.c.l.b16 %v313
        %v574 = vunpack.c.h.b16 %v313
        %v575 = vunpack.c.l.b16 %v314
        %v576 = vunpack.c.h.b16 %v314
        %v577 = vunpack.c.l.b16 %v315
        %v578 = vunpack.c.h.b16 %v315
        %v579 = vunpack.c.l.b16 %v316
        %v580 = vunpack.c.h.b16 %v316
        %v581 = vunpack.c.l.b16 %v317
        %v582 = vunpack.c.h.b16 %v317
        %v583 = vunpack.c.l.b16 %v318
        %v584 = vunpack.c.h.b16 %v318
        %v585 = vunpack.c.l.b16 %v319
        %v586 = vunpack.c.h.b16 %v319
        %v587 = vunpack.c.l.b16 %v320
        %v588 = vunpack.c.h.b16 %v320
        %v589 = vunpack.c.l.b16 %v321
        %v590 = vunpack.c.h.b16 %v321
        %v591 = vunpack.c.l.b16 %v322
        %v592 = vunpack.c.h.b16 %v322
        %v593 = vunpack.c.l.b16 %v323
        %v594 = vunpack.c.h.b16 %v323
        %v595 = vunpack.c.l.b16 %v324
        %v596 = vunpack.c.h.b16 %v324
        %v597 = vunpack.c.l.b16 %v325
        %v598 = vunpack.c.h.b16 %v325
        %v599 = vunpack.c.l.b16 %v326
        %v600 = vunpack.c.h.b16 %v326
        %v601 = vunpack.c.l.b16 %v327
        %v602 = vunpack.c.h.b16 %v327
        %v603 = vunpack.c.l.b16 %v328
        %v604 = vunpack.c.h.b16 %v328
        %v605 = vunpack.c.l.b16 %v329
        %v606 = vunpack.c.h.b16 %v329
        %v607 = vunpack.c.l.b16 %v330
        %v608 = vunpack.c.h.b16 %v330
        %v609 = vunpack.c.l.b16 %v331
        %v610 = vunpack.c.h.b16 %v331
        %v611 = vpack.c.b16 %v497, %v491
        %v612 = vpack.c.b16 %v498, %v492
        %v613 = vpack.c.b16 %v499, %v493
        %v614 = vpack.c.b16 %v500, %v494
        %v615 = vpack.c.b16 %v501, %v495
        %v616 = vpack.c.b16 %v502, %v496
        %v617 = vpack.c.b16 %v509, %v503
        %v618 = vpack.c.b16 %v510, %v504
        %v619 = vpack.c.b16 %v511, %v505
        %v620 = vpack.c.b16 %v512, %v506
        %v621 = vpack.c.b16 %v513, %v507
        %v622 = vpack.c.b16 %v514, %v508
        %v623 = vpack.c.b16 %v521, %v515
        %v624 = vpack.c.b16 %v522, %v516
        %v625 = vpack.c.b16 %v523, %v517
        %v626 = vpack.c.b16 %v524, %v518
        %v627 = vpack.c.b16 %v525, %v519
        %v628 = vpack.c.b16 %v526, %v520
        %v629 = vpack.c.b16 %v533, %v527
        %v630 = vpack.c.b16 %v534, %v528
        %v631 = vpack.c.b16 %v535, %v529
        %v632 = vpack.c.b16 %v536, %v530
        %v633 = vpack.c.b16 %v537, %v531
        %v634 = vpack.c.b16 %v538, %v532
        %v635 = vpack.c.b16 %v545, %v539
        %v636 = vpack.c.b16 %v546, %v540
        %v637 = vpack.c.b16 %v547, %v541
        %v638 = vpack.c.b16 %v548, %v542
        %v639 = vpack.c.b16 %v549, %v543
        %v640 = vpack.c.b16 %v550, %v544
        %v641 = vpack.c.b16 %v557, %v551
        %v642 = vpack.c.b16 %v558, %v552
        %v643 = vpack.c.b16 %v559, %v553
        %v644 = vpack.c.b16 %v560, %v554
        %v645 = vpack.c.b16 %v561, %v555
        %v646 = vpack.c.b16 %v562, %v556
        %v647 = vpack.c.b16 %v569, %v563
        %v648 = vpack.c.b16 %v570, %v564
        %v649 = vpack.c.b16 %v571, %v565
        %v650 = vpack.c.b16 %v572, %v566
        %v651 = vpack.c.b16 %v573, %v567
        %v652 = vpack.c.b16 %v574, %v568
        %v653 = vpack.c.b16 %v581, %v575
        %v654 = vpack.c.b16 %v582, %v576
        %v655 = vpack.c.b16 %v583, %v577
        %v656 = vpack.c.b16 %v584, %v578
        %v657 = vpack.c.b16 %v585, %v579
        %v658 = vpack.c.b16 %v586, %v580
        %v659 = vpack.c.b16 %v593, %v587
        %v660 = vpack.c.b16 %v594, %v588
        %v661 = vpack.c.b16 %v595, %v589
        %v662 = vpack.c.b16 %v596, %v590
        %v663 = vpack.c.b16 %v597, %v591
        %v664 = vpack.c.b16 %v598, %v592
        %v665 = vpack.c.b16 %v605, %v599
        %v666 = vpack.c.b16 %v606, %v600
        %v667 = vpack.c.b16 %v607, %v601
        %v668 = vpack.c.b16 %v608, %v602
        %v669 = vpack.c.b16 %v609, %v603
        %v670 = vpack.c.b16 %v610, %v604
        %v830 = vunpack.c.l.b16 %v332
        %v831 = vunpack.c.h.b16 %v332
        %v832 = vunpack.c.l.b16 %v333
        %v833 = vunpack.c.h.b16 %v333
        %v834 = vunpack.c.l.b16 %v334
        %v835 = vunpack.c.h.b16 %v334
        %v836 = vunpack.c.l.b16 %v335
        %v837 = vunpack.c.h.b16 %v335
        %v838 = vunpack.c.l.b16 %v336
        %v839 = vunpack.c.h.b16 %v336
        %v840 = vunpack.c.l.b16 %v337
        %v841 = vunpack.c.h.b16 %v337
        %v842 = vunpack.c.l.b16 %v338
        %v843 = vunpack.c.h.b16 %v338
        %v844 = vunpack.c.l.b16 %v339
        %v845 = vunpack.c.h.b16 %v339
        %v846 = vunpack.c.l.b16 %v340
        %v847 = vunpack.c.h.b16 %v340
        %v848 = vunpack.c.l.b16 %v341
        %v849 = vunpack.c.h.b16 %v341
        %v850 = vunpack.c.l.b16 %v342
        %v851 = vunpack.c.h.b16 %v342
        %v852 = vunpack.c.l.b16 %v343
        %v853 = vunpack.c.h.b16 %v343
        %v854 = vunpack.c.l.b16 %v344
        %v855 = vunpack.c.h.b16 %v344
        %v856 = vunpack.c.l.b16 %v345
        %v857 = vunpack.c.h.b16 %v345
        %v858 = vunpack.c.l.b16 %v346
        %v859 = vunpack.c.h.b16 %v346
        %v860 = vunpack.c.l.b16 %v347
        %v861 = vunpack.c.h.b16 %v347
        %v862 = vunpack.c.l.b16 %v348
        %v863 = vunpack.c.h.b16 %v348
        %v864 = vunpack.c.l.b16 %v349
        %v865 = vunpack.c.h.b16 %v349
        %v866 = vunpack.c.l.b16 %v350
        %v867 = vunpack.c.h.b16 %v350
        %v868 = vunpack.c.l.b16 %v351
        %v869 = vunpack.c.h.b16 %v351
        %v870 = vunpack.c.l.b16 %v352
        %v871 = vunpack.c.h.b16 %v352
        %v872 = vunpack.c.l.b16 %v353
        %v873 = vunpack.c.h.b16 %v353
        %v874 = vunpack.c.l.b16 %v354
        %v875 = vunpack.c.h.b16 %v354
        %v876 = vunpack.c.l.b16 %v355
        %v877 = vunpack.c.h.b16 %v355
        %v878 = vunpack.c.l.b16 %v356
        %v879 = vunpack.c.h.b16 %v356
        %v880 = vunpack.c.l.b16 %v357
        %v881 = vunpack.c.h.b16 %v357
        %v882 = vunpack.c.l.b16 %v358
        %v883 = vunpack.c.h.b16 %v358
        %v884 = vunpack.c.l.b16 %v359
        %v885 = vunpack.c.h.b16 %v359
        %v886 = vunpack.c.l.b16 %v360
        %v887 = vunpack.c.h.b16 %v360
        %v888 = vunpack.c.l.b16 %v361
        %v889 = vunpack.c.h.b16 %v361
        %v890 = vunpack.c.l.b16 %v362
        %v891 = vunpack.c.h.b16 %v362
        %v892 = vunpack.c.l.b16 %v363
        %v893 = vunpack.c.h.b16 %v363
        %v894 = vunpack.c.l.b16 %v364
        %v895 = vunpack.c.h.b16 %v364
        %v896 = vunpack.c.l.b16 %v365
        %v897 = vunpack.c.h.b16 %v365
        %v898 = vunpack.c.l.b16 %v366
        %v899 = vunpack.c.h.b16 %v366
        %v900 = vunpack.c.l.b16 %v367
        %v901 = vunpack.c.h.b16 %v367
        %v902 = vunpack.c.l.b16 %v368
        %v903 = vunpack.c.h.b16 %v368
        %v904 = vunpack.c.l.b16 %v369
        %v905 = vunpack.c.h.b16 %v369
        %v906 = vunpack.c.l.b16 %v370
        %v907 = vunpack.c.h.b16 %v370
        %v908 = vunpack.c.l.b16 %v371
        %v909 = vunpack.c.h.b16 %v371
        %v910 = vunpack.c.l.b16 %v372
        %v911 = vunpack.c.h.b16 %v372
        %v912 = vunpack.c.l.b16 %v373
        %v913 = vunpack.c.h.b16 %v373
        %v914 = vunpack.c.l.b16 %v374
        %v915 = vunpack.c.h.b16 %v374
        %v916 = vunpack.c.l.b16 %v375
        %v917 = vunpack.c.h.b16 %v375
        %v918 = vunpack.c.l.b16 %v376
        %v919 = vunpack.c.h.b16 %v376
        %v920 = vunpack.c.l.b16 %v377
        %v921 = vunpack.c.h.b16 %v377
        %v922 = vunpack.c.l.b16 %v378
        %v923 = vunpack.c.h.b16 %v378
        %v924 = vunpack.c.l.b16 %v379
        %v925 = vunpack.c.h.b16 %v379
        %v926 = vunpack.c.l.b16 %v380
        %v927 = vunpack.c.h.b16 %v380
        %v928 = vunpack.c.l.b16 %v381
        %v929 = vunpack.c.h.b16 %v381
        %v930 = vunpack.c.l.b16 %v382
        %v931 = vunpack.c.h.b16 %v382
        %v932 = vunpack.c.l.b16 %v383
        %v933 = vunpack.c.h.b16 %v383
        %v934 = vunpack.c.l.b16 %v384
        %v935 = vunpack.c.h.b16 %v384
        %v936 = vunpack.c.l.b16 %v385
        %v937 = vunpack.c.h.b16 %v385
        %v938 = vunpack.c.l.b16 %v386
        %v939 = vunpack.c.h.b16 %v386
        %v940 = vunpack.c.l.b16 %v387
        %v941 = vunpack.c.h.b16 %v387
        %v942 = vunpack.c.l.b16 %v388
        %v943 = vunpack.c.h.b16 %v388
        %v944 = vunpack.c.l.b16 %v389
        %v945 = vunpack.c.h.b16 %v389
        %v946 = vunpack.c.l.b16 %v390
        %v947 = vunpack.c.h.b16 %v390
        %v948 = vunpack.c.l.b16 %v391
        %v949 = vunpack.c.h.b16 %v391
        %v950 = vunpack.c.l.b16 %v392
        %v951 = vunpack.c.h.b16 %v392
        %v952 = vunpack.c.l.b16 %v393
        %v953 = vunpack.c.h.b16 %v393
        %v954 = vunpack.c.l.b16 %v394
        %v955 = vunpack.c.h.b16 %v394
        %v956 = vunpack.c.l.b16 %v395
        %v957 = vunpack.c.h.b16 %v395
        %v958 = vunpack.c.l.b16 %v396
        %v959 = vunpack.c.h.b16 %v396
        %v960 = vunpack.c.l.b16 %v397
        %v961 = vunpack.c.h.b16 %v397
        %v962 = vunpack.c.l.b16 %v398
        %v963 = vunpack.c.h.b16 %v398
        %v964 = vunpack.c.l.b16 %v399
        %v965 = vunpack.c.h.b16 %v399
        %v966 = vunpack.c.l.b16 %v400
        %v967 = vunpack.c.h.b16 %v400
        %v968 = vunpack.c.l.b16 %v401
        %v969 = vunpack.c.h.b16 %v401
        %v970 = vunpack.c.l.b16 %v402
        %v971 = vunpack.c.h.b16 %v402
        %v972 = vunpack.c.l.b16 %v403
        %v973 = vunpack.c.h.b16 %v403
        %v974 = vunpack.c.l.b16 %v404
        %v975 = vunpack.c.h.b16 %v404
        %v976 = vunpack.c.l.b16 %v405
        %v977 = vunpack.c.h.b16 %v405
        %v978 = vunpack.c.l.b16 %v406
        %v979 = vunpack.c.h.b16 %v406
        %v980 = vunpack.c.l.b16 %v407
        %v981 = vunpack.c.h.b16 %v407
        %v982 = vunpack.c.l.b16 %v408
        %v983 = vunpack.c.h.b16 %v408
        %v984 = vunpack.c.l.b16 %v409
        %v985 = vunpack.c.h.b16 %v409
        %v986 = vunpack.c.l.b16 %v410
        %v987 = vunpack.c.h.b16 %v410
        %v988 = vunpack.c.l.b16 %v411
        %v989 = vunpack.c.h.b16 %v411
        %v990 = vunpack.c.l.b16 %v412
        %v991 = vunpack.c.h.b16 %v412
        %v992 = vunpack.c.l.b16 %v413
        %v993 = vunpack.c.h.b16 %v413
        %v994 = vunpack.c.l.b16 %v414
        %v995 = vunpack.c.h.b16 %v414
        %v996 = vunpack.c.l.b16 %v415
        %v997 = vunpack.c.h.b16 %v415
        %v998 = vunpack.c.l.b16 %v416
        %v999 = vunpack.c.h.b16 %v416
        %v1000 = vunpack.c.l.b16 %v417
        %v1001 = vunpack.c.h.b16 %v417
        %v1002 = vunpack.c.l.b16 %v418
        %v1003 = vunpack.c.h.b16 %v418
        %v1004 = vunpack.c.l.b16 %v419
        %v1005 = vunpack.c.h.b16 %v419
        %v1006 = vunpack.c.l.b16 %v420
        %v1007 = vunpack.c.h.b16 %v420
        %v1008 = vunpack.c.l.b16 %v421
        %v1009 = vunpack.c.h.b16 %v421
        %v1010 = vunpack.c.l.b16 %v422
        %v1011 = vunpack.c.h.b16 %v422
        %v1012 = vunpack.c.l.b16 %v423
        %v1013 = vunpack.c.h.b16 %v423
        %v1014 = vunpack.c.l.b16 %v424
        %v1015 = vunpack.c.h.b16 %v424
        %v1016 = vunpack.c.l.b16 %v425
        %v1017 = vunpack.c.h.b16 %v425
        %v1018 = vunpack.c.l.b16 %v426
        %v1019 = vunpack.c.h.b16 %v426
        %v1020 = vunpack.c.l.b16 %v427
        %v1021 = vunpack.c.h.b16 %v427
        %v1022 = vunpack.c.l.b16 %v428
        %v1023 = vunpack.c.h.b16 %v428
        %v1024 = vunpack.c.l.b16 %v429
        %v1025 = vunpack.c.h.b16 %v429
        %v1026 = vunpack.c.l.b16 %v430
        %v1027 = vunpack.c.h.b16 %v430
        %v1028 = vpack.c.b16 %v836, %v830
        %v1029 = vpack.c.b16 %v837, %v831
        %v1030 = vpack.c.b16 %v838, %v832
        %v1031 = vpack.c.b16 %v839, %v833
        %v1032 = vpack.c.b16 %v840, %v834
        %v1033 = vpack.c.b16 %v841, %v835
        %v1034 = vpack.c.b16 %v848, %v842
        %v1035 = vpack.c.b16 %v849, %v843
        %v1036 = vpack.c.b16 %v850, %v844
        %v1037 = vpack.c.b16 %v851, %v845
        %v1038 = vpack.c.b16 %v852, %v846
        %v1039 = vpack.c.b16 %v853, %v847
        %v1040 = vpack.c.b16 %v860, %v854
        %v1041 = vpack.c.b16 %v861, %v855
        %v1042 = vpack.c.b16 %v862, %v856
        %v1043 = vpack.c.b16 %v863, %v857
        %v1044 = vpack.c.b16 %v864, %v858
        %v1045 = vpack.c.b16 %v865, %v859
        %v1046 = vpack.c.b16 %v872, %v866
        %v1047 = vpack.c.b16 %v873, %v867
        %v1048 = vpack.c.b16 %v874, %v868
        %v1049 = vpack.c.b16 %v875, %v869
        %v1050 = vpack.c.b16 %v876, %v870
        %v1051 = vpack.c.b16 %v877, %v871
        %v1052 = vpack.c.b16 %v884, %v878
        %v1053 = vpack.c.b16 %v885, %v879
        %v1054 = vpack.c.b16 %v886, %v880
        %v1055 = vpack.c.b16 %v887, %v881
        %v1056 = vpack.c.b16 %v888, %v882
        %v1057 = vpack.c.b16 %v889, %v883
        %v1058 = vpack.c.b16 %v896, %v890
        %v1059 = vpack.c.b16 %v897, %v891
        %v1060 = vpack.c.b16 %v898, %v892
        %v1061 = vpack.c.b16 %v899, %v893
        %v1062 = vpack.c.b16 %v900, %v894
        %v1063 = vpack.c.b16 %v901, %v895
        %v1064 = vpack.c.b16 %v908, %v902
        %v1065 = vpack.c.b16 %v909, %v903
        %v1066 = vpack.c.b16 %v910, %v904
        %v1067 = vpack.c.b16 %v911, %v905
        %v1068 = vpack.c.b16 %v912, %v906
        %v1069 = vpack.c.b16 %v913, %v907
        %v1070 = vpack.c.b16 %v920, %v914
        %v1071 = vpack.c.b16 %v921, %v915
        %v1072 = vpack.c.b16 %v922, %v916
        %v1073 = vpack.c.b16 %v923, %v917
        %v1074 = vpack.c.b16 %v924, %v918
        %v1075 = vpack.c.b16 %v925, %v919
        %v1076 = vpack.c.b16 %v932, %v926
        %v1077 = vpack.c.b16 %v933, %v927
        %v1078 = vpack.c.b16 %v934, %v928
        %v1079 = vpack.c.b16 %v935, %v929
        %v1080 = vpack.c.b16 %v936, %v930
        %v1081 = vpack.c.b16 %v937, %v931
        %v1082 = vpack.c.b16 %v944, %v938
        %v1083 = vpack.c.b16 %v945, %v939
        %v1084 = vpack.c.b16 %v946, %v940
        %v1085 = vpack.c.b16 %v947, %v941
        %v1086 = vpack.c.b16 %v948, %v942
        %v1087 = vpack.c.b16 %v949, %v943
        %v1088 = vpack.c.b16 %v956, %v950
        %v1089 = vpack.c.b16 %v957, %v951
        %v1090 = vpack.c.b16 %v958, %v952
        %v1091 = vpack.c.b16 %v959, %v953
        %v1092 = vpack.c.b16 %v960, %v954
        %v1093 = vpack.c.b16 %v961, %v955
        %v1094 = vpack.c.b16 %v968, %v962
        %v1095 = vpack.c.b16 %v969, %v963
        %v1096 = vpack.c.b16 %v970, %v964
        %v1097 = vpack.c.b16 %v971, %v965
        %v1098 = vpack.c.b16 %v972, %v966
        %v1099 = vpack.c.b16 %v973, %v967
        %v1100 = vpack.c.b16 %v980, %v974
        %v1101 = vpack.c.b16 %v981, %v975
        %v1102 = vpack.c.b16 %v982, %v976
        %v1103 = vpack.c.b16 %v983, %v977
        %v1104 = vpack.c.b16 %v984, %v978
        %v1105 = vpack.c.b16 %v985, %v979
        %v1106 = vpack.c.b16 %v992, %v986
        %v1107 = vpack.c.b16 %v993, %v987
        %v1108 = vpack.c.b16 %v994, %v988
        %v1109 = vpack.c.b16 %v995, %v989
        %v1110 = vpack.c.b16 %v996, %v990
        %v1111 = vpack.c.b16 %v997, %v991
        %v1112 = vpack.c.b16 %v1004, %v998
        %v1113 = vpack.c.b16 %v1005, %v999
        %v1114 = vpack.c.b16 %v1006, %v1000
        %v1115 = vpack.c.b16 %v1007, %v1001
        %v1116 = vpack.c.b16 %v1008, %v1002
        %v1117 = vpack.c.b16 %v1009, %v1003
        %v1118 = vpack.c.b16 %v1016, %v1010
        %v1119 = vpack.c.b16 %v1017, %v1011
        %v1120 = vpack.c.b16 %v1018, %v1012
        %v1121 = vpack.c.b16 %v1019, %v1013
        %v1122 = vpack.c.b16 %v1020, %v1014
        %v1123 = vpack.c.b16 %v1021, %v1015
        %v1124 = vpack.c.b16 %v1022, %v1022
        %v1125 = vpack.c.b16 %v1023, %v1023
        %v1126 = vpack.c.b16 %v1024, %v1024
        %v1127 = vpack.c.b16 %v1025, %v1025
        %v1128 = vpack.c.b16 %v1026, %v1026
        %v1129 = vpack.c.b16 %v1027, %v1027
        %1232 = vmatprep.subr.bf16.mxu0 %v1071
        %1233 = vmatpush1.bf16.xpose.msra.mxu0 %v1070
        %1234 = vmatprep.subr.bf16.mxu0 %v1065
        %1235 = vmatpush1.bf16.xpose.msra.mxu0 %v1064
        %1236 = vmatprep.subr.bf16.mxu0 %v1059
        %1237 = vmatpush1.bf16.xpose.msra.mxu0 %v1058
        %1238 = vmatprep.subr.bf16.mxu0 %v1053
        %1239 = vmatpush1.bf16.xpose.msra.mxu0 %v1052
        %1240 = vmatprep.subr.bf16.mxu0 %v1047
        %1241 = vmatpush1.bf16.xpose.msra.mxu0 %v1046
        %1242 = vmatprep.subr.bf16.mxu0 %v1041
        %1243 = vmatpush1.bf16.xpose.msra.mxu0 %v1040
        %1244 = vmatprep.subr.bf16.mxu0 %v1035
        %1245 = vmatpush1.bf16.xpose.msra.mxu0 %v1034
        %1246 = vmatprep.subr.bf16.mxu0 %v1029
        %1247 = vmatpush1.bf16.xpose.msra.mxu0 %v1028
        %1248 = vmatprep.subr.bf16.mxu0 %v1119
        %1249 = vmatpush2.bf16.xpose.msra.mxu0 %v1118
        %1250 = vmatprep.subr.bf16.mxu0 %v1113
        %1251 = vmatpush2.bf16.xpose.msra.mxu0 %v1112
        %1252 = vmatprep.subr.bf16.mxu0 %v1107
        %1253 = vmatpush2.bf16.xpose.msra.mxu0 %v1106
        %1254 = vmatprep.subr.bf16.mxu0 %v1101
        %1255 = vmatpush2.bf16.xpose.msra.mxu0 %v1100
        %1256 = vmatprep.subr.bf16.mxu0 %v1095
        %1257 = vmatpush2.bf16.xpose.msra.mxu0 %v1094
        %1258 = vmatprep.subr.bf16.mxu0 %v1089
        %1259 = vmatpush2.bf16.xpose.msra.mxu0 %v1088
        %1260 = vmatprep.subr.bf16.mxu0 %v1083
        %1261 = vmatpush2.bf16.xpose.msra.mxu0 %v1082
        %1262 = vmatprep.subr.bf16.mxu0 %v1077
        %1263 = vmatpush2.bf16.xpose.msra.mxu0 %v1076
        %1264 = vmatprep.mubr.bf16.mxu0 %v612
        %1265 = vmatmul.mubr.bf16.gmra.mxu0 %v611
        %v1266 = vpop.f32.mrf.mxu0
        %v1267 = vadd.f32 0.0, %v1266
        %v1268 = vpop.f32.mrf.mxu0
        %v1269 = vadd.f32 0.0, %v1268
        %v1270 = vpop.f32.mrf.mxu0
        %v1271 = vadd.f32 0.0, %v1270
        %v1272 = vpop.f32.mrf.mxu0
        %v1273 = vadd.f32 0.0, %v1272
        %1274 = vmatprep.mubr.bf16.mxu0 %v618
        %1275 = vmatmul.mubr.bf16.gmra.mxu0 %v617
        %v1276 = vpop.f32.mrf.mxu0
        %v1277 = vadd.f32 0.0, %v1276
        %v1278 = vpop.f32.mrf.mxu0
        %v1279 = vadd.f32 0.0, %v1278
        %v1280 = vpop.f32.mrf.mxu0
        %v1281 = vadd.f32 0.0, %v1280
        %v1282 = vpop.f32.mrf.mxu0
        %v1283 = vadd.f32 0.0, %v1282
        %1284 = vmatprep.mubr.bf16.mxu0 %v624
        %1285 = vmatmul.mubr.bf16.gmra.mxu0 %v623
        %v1286 = vpop.f32.mrf.mxu0
        %v1287 = vadd.f32 0.0, %v1286
        %v1288 = vpop.f32.mrf.mxu0
        %v1289 = vadd.f32 0.0, %v1288
        %v1290 = vpop.f32.mrf.mxu0
        %v1291 = vadd.f32 0.0, %v1290
        %v1292 = vpop.f32.mrf.mxu0
        %v1293 = vadd.f32 0.0, %v1292
        %1294 = vmatprep.mubr.bf16.mxu0 %v630
        %1295 = vmatmul.mubr.bf16.gmra.mxu0 %v629
        %v1296 = vpop.f32.mrf.mxu0
        %v1297 = vadd.f32 0.0, %v1296
        %v1298 = vpop.f32.mrf.mxu0
        %v1299 = vadd.f32 0.0, %v1298
        %v1300 = vpop.f32.mrf.mxu0
        %v1301 = vadd.f32 0.0, %v1300
        %v1302 = vpop.f32.mrf.mxu0
        %v1303 = vadd.f32 0.0, %v1302
        %1304 = vmatprep.mubr.bf16.mxu0 %v636
        %1305 = vmatmul.mubr.bf16.gmra.mxu0 %v635
        %v1306 = vpop.f32.mrf.mxu0
        %v1307 = vadd.f32 0.0, %v1306
        %v1308 = vpop.f32.mrf.mxu0
        %v1309 = vadd.f32 0.0, %v1308
        %v1310 = vpop.f32.mrf.mxu0
        %v1311 = vadd.f32 0.0, %v1310
        %v1312 = vpop.f32.mrf.mxu0
        %v1313 = vadd.f32 0.0, %v1312
        %1314 = vmatprep.mubr.bf16.mxu0 %v642
        %1315 = vmatmul.mubr.bf16.gmra.mxu0 %v641
        %v1316 = vpop.f32.mrf.mxu0
        %v1317 = vadd.f32 0.0, %v1316
        %v1318 = vpop.f32.mrf.mxu0
        %v1319 = vadd.f32 0.0, %v1318
        %v1320 = vpop.f32.mrf.mxu0
        %v1321 = vadd.f32 0.0, %v1320
        %v1322 = vpop.f32.mrf.mxu0
        %v1323 = vadd.f32 0.0, %v1322
        %1324 = vmatprep.mubr.bf16.mxu0 %v648
        %1325 = vmatmul.mubr.bf16.gmra.mxu0 %v647
        %v1326 = vpop.f32.mrf.mxu0
        %v1327 = vadd.f32 0.0, %v1326
        %v1328 = vpop.f32.mrf.mxu0
        %v1329 = vadd.f32 0.0, %v1328
        %v1330 = vpop.f32.mrf.mxu0
        %v1331 = vadd.f32 0.0, %v1330
        %v1332 = vpop.f32.mrf.mxu0
        %v1333 = vadd.f32 0.0, %v1332
        %1334 = vmatprep.mubr.bf16.mxu0 %v654
        %1335 = vmatmul.mubr.bf16.gmra.mxu0 %v653
        %v1336 = vpop.f32.mrf.mxu0
        %v1337 = vadd.f32 0.0, %v1336
        %v1338 = vpop.f32.mrf.mxu0
        %v1339 = vadd.f32 0.0, %v1338
        %v1340 = vpop.f32.mrf.mxu0
        %v1341 = vadd.f32 0.0, %v1340
        %v1342 = vpop.f32.mrf.mxu0
        %v1343 = vadd.f32 0.0, %v1342
        %1344 = vmatprep.mubr.bf16.mxu0 %v660
        %1345 = vmatmul.mubr.bf16.gmra.mxu0 %v659
        %v1346 = vpop.f32.mrf.mxu0
        %v1347 = vadd.f32 0.0, %v1346
        %v1348 = vpop.f32.mrf.mxu0
        %v1349 = vadd.f32 0.0, %v1348
        %v1350 = vpop.f32.mrf.mxu0
        %v1351 = vadd.f32 0.0, %v1350
        %v1352 = vpop.f32.mrf.mxu0
        %v1353 = vadd.f32 0.0, %v1352
        %1354 = vmatprep.mubr.bf16.mxu0 %v666
        %1355 = vmatmul.mubr.bf16.gmra.mxu0 %v665
        %v1356 = vpop.f32.mrf.mxu0
        %v1357 = vadd.f32 0.0, %v1356
        %v1358 = vpop.f32.mrf.mxu0
        %v1359 = vadd.f32 0.0, %v1358
        %v1360 = vpop.f32.mrf.mxu0
        %v1361 = vadd.f32 0.0, %v1360
        %v1362 = vpop.f32.mrf.mxu0
        %v1363 = vadd.f32 0.0, %v1362
        %1364 = vdwg.mxu0
        %1365 = vmatprep.subr.bf16.mxu0 %v1073
        %1366 = vmatpush1.bf16.xpose.msra.mxu0 %v1072
        %1367 = vmatprep.subr.bf16.mxu0 %v1067
        %1368 = vmatpush1.bf16.xpose.msra.mxu0 %v1066
        %1369 = vmatprep.subr.bf16.mxu0 %v1061
        %1370 = vmatpush1.bf16.xpose.msra.mxu0 %v1060
        %1371 = vmatprep.subr.bf16.mxu0 %v1055
        %1372 = vmatpush1.bf16.xpose.msra.mxu0 %v1054
        %1373 = vmatprep.subr.bf16.mxu0 %v1049
        %1374 = vmatpush1.bf16.xpose.msra.mxu0 %v1048
        %1375 = vmatprep.subr.bf16.mxu0 %v1043
        %1376 = vmatpush1.bf16.xpose.msra.mxu0 %v1042
        %1377 = vmatprep.subr.bf16.mxu0 %v1037
        %1378 = vmatpush1.bf16.xpose.msra.mxu0 %v1036
        %1379 = vmatprep.subr.bf16.mxu0 %v1031
        %1380 = vmatpush1.bf16.xpose.msra.mxu0 %v1030
        %1381 = vmatprep.subr.bf16.mxu0 %v1121
        %1382 = vmatpush2.bf16.xpose.msra.mxu0 %v1120
        %1383 = vmatprep.subr.bf16.mxu0 %v1115
        %1384 = vmatpush2.bf16.xpose.msra.mxu0 %v1114
        %1385 = vmatprep.subr.bf16.mxu0 %v1109
        %1386 = vmatpush2.bf16.xpose.msra.mxu0 %v1108
        %1387 = vmatprep.subr.bf16.mxu0 %v1103
        %1388 = vmatpush2.bf16.xpose.msra.mxu0 %v1102
        %1389 = vmatprep.subr.bf16.mxu0 %v1097
        %1390 = vmatpush2.bf16.xpose.msra.mxu0 %v1096
        %1391 = vmatprep.subr.bf16.mxu0 %v1091
        %1392 = vmatpush2.bf16.xpose.msra.mxu0 %v1090
        %1393 = vmatprep.subr.bf16.mxu0 %v1085
        %1394 = vmatpush2.bf16.xpose.msra.mxu0 %v1084
        %1395 = vmatprep.subr.bf16.mxu0 %v1079
        %1396 = vmatpush2.bf16.xpose.msra.mxu0 %v1078
        %1397 = vmatprep.mubr.bf16.mxu0 %v614
        %1398 = vmatmul.mubr.bf16.gmra.mxu0 %v613
        %v1399 = vpop.f32.mrf.mxu0
        %v1400 = vadd.f32 %v1267, %v1399
        %v1401 = vpop.f32.mrf.mxu0
        %v1402 = vadd.f32 %v1269, %v1401
        %v1403 = vpop.f32.mrf.mxu0
        %v1404 = vadd.f32 %v1271, %v1403
        %v1405 = vpop.f32.mrf.mxu0
        %v1406 = vadd.f32 %v1273, %v1405
        %1407 = vmatprep.mubr.bf16.mxu0 %v620
        %1408 = vmatmul.mubr.bf16.gmra.mxu0 %v619
        %v1409 = vpop.f32.mrf.mxu0
        %v1410 = vadd.f32 %v1277, %v1409
        %v1411 = vpop.f32.mrf.mxu0
        %v1412 = vadd.f32 %v1279, %v1411
        %v1413 = vpop.f32.mrf.mxu0
        %v1414 = vadd.f32 %v1281, %v1413
        %v1415 = vpop.f32.mrf.mxu0
        %v1416 = vadd.f32 %v1283, %v1415
        %1417 = vmatprep.mubr.bf16.mxu0 %v626
        %1418 = vmatmul.mubr.bf16.gmra.mxu0 %v625
        %v1419 = vpop.f32.mrf.mxu0
        %v1420 = vadd.f32 %v1287, %v1419
        %v1421 = vpop.f32.mrf.mxu0
        %v1422 = vadd.f32 %v1289, %v1421
        %v1423 = vpop.f32.mrf.mxu0
        %v1424 = vadd.f32 %v1291, %v1423
        %v1425 = vpop.f32.mrf.mxu0
        %v1426 = vadd.f32 %v1293, %v1425
        %1427 = vmatprep.mubr.bf16.mxu0 %v632
        %1428 = vmatmul.mubr.bf16.gmra.mxu0 %v631
        %v1429 = vpop.f32.mrf.mxu0
        %v1430 = vadd.f32 %v1297, %v1429
        %v1431 = vpop.f32.mrf.mxu0
        %v1432 = vadd.f32 %v1299, %v1431
        %v1433 = vpop.f32.mrf.mxu0
        %v1434 = vadd.f32 %v1301, %v1433
        %v1435 = vpop.f32.mrf.mxu0
        %v1436 = vadd.f32 %v1303, %v1435
        %1437 = vmatprep.mubr.bf16.mxu0 %v638
        %1438 = vmatmul.mubr.bf16.gmra.mxu0 %v637
        %v1439 = vpop.f32.mrf.mxu0
        %v1440 = vadd.f32 %v1307, %v1439
        %v1441 = vpop.f32.mrf.mxu0
        %v1442 = vadd.f32 %v1309, %v1441
        %v1443 = vpop.f32.mrf.mxu0
        %v1444 = vadd.f32 %v1311, %v1443
        %v1445 = vpop.f32.mrf.mxu0
        %v1446 = vadd.f32 %v1313, %v1445
        %1447 = vmatprep.mubr.bf16.mxu0 %v644
        %1448 = vmatmul.mubr.bf16.gmra.mxu0 %v643
        %v1449 = vpop.f32.mrf.mxu0
        %v1450 = vadd.f32 %v1317, %v1449
        %v1451 = vpop.f32.mrf.mxu0
        %v1452 = vadd.f32 %v1319, %v1451
        %v1453 = vpop.f32.mrf.mxu0
        %v1454 = vadd.f32 %v1321, %v1453
        %v1455 = vpop.f32.mrf.mxu0
        %v1456 = vadd.f32 %v1323, %v1455
        %1457 = vmatprep.mubr.bf16.mxu0 %v650
        %1458 = vmatmul.mubr.bf16.gmra.mxu0 %v649
        %v1459 = vpop.f32.mrf.mxu0
        %v1460 = vadd.f32 %v1327, %v1459
        %v1461 = vpop.f32.mrf.mxu0
        %v1462 = vadd.f32 %v1329, %v1461
        %v1463 = vpop.f32.mrf.mxu0
        %v1464 = vadd.f32 %v1331, %v1463
        %v1465 = vpop.f32.mrf.mxu0
        %v1466 = vadd.f32 %v1333, %v1465
        %1467 = vmatprep.mubr.bf16.mxu0 %v656
        %1468 = vmatmul.mubr.bf16.gmra.mxu0 %v655
        %v1469 = vpop.f32.mrf.mxu0
        %v1470 = vadd.f32 %v1337, %v1469
        %v1471 = vpop.f32.mrf.mxu0
        %v1472 = vadd.f32 %v1339, %v1471
        %v1473 = vpop.f32.mrf.mxu0
        %v1474 = vadd.f32 %v1341, %v1473
        %v1475 = vpop.f32.mrf.mxu0
        %v1476 = vadd.f32 %v1343, %v1475
        %1477 = vmatprep.mubr.bf16.mxu0 %v662
        %1478 = vmatmul.mubr.bf16.gmra.mxu0 %v661
        %v1479 = vpop.f32.mrf.mxu0
        %v1480 = vadd.f32 %v1347, %v1479
        %v1481 = vpop.f32.mrf.mxu0
        %v1482 = vadd.f32 %v1349, %v1481
        %v1483 = vpop.f32.mrf.mxu0
        %v1484 = vadd.f32 %v1351, %v1483
        %v1485 = vpop.f32.mrf.mxu0
        %v1486 = vadd.f32 %v1353, %v1485
        %1487 = vmatprep.mubr.bf16.mxu0 %v668
        %1488 = vmatmul.mubr.bf16.gmra.mxu0 %v667
        %v1489 = vpop.f32.mrf.mxu0
        %v1490 = vadd.f32 %v1357, %v1489
        %v1491 = vpop.f32.mrf.mxu0
        %v1492 = vadd.f32 %v1359, %v1491
        %v1493 = vpop.f32.mrf.mxu0
        %v1494 = vadd.f32 %v1361, %v1493
        %v1495 = vpop.f32.mrf.mxu0
        %v1496 = vadd.f32 %v1363, %v1495
        %1497 = vdwg.mxu0
        %1498 = vmatprep.subr.bf16.mxu0 %v1075
        %1499 = vmatpush1.bf16.xpose.msra.mxu0 %v1074
        %1500 = vmatprep.subr.bf16.mxu0 %v1069
        %1501 = vmatpush1.bf16.xpose.msra.mxu0 %v1068
        %1502 = vmatprep.subr.bf16.mxu0 %v1063
        %1503 = vmatpush1.bf16.xpose.msra.mxu0 %v1062
        %1504 = vmatprep.subr.bf16.mxu0 %v1057
        %1505 = vmatpush1.bf16.xpose.msra.mxu0 %v1056
        %1506 = vmatprep.subr.bf16.mxu0 %v1051
        %1507 = vmatpush1.bf16.xpose.msra.mxu0 %v1050
        %1508 = vmatprep.subr.bf16.mxu0 %v1045
        %1509 = vmatpush1.bf16.xpose.msra.mxu0 %v1044
        %1510 = vmatprep.subr.bf16.mxu0 %v1039
        %1511 = vmatpush1.bf16.xpose.msra.mxu0 %v1038
        %1512 = vmatprep.subr.bf16.mxu0 %v1033
        %1513 = vmatpush1.bf16.xpose.msra.mxu0 %v1032
        %1514 = vmatprep.subr.bf16.mxu0 %v1123
        %1515 = vmatpush2.bf16.xpose.msra.mxu0 %v1122
        %1516 = vmatprep.subr.bf16.mxu0 %v1117
        %1517 = vmatpush2.bf16.xpose.msra.mxu0 %v1116
        %1518 = vmatprep.subr.bf16.mxu0 %v1111
        %1519 = vmatpush2.bf16.xpose.msra.mxu0 %v1110
        %1520 = vmatprep.subr.bf16.mxu0 %v1105
        %1521 = vmatpush2.bf16.xpose.msra.mxu0 %v1104
        %1522 = vmatprep.subr.bf16.mxu0 %v1099
        %1523 = vmatpush2.bf16.xpose.msra.mxu0 %v1098
        %1524 = vmatprep.subr.bf16.mxu0 %v1093
        %1525 = vmatpush2.bf16.xpose.msra.mxu0 %v1092
        %1526 = vmatprep.subr.bf16.mxu0 %v1087
        %1527 = vmatpush2.bf16.xpose.msra.mxu0 %v1086
        %1528 = vmatprep.subr.bf16.mxu0 %v1081
        %1529 = vmatpush2.bf16.xpose.msra.mxu0 %v1080
        %1530 = vmatprep.mubr.bf16.mxu0 %v616
        %1531 = vmatmul.mubr.bf16.gmra.mxu0 %v615
        %v1532 = vpop.f32.mrf.mxu0
        %v1533 = vadd.f32 %v1400, %v1532
        %v1534 = vpop.f32.mrf.mxu0
        %v1535 = vadd.f32 %v1402, %v1534
        %v1536 = vpop.f32.mrf.mxu0
        %v1537 = vadd.f32 %v1404, %v1536
        %v1538 = vpop.f32.mrf.mxu0
        %v1539 = vadd.f32 %v1406, %v1538
        %1540 = vmatprep.mubr.bf16.mxu0 %v622
        %1541 = vmatmul.mubr.bf16.gmra.mxu0 %v621
        %v1542 = vpop.f32.mrf.mxu0
        %v1543 = vadd.f32 %v1410, %v1542
        %v1544 = vpop.f32.mrf.mxu0
        %v1545 = vadd.f32 %v1412, %v1544
        %v1546 = vpop.f32.mrf.mxu0
        %v1547 = vadd.f32 %v1414, %v1546
        %v1548 = vpop.f32.mrf.mxu0
        %v1549 = vadd.f32 %v1416, %v1548
        %1550 = vmatprep.mubr.bf16.mxu0 %v628
        %1551 = vmatmul.mubr.bf16.gmra.mxu0 %v627
        %v1552 = vpop.f32.mrf.mxu0
        %v1553 = vadd.f32 %v1420, %v1552
        %v1554 = vpop.f32.mrf.mxu0
        %v1555 = vadd.f32 %v1422, %v1554
        %v1556 = vpop.f32.mrf.mxu0
        %v1557 = vadd.f32 %v1424, %v1556
        %v1558 = vpop.f32.mrf.mxu0
        %v1559 = vadd.f32 %v1426, %v1558
        %1560 = vmatprep.mubr.bf16.mxu0 %v634
        %1561 = vmatmul.mubr.bf16.gmra.mxu0 %v633
        %v1562 = vpop.f32.mrf.mxu0
        %v1563 = vadd.f32 %v1430, %v1562
        %v1564 = vpop.f32.mrf.mxu0
        %v1565 = vadd.f32 %v1432, %v1564
        %v1566 = vpop.f32.mrf.mxu0
        %v1567 = vadd.f32 %v1434, %v1566
        %v1568 = vpop.f32.mrf.mxu0
        %v1569 = vadd.f32 %v1436, %v1568
        %1570 = vmatprep.mubr.bf16.mxu0 %v640
        %1571 = vmatmul.mubr.bf16.gmra.mxu0 %v639
        %v1572 = vpop.f32.mrf.mxu0
        %v1573 = vadd.f32 %v1440, %v1572
        %v1574 = vpop.f32.mrf.mxu0
        %v1575 = vadd.f32 %v1442, %v1574
        %v1576 = vpop.f32.mrf.mxu0
        %v1577 = vadd.f32 %v1444, %v1576
        %v1578 = vpop.f32.mrf.mxu0
        %v1579 = vadd.f32 %v1446, %v1578
        %1580 = vmatprep.mubr.bf16.mxu0 %v646
        %1581 = vmatmul.mubr.bf16.gmra.mxu0 %v645
        %v1582 = vpop.f32.mrf.mxu0
        %v1583 = vadd.f32 %v1450, %v1582
        %v1584 = vpop.f32.mrf.mxu0
        %v1585 = vadd.f32 %v1452, %v1584
        %v1586 = vpop.f32.mrf.mxu0
        %v1587 = vadd.f32 %v1454, %v1586
        %v1588 = vpop.f32.mrf.mxu0
        %v1589 = vadd.f32 %v1456, %v1588
        %1590 = vmatprep.mubr.bf16.mxu0 %v652
        %1591 = vmatmul.mubr.bf16.gmra.mxu0 %v651
        %v1592 = vpop.f32.mrf.mxu0
        %v1593 = vadd.f32 %v1460, %v1592
        %v1594 = vpop.f32.mrf.mxu0
        %v1595 = vadd.f32 %v1462, %v1594
        %v1596 = vpop.f32.mrf.mxu0
        %v1597 = vadd.f32 %v1464, %v1596
        %v1598 = vpop.f32.mrf.mxu0
        %v1599 = vadd.f32 %v1466, %v1598
        %1600 = vmatprep.mubr.bf16.mxu0 %v658
        %1601 = vmatmul.mubr.bf16.gmra.mxu0 %v657
        %v1602 = vpop.f32.mrf.mxu0
        %v1603 = vadd.f32 %v1470, %v1602
        %v1604 = vpop.f32.mrf.mxu0
        %v1605 = vadd.f32 %v1472, %v1604
        %v1606 = vpop.f32.mrf.mxu0
        %v1607 = vadd.f32 %v1474, %v1606
        %v1608 = vpop.f32.mrf.mxu0
        %v1609 = vadd.f32 %v1476, %v1608
        %1610 = vmatprep.mubr.bf16.mxu0 %v664
        %1611 = vmatmul.mubr.bf16.gmra.mxu0 %v663
        %v1612 = vpop.f32.mrf.mxu0
        %v1613 = vadd.f32 %v1480, %v1612
        %v1614 = vpop.f32.mrf.mxu0
        %v1615 = vadd.f32 %v1482, %v1614
        %v1616 = vpop.f32.mrf.mxu0
        %v1617 = vadd.f32 %v1484, %v1616
        %v1618 = vpop.f32.mrf.mxu0
        %v1619 = vadd.f32 %v1486, %v1618
        %1620 = vmatprep.mubr.bf16.mxu0 %v670
        %1621 = vmatmul.mubr.bf16.gmra.mxu0 %v669
        %v1622 = vpop.f32.mrf.mxu0
        %v1623 = vadd.f32 %v1490, %v1622
        %v1624 = vpop.f32.mrf.mxu0
        %v1625 = vadd.f32 %v1492, %v1624
        %v1626 = vpop.f32.mrf.mxu0
        %v1627 = vadd.f32 %v1494, %v1626
        %v1628 = vpop.f32.mrf.mxu0
        %v1629 = vadd.f32 %v1496, %v1628
        %1630 = vdwg.mxu0
        %1631 = vmatprep.subr.bf16.mxu0 0
        %1632 = vmatpush1.bf16.xpose.msra.mxu0 0
        %1633 = vmatprep.subr.bf16.mxu0 0
        %1634 = vmatpush1.bf16.xpose.msra.mxu0 0
        %1635 = vmatprep.subr.bf16.mxu0 0
        %1636 = vmatpush1.bf16.xpose.msra.mxu0 0
        %1637 = vmatprep.subr.bf16.mxu0 0
        %1638 = vmatpush1.bf16.xpose.msra.mxu0 0
        %1639 = vmatprep.subr.bf16.mxu0 0
        %1640 = vmatpush1.bf16.xpose.msra.mxu0 0
        %1641 = vmatprep.subr.bf16.mxu0 0
        %1642 = vmatpush1.bf16.xpose.msra.mxu0 0
        %1643 = vmatprep.subr.bf16.mxu0 0
        %1644 = vmatpush1.bf16.xpose.msra.mxu0 0
        %1645 = vmatprep.subr.bf16.mxu0 %v1125
        %1646 = vmatpush1.bf16.xpose.msra.mxu0 %v1124
        %1647 = vmatprep.subr.bf16.mxu0 0
        %1648 = vmatpush2.bf16.xpose.msra.mxu0 0
        %1649 = vmatprep.subr.bf16.mxu0 0
        %1650 = vmatpush2.bf16.xpose.msra.mxu0 0
        %1651 = vmatprep.subr.bf16.mxu0 0
        %1652 = vmatpush2.bf16.xpose.msra.mxu0 0
        %1653 = vmatprep.subr.bf16.mxu0 0
        %1654 = vmatpush2.bf16.xpose.msra.mxu0 0
        %1655 = vmatprep.subr.bf16.mxu0 0
        %1656 = vmatpush2.bf16.xpose.msra.mxu0 0
        %1657 = vmatprep.subr.bf16.mxu0 0
        %1658 = vmatpush2.bf16.xpose.msra.mxu0 0
        %1659 = vmatprep.subr.bf16.mxu0 0
        %1660 = vmatpush2.bf16.xpose.msra.mxu0 0
        %1661 = vmatprep.subr.bf16.mxu0 0
        %1662 = vmatpush2.bf16.xpose.msra.mxu0 0
        %1663 = vmatprep.mubr.bf16.mxu0 %v612
        %1664 = vmatmul.mubr.bf16.gmra.mxu0 %v611
        %v1665 = vpop.f32.mrf.mxu0
        %v1666 = vadd.f32 0.0, %v1665
        %v1667 = vpop.f32.mrf.mxu0
        %v1668 = vpop.f32.mrf.mxu0
        %v1669 = vadd.f32 0.0, %v1668
        %v1670 = vpop.f32.mrf.mxu0
        %1671 = vmatprep.mubr.bf16.mxu0 %v618
        %1672 = vmatmul.mubr.bf16.gmra.mxu0 %v617
        %v1673 = vpop.f32.mrf.mxu0
        %v1674 = vadd.f32 0.0, %v1673
        %v1675 = vpop.f32.mrf.mxu0
        %v1676 = vpop.f32.mrf.mxu0
        %v1677 = vadd.f32 0.0, %v1676
        %v1678 = vpop.f32.mrf.mxu0
        %1679 = vmatprep.mubr.bf16.mxu0 %v624
        %1680 = vmatmul.mubr.bf16.gmra.mxu0 %v623
        %v1681 = vpop.f32.mrf.mxu0
        %v1682 = vadd.f32 0.0, %v1681
        %v1683 = vpop.f32.mrf.mxu0
        %v1684 = vpop.f32.mrf.mxu0
        %v1685 = vadd.f32 0.0, %v1684
        %v1686 = vpop.f32.mrf.mxu0
        %1687 = vmatprep.mubr.bf16.mxu0 %v630
        %1688 = vmatmul.mubr.bf16.gmra.mxu0 %v629
        %v1689 = vpop.f32.mrf.mxu0
        %v1690 = vadd.f32 0.0, %v1689
        %v1691 = vpop.f32.mrf.mxu0
        %v1692 = vpop.f32.mrf.mxu0
        %v1693 = vadd.f32 0.0, %v1692
        %v1694 = vpop.f32.mrf.mxu0
        %1695 = vmatprep.mubr.bf16.mxu0 %v636
        %1696 = vmatmul.mubr.bf16.gmra.mxu0 %v635
        %v1697 = vpop.f32.mrf.mxu0
        %v1698 = vadd.f32 0.0, %v1697
        %v1699 = vpop.f32.mrf.mxu0
        %v1700 = vpop.f32.mrf.mxu0
        %v1701 = vadd.f32 0.0, %v1700
        %v1702 = vpop.f32.mrf.mxu0
        %1703 = vmatprep.mubr.bf16.mxu0 %v642
        %1704 = vmatmul.mubr.bf16.gmra.mxu0 %v641
        %v1705 = vpop.f32.mrf.mxu0
        %v1706 = vadd.f32 0.0, %v1705
        %v1707 = vpop.f32.mrf.mxu0
        %v1708 = vpop.f32.mrf.mxu0
        %v1709 = vadd.f32 0.0, %v1708
        %v1710 = vpop.f32.mrf.mxu0
        %1711 = vmatprep.mubr.bf16.mxu0 %v648
        %1712 = vmatmul.mubr.bf16.gmra.mxu0 %v647
        %v1713 = vpop.f32.mrf.mxu0
        %v1714 = vadd.f32 0.0, %v1713
        %v1715 = vpop.f32.mrf.mxu0
        %v1716 = vpop.f32.mrf.mxu0
        %v1717 = vadd.f32 0.0, %v1716
        %v1718 = vpop.f32.mrf.mxu0
        %1719 = vmatprep.mubr.bf16.mxu0 %v654
        %1720 = vmatmul.mubr.bf16.gmra.mxu0 %v653
        %v1721 = vpop.f32.mrf.mxu0
        %v1722 = vadd.f32 0.0, %v1721
        %v1723 = vpop.f32.mrf.mxu0
        %v1724 = vpop.f32.mrf.mxu0
        %v1725 = vadd.f32 0.0, %v1724
        %v1726 = vpop.f32.mrf.mxu0
        %1727 = vmatprep.mubr.bf16.mxu0 %v660
        %1728 = vmatmul.mubr.bf16.gmra.mxu0 %v659
        %v1729 = vpop.f32.mrf.mxu0
        %v1730 = vadd.f32 0.0, %v1729
        %v1731 = vpop.f32.mrf.mxu0
        %v1732 = vpop.f32.mrf.mxu0
        %v1733 = vadd.f32 0.0, %v1732
        %v1734 = vpop.f32.mrf.mxu0
        %1735 = vmatprep.mubr.bf16.mxu0 %v666
        %1736 = vmatmul.mubr.bf16.gmra.mxu0 %v665
        %v1737 = vpop.f32.mrf.mxu0
        %v1738 = vadd.f32 0.0, %v1737
        %v1739 = vpop.f32.mrf.mxu0
        %v1740 = vpop.f32.mrf.mxu0
        %v1741 = vadd.f32 0.0, %v1740
        %v1742 = vpop.f32.mrf.mxu0
        %1743 = vdwg.mxu0
        %1744 = vmatprep.subr.bf16.mxu0 0
        %1745 = vmatpush1.bf16.xpose.msra.mxu0 0
        %1746 = vmatprep.subr.bf16.mxu0 0
        %1747 = vmatpush1.bf16.xpose.msra.mxu0 0
        %1748 = vmatprep.subr.bf16.mxu0 0
        %1749 = vmatpush1.bf16.xpose.msra.mxu0 0
        %1750 = vmatprep.subr.bf16.mxu0 0
        %1751 = vmatpush1.bf16.xpose.msra.mxu0 0
        %1752 = vmatprep.subr.bf16.mxu0 0
        %1753 = vmatpush1.bf16.xpose.msra.mxu0 0
        %1754 = vmatprep.subr.bf16.mxu0 0
        %1755 = vmatpush1.bf16.xpose.msra.mxu0 0
        %1756 = vmatprep.subr.bf16.mxu0 0
        %1757 = vmatpush1.bf16.xpose.msra.mxu0 0
        %1758 = vmatprep.subr.bf16.mxu0 %v1127
        %1759 = vmatpush1.bf16.xpose.msra.mxu0 %v1126
        %1760 = vmatprep.subr.bf16.mxu0 0
        %1761 = vmatpush2.bf16.xpose.msra.mxu0 0
        %1762 = vmatprep.subr.bf16.mxu0 0
        %1763 = vmatpush2.bf16.xpose.msra.mxu0 0
        %1764 = vmatprep.subr.bf16.mxu0 0
        %1765 = vmatpush2.bf16.xpose.msra.mxu0 0
        %1766 = vmatprep.subr.bf16.mxu0 0
        %1767 = vmatpush2.bf16.xpose.msra.mxu0 0
        %1768 = vmatprep.subr.bf16.mxu0 0
        %1769 = vmatpush2.bf16.xpose.msra.mxu0 0
        %1770 = vmatprep.subr.bf16.mxu0 0
        %1771 = vmatpush2.bf16.xpose.msra.mxu0 0
        %1772 = vmatprep.subr.bf16.mxu0 0
        %1773 = vmatpush2.bf16.xpose.msra.mxu0 0
        %1774 = vmatprep.subr.bf16.mxu0 0
        %1775 = vmatpush2.bf16.xpose.msra.mxu0 0
        %1776 = vmatprep.mubr.bf16.mxu0 %v614
        %1777 = vmatmul.mubr.bf16.gmra.mxu0 %v613
        %v1778 = vpop.f32.mrf.mxu0
        %v1779 = vadd.f32 %v1666, %v1778
        %v1780 = vpop.f32.mrf.mxu0
        %v1781 = vpop.f32.mrf.mxu0
        %v1782 = vadd.f32 %v1669, %v1781
        %v1783 = vpop.f32.mrf.mxu0
        %1784 = vmatprep.mubr.bf16.mxu0 %v620
        %1785 = vmatmul.mubr.bf16.gmra.mxu0 %v619
        %v1786 = vpop.f32.mrf.mxu0
        %v1787 = vadd.f32 %v1674, %v1786
        %v1788 = vpop.f32.mrf.mxu0
        %v1789 = vpop.f32.mrf.mxu0
        %v1790 = vadd.f32 %v1677, %v1789
        %v1791 = vpop.f32.mrf.mxu0
        %1792 = vmatprep.mubr.bf16.mxu0 %v626
        %1793 = vmatmul.mubr.bf16.gmra.mxu0 %v625
        %v1794 = vpop.f32.mrf.mxu0
        %v1795 = vadd.f32 %v1682, %v1794
        %v1796 = vpop.f32.mrf.mxu0
        %v1797 = vpop.f32.mrf.mxu0
        %v1798 = vadd.f32 %v1685, %v1797
        %v1799 = vpop.f32.mrf.mxu0
        %1800 = vmatprep.mubr.bf16.mxu0 %v632
        %1801 = vmatmul.mubr.bf16.gmra.mxu0 %v631
        %v1802 = vpop.f32.mrf.mxu0
        %v1803 = vadd.f32 %v1690, %v1802
        %v1804 = vpop.f32.mrf.mxu0
        %v1805 = vpop.f32.mrf.mxu0
        %v1806 = vadd.f32 %v1693, %v1805
        %v1807 = vpop.f32.mrf.mxu0
        %1808 = vmatprep.mubr.bf16.mxu0 %v638
        %1809 = vmatmul.mubr.bf16.gmra.mxu0 %v637
        %v1810 = vpop.f32.mrf.mxu0
        %v1811 = vadd.f32 %v1698, %v1810
        %v1812 = vpop.f32.mrf.mxu0
        %v1813 = vpop.f32.mrf.mxu0
        %v1814 = vadd.f32 %v1701, %v1813
        %v1815 = vpop.f32.mrf.mxu0
        %1816 = vmatprep.mubr.bf16.mxu0 %v644
        %1817 = vmatmul.mubr.bf16.gmra.mxu0 %v643
        %v1818 = vpop.f32.mrf.mxu0
        %v1819 = vadd.f32 %v1706, %v1818
        %v1820 = vpop.f32.mrf.mxu0
        %v1821 = vpop.f32.mrf.mxu0
        %v1822 = vadd.f32 %v1709, %v1821
        %v1823 = vpop.f32.mrf.mxu0
        %1824 = vmatprep.mubr.bf16.mxu0 %v650
        %1825 = vmatmul.mubr.bf16.gmra.mxu0 %v649
        %v1826 = vpop.f32.mrf.mxu0
        %v1827 = vadd.f32 %v1714, %v1826
        %v1828 = vpop.f32.mrf.mxu0
        %v1829 = vpop.f32.mrf.mxu0
        %v1830 = vadd.f32 %v1717, %v1829
        %v1831 = vpop.f32.mrf.mxu0
        %1832 = vmatprep.mubr.bf16.mxu0 %v656
        %1833 = vmatmul.mubr.bf16.gmra.mxu0 %v655
        %v1834 = vpop.f32.mrf.mxu0
        %v1835 = vadd.f32 %v1722, %v1834
        %v1836 = vpop.f32.mrf.mxu0
        %v1837 = vpop.f32.mrf.mxu0
        %v1838 = vadd.f32 %v1725, %v1837
        %v1839 = vpop.f32.mrf.mxu0
        %1840 = vmatprep.mubr.bf16.mxu0 %v662
        %1841 = vmatmul.mubr.bf16.gmra.mxu0 %v661
        %v1842 = vpop.f32.mrf.mxu0
        %v1843 = vadd.f32 %v1730, %v1842
        %v1844 = vpop.f32.mrf.mxu0
        %v1845 = vpop.f32.mrf.mxu0
        %v1846 = vadd.f32 %v1733, %v1845
        %v1847 = vpop.f32.mrf.mxu0
        %1848 = vmatprep.mubr.bf16.mxu0 %v668
        %1849 = vmatmul.mubr.bf16.gmra.mxu0 %v667
        %v1850 = vpop.f32.mrf.mxu0
        %v1851 = vadd.f32 %v1738, %v1850
        %v1852 = vpop.f32.mrf.mxu0
        %v1853 = vpop.f32.mrf.mxu0
        %v1854 = vadd.f32 %v1741, %v1853
        %v1855 = vpop.f32.mrf.mxu0
        %1856 = vdwg.mxu0
        %1857 = vmatprep.subr.bf16.mxu0 0
        %1858 = vmatpush1.bf16.xpose.msra.mxu0 0
        %1859 = vmatprep.subr.bf16.mxu0 0
        %1860 = vmatpush1.bf16.xpose.msra.mxu0 0
        %1861 = vmatprep.subr.bf16.mxu0 0
        %1862 = vmatpush1.bf16.xpose.msra.mxu0 0
        %1863 = vmatprep.subr.bf16.mxu0 0
        %1864 = vmatpush1.bf16.xpose.msra.mxu0 0
        %1865 = vmatprep.subr.bf16.mxu0 0
        %1866 = vmatpush1.bf16.xpose.msra.mxu0 0
        %1867 = vmatprep.subr.bf16.mxu0 0
        %1868 = vmatpush1.bf16.xpose.msra.mxu0 0
        %1869 = vmatprep.subr.bf16.mxu0 0
        %1870 = vmatpush1.bf16.xpose.msra.mxu0 0
        %1871 = vmatprep.subr.bf16.mxu0 %v1129
        %1872 = vmatpush1.bf16.xpose.msra.mxu0 %v1128
        %1873 = vmatprep.subr.bf16.mxu0 0
        %1874 = vmatpush2.bf16.xpose.msra.mxu0 0
        %1875 = vmatprep.subr.bf16.mxu0 0
        %1876 = vmatpush2.bf16.xpose.msra.mxu0 0
        %1877 = vmatprep.subr.bf16.mxu0 0
        %1878 = vmatpush2.bf16.xpose.msra.mxu0 0
        %1879 = vmatprep.subr.bf16.mxu0 0
        %1880 = vmatpush2.bf16.xpose.msra.mxu0 0
        %1881 = vmatprep.subr.bf16.mxu0 0
        %1882 = vmatpush2.bf16.xpose.msra.mxu0 0
        %1883 = vmatprep.subr.bf16.mxu0 0
        %1884 = vmatpush2.bf16.xpose.msra.mxu0 0
        %1885 = vmatprep.subr.bf16.mxu0 0
        %1886 = vmatpush2.bf16.xpose.msra.mxu0 0
        %1887 = vmatprep.subr.bf16.mxu0 0
        %1888 = vmatpush2.bf16.xpose.msra.mxu0 0
        %1889 = vmatprep.mubr.bf16.mxu0 %v616
        %1890 = vmatmul.mubr.bf16.gmra.mxu0 %v615
        %v1891 = vpop.f32.mrf.mxu0
        %v1892 = vadd.f32 %v1779, %v1891
        %v1893 = vpop.f32.mrf.mxu0
        %v1894 = vpop.f32.mrf.mxu0
        %v1895 = vadd.f32 %v1782, %v1894
        %v1896 = vpop.f32.mrf.mxu0
        %1897 = vmatprep.mubr.bf16.mxu0 %v622
        %1898 = vmatmul.mubr.bf16.gmra.mxu0 %v621
        %v1899 = vpop.f32.mrf.mxu0
        %v1900 = vadd.f32 %v1787, %v1899
        %v1901 = vpop.f32.mrf.mxu0
        %v1902 = vpop.f32.mrf.mxu0
        %v1903 = vadd.f32 %v1790, %v1902
        %v1904 = vpop.f32.mrf.mxu0
        %1905 = vmatprep.mubr.bf16.mxu0 %v628
        %1906 = vmatmul.mubr.bf16.gmra.mxu0 %v627
        %v1907 = vpop.f32.mrf.mxu0
        %v1908 = vadd.f32 %v1795, %v1907
        %v1909 = vpop.f32.mrf.mxu0
        %v1910 = vpop.f32.mrf.mxu0
        %v1911 = vadd.f32 %v1798, %v1910
        %v1912 = vpop.f32.mrf.mxu0
        %1913 = vmatprep.mubr.bf16.mxu0 %v634
        %1914 = vmatmul.mubr.bf16.gmra.mxu0 %v633
        %v1915 = vpop.f32.mrf.mxu0
        %v1916 = vadd.f32 %v1803, %v1915
        %v1917 = vpop.f32.mrf.mxu0
        %v1918 = vpop.f32.mrf.mxu0
        %v1919 = vadd.f32 %v1806, %v1918
        %v1920 = vpop.f32.mrf.mxu0
        %1921 = vmatprep.mubr.bf16.mxu0 %v640
        %1922 = vmatmul.mubr.bf16.gmra.mxu0 %v639
        %v1923 = vpop.f32.mrf.mxu0
        %v1924 = vadd.f32 %v1811, %v1923
        %v1925 = vpop.f32.mrf.mxu0
        %v1926 = vpop.f32.mrf.mxu0
        %v1927 = vadd.f32 %v1814, %v1926
        %v1928 = vpop.f32.mrf.mxu0
        %1929 = vmatprep.mubr.bf16.mxu0 %v646
        %1930 = vmatmul.mubr.bf16.gmra.mxu0 %v645
        %v1931 = vpop.f32.mrf.mxu0
        %v1932 = vadd.f32 %v1819, %v1931
        %v1933 = vpop.f32.mrf.mxu0
        %v1934 = vpop.f32.mrf.mxu0
        %v1935 = vadd.f32 %v1822, %v1934
        %v1936 = vpop.f32.mrf.mxu0
        %1937 = vmatprep.mubr.bf16.mxu0 %v652
        %1938 = vmatmul.mubr.bf16.gmra.mxu0 %v651
        %v1939 = vpop.f32.mrf.mxu0
        %v1940 = vadd.f32 %v1827, %v1939
        %v1941 = vpop.f32.mrf.mxu0
        %v1942 = vpop.f32.mrf.mxu0
        %v1943 = vadd.f32 %v1830, %v1942
        %v1944 = vpop.f32.mrf.mxu0
        %1945 = vmatprep.mubr.bf16.mxu0 %v658
        %1946 = vmatmul.mubr.bf16.gmra.mxu0 %v657
        %v1947 = vpop.f32.mrf.mxu0
        %v1948 = vadd.f32 %v1835, %v1947
        %v1949 = vpop.f32.mrf.mxu0
        %v1950 = vpop.f32.mrf.mxu0
        %v1951 = vadd.f32 %v1838, %v1950
        %v1952 = vpop.f32.mrf.mxu0
        %1953 = vmatprep.mubr.bf16.mxu0 %v664
        %1954 = vmatmul.mubr.bf16.gmra.mxu0 %v663
        %v1955 = vpop.f32.mrf.mxu0
        %v1956 = vadd.f32 %v1843, %v1955
        %v1957 = vpop.f32.mrf.mxu0
        %v1958 = vpop.f32.mrf.mxu0
        %v1959 = vadd.f32 %v1846, %v1958
        %v1960 = vpop.f32.mrf.mxu0
        %1961 = vmatprep.mubr.bf16.mxu0 %v670
        %1962 = vmatmul.mubr.bf16.gmra.mxu0 %v669
        %v1963 = vpop.f32.mrf.mxu0
        %v1964 = vadd.f32 %v1851, %v1963
        %v1965 = vpop.f32.mrf.mxu0
        %v1966 = vpop.f32.mrf.mxu0
        %v1967 = vadd.f32 %v1854, %v1966
        %v1968 = vpop.f32.mrf.mxu0
        %1969 = vdwg.mxu0
        %1970 = vst [vmem:[#allocation2] sm:$0xff] %v1533
        %1971 = vst [vmem:[#allocation2 + $0x8] sm:$0xff] %v1535
        %vm1972 = vcmask 31744
        %1973 = vst.msk [vmem:[#allocation2 + $0x10] sm:$0xff] %vm1972, %v1892
        %1974 = vst [vmem:[#allocation2 + $0x18] sm:$0xff] %v1537
        %1975 = vst [vmem:[#allocation2 + $0x20] sm:$0xff] %v1539
        %1976 = vst.msk [vmem:[#allocation2 + $0x28] sm:$0xff] %vm1972, %v1895
        %1977 = vst [vmem:[#allocation2 + $0x30] sm:$0xff] %v1543
        %1978 = vst [vmem:[#allocation2 + $0x38] sm:$0xff] %v1545
        %1979 = vst.msk [vmem:[#allocation2 + $0x40] sm:$0xff] %vm1972, %v1900
        %1980 = vst [vmem:[#allocation2 + $0x48] sm:$0xff] %v1547
        %1981 = vst [vmem:[#allocation2 + $0x50] sm:$0xff] %v1549
        %1982 = vst.msk [vmem:[#allocation2 + $0x58] sm:$0xff] %vm1972, %v1903
        %1983 = vst [vmem:[#allocation2 + $0x60] sm:$0xff] %v1553
        %1984 = vst [vmem:[#allocation2 + $0x68] sm:$0xff] %v1555
        %1985 = vst.msk [vmem:[#allocation2 + $0x70] sm:$0xff] %vm1972, %v1908
        %1986 = vst [vmem:[#allocation2 + $0x78] sm:$0xff] %v1557
        %1987 = vst [vmem:[#allocation2 + $0x80] sm:$0xff] %v1559
        %1988 = vst.msk [vmem:[#allocation2 + $0x88] sm:$0xff] %vm1972, %v1911
        %1989 = vst [vmem:[#allocation2 + $0x90] sm:$0xff] %v1563
        %1990 = vst [vmem:[#allocation2 + $0x98] sm:$0xff] %v1565
        %1991 = vst.msk [vmem:[#allocation2 + $0xa0] sm:$0xff] %vm1972, %v1916
        %1992 = vst [vmem:[#allocation2 + $0xa8] sm:$0xff] %v1567
        %1993 = vst [vmem:[#allocation2 + $0xb0] sm:$0xff] %v1569
        %1994 = vst.msk [vmem:[#allocation2 + $0xb8] sm:$0xff] %vm1972, %v1919
        %1995 = vst [vmem:[#allocation2 + $0xc0] sm:$0xff] %v1573
        %1996 = vst [vmem:[#allocation2 + $0xc8] sm:$0xff] %v1575
        %1997 = vst.msk [vmem:[#allocation2 + $0xd0] sm:$0xff] %vm1972, %v1924
        %1998 = vst [vmem:[#allocation2 + $0xd8] sm:$0xff] %v1577
        %1999 = vst [vmem:[#allocation2 + $0xe0] sm:$0xff] %v1579
        %2000 = vst.msk [vmem:[#allocation2 + $0xe8] sm:$0xff] %vm1972, %v1927
        %2001 = vst [vmem:[#allocation2 + $0xf0] sm:$0xff] %v1583
        %2002 = vst [vmem:[#allocation2 + $0xf8] sm:$0xff] %v1585
        %2003 = vst.msk [vmem:[#allocation2 + $0x100] sm:$0xff] %vm1972, %v1932
        %2004 = vst [vmem:[#allocation2 + $0x108] sm:$0xff] %v1587
        %2005 = vst [vmem:[#allocation2 + $0x110] sm:$0xff] %v1589
        %2006 = vst.msk [vmem:[#allocation2 + $0x118] sm:$0xff] %vm1972, %v1935
        %2007 = vst [vmem:[#allocation2 + $0x120] sm:$0xff] %v1593
        %2008 = vst [vmem:[#allocation2 + $0x128] sm:$0xff] %v1595
        %2009 = vst.msk [vmem:[#allocation2 + $0x130] sm:$0xff] %vm1972, %v1940
        %2010 = vst [vmem:[#allocation2 + $0x138] sm:$0xff] %v1597
        %2011 = vst [vmem:[#allocation2 + $0x140] sm:$0xff] %v1599
        %2012 = vst.msk [vmem:[#allocation2 + $0x148] sm:$0xff] %vm1972, %v1943
        %2013 = vst [vmem:[#allocation2 + $0x150] sm:$0xff] %v1603
        %2014 = vst [vmem:[#allocation2 + $0x158] sm:$0xff] %v1605
        %2015 = vst.msk [vmem:[#allocation2 + $0x160] sm:$0xff] %vm1972, %v1948
        %2016 = vst [vmem:[#allocation2 + $0x168] sm:$0xff] %v1607
        %2017 = vst [vmem:[#allocation2 + $0x170] sm:$0xff] %v1609
        %2018 = vst.msk [vmem:[#allocation2 + $0x178] sm:$0xff] %vm1972, %v1951
        %2019 = vst [vmem:[#allocation2 + $0x180] sm:$0xff] %v1613
        %2020 = vst [vmem:[#allocation2 + $0x188] sm:$0xff] %v1615
        %2021 = vst.msk [vmem:[#allocation2 + $0x190] sm:$0xff] %vm1972, %v1956
        %2022 = vst [vmem:[#allocation2 + $0x198] sm:$0xff] %v1617
        %2023 = vst [vmem:[#allocation2 + $0x1a0] sm:$0xff] %v1619
        %2024 = vst.msk [vmem:[#allocation2 + $0x1a8] sm:$0xff] %vm1972, %v1959
        %2025 = vst [vmem:[#allocation2 + $0x1b0] sm:$0xff] %v1623
        %2026 = vst [vmem:[#allocation2 + $0x1b8] sm:$0xff] %v1625
        %2027 = vst.msk [vmem:[#allocation2 + $0x1c0] sm:$0xff] %vm1972, %v1964
        %2028 = vst [vmem:[#allocation2 + $0x1c8] sm:$0xff] %v1627
        %2029 = vst [vmem:[#allocation2 + $0x1d0] sm:$0xff] %v1629
        %2030 = vst.msk [vmem:[#allocation2 + $0x1d8] sm:$0xff] %vm1972, %v1967
        %v2031 = vld [vmem:[#allocation2] sm:$0xff]
        %v2032 = vld [vmem:[#allocation2 + $0x8] sm:$0xff]
        %v2033 = vld [vmem:[#allocation2 + $0x18] sm:$0xff]
        %v2034 = vld [vmem:[#allocation2 + $0x20] sm:$0xff]
        %v2035 = vld [vmem:[#allocation2 + $0x28] sm:$0xff]
        %2039 = vrot.lane.b32.xlu0 %v2033, 127
        %v2040 = vpop.permute.xlu0 %2039
        %2041 = vrot.lane.b32.xlu0 %v2034, 127
        %v2042 = vpop.permute.xlu0 %2041
        %2043 = vrot.lane.b32.xlu0 %v2035, 127
        %v2044 = vpop.permute.xlu0 %2043
        %vm2045 = vcmask 1039360
        %v2046 = vsel %vm2045, %v2040, %v2042
        %v2047 = vsel %vm2045, %v2042, %v2044
        %v2050 = vadd.f32 %v2031, %v2046
        %v2051 = vadd.f32 %v2032, %v2047
        %v2052 = vld [vmem:[#allocation2 + $0x30] sm:$0xff]
        %v2053 = vld [vmem:[#allocation2 + $0x38] sm:$0xff]
        %v2054 = vld [vmem:[#allocation2 + $0x40] sm:$0xff]
        %2058 = vrot.lane.b32.xlu0 %v2052, 126
        %v2059 = vpop.permute.xlu0 %2058
        %2060 = vrot.lane.b32.xlu0 %v2053, 126
        %v2061 = vpop.permute.xlu0 %2060
        %2062 = vrot.lane.b32.xlu0 %v2054, 126
        %v2063 = vpop.permute.xlu0 %2062
        %vm2064 = vcmask 1031168
        %v2065 = vsel %vm2064, %v2059, %v2061
        %v2066 = vsel %vm2064, %v2061, %v2063
        %v2069 = vadd.f32 %v2050, %v2065
        %v2070 = vadd.f32 %v2051, %v2066
        %v2071 = vld [vmem:[#allocation2 + $0x48] sm:$0xff]
        %v2072 = vld [vmem:[#allocation2 + $0x50] sm:$0xff]
        %v2073 = vld [vmem:[#allocation2 + $0x58] sm:$0xff]
        %2077 = vrot.lane.b32.xlu0 %v2071, 125
        %v2078 = vpop.permute.xlu0 %2077
        %2079 = vrot.lane.b32.xlu0 %v2072, 125
        %v2080 = vpop.permute.xlu0 %2079
        %2081 = vrot.lane.b32.xlu0 %v2073, 125
        %v2082 = vpop.permute.xlu0 %2081
        %vm2083 = vcmask 1022976
        %v2084 = vsel %vm2083, %v2078, %v2080
        %v2085 = vsel %vm2083, %v2080, %v2082
        %v2088 = vadd.f32 %v2069, %v2084
        %v2089 = vadd.f32 %v2070, %v2085
        %v2090 = vld [vmem:[#allocation2 + $0x60] sm:$0xff]
        %v2091 = vld [vmem:[#allocation2 + $0x68] sm:$0xff]
        %v2092 = vld [vmem:[#allocation2 + $0x70] sm:$0xff]
        %2096 = vrot.lane.b32.xlu0 %v2090, 124
        %v2097 = vpop.permute.xlu0 %2096
        %2098 = vrot.lane.b32.xlu0 %v2091, 124
        %v2099 = vpop.permute.xlu0 %2098
        %2100 = vrot.lane.b32.xlu0 %v2092, 124
        %v2101 = vpop.permute.xlu0 %2100
        %vm2102 = vcmask 1014784
        %v2103 = vsel %vm2102, %v2097, %v2099
        %v2104 = vsel %vm2102, %v2099, %v2101
        %v2107 = vadd.f32 %v2088, %v2103
        %v2108 = vadd.f32 %v2089, %v2104
        %v2109 = vld [vmem:[#allocation2 + $0x78] sm:$0xff]
        %v2110 = vld [vmem:[#allocation2 + $0x80] sm:$0xff]
        %v2111 = vld [vmem:[#allocation2 + $0x88] sm:$0xff]
        %2115 = vrot.lane.b32.xlu0 %v2109, 123
        %v2116 = vpop.permute.xlu0 %2115
        %2117 = vrot.lane.b32.xlu0 %v2110, 123
        %v2118 = vpop.permute.xlu0 %2117
        %2119 = vrot.lane.b32.xlu0 %v2111, 123
        %v2120 = vpop.permute.xlu0 %2119
        %vm2121 = vcmask 1006592
        %v2122 = vsel %vm2121, %v2116, %v2118
        %v2123 = vsel %vm2121, %v2118, %v2120
        %v2126 = vadd.f32 %v2107, %v2122
        %v2127 = vadd.f32 %v2108, %v2123
        %v2128 = vld [vmem:[#allocation2 + $0x90] sm:$0xff]
        %v2129 = vld [vmem:[#allocation2 + $0x98] sm:$0xff]
        %v2130 = vld [vmem:[#allocation2 + $0xa0] sm:$0xff]
        %2134 = vrot.lane.b32.xlu0 %v2128, 122
        %v2135 = vpop.permute.xlu0 %2134
        %2136 = vrot.lane.b32.xlu0 %v2129, 122
        %v2137 = vpop.permute.xlu0 %2136
        %2138 = vrot.lane.b32.xlu0 %v2130, 122
        %v2139 = vpop.permute.xlu0 %2138
        %vm2140 = vcmask 998400
        %v2141 = vsel %vm2140, %v2135, %v2137
        %v2142 = vsel %vm2140, %v2137, %v2139
        %v2145 = vadd.f32 %v2126, %v2141
        %v2146 = vadd.f32 %v2127, %v2142
        %v2147 = vld [vmem:[#allocation2 + $0xa8] sm:$0xff]
        %v2148 = vld [vmem:[#allocation2 + $0xb0] sm:$0xff]
        %v2149 = vld [vmem:[#allocation2 + $0xb8] sm:$0xff]
        %2153 = vrot.lane.b32.xlu0 %v2147, 121
        %v2154 = vpop.permute.xlu0 %2153
        %2155 = vrot.lane.b32.xlu0 %v2148, 121
        %v2156 = vpop.permute.xlu0 %2155
        %2157 = vrot.lane.b32.xlu0 %v2149, 121
        %v2158 = vpop.permute.xlu0 %2157
        %vm2159 = vcmask 990208
        %v2160 = vsel %vm2159, %v2154, %v2156
        %v2161 = vsel %vm2159, %v2156, %v2158
        %v2164 = vadd.f32 %v2145, %v2160
        %v2165 = vadd.f32 %v2146, %v2161
        %v2166 = vld [vmem:[#allocation2 + $0xc0] sm:$0xff]
        %v2167 = vld [vmem:[#allocation2 + $0xc8] sm:$0xff]
        %v2168 = vld [vmem:[#allocation2 + $0xd0] sm:$0xff]
        %2172 = vrot.lane.b32.xlu0 %v2166, 120
        %v2173 = vpop.permute.xlu0 %2172
        %2174 = vrot.lane.b32.xlu0 %v2167, 120
        %v2175 = vpop.permute.xlu0 %2174
        %2176 = vrot.lane.b32.xlu0 %v2168, 120
        %v2177 = vpop.permute.xlu0 %2176
        %vm2178 = vcmask 982016
        %v2179 = vsel %vm2178, %v2173, %v2175
        %v2180 = vsel %vm2178, %v2175, %v2177
        %v2183 = vadd.f32 %v2164, %v2179
        %v2184 = vadd.f32 %v2165, %v2180
        %v2185 = vld [vmem:[#allocation2 + $0xd8] sm:$0xff]
        %v2186 = vld [vmem:[#allocation2 + $0xe0] sm:$0xff]
        %v2187 = vld [vmem:[#allocation2 + $0xe8] sm:$0xff]
        %2191 = vrot.lane.b32.xlu0 %v2185, 119
        %v2192 = vpop.permute.xlu0 %2191
        %2193 = vrot.lane.b32.xlu0 %v2186, 119
        %v2194 = vpop.permute.xlu0 %2193
        %2195 = vrot.lane.b32.xlu0 %v2187, 119
        %v2196 = vpop.permute.xlu0 %2195
        %vm2197 = vcmask 973824
        %v2198 = vsel %vm2197, %v2192, %v2194
        %v2199 = vsel %vm2197, %v2194, %v2196
        %v2202 = vadd.f32 %v2183, %v2198
        %v2203 = vadd.f32 %v2184, %v2199
        %v2204 = vld [vmem:[#allocation2 + $0xf0] sm:$0xff]
        %v2205 = vld [vmem:[#allocation2 + $0xf8] sm:$0xff]
        %v2206 = vld [vmem:[#allocation2 + $0x100] sm:$0xff]
        %2210 = vrot.lane.b32.xlu0 %v2204, 118
        %v2211 = vpop.permute.xlu0 %2210
        %2212 = vrot.lane.b32.xlu0 %v2205, 118
        %v2213 = vpop.permute.xlu0 %2212
        %2214 = vrot.lane.b32.xlu0 %v2206, 118
        %v2215 = vpop.permute.xlu0 %2214
        %vm2216 = vcmask 965632
        %v2217 = vsel %vm2216, %v2211, %v2213
        %v2218 = vsel %vm2216, %v2213, %v2215
        %v2221 = vadd.f32 %v2202, %v2217
        %v2222 = vadd.f32 %v2203, %v2218
        %v2223 = vld [vmem:[#allocation2 + $0x108] sm:$0xff]
        %v2224 = vld [vmem:[#allocation2 + $0x110] sm:$0xff]
        %v2225 = vld [vmem:[#allocation2 + $0x118] sm:$0xff]
        %2229 = vrot.lane.b32.xlu0 %v2223, 117
        %v2230 = vpop.permute.xlu0 %2229
        %2231 = vrot.lane.b32.xlu0 %v2224, 117
        %v2232 = vpop.permute.xlu0 %2231
        %2233 = vrot.lane.b32.xlu0 %v2225, 117
        %v2234 = vpop.permute.xlu0 %2233
        %vm2235 = vcmask 957440
        %v2236 = vsel %vm2235, %v2230, %v2232
        %v2237 = vsel %vm2235, %v2232, %v2234
        %v2240 = vadd.f32 %v2221, %v2236
        %v2241 = vadd.f32 %v2222, %v2237
        %v2242 = vld [vmem:[#allocation2 + $0x120] sm:$0xff]
        %v2243 = vld [vmem:[#allocation2 + $0x128] sm:$0xff]
        %v2244 = vld [vmem:[#allocation2 + $0x130] sm:$0xff]
        %2248 = vrot.lane.b32.xlu0 %v2242, 116
        %v2249 = vpop.permute.xlu0 %2248
        %2250 = vrot.lane.b32.xlu0 %v2243, 116
        %v2251 = vpop.permute.xlu0 %2250
        %2252 = vrot.lane.b32.xlu0 %v2244, 116
        %v2253 = vpop.permute.xlu0 %2252
        %vm2254 = vcmask 949248
        %v2255 = vsel %vm2254, %v2249, %v2251
        %v2256 = vsel %vm2254, %v2251, %v2253
        %v2259 = vadd.f32 %v2240, %v2255
        %v2260 = vadd.f32 %v2241, %v2256
        %v2261 = vld [vmem:[#allocation2 + $0x138] sm:$0xff]
        %v2262 = vld [vmem:[#allocation2 + $0x140] sm:$0xff]
        %v2263 = vld [vmem:[#allocation2 + $0x148] sm:$0xff]
        %2267 = vrot.lane.b32.xlu0 %v2261, 115
        %v2268 = vpop.permute.xlu0 %2267
        %2269 = vrot.lane.b32.xlu0 %v2262, 115
        %v2270 = vpop.permute.xlu0 %2269
        %2271 = vrot.lane.b32.xlu0 %v2263, 115
        %v2272 = vpop.permute.xlu0 %2271
        %vm2273 = vcmask 941056
        %v2274 = vsel %vm2273, %v2268, %v2270
        %v2275 = vsel %vm2273, %v2270, %v2272
        %v2278 = vadd.f32 %v2259, %v2274
        %v2279 = vadd.f32 %v2260, %v2275
        %v2280 = vld [vmem:[#allocation2 + $0x150] sm:$0xff]
        %v2281 = vld [vmem:[#allocation2 + $0x158] sm:$0xff]
        %v2282 = vld [vmem:[#allocation2 + $0x160] sm:$0xff]
        %2286 = vrot.lane.b32.xlu0 %v2280, 114
        %v2287 = vpop.permute.xlu0 %2286
        %2288 = vrot.lane.b32.xlu0 %v2281, 114
        %v2289 = vpop.permute.xlu0 %2288
        %2290 = vrot.lane.b32.xlu0 %v2282, 114
        %v2291 = vpop.permute.xlu0 %2290
        %vm2292 = vcmask 932864
        %v2293 = vsel %vm2292, %v2287, %v2289
        %v2294 = vsel %vm2292, %v2289, %v2291
        %v2297 = vadd.f32 %v2278, %v2293
        %v2298 = vadd.f32 %v2279, %v2294
        %v2299 = vld [vmem:[#allocation2 + $0x168] sm:$0xff]
        %v2300 = vld [vmem:[#allocation2 + $0x170] sm:$0xff]
        %v2301 = vld [vmem:[#allocation2 + $0x178] sm:$0xff]
        %2305 = vrot.lane.b32.xlu0 %v2299, 113
        %v2306 = vpop.permute.xlu0 %2305
        %2307 = vrot.lane.b32.xlu0 %v2300, 113
        %v2308 = vpop.permute.xlu0 %2307
        %2309 = vrot.lane.b32.xlu0 %v2301, 113
        %v2310 = vpop.permute.xlu0 %2309
        %vm2311 = vcmask 924672
        %v2312 = vsel %vm2311, %v2306, %v2308
        %v2313 = vsel %vm2311, %v2308, %v2310
        %v2316 = vadd.f32 %v2297, %v2312
        %v2317 = vadd.f32 %v2298, %v2313
        %v2318 = vld [vmem:[#allocation2 + $0x180] sm:$0xff]
        %v2319 = vld [vmem:[#allocation2 + $0x188] sm:$0xff]
        %v2320 = vld [vmem:[#allocation2 + $0x190] sm:$0xff]
        %2324 = vrot.lane.b32.xlu0 %v2318, 112
        %v2325 = vpop.permute.xlu0 %2324
        %2326 = vrot.lane.b32.xlu0 %v2319, 112
        %v2327 = vpop.permute.xlu0 %2326
        %2328 = vrot.lane.b32.xlu0 %v2320, 112
        %v2329 = vpop.permute.xlu0 %2328
        %vm2330 = vcmask 916480
        %v2331 = vsel %vm2330, %v2325, %v2327
        %v2332 = vsel %vm2330, %v2327, %v2329
        %v2335 = vadd.f32 %v2316, %v2331
        %v2336 = vadd.f32 %v2317, %v2332
        %v2337 = vld [vmem:[#allocation2 + $0x198] sm:$0xff]
        %v2338 = vld [vmem:[#allocation2 + $0x1a0] sm:$0xff]
        %v2339 = vld [vmem:[#allocation2 + $0x1a8] sm:$0xff]
        %2343 = vrot.lane.b32.xlu0 %v2337, 111
        %v2344 = vpop.permute.xlu0 %2343
        %2345 = vrot.lane.b32.xlu0 %v2338, 111
        %v2346 = vpop.permute.xlu0 %2345
        %2347 = vrot.lane.b32.xlu0 %v2339, 111
        %v2348 = vpop.permute.xlu0 %2347
        %vm2349 = vcmask 908288
        %v2350 = vsel %vm2349, %v2344, %v2346
        %v2351 = vsel %vm2349, %v2346, %v2348
        %v2354 = vadd.f32 %v2335, %v2350
        %v2355 = vadd.f32 %v2336, %v2351
        %v2356 = vld [vmem:[#allocation2 + $0x1b0] sm:$0xff]
        %v2357 = vld [vmem:[#allocation2 + $0x1b8] sm:$0xff]
        %v2358 = vld [vmem:[#allocation2 + $0x1c0] sm:$0xff]
        %2362 = vrot.lane.b32.xlu0 %v2356, 110
        %v2363 = vpop.permute.xlu0 %2362
        %2364 = vrot.lane.b32.xlu0 %v2357, 110
        %v2365 = vpop.permute.xlu0 %2364
        %2366 = vrot.lane.b32.xlu0 %v2358, 110
        %v2367 = vpop.permute.xlu0 %2366
        %vm2368 = vcmask 900096
        %v2369 = vsel %vm2368, %v2363, %v2365
        %v2370 = vsel %vm2368, %v2365, %v2367
        %v2373 = vadd.f32 %v2354, %v2369
        %v2374 = vadd.f32 %v2355, %v2370
        %v2375 = vld [vmem:[#allocation2 + $0x1c8] sm:$0xff]
        %v2376 = vld [vmem:[#allocation2 + $0x1d0] sm:$0xff]
        %v2377 = vld [vmem:[#allocation2 + $0x1d8] sm:$0xff]
        %2381 = vrot.lane.b32.xlu0 %v2375, 109
        %v2382 = vpop.permute.xlu0 %2381
        %2383 = vrot.lane.b32.xlu0 %v2376, 109
        %v2384 = vpop.permute.xlu0 %2383
        %2385 = vrot.lane.b32.xlu0 %v2377, 109
        %v2386 = vpop.permute.xlu0 %2385
        %vm2387 = vcmask 891904
        %v2388 = vsel %vm2387, %v2382, %v2384
        %v2389 = vsel %vm2387, %v2384, %v2386
        %v2392 = vadd.f32 %v2373, %v2388
        %v2393 = vadd.f32 %v2374, %v2389
        %v2394 = vld [vmem:[%s2] sm:$0xff]
        %2396 = vset.pattern.permute.xlu0 0
        %2397 = vperm.xlu0 %2396, %v2394
        %v2398 = vpop.permute.xlu0 %2397
        %v2400 = vadd.f32 %v2392, %v2398
        %v2401 = vadd.f32 %v2393, %v2398
        %v2402 = vmax.f32 %v2400, 0.0
        %v2403 = vmax.f32 %v2401, 0.0
        %2406 = vrot.lane.b32.xlu0 %v2402, 127
        %v2407 = vpop.permute.xlu0 %2406
        %2408 = vrot.lane.b32.xlu0 %v2403, 127
        %v2409 = vpop.permute.xlu0 %2408
        %v2410 = vsel %vm2045, %v2407, %v2409
        %v2413 = vmax.f32 %v2402, %v2410
        %v2414 = vmax.f32 %v2403, %v2409
        %2415 = vrot.lane.b32.xlu0 %v2402, 126
        %v2416 = vpop.permute.xlu0 %2415
        %2417 = vrot.lane.b32.xlu0 %v2403, 126
        %v2418 = vpop.permute.xlu0 %2417
        %v2419 = vsel %vm2064, %v2416, %v2418
        %v2422 = vmax.f32 %v2413, %v2419
        %v2423 = vmax.f32 %v2414, %v2418
        %v2424 = vld [vmem:[%s1] sm:$0xff]
        %v2425 = vld [vmem:[%s1 + $0x8] sm:$0xff]
        %v2426 = vld [vmem:[%s1 + $0x10] sm:$0xff]
        %v2427 = vld [vmem:[%s1 + $0x18] sm:$0xff]
        %v2428 = vld [vmem:[%s1 + $0x20] sm:$0xff]
        %v2429 = vld [vmem:[%s1 + $0x28] sm:$0xff]
        %v2430 = vld [vmem:[%s1 + $0x30] sm:$0xff]
        %v2431 = vld [vmem:[%s1 + $0x38] sm:$0xff]
        %v2432 = vld [vmem:[%s1 + $0x40] sm:$0xff]
        %v2433 = vld [vmem:[%s1 + $0x48] sm:$0xff]
        %v2434 = vld [vmem:[%s1 + $0x50] sm:$0xff]
        %v2435 = vld [vmem:[%s1 + $0x58] sm:$0xff]
        %v2436 = vld [vmem:[%s1 + $0x60] sm:$0xff]
        %v2437 = vld [vmem:[%s1 + $0x68] sm:$0xff]
        %v2438 = vld [vmem:[%s1 + $0x70] sm:$0xff]
        %v2439 = vld [vmem:[%s1 + $0x78] sm:$0xff]
        %v2440 = vld [vmem:[%s1 + $0x80] sm:$0xff]
        %v2441 = vld [vmem:[%s1 + $0x88] sm:$0xff]
        %v2442 = vld [vmem:[%s1 + $0x90] sm:$0xff]
        %v2443 = vld [vmem:[%s1 + $0x98] sm:$0xff]
        %v2444 = vld [vmem:[%s1 + $0xa0] sm:$0xff]
        %v2445 = vld [vmem:[%s1 + $0xa8] sm:$0xff]
        %v2446 = vld [vmem:[%s1 + $0xb0] sm:$0xff]
        %v2447 = vld [vmem:[%s1 + $0xb8] sm:$0xff]
        %v2448 = vld [vmem:[%s1 + $0xc0] sm:$0xff]
        %v2449 = vld [vmem:[%s1 + $0xc8] sm:$0xff]
        %v2450 = vld [vmem:[%s1 + $0xd0] sm:$0xff]
        %v2451 = vld [vmem:[%s1 + $0xd8] sm:$0xff]
        %v2452 = vld [vmem:[%s1 + $0xe0] sm:$0xff]
        %v2453 = vld [vmem:[%s1 + $0xe8] sm:$0xff]
        %v2454 = vld [vmem:[%s1 + $0xf0] sm:$0xff]
        %v2455 = vld [vmem:[%s1 + $0xf8] sm:$0xff]
        %v2456 = vld [vmem:[%s1 + $0x100] sm:$0xff]
        %v2457 = vld [vmem:[%s1 + $0x108] sm:$0xff]
        %v2458 = vld [vmem:[%s1 + $0x110] sm:$0xff]
        %v2459 = vld [vmem:[%s1 + $0x118] sm:$0xff]
        %v2460 = vld [vmem:[%s1 + $0x120] sm:$0xff]
        %v2461 = vld [vmem:[%s1 + $0x128] sm:$0xff]
        %v2462 = vld [vmem:[%s1 + $0x130] sm:$0xff]
        %v2463 = vld [vmem:[%s1 + $0x138] sm:$0xff]
        %v2464 = vld [vmem:[%s1 + $0x140] sm:$0xff]
        %v2465 = vld [vmem:[%s1 + $0x148] sm:$0xff]
        %v2466 = vld [vmem:[%s1 + $0x150] sm:$0xff]
        %v2467 = vld [vmem:[%s1 + $0x158] sm:$0xff]
        %v2468 = vld [vmem:[%s1 + $0x160] sm:$0xff]
        %v2469 = vld [vmem:[%s1 + $0x168] sm:$0xff]
        %v2470 = vld [vmem:[%s1 + $0x170] sm:$0xff]
        %v2471 = vld [vmem:[%s1 + $0x178] sm:$0xff]
        %v2472 = vld [vmem:[%s1 + $0x180] sm:$0xff]
        %v2473 = vld [vmem:[%s1 + $0x188] sm:$0xff]
        %v2474 = vld [vmem:[%s1 + $0x190] sm:$0xff]
        %v2475 = vld [vmem:[%s1 + $0x198] sm:$0xff]
        %v2476 = vld [vmem:[%s1 + $0x1a0] sm:$0xff]
        %v2477 = vld [vmem:[%s1 + $0x1a8] sm:$0xff]
        %v2478 = vld [vmem:[%s1 + $0x1b0] sm:$0xff]
        %v2479 = vld [vmem:[%s1 + $0x1b8] sm:$0xff]
        %v2480 = vld [vmem:[%s1 + $0x1c0] sm:$0xff]
        %v2481 = vld [vmem:[%s1 + $0x1c8] sm:$0xff]
        %v2482 = vld [vmem:[%s1 + $0x1d0] sm:$0xff]
        %v2483 = vld [vmem:[%s1 + $0x1d8] sm:$0xff]
        %s2484 = scalar_lea.vmem %s226, 792
        %v2485 = vld [vmem:[%s2484] sm:$0xff]
        %v2486 = vld [vmem:[%s2484 + $0x8] sm:$0xff]
        %v2487 = vld [vmem:[%s2484 + $0x10] sm:$0xff]
        %v2488 = vld [vmem:[%s2484 + $0x18] sm:$0xff]
        %v2489 = vld [vmem:[%s2484 + $0x20] sm:$0xff]
        %v2490 = vld [vmem:[%s2484 + $0x28] sm:$0xff]
        %v2491 = vld [vmem:[%s2484 + $0x30] sm:$0xff]
        %v2492 = vld [vmem:[%s2484 + $0x38] sm:$0xff]
        %v2493 = vld [vmem:[%s2484 + $0x40] sm:$0xff]
        %v2494 = vld [vmem:[%s2484 + $0x48] sm:$0xff]
        %v2495 = vld [vmem:[%s2484 + $0x50] sm:$0xff]
        %v2496 = vld [vmem:[%s2484 + $0x58] sm:$0xff]
        %v2497 = vld [vmem:[%s2484 + $0x60] sm:$0xff]
        %v2498 = vld [vmem:[%s2484 + $0x68] sm:$0xff]
        %v2499 = vld [vmem:[%s2484 + $0x70] sm:$0xff]
        %v2500 = vld [vmem:[%s2484 + $0x78] sm:$0xff]
        %v2501 = vld [vmem:[%s2484 + $0x80] sm:$0xff]
        %v2502 = vld [vmem:[%s2484 + $0x88] sm:$0xff]
        %v2503 = vld [vmem:[%s2484 + $0x90] sm:$0xff]
        %v2504 = vld [vmem:[%s2484 + $0x98] sm:$0xff]
        %v2505 = vld [vmem:[%s2484 + $0xa0] sm:$0xff]
        %v2506 = vld [vmem:[%s2484 + $0xa8] sm:$0xff]
        %v2507 = vld [vmem:[%s2484 + $0xb0] sm:$0xff]
        %v2508 = vld [vmem:[%s2484 + $0xb8] sm:$0xff]
        %v2509 = vld [vmem:[%s2484 + $0xc0] sm:$0xff]
        %v2510 = vld [vmem:[%s2484 + $0xc8] sm:$0xff]
        %v2511 = vld [vmem:[%s2484 + $0xd0] sm:$0xff]
        %v2512 = vld [vmem:[%s2484 + $0xd8] sm:$0xff]
        %v2513 = vld [vmem:[%s2484 + $0xe0] sm:$0xff]
        %v2514 = vld [vmem:[%s2484 + $0xe8] sm:$0xff]
        %v2515 = vld [vmem:[%s2484 + $0xf0] sm:$0xff]
        %v2516 = vld [vmem:[%s2484 + $0xf8] sm:$0xff]
        %v2517 = vld [vmem:[%s2484 + $0x100] sm:$0xff]
        %v2518 = vld [vmem:[%s2484 + $0x108] sm:$0xff]
        %v2519 = vld [vmem:[%s2484 + $0x110] sm:$0xff]
        %v2520 = vld [vmem:[%s2484 + $0x118] sm:$0xff]
        %v2521 = vld [vmem:[%s2484 + $0x120] sm:$0xff]
        %v2522 = vld [vmem:[%s2484 + $0x128] sm:$0xff]
        %v2523 = vld [vmem:[%s2484 + $0x130] sm:$0xff]
        %v2524 = vld [vmem:[%s2484 + $0x138] sm:$0xff]
        %v2525 = vld [vmem:[%s2484 + $0x140] sm:$0xff]
        %v2526 = vld [vmem:[%s2484 + $0x148] sm:$0xff]
        %v2527 = vld [vmem:[%s2484 + $0x150] sm:$0xff]
        %v2528 = vld [vmem:[%s2484 + $0x158] sm:$0xff]
        %v2529 = vld [vmem:[%s2484 + $0x160] sm:$0xff]
        %v2530 = vld [vmem:[%s2484 + $0x168] sm:$0xff]
        %v2531 = vld [vmem:[%s2484 + $0x170] sm:$0xff]
        %v2532 = vld [vmem:[%s2484 + $0x178] sm:$0xff]
        %v2533 = vld [vmem:[%s2484 + $0x180] sm:$0xff]
        %v2534 = vld [vmem:[%s2484 + $0x188] sm:$0xff]
        %v2535 = vld [vmem:[%s2484 + $0x190] sm:$0xff]
        %v2536 = vld [vmem:[%s2484 + $0x198] sm:$0xff]
        %v2537 = vld [vmem:[%s2484 + $0x1a0] sm:$0xff]
        %v2538 = vld [vmem:[%s2484 + $0x1a8] sm:$0xff]
        %v2539 = vld [vmem:[%s2484 + $0x1b0] sm:$0xff]
        %v2540 = vld [vmem:[%s2484 + $0x1b8] sm:$0xff]
        %v2541 = vld [vmem:[%s2484 + $0x1c0] sm:$0xff]
        %v2542 = vld [vmem:[%s2484 + $0x1c8] sm:$0xff]
        %v2543 = vld [vmem:[%s2484 + $0x1d0] sm:$0xff]
        %v2544 = vld [vmem:[%s2484 + $0x1d8] sm:$0xff]
        %v2545 = vld [vmem:[%s2484 + $0x1e0] sm:$0xff]
        %v2546 = vld [vmem:[%s2484 + $0x1e8] sm:$0xff]
        %v2547 = vld [vmem:[%s2484 + $0x1f0] sm:$0xff]
        %v2548 = vld [vmem:[%s2484 + $0x1f8] sm:$0xff]
        %v2549 = vld [vmem:[%s2484 + $0x200] sm:$0xff]
        %v2550 = vld [vmem:[%s2484 + $0x208] sm:$0xff]
        %v2551 = vld [vmem:[%s2484 + $0x210] sm:$0xff]
        %v2552 = vld [vmem:[%s2484 + $0x218] sm:$0xff]
        %v2553 = vld [vmem:[%s2484 + $0x220] sm:$0xff]
        %v2554 = vld [vmem:[%s2484 + $0x228] sm:$0xff]
        %v2555 = vld [vmem:[%s2484 + $0x230] sm:$0xff]
        %v2556 = vld [vmem:[%s2484 + $0x238] sm:$0xff]
        %v2557 = vld [vmem:[%s2484 + $0x240] sm:$0xff]
        %v2558 = vld [vmem:[%s2484 + $0x248] sm:$0xff]
        %v2559 = vld [vmem:[%s2484 + $0x250] sm:$0xff]
        %v2560 = vld [vmem:[%s2484 + $0x258] sm:$0xff]
        %v2561 = vld [vmem:[%s2484 + $0x260] sm:$0xff]
        %v2562 = vld [vmem:[%s2484 + $0x268] sm:$0xff]
        %v2563 = vld [vmem:[%s2484 + $0x270] sm:$0xff]
        %v2564 = vld [vmem:[%s2484 + $0x278] sm:$0xff]
        %v2565 = vld [vmem:[%s2484 + $0x280] sm:$0xff]
        %v2566 = vld [vmem:[%s2484 + $0x288] sm:$0xff]
        %v2567 = vld [vmem:[%s2484 + $0x290] sm:$0xff]
        %v2568 = vld [vmem:[%s2484 + $0x298] sm:$0xff]
        %v2569 = vld [vmem:[%s2484 + $0x2a0] sm:$0xff]
        %v2570 = vld [vmem:[%s2484 + $0x2a8] sm:$0xff]
        %v2571 = vld [vmem:[%s2484 + $0x2b0] sm:$0xff]
        %v2572 = vld [vmem:[%s2484 + $0x2b8] sm:$0xff]
        %v2573 = vld [vmem:[%s2484 + $0x2c0] sm:$0xff]
        %v2574 = vld [vmem:[%s2484 + $0x2c8] sm:$0xff]
        %v2575 = vld [vmem:[%s2484 + $0x2d0] sm:$0xff]
        %v2576 = vld [vmem:[%s2484 + $0x2d8] sm:$0xff]
        %v2577 = vld [vmem:[%s2484 + $0x2e0] sm:$0xff]
        %v2578 = vld [vmem:[%s2484 + $0x2e8] sm:$0xff]
        %v2579 = vld [vmem:[%s2484 + $0x2f0] sm:$0xff]
        %v2580 = vld [vmem:[%s2484 + $0x2f8] sm:$0xff]
        %v2581 = vld [vmem:[%s2484 + $0x300] sm:$0x33]
        %v2582 = vld [vmem:[%s2484 + $0x308] sm:$0x33]
        %v2583 = vld [vmem:[%s2484 + $0x310] sm:$0x33]
        %v2644 = vunpack.c.l.b16 %v2424
        %v2645 = vunpack.c.h.b16 %v2424
        %v2646 = vunpack.c.l.b16 %v2425
        %v2647 = vunpack.c.h.b16 %v2425
        %v2648 = vunpack.c.l.b16 %v2426
        %v2649 = vunpack.c.h.b16 %v2426
        %v2650 = vunpack.c.l.b16 %v2427
        %v2651 = vunpack.c.h.b16 %v2427
        %v2652 = vunpack.c.l.b16 %v2428
        %v2653 = vunpack.c.h.b16 %v2428
        %v2654 = vunpack.c.l.b16 %v2429
        %v2655 = vunpack.c.h.b16 %v2429
        %v2656 = vunpack.c.l.b16 %v2430
        %v2657 = vunpack.c.h.b16 %v2430
        %v2658 = vunpack.c.l.b16 %v2431
        %v2659 = vunpack.c.h.b16 %v2431
        %v2660 = vunpack.c.l.b16 %v2432
        %v2661 = vunpack.c.h.b16 %v2432
        %v2662 = vunpack.c.l.b16 %v2433
        %v2663 = vunpack.c.h.b16 %v2433
        %v2664 = vunpack.c.l.b16 %v2434
        %v2665 = vunpack.c.h.b16 %v2434
        %v2666 = vunpack.c.l.b16 %v2435
        %v2667 = vunpack.c.h.b16 %v2435
        %v2668 = vunpack.c.l.b16 %v2436
        %v2669 = vunpack.c.h.b16 %v2436
        %v2670 = vunpack.c.l.b16 %v2437
        %v2671 = vunpack.c.h.b16 %v2437
        %v2672 = vunpack.c.l.b16 %v2438
        %v2673 = vunpack.c.h.b16 %v2438
        %v2674 = vunpack.c.l.b16 %v2439
        %v2675 = vunpack.c.h.b16 %v2439
        %v2676 = vunpack.c.l.b16 %v2440
        %v2677 = vunpack.c.h.b16 %v2440
        %v2678 = vunpack.c.l.b16 %v2441
        %v2679 = vunpack.c.h.b16 %v2441
        %v2680 = vunpack.c.l.b16 %v2442
        %v2681 = vunpack.c.h.b16 %v2442
        %v2682 = vunpack.c.l.b16 %v2443
        %v2683 = vunpack.c.h.b16 %v2443
        %v2684 = vunpack.c.l.b16 %v2444
        %v2685 = vunpack.c.h.b16 %v2444
        %v2686 = vunpack.c.l.b16 %v2445
        %v2687 = vunpack.c.h.b16 %v2445
        %v2688 = vunpack.c.l.b16 %v2446
        %v2689 = vunpack.c.h.b16 %v2446
        %v2690 = vunpack.c.l.b16 %v2447
        %v2691 = vunpack.c.h.b16 %v2447
        %v2692 = vunpack.c.l.b16 %v2448
        %v2693 = vunpack.c.h.b16 %v2448
        %v2694 = vunpack.c.l.b16 %v2449
        %v2695 = vunpack.c.h.b16 %v2449
        %v2696 = vunpack.c.l.b16 %v2450
        %v2697 = vunpack.c.h.b16 %v2450
        %v2698 = vunpack.c.l.b16 %v2451
        %v2699 = vunpack.c.h.b16 %v2451
        %v2700 = vunpack.c.l.b16 %v2452
        %v2701 = vunpack.c.h.b16 %v2452
        %v2702 = vunpack.c.l.b16 %v2453
        %v2703 = vunpack.c.h.b16 %v2453
        %v2704 = vunpack.c.l.b16 %v2454
        %v2705 = vunpack.c.h.b16 %v2454
        %v2706 = vunpack.c.l.b16 %v2455
        %v2707 = vunpack.c.h.b16 %v2455
        %v2708 = vunpack.c.l.b16 %v2456
        %v2709 = vunpack.c.h.b16 %v2456
        %v2710 = vunpack.c.l.b16 %v2457
        %v2711 = vunpack.c.h.b16 %v2457
        %v2712 = vunpack.c.l.b16 %v2458
        %v2713 = vunpack.c.h.b16 %v2458
        %v2714 = vunpack.c.l.b16 %v2459
        %v2715 = vunpack.c.h.b16 %v2459
        %v2716 = vunpack.c.l.b16 %v2460
        %v2717 = vunpack.c.h.b16 %v2460
        %v2718 = vunpack.c.l.b16 %v2461
        %v2719 = vunpack.c.h.b16 %v2461
        %v2720 = vunpack.c.l.b16 %v2462
        %v2721 = vunpack.c.h.b16 %v2462
        %v2722 = vunpack.c.l.b16 %v2463
        %v2723 = vunpack.c.h.b16 %v2463
        %v2724 = vunpack.c.l.b16 %v2464
        %v2725 = vunpack.c.h.b16 %v2464
        %v2726 = vunpack.c.l.b16 %v2465
        %v2727 = vunpack.c.h.b16 %v2465
        %v2728 = vunpack.c.l.b16 %v2466
        %v2729 = vunpack.c.h.b16 %v2466
        %v2730 = vunpack.c.l.b16 %v2467
        %v2731 = vunpack.c.h.b16 %v2467
        %v2732 = vunpack.c.l.b16 %v2468
        %v2733 = vunpack.c.h.b16 %v2468
        %v2734 = vunpack.c.l.b16 %v2469
        %v2735 = vunpack.c.h.b16 %v2469
        %v2736 = vunpack.c.l.b16 %v2470
        %v2737 = vunpack.c.h.b16 %v2470
        %v2738 = vunpack.c.l.b16 %v2471
        %v2739 = vunpack.c.h.b16 %v2471
        %v2740 = vunpack.c.l.b16 %v2472
        %v2741 = vunpack.c.h.b16 %v2472
        %v2742 = vunpack.c.l.b16 %v2473
        %v2743 = vunpack.c.h.b16 %v2473
        %v2744 = vunpack.c.l.b16 %v2474
        %v2745 = vunpack.c.h.b16 %v2474
        %v2746 = vunpack.c.l.b16 %v2475
        %v2747 = vunpack.c.h.b16 %v2475
        %v2748 = vunpack.c.l.b16 %v2476
        %v2749 = vunpack.c.h.b16 %v2476
        %v2750 = vunpack.c.l.b16 %v2477
        %v2751 = vunpack.c.h.b16 %v2477
        %v2752 = vunpack.c.l.b16 %v2478
        %v2753 = vunpack.c.h.b16 %v2478
        %v2754 = vunpack.c.l.b16 %v2479
        %v2755 = vunpack.c.h.b16 %v2479
        %v2756 = vunpack.c.l.b16 %v2480
        %v2757 = vunpack.c.h.b16 %v2480
        %v2758 = vunpack.c.l.b16 %v2481
        %v2759 = vunpack.c.h.b16 %v2481
        %v2760 = vunpack.c.l.b16 %v2482
        %v2761 = vunpack.c.h.b16 %v2482
        %v2762 = vunpack.c.l.b16 %v2483
        %v2763 = vunpack.c.h.b16 %v2483
        %v2764 = vpack.c.b16 %v2650, %v2644
        %v2765 = vpack.c.b16 %v2651, %v2645
        %v2766 = vpack.c.b16 %v2652, %v2646
        %v2767 = vpack.c.b16 %v2653, %v2647
        %v2768 = vpack.c.b16 %v2654, %v2648
        %v2769 = vpack.c.b16 %v2655, %v2649
        %v2770 = vpack.c.b16 %v2662, %v2656
        %v2771 = vpack.c.b16 %v2663, %v2657
        %v2772 = vpack.c.b16 %v2664, %v2658
        %v2773 = vpack.c.b16 %v2665, %v2659
        %v2774 = vpack.c.b16 %v2666, %v2660
        %v2775 = vpack.c.b16 %v2667, %v2661
        %v2776 = vpack.c.b16 %v2674, %v2668
        %v2777 = vpack.c.b16 %v2675, %v2669
        %v2778 = vpack.c.b16 %v2676, %v2670
        %v2779 = vpack.c.b16 %v2677, %v2671
        %v2780 = vpack.c.b16 %v2678, %v2672
        %v2781 = vpack.c.b16 %v2679, %v2673
        %v2782 = vpack.c.b16 %v2686, %v2680
        %v2783 = vpack.c.b16 %v2687, %v2681
        %v2784 = vpack.c.b16 %v2688, %v2682
        %v2785 = vpack.c.b16 %v2689, %v2683
        %v2786 = vpack.c.b16 %v2690, %v2684
        %v2787 = vpack.c.b16 %v2691, %v2685
        %v2788 = vpack.c.b16 %v2698, %v2692
        %v2789 = vpack.c.b16 %v2699, %v2693
        %v2790 = vpack.c.b16 %v2700, %v2694
        %v2791 = vpack.c.b16 %v2701, %v2695
        %v2792 = vpack.c.b16 %v2702, %v2696
        %v2793 = vpack.c.b16 %v2703, %v2697
        %v2794 = vpack.c.b16 %v2710, %v2704
        %v2795 = vpack.c.b16 %v2711, %v2705
        %v2796 = vpack.c.b16 %v2712, %v2706
        %v2797 = vpack.c.b16 %v2713, %v2707
        %v2798 = vpack.c.b16 %v2714, %v2708
        %v2799 = vpack.c.b16 %v2715, %v2709
        %v2800 = vpack.c.b16 %v2722, %v2716
        %v2801 = vpack.c.b16 %v2723, %v2717
        %v2802 = vpack.c.b16 %v2724, %v2718
        %v2803 = vpack.c.b16 %v2725, %v2719
        %v2804 = vpack.c.b16 %v2726, %v2720
        %v2805 = vpack.c.b16 %v2727, %v2721
        %v2806 = vpack.c.b16 %v2734, %v2728
        %v2807 = vpack.c.b16 %v2735, %v2729
        %v2808 = vpack.c.b16 %v2736, %v2730
        %v2809 = vpack.c.b16 %v2737, %v2731
        %v2810 = vpack.c.b16 %v2738, %v2732
        %v2811 = vpack.c.b16 %v2739, %v2733
        %v2812 = vpack.c.b16 %v2746, %v2740
        %v2813 = vpack.c.b16 %v2747, %v2741
        %v2814 = vpack.c.b16 %v2748, %v2742
        %v2815 = vpack.c.b16 %v2749, %v2743
        %v2816 = vpack.c.b16 %v2750, %v2744
        %v2817 = vpack.c.b16 %v2751, %v2745
        %v2818 = vpack.c.b16 %v2758, %v2752
        %v2819 = vpack.c.b16 %v2759, %v2753
        %v2820 = vpack.c.b16 %v2760, %v2754
        %v2821 = vpack.c.b16 %v2761, %v2755
        %v2822 = vpack.c.b16 %v2762, %v2756
        %v2823 = vpack.c.b16 %v2763, %v2757
        %v2983 = vunpack.c.l.b16 %v2485
        %v2984 = vunpack.c.h.b16 %v2485
        %v2985 = vunpack.c.l.b16 %v2486
        %v2986 = vunpack.c.h.b16 %v2486
        %v2987 = vunpack.c.l.b16 %v2487
        %v2988 = vunpack.c.h.b16 %v2487
        %v2989 = vunpack.c.l.b16 %v2488
        %v2990 = vunpack.c.h.b16 %v2488
        %v2991 = vunpack.c.l.b16 %v2489
        %v2992 = vunpack.c.h.b16 %v2489
        %v2993 = vunpack.c.l.b16 %v2490
        %v2994 = vunpack.c.h.b16 %v2490
        %v2995 = vunpack.c.l.b16 %v2491
        %v2996 = vunpack.c.h.b16 %v2491
        %v2997 = vunpack.c.l.b16 %v2492
        %v2998 = vunpack.c.h.b16 %v2492
        %v2999 = vunpack.c.l.b16 %v2493
        %v3000 = vunpack.c.h.b16 %v2493
        %v3001 = vunpack.c.l.b16 %v2494
        %v3002 = vunpack.c.h.b16 %v2494
        %v3003 = vunpack.c.l.b16 %v2495
        %v3004 = vunpack.c.h.b16 %v2495
        %v3005 = vunpack.c.l.b16 %v2496
        %v3006 = vunpack.c.h.b16 %v2496
        %v3007 = vunpack.c.l.b16 %v2497
        %v3008 = vunpack.c.h.b16 %v2497
        %v3009 = vunpack.c.l.b16 %v2498
        %v3010 = vunpack.c.h.b16 %v2498
        %v3011 = vunpack.c.l.b16 %v2499
        %v3012 = vunpack.c.h.b16 %v2499
        %v3013 = vunpack.c.l.b16 %v2500
        %v3014 = vunpack.c.h.b16 %v2500
        %v3015 = vunpack.c.l.b16 %v2501
        %v3016 = vunpack.c.h.b16 %v2501
        %v3017 = vunpack.c.l.b16 %v2502
        %v3018 = vunpack.c.h.b16 %v2502
        %v3019 = vunpack.c.l.b16 %v2503
        %v3020 = vunpack.c.h.b16 %v2503
        %v3021 = vunpack.c.l.b16 %v2504
        %v3022 = vunpack.c.h.b16 %v2504
        %v3023 = vunpack.c.l.b16 %v2505
        %v3024 = vunpack.c.h.b16 %v2505
        %v3025 = vunpack.c.l.b16 %v2506
        %v3026 = vunpack.c.h.b16 %v2506
        %v3027 = vunpack.c.l.b16 %v2507
        %v3028 = vunpack.c.h.b16 %v2507
        %v3029 = vunpack.c.l.b16 %v2508
        %v3030 = vunpack.c.h.b16 %v2508
        %v3031 = vunpack.c.l.b16 %v2509
        %v3032 = vunpack.c.h.b16 %v2509
        %v3033 = vunpack.c.l.b16 %v2510
        %v3034 = vunpack.c.h.b16 %v2510
        %v3035 = vunpack.c.l.b16 %v2511
        %v3036 = vunpack.c.h.b16 %v2511
        %v3037 = vunpack.c.l.b16 %v2512
        %v3038 = vunpack.c.h.b16 %v2512
        %v3039 = vunpack.c.l.b16 %v2513
        %v3040 = vunpack.c.h.b16 %v2513
        %v3041 = vunpack.c.l.b16 %v2514
        %v3042 = vunpack.c.h.b16 %v2514
        %v3043 = vunpack.c.l.b16 %v2515
        %v3044 = vunpack.c.h.b16 %v2515
        %v3045 = vunpack.c.l.b16 %v2516
        %v3046 = vunpack.c.h.b16 %v2516
        %v3047 = vunpack.c.l.b16 %v2517
        %v3048 = vunpack.c.h.b16 %v2517
        %v3049 = vunpack.c.l.b16 %v2518
        %v3050 = vunpack.c.h.b16 %v2518
        %v3051 = vunpack.c.l.b16 %v2519
        %v3052 = vunpack.c.h.b16 %v2519
        %v3053 = vunpack.c.l.b16 %v2520
        %v3054 = vunpack.c.h.b16 %v2520
        %v3055 = vunpack.c.l.b16 %v2521
        %v3056 = vunpack.c.h.b16 %v2521
        %v3057 = vunpack.c.l.b16 %v2522
        %v3058 = vunpack.c.h.b16 %v2522
        %v3059 = vunpack.c.l.b16 %v2523
        %v3060 = vunpack.c.h.b16 %v2523
        %v3061 = vunpack.c.l.b16 %v2524
        %v3062 = vunpack.c.h.b16 %v2524
        %v3063 = vunpack.c.l.b16 %v2525
        %v3064 = vunpack.c.h.b16 %v2525
        %v3065 = vunpack.c.l.b16 %v2526
        %v3066 = vunpack.c.h.b16 %v2526
        %v3067 = vunpack.c.l.b16 %v2527
        %v3068 = vunpack.c.h.b16 %v2527
        %v3069 = vunpack.c.l.b16 %v2528
        %v3070 = vunpack.c.h.b16 %v2528
        %v3071 = vunpack.c.l.b16 %v2529
        %v3072 = vunpack.c.h.b16 %v2529
        %v3073 = vunpack.c.l.b16 %v2530
        %v3074 = vunpack.c.h.b16 %v2530
        %v3075 = vunpack.c.l.b16 %v2531
        %v3076 = vunpack.c.h.b16 %v2531
        %v3077 = vunpack.c.l.b16 %v2532
        %v3078 = vunpack.c.h.b16 %v2532
        %v3079 = vunpack.c.l.b16 %v2533
        %v3080 = vunpack.c.h.b16 %v2533
        %v3081 = vunpack.c.l.b16 %v2534
        %v3082 = vunpack.c.h.b16 %v2534
        %v3083 = vunpack.c.l.b16 %v2535
        %v3084 = vunpack.c.h.b16 %v2535
        %v3085 = vunpack.c.l.b16 %v2536
        %v3086 = vunpack.c.h.b16 %v2536
        %v3087 = vunpack.c.l.b16 %v2537
        %v3088 = vunpack.c.h.b16 %v2537
        %v3089 = vunpack.c.l.b16 %v2538
        %v3090 = vunpack.c.h.b16 %v2538
        %v3091 = vunpack.c.l.b16 %v2539
        %v3092 = vunpack.c.h.b16 %v2539
        %v3093 = vunpack.c.l.b16 %v2540
        %v3094 = vunpack.c.h.b16 %v2540
        %v3095 = vunpack.c.l.b16 %v2541
        %v3096 = vunpack.c.h.b16 %v2541
        %v3097 = vunpack.c.l.b16 %v2542
        %v3098 = vunpack.c.h.b16 %v2542
        %v3099 = vunpack.c.l.b16 %v2543
        %v3100 = vunpack.c.h.b16 %v2543
        %v3101 = vunpack.c.l.b16 %v2544
        %v3102 = vunpack.c.h.b16 %v2544
        %v3103 = vunpack.c.l.b16 %v2545
        %v3104 = vunpack.c.h.b16 %v2545
        %v3105 = vunpack.c.l.b16 %v2546
        %v3106 = vunpack.c.h.b16 %v2546
        %v3107 = vunpack.c.l.b16 %v2547
        %v3108 = vunpack.c.h.b16 %v2547
        %v3109 = vunpack.c.l.b16 %v2548
        %v3110 = vunpack.c.h.b16 %v2548
        %v3111 = vunpack.c.l.b16 %v2549
        %v3112 = vunpack.c.h.b16 %v2549
        %v3113 = vunpack.c.l.b16 %v2550
        %v3114 = vunpack.c.h.b16 %v2550
        %v3115 = vunpack.c.l.b16 %v2551
        %v3116 = vunpack.c.h.b16 %v2551
        %v3117 = vunpack.c.l.b16 %v2552
        %v3118 = vunpack.c.h.b16 %v2552
        %v3119 = vunpack.c.l.b16 %v2553
        %v3120 = vunpack.c.h.b16 %v2553
        %v3121 = vunpack.c.l.b16 %v2554
        %v3122 = vunpack.c.h.b16 %v2554
        %v3123 = vunpack.c.l.b16 %v2555
        %v3124 = vunpack.c.h.b16 %v2555
        %v3125 = vunpack.c.l.b16 %v2556
        %v3126 = vunpack.c.h.b16 %v2556
        %v3127 = vunpack.c.l.b16 %v2557
        %v3128 = vunpack.c.h.b16 %v2557
        %v3129 = vunpack.c.l.b16 %v2558
        %v3130 = vunpack.c.h.b16 %v2558
        %v3131 = vunpack.c.l.b16 %v2559
        %v3132 = vunpack.c.h.b16 %v2559
        %v3133 = vunpack.c.l.b16 %v2560
        %v3134 = vunpack.c.h.b16 %v2560
        %v3135 = vunpack.c.l.b16 %v2561
        %v3136 = vunpack.c.h.b16 %v2561
        %v3137 = vunpack.c.l.b16 %v2562
        %v3138 = vunpack.c.h.b16 %v2562
        %v3139 = vunpack.c.l.b16 %v2563
        %v3140 = vunpack.c.h.b16 %v2563
        %v3141 = vunpack.c.l.b16 %v2564
        %v3142 = vunpack.c.h.b16 %v2564
        %v3143 = vunpack.c.l.b16 %v2565
        %v3144 = vunpack.c.h.b16 %v2565
        %v3145 = vunpack.c.l.b16 %v2566
        %v3146 = vunpack.c.h.b16 %v2566
        %v3147 = vunpack.c.l.b16 %v2567
        %v3148 = vunpack.c.h.b16 %v2567
        %v3149 = vunpack.c.l.b16 %v2568
        %v3150 = vunpack.c.h.b16 %v2568
        %v3151 = vunpack.c.l.b16 %v2569
        %v3152 = vunpack.c.h.b16 %v2569
        %v3153 = vunpack.c.l.b16 %v2570
        %v3154 = vunpack.c.h.b16 %v2570
        %v3155 = vunpack.c.l.b16 %v2571
        %v3156 = vunpack.c.h.b16 %v2571
        %v3157 = vunpack.c.l.b16 %v2572
        %v3158 = vunpack.c.h.b16 %v2572
        %v3159 = vunpack.c.l.b16 %v2573
        %v3160 = vunpack.c.h.b16 %v2573
        %v3161 = vunpack.c.l.b16 %v2574
        %v3162 = vunpack.c.h.b16 %v2574
        %v3163 = vunpack.c.l.b16 %v2575
        %v3164 = vunpack.c.h.b16 %v2575
        %v3165 = vunpack.c.l.b16 %v2576
        %v3166 = vunpack.c.h.b16 %v2576
        %v3167 = vunpack.c.l.b16 %v2577
        %v3168 = vunpack.c.h.b16 %v2577
        %v3169 = vunpack.c.l.b16 %v2578
        %v3170 = vunpack.c.h.b16 %v2578
        %v3171 = vunpack.c.l.b16 %v2579
        %v3172 = vunpack.c.h.b16 %v2579
        %v3173 = vunpack.c.l.b16 %v2580
        %v3174 = vunpack.c.h.b16 %v2580
        %v3175 = vunpack.c.l.b16 %v2581
        %v3176 = vunpack.c.h.b16 %v2581
        %v3177 = vunpack.c.l.b16 %v2582
        %v3178 = vunpack.c.h.b16 %v2582
        %v3179 = vunpack.c.l.b16 %v2583
        %v3180 = vunpack.c.h.b16 %v2583
        %v3181 = vpack.c.b16 %v2989, %v2983
        %v3182 = vpack.c.b16 %v2990, %v2984
        %v3183 = vpack.c.b16 %v2991, %v2985
        %v3184 = vpack.c.b16 %v2992, %v2986
        %v3185 = vpack.c.b16 %v2993, %v2987
        %v3186 = vpack.c.b16 %v2994, %v2988
        %v3187 = vpack.c.b16 %v3001, %v2995
        %v3188 = vpack.c.b16 %v3002, %v2996
        %v3189 = vpack.c.b16 %v3003, %v2997
        %v3190 = vpack.c.b16 %v3004, %v2998
        %v3191 = vpack.c.b16 %v3005, %v2999
        %v3192 = vpack.c.b16 %v3006, %v3000
        %v3193 = vpack.c.b16 %v3013, %v3007
        %v3194 = vpack.c.b16 %v3014, %v3008
        %v3195 = vpack.c.b16 %v3015, %v3009
        %v3196 = vpack.c.b16 %v3016, %v3010
        %v3197 = vpack.c.b16 %v3017, %v3011
        %v3198 = vpack.c.b16 %v3018, %v3012
        %v3199 = vpack.c.b16 %v3025, %v3019
        %v3200 = vpack.c.b16 %v3026, %v3020
        %v3201 = vpack.c.b16 %v3027, %v3021
        %v3202 = vpack.c.b16 %v3028, %v3022
        %v3203 = vpack.c.b16 %v3029, %v3023
        %v3204 = vpack.c.b16 %v3030, %v3024
        %v3205 = vpack.c.b16 %v3037, %v3031
        %v3206 = vpack.c.b16 %v3038, %v3032
        %v3207 = vpack.c.b16 %v3039, %v3033
        %v3208 = vpack.c.b16 %v3040, %v3034
        %v3209 = vpack.c.b16 %v3041, %v3035
        %v3210 = vpack.c.b16 %v3042, %v3036
        %v3211 = vpack.c.b16 %v3049, %v3043
        %v3212 = vpack.c.b16 %v3050, %v3044
        %v3213 = vpack.c.b16 %v3051, %v3045
        %v3214 = vpack.c.b16 %v3052, %v3046
        %v3215 = vpack.c.b16 %v3053, %v3047
        %v3216 = vpack.c.b16 %v3054, %v3048
        %v3217 = vpack.c.b16 %v3061, %v3055
        %v3218 = vpack.c.b16 %v3062, %v3056
        %v3219 = vpack.c.b16 %v3063, %v3057
        %v3220 = vpack.c.b16 %v3064, %v3058
        %v3221 = vpack.c.b16 %v3065, %v3059
        %v3222 = vpack.c.b16 %v3066, %v3060
        %v3223 = vpack.c.b16 %v3073, %v3067
        %v3224 = vpack.c.b16 %v3074, %v3068
        %v3225 = vpack.c.b16 %v3075, %v3069
        %v3226 = vpack.c.b16 %v3076, %v3070
        %v3227 = vpack.c.b16 %v3077, %v3071
        %v3228 = vpack.c.b16 %v3078, %v3072
        %v3229 = vpack.c.b16 %v3085, %v3079
        %v3230 = vpack.c.b16 %v3086, %v3080
        %v3231 = vpack.c.b16 %v3087, %v3081
        %v3232 = vpack.c.b16 %v3088, %v3082
        %v3233 = vpack.c.b16 %v3089, %v3083
        %v3234 = vpack.c.b16 %v3090, %v3084
        %v3235 = vpack.c.b16 %v3097, %v3091
        %v3236 = vpack.c.b16 %v3098, %v3092
        %v3237 = vpack.c.b16 %v3099, %v3093
        %v3238 = vpack.c.b16 %v3100, %v3094
        %v3239 = vpack.c.b16 %v3101, %v3095
        %v3240 = vpack.c.b16 %v3102, %v3096
        %v3241 = vpack.c.b16 %v3109, %v3103
        %v3242 = vpack.c.b16 %v3110, %v3104
        %v3243 = vpack.c.b16 %v3111, %v3105
        %v3244 = vpack.c.b16 %v3112, %v3106
        %v3245 = vpack.c.b16 %v3113, %v3107
        %v3246 = vpack.c.b16 %v3114, %v3108
        %v3247 = vpack.c.b16 %v3121, %v3115
        %v3248 = vpack.c.b16 %v3122, %v3116
        %v3249 = vpack.c.b16 %v3123, %v3117
        %v3250 = vpack.c.b16 %v3124, %v3118
        %v3251 = vpack.c.b16 %v3125, %v3119
        %v3252 = vpack.c.b16 %v3126, %v3120
        %v3253 = vpack.c.b16 %v3133, %v3127
        %v3254 = vpack.c.b16 %v3134, %v3128
        %v3255 = vpack.c.b16 %v3135, %v3129
        %v3256 = vpack.c.b16 %v3136, %v3130
        %v3257 = vpack.c.b16 %v3137, %v3131
        %v3258 = vpack.c.b16 %v3138, %v3132
        %v3259 = vpack.c.b16 %v3145, %v3139
        %v3260 = vpack.c.b16 %v3146, %v3140
        %v3261 = vpack.c.b16 %v3147, %v3141
        %v3262 = vpack.c.b16 %v3148, %v3142
        %v3263 = vpack.c.b16 %v3149, %v3143
        %v3264 = vpack.c.b16 %v3150, %v3144
        %v3265 = vpack.c.b16 %v3157, %v3151
        %v3266 = vpack.c.b16 %v3158, %v3152
        %v3267 = vpack.c.b16 %v3159, %v3153
        %v3268 = vpack.c.b16 %v3160, %v3154
        %v3269 = vpack.c.b16 %v3161, %v3155
        %v3270 = vpack.c.b16 %v3162, %v3156
        %v3271 = vpack.c.b16 %v3169, %v3163
        %v3272 = vpack.c.b16 %v3170, %v3164
        %v3273 = vpack.c.b16 %v3171, %v3165
        %v3274 = vpack.c.b16 %v3172, %v3166
        %v3275 = vpack.c.b16 %v3173, %v3167
        %v3276 = vpack.c.b16 %v3174, %v3168
        %v3277 = vpack.c.b16 %v3175, %v3175
        %v3278 = vpack.c.b16 %v3176, %v3176
        %v3279 = vpack.c.b16 %v3177, %v3177
        %v3280 = vpack.c.b16 %v3178, %v3178
        %v3281 = vpack.c.b16 %v3179, %v3179
        %v3282 = vpack.c.b16 %v3180, %v3180
        %3385 = vmatprep.subr.bf16.mxu0 %v3224
        %3386 = vmatpush1.bf16.xpose.msra.mxu0 %v3223
        %3387 = vmatprep.subr.bf16.mxu0 %v3218
        %3388 = vmatpush1.bf16.xpose.msra.mxu0 %v3217
        %3389 = vmatprep.subr.bf16.mxu0 %v3212
        %3390 = vmatpush1.bf16.xpose.msra.mxu0 %v3211
        %3391 = vmatprep.subr.bf16.mxu0 %v3206
        %3392 = vmatpush1.bf16.xpose.msra.mxu0 %v3205
        %3393 = vmatprep.subr.bf16.mxu0 %v3200
        %3394 = vmatpush1.bf16.xpose.msra.mxu0 %v3199
        %3395 = vmatprep.subr.bf16.mxu0 %v3194
        %3396 = vmatpush1.bf16.xpose.msra.mxu0 %v3193
        %3397 = vmatprep.subr.bf16.mxu0 %v3188
        %3398 = vmatpush1.bf16.xpose.msra.mxu0 %v3187
        %3399 = vmatprep.subr.bf16.mxu0 %v3182
        %3400 = vmatpush1.bf16.xpose.msra.mxu0 %v3181
        %3401 = vmatprep.subr.bf16.mxu0 %v3272
        %3402 = vmatpush2.bf16.xpose.msra.mxu0 %v3271
        %3403 = vmatprep.subr.bf16.mxu0 %v3266
        %3404 = vmatpush2.bf16.xpose.msra.mxu0 %v3265
        %3405 = vmatprep.subr.bf16.mxu0 %v3260
        %3406 = vmatpush2.bf16.xpose.msra.mxu0 %v3259
        %3407 = vmatprep.subr.bf16.mxu0 %v3254
        %3408 = vmatpush2.bf16.xpose.msra.mxu0 %v3253
        %3409 = vmatprep.subr.bf16.mxu0 %v3248
        %3410 = vmatpush2.bf16.xpose.msra.mxu0 %v3247
        %3411 = vmatprep.subr.bf16.mxu0 %v3242
        %3412 = vmatpush2.bf16.xpose.msra.mxu0 %v3241
        %3413 = vmatprep.subr.bf16.mxu0 %v3236
        %3414 = vmatpush2.bf16.xpose.msra.mxu0 %v3235
        %3415 = vmatprep.subr.bf16.mxu0 %v3230
        %3416 = vmatpush2.bf16.xpose.msra.mxu0 %v3229
        %3417 = vmatprep.mubr.bf16.mxu0 %v2765
        %3418 = vmatmul.mubr.bf16.gmra.mxu0 %v2764
        %v3419 = vpop.f32.mrf.mxu0
        %v3420 = vadd.f32 0.0, %v3419
        %v3421 = vpop.f32.mrf.mxu0
        %v3422 = vadd.f32 0.0, %v3421
        %v3423 = vpop.f32.mrf.mxu0
        %v3424 = vadd.f32 0.0, %v3423
        %v3425 = vpop.f32.mrf.mxu0
        %v3426 = vadd.f32 0.0, %v3425
        %3427 = vmatprep.mubr.bf16.mxu0 %v2771
        %3428 = vmatmul.mubr.bf16.gmra.mxu0 %v2770
        %v3429 = vpop.f32.mrf.mxu0
        %v3430 = vadd.f32 0.0, %v3429
        %v3431 = vpop.f32.mrf.mxu0
        %v3432 = vadd.f32 0.0, %v3431
        %v3433 = vpop.f32.mrf.mxu0
        %v3434 = vadd.f32 0.0, %v3433
        %v3435 = vpop.f32.mrf.mxu0
        %v3436 = vadd.f32 0.0, %v3435
        %3437 = vmatprep.mubr.bf16.mxu0 %v2777
        %3438 = vmatmul.mubr.bf16.gmra.mxu0 %v2776
        %v3439 = vpop.f32.mrf.mxu0
        %v3440 = vadd.f32 0.0, %v3439
        %v3441 = vpop.f32.mrf.mxu0
        %v3442 = vadd.f32 0.0, %v3441
        %v3443 = vpop.f32.mrf.mxu0
        %v3444 = vadd.f32 0.0, %v3443
        %v3445 = vpop.f32.mrf.mxu0
        %v3446 = vadd.f32 0.0, %v3445
        %3447 = vmatprep.mubr.bf16.mxu0 %v2783
        %3448 = vmatmul.mubr.bf16.gmra.mxu0 %v2782
        %v3449 = vpop.f32.mrf.mxu0
        %v3450 = vadd.f32 0.0, %v3449
        %v3451 = vpop.f32.mrf.mxu0
        %v3452 = vadd.f32 0.0, %v3451
        %v3453 = vpop.f32.mrf.mxu0
        %v3454 = vadd.f32 0.0, %v3453
        %v3455 = vpop.f32.mrf.mxu0
        %v3456 = vadd.f32 0.0, %v3455
        %3457 = vmatprep.mubr.bf16.mxu0 %v2789
        %3458 = vmatmul.mubr.bf16.gmra.mxu0 %v2788
        %v3459 = vpop.f32.mrf.mxu0
        %v3460 = vadd.f32 0.0, %v3459
        %v3461 = vpop.f32.mrf.mxu0
        %v3462 = vadd.f32 0.0, %v3461
        %v3463 = vpop.f32.mrf.mxu0
        %v3464 = vadd.f32 0.0, %v3463
        %v3465 = vpop.f32.mrf.mxu0
        %v3466 = vadd.f32 0.0, %v3465
        %3467 = vmatprep.mubr.bf16.mxu0 %v2795
        %3468 = vmatmul.mubr.bf16.gmra.mxu0 %v2794
        %v3469 = vpop.f32.mrf.mxu0
        %v3470 = vadd.f32 0.0, %v3469
        %v3471 = vpop.f32.mrf.mxu0
        %v3472 = vadd.f32 0.0, %v3471
        %v3473 = vpop.f32.mrf.mxu0
        %v3474 = vadd.f32 0.0, %v3473
        %v3475 = vpop.f32.mrf.mxu0
        %v3476 = vadd.f32 0.0, %v3475
        %3477 = vmatprep.mubr.bf16.mxu0 %v2801
        %3478 = vmatmul.mubr.bf16.gmra.mxu0 %v2800
        %v3479 = vpop.f32.mrf.mxu0
        %v3480 = vadd.f32 0.0, %v3479
        %v3481 = vpop.f32.mrf.mxu0
        %v3482 = vadd.f32 0.0, %v3481
        %v3483 = vpop.f32.mrf.mxu0
        %v3484 = vadd.f32 0.0, %v3483
        %v3485 = vpop.f32.mrf.mxu0
        %v3486 = vadd.f32 0.0, %v3485
        %3487 = vmatprep.mubr.bf16.mxu0 %v2807
        %3488 = vmatmul.mubr.bf16.gmra.mxu0 %v2806
        %v3489 = vpop.f32.mrf.mxu0
        %v3490 = vadd.f32 0.0, %v3489
        %v3491 = vpop.f32.mrf.mxu0
        %v3492 = vadd.f32 0.0, %v3491
        %v3493 = vpop.f32.mrf.mxu0
        %v3494 = vadd.f32 0.0, %v3493
        %v3495 = vpop.f32.mrf.mxu0
        %v3496 = vadd.f32 0.0, %v3495
        %3497 = vmatprep.mubr.bf16.mxu0 %v2813
        %3498 = vmatmul.mubr.bf16.gmra.mxu0 %v2812
        %v3499 = vpop.f32.mrf.mxu0
        %v3500 = vadd.f32 0.0, %v3499
        %v3501 = vpop.f32.mrf.mxu0
        %v3502 = vadd.f32 0.0, %v3501
        %v3503 = vpop.f32.mrf.mxu0
        %v3504 = vadd.f32 0.0, %v3503
        %v3505 = vpop.f32.mrf.mxu0
        %v3506 = vadd.f32 0.0, %v3505
        %3507 = vmatprep.mubr.bf16.mxu0 %v2819
        %3508 = vmatmul.mubr.bf16.gmra.mxu0 %v2818
        %v3509 = vpop.f32.mrf.mxu0
        %v3510 = vadd.f32 0.0, %v3509
        %v3511 = vpop.f32.mrf.mxu0
        %v3512 = vadd.f32 0.0, %v3511
        %v3513 = vpop.f32.mrf.mxu0
        %v3514 = vadd.f32 0.0, %v3513
        %v3515 = vpop.f32.mrf.mxu0
        %v3516 = vadd.f32 0.0, %v3515
        %3517 = vdwg.mxu0
        %3518 = vmatprep.subr.bf16.mxu0 %v3226
        %3519 = vmatpush1.bf16.xpose.msra.mxu0 %v3225
        %3520 = vmatprep.subr.bf16.mxu0 %v3220
        %3521 = vmatpush1.bf16.xpose.msra.mxu0 %v3219
        %3522 = vmatprep.subr.bf16.mxu0 %v3214
        %3523 = vmatpush1.bf16.xpose.msra.mxu0 %v3213
        %3524 = vmatprep.subr.bf16.mxu0 %v3208
        %3525 = vmatpush1.bf16.xpose.msra.mxu0 %v3207
        %3526 = vmatprep.subr.bf16.mxu0 %v3202
        %3527 = vmatpush1.bf16.xpose.msra.mxu0 %v3201
        %3528 = vmatprep.subr.bf16.mxu0 %v3196
        %3529 = vmatpush1.bf16.xpose.msra.mxu0 %v3195
        %3530 = vmatprep.subr.bf16.mxu0 %v3190
        %3531 = vmatpush1.bf16.xpose.msra.mxu0 %v3189
        %3532 = vmatprep.subr.bf16.mxu0 %v3184
        %3533 = vmatpush1.bf16.xpose.msra.mxu0 %v3183
        %3534 = vmatprep.subr.bf16.mxu0 %v3274
        %3535 = vmatpush2.bf16.xpose.msra.mxu0 %v3273
        %3536 = vmatprep.subr.bf16.mxu0 %v3268
        %3537 = vmatpush2.bf16.xpose.msra.mxu0 %v3267
        %3538 = vmatprep.subr.bf16.mxu0 %v3262
        %3539 = vmatpush2.bf16.xpose.msra.mxu0 %v3261
        %3540 = vmatprep.subr.bf16.mxu0 %v3256
        %3541 = vmatpush2.bf16.xpose.msra.mxu0 %v3255
        %3542 = vmatprep.subr.bf16.mxu0 %v3250
        %3543 = vmatpush2.bf16.xpose.msra.mxu0 %v3249
        %3544 = vmatprep.subr.bf16.mxu0 %v3244
        %3545 = vmatpush2.bf16.xpose.msra.mxu0 %v3243
        %3546 = vmatprep.subr.bf16.mxu0 %v3238
        %3547 = vmatpush2.bf16.xpose.msra.mxu0 %v3237
        %3548 = vmatprep.subr.bf16.mxu0 %v3232
        %3549 = vmatpush2.bf16.xpose.msra.mxu0 %v3231
        %3550 = vmatprep.mubr.bf16.mxu0 %v2767
        %3551 = vmatmul.mubr.bf16.gmra.mxu0 %v2766
        %v3552 = vpop.f32.mrf.mxu0
        %v3553 = vadd.f32 %v3420, %v3552
        %v3554 = vpop.f32.mrf.mxu0
        %v3555 = vadd.f32 %v3422, %v3554
        %v3556 = vpop.f32.mrf.mxu0
        %v3557 = vadd.f32 %v3424, %v3556
        %v3558 = vpop.f32.mrf.mxu0
        %v3559 = vadd.f32 %v3426, %v3558
        %3560 = vmatprep.mubr.bf16.mxu0 %v2773
        %3561 = vmatmul.mubr.bf16.gmra.mxu0 %v2772
        %v3562 = vpop.f32.mrf.mxu0
        %v3563 = vadd.f32 %v3430, %v3562
        %v3564 = vpop.f32.mrf.mxu0
        %v3565 = vadd.f32 %v3432, %v3564
        %v3566 = vpop.f32.mrf.mxu0
        %v3567 = vadd.f32 %v3434, %v3566
        %v3568 = vpop.f32.mrf.mxu0
        %v3569 = vadd.f32 %v3436, %v3568
        %3570 = vmatprep.mubr.bf16.mxu0 %v2779
        %3571 = vmatmul.mubr.bf16.gmra.mxu0 %v2778
        %v3572 = vpop.f32.mrf.mxu0
        %v3573 = vadd.f32 %v3440, %v3572
        %v3574 = vpop.f32.mrf.mxu0
        %v3575 = vadd.f32 %v3442, %v3574
        %v3576 = vpop.f32.mrf.mxu0
        %v3577 = vadd.f32 %v3444, %v3576
        %v3578 = vpop.f32.mrf.mxu0
        %v3579 = vadd.f32 %v3446, %v3578
        %3580 = vmatprep.mubr.bf16.mxu0 %v2785
        %3581 = vmatmul.mubr.bf16.gmra.mxu0 %v2784
        %v3582 = vpop.f32.mrf.mxu0
        %v3583 = vadd.f32 %v3450, %v3582
        %v3584 = vpop.f32.mrf.mxu0
        %v3585 = vadd.f32 %v3452, %v3584
        %v3586 = vpop.f32.mrf.mxu0
        %v3587 = vadd.f32 %v3454, %v3586
        %v3588 = vpop.f32.mrf.mxu0
        %v3589 = vadd.f32 %v3456, %v3588
        %3590 = vmatprep.mubr.bf16.mxu0 %v2791
        %3591 = vmatmul.mubr.bf16.gmra.mxu0 %v2790
        %v3592 = vpop.f32.mrf.mxu0
        %v3593 = vadd.f32 %v3460, %v3592
        %v3594 = vpop.f32.mrf.mxu0
        %v3595 = vadd.f32 %v3462, %v3594
        %v3596 = vpop.f32.mrf.mxu0
        %v3597 = vadd.f32 %v3464, %v3596
        %v3598 = vpop.f32.mrf.mxu0
        %v3599 = vadd.f32 %v3466, %v3598
        %3600 = vmatprep.mubr.bf16.mxu0 %v2797
        %3601 = vmatmul.mubr.bf16.gmra.mxu0 %v2796
        %v3602 = vpop.f32.mrf.mxu0
        %v3603 = vadd.f32 %v3470, %v3602
        %v3604 = vpop.f32.mrf.mxu0
        %v3605 = vadd.f32 %v3472, %v3604
        %v3606 = vpop.f32.mrf.mxu0
        %v3607 = vadd.f32 %v3474, %v3606
        %v3608 = vpop.f32.mrf.mxu0
        %v3609 = vadd.f32 %v3476, %v3608
        %3610 = vmatprep.mubr.bf16.mxu0 %v2803
        %3611 = vmatmul.mubr.bf16.gmra.mxu0 %v2802
        %v3612 = vpop.f32.mrf.mxu0
        %v3613 = vadd.f32 %v3480, %v3612
        %v3614 = vpop.f32.mrf.mxu0
        %v3615 = vadd.f32 %v3482, %v3614
        %v3616 = vpop.f32.mrf.mxu0
        %v3617 = vadd.f32 %v3484, %v3616
        %v3618 = vpop.f32.mrf.mxu0
        %v3619 = vadd.f32 %v3486, %v3618
        %3620 = vmatprep.mubr.bf16.mxu0 %v2809
        %3621 = vmatmul.mubr.bf16.gmra.mxu0 %v2808
        %v3622 = vpop.f32.mrf.mxu0
        %v3623 = vadd.f32 %v3490, %v3622
        %v3624 = vpop.f32.mrf.mxu0
        %v3625 = vadd.f32 %v3492, %v3624
        %v3626 = vpop.f32.mrf.mxu0
        %v3627 = vadd.f32 %v3494, %v3626
        %v3628 = vpop.f32.mrf.mxu0
        %v3629 = vadd.f32 %v3496, %v3628
        %3630 = vmatprep.mubr.bf16.mxu0 %v2815
        %3631 = vmatmul.mubr.bf16.gmra.mxu0 %v2814
        %v3632 = vpop.f32.mrf.mxu0
        %v3633 = vadd.f32 %v3500, %v3632
        %v3634 = vpop.f32.mrf.mxu0
        %v3635 = vadd.f32 %v3502, %v3634
        %v3636 = vpop.f32.mrf.mxu0
        %v3637 = vadd.f32 %v3504, %v3636
        %v3638 = vpop.f32.mrf.mxu0
        %v3639 = vadd.f32 %v3506, %v3638
        %3640 = vmatprep.mubr.bf16.mxu0 %v2821
        %3641 = vmatmul.mubr.bf16.gmra.mxu0 %v2820
        %v3642 = vpop.f32.mrf.mxu0
        %v3643 = vadd.f32 %v3510, %v3642
        %v3644 = vpop.f32.mrf.mxu0
        %v3645 = vadd.f32 %v3512, %v3644
        %v3646 = vpop.f32.mrf.mxu0
        %v3647 = vadd.f32 %v3514, %v3646
        %v3648 = vpop.f32.mrf.mxu0
        %v3649 = vadd.f32 %v3516, %v3648
        %3650 = vdwg.mxu0
        %3651 = vmatprep.subr.bf16.mxu0 %v3228
        %3652 = vmatpush1.bf16.xpose.msra.mxu0 %v3227
        %3653 = vmatprep.subr.bf16.mxu0 %v3222
        %3654 = vmatpush1.bf16.xpose.msra.mxu0 %v3221
        %3655 = vmatprep.subr.bf16.mxu0 %v3216
        %3656 = vmatpush1.bf16.xpose.msra.mxu0 %v3215
        %3657 = vmatprep.subr.bf16.mxu0 %v3210
        %3658 = vmatpush1.bf16.xpose.msra.mxu0 %v3209
        %3659 = vmatprep.subr.bf16.mxu0 %v3204
        %3660 = vmatpush1.bf16.xpose.msra.mxu0 %v3203
        %3661 = vmatprep.subr.bf16.mxu0 %v3198
        %3662 = vmatpush1.bf16.xpose.msra.mxu0 %v3197
        %3663 = vmatprep.subr.bf16.mxu0 %v3192
        %3664 = vmatpush1.bf16.xpose.msra.mxu0 %v3191
        %3665 = vmatprep.subr.bf16.mxu0 %v3186
        %3666 = vmatpush1.bf16.xpose.msra.mxu0 %v3185
        %3667 = vmatprep.subr.bf16.mxu0 %v3276
        %3668 = vmatpush2.bf16.xpose.msra.mxu0 %v3275
        %3669 = vmatprep.subr.bf16.mxu0 %v3270
        %3670 = vmatpush2.bf16.xpose.msra.mxu0 %v3269
        %3671 = vmatprep.subr.bf16.mxu0 %v3264
        %3672 = vmatpush2.bf16.xpose.msra.mxu0 %v3263
        %3673 = vmatprep.subr.bf16.mxu0 %v3258
        %3674 = vmatpush2.bf16.xpose.msra.mxu0 %v3257
        %3675 = vmatprep.subr.bf16.mxu0 %v3252
        %3676 = vmatpush2.bf16.xpose.msra.mxu0 %v3251
        %3677 = vmatprep.subr.bf16.mxu0 %v3246
        %3678 = vmatpush2.bf16.xpose.msra.mxu0 %v3245
        %3679 = vmatprep.subr.bf16.mxu0 %v3240
        %3680 = vmatpush2.bf16.xpose.msra.mxu0 %v3239
        %3681 = vmatprep.subr.bf16.mxu0 %v3234
        %3682 = vmatpush2.bf16.xpose.msra.mxu0 %v3233
        %3683 = vmatprep.mubr.bf16.mxu0 %v2769
        %3684 = vmatmul.mubr.bf16.gmra.mxu0 %v2768
        %v3685 = vpop.f32.mrf.mxu0
        %v3686 = vadd.f32 %v3553, %v3685
        %v3687 = vpop.f32.mrf.mxu0
        %v3688 = vadd.f32 %v3555, %v3687
        %v3689 = vpop.f32.mrf.mxu0
        %v3690 = vadd.f32 %v3557, %v3689
        %v3691 = vpop.f32.mrf.mxu0
        %v3692 = vadd.f32 %v3559, %v3691
        %3693 = vmatprep.mubr.bf16.mxu0 %v2775
        %3694 = vmatmul.mubr.bf16.gmra.mxu0 %v2774
        %v3695 = vpop.f32.mrf.mxu0
        %v3696 = vadd.f32 %v3563, %v3695
        %v3697 = vpop.f32.mrf.mxu0
        %v3698 = vadd.f32 %v3565, %v3697
        %v3699 = vpop.f32.mrf.mxu0
        %v3700 = vadd.f32 %v3567, %v3699
        %v3701 = vpop.f32.mrf.mxu0
        %v3702 = vadd.f32 %v3569, %v3701
        %3703 = vmatprep.mubr.bf16.mxu0 %v2781
        %3704 = vmatmul.mubr.bf16.gmra.mxu0 %v2780
        %v3705 = vpop.f32.mrf.mxu0
        %v3706 = vadd.f32 %v3573, %v3705
        %v3707 = vpop.f32.mrf.mxu0
        %v3708 = vadd.f32 %v3575, %v3707
        %v3709 = vpop.f32.mrf.mxu0
        %v3710 = vadd.f32 %v3577, %v3709
        %v3711 = vpop.f32.mrf.mxu0
        %v3712 = vadd.f32 %v3579, %v3711
        %3713 = vmatprep.mubr.bf16.mxu0 %v2787
        %3714 = vmatmul.mubr.bf16.gmra.mxu0 %v2786
        %v3715 = vpop.f32.mrf.mxu0
        %v3716 = vadd.f32 %v3583, %v3715
        %v3717 = vpop.f32.mrf.mxu0
        %v3718 = vadd.f32 %v3585, %v3717
        %v3719 = vpop.f32.mrf.mxu0
        %v3720 = vadd.f32 %v3587, %v3719
        %v3721 = vpop.f32.mrf.mxu0
        %v3722 = vadd.f32 %v3589, %v3721
        %3723 = vmatprep.mubr.bf16.mxu0 %v2793
        %3724 = vmatmul.mubr.bf16.gmra.mxu0 %v2792
        %v3725 = vpop.f32.mrf.mxu0
        %v3726 = vadd.f32 %v3593, %v3725
        %v3727 = vpop.f32.mrf.mxu0
        %v3728 = vadd.f32 %v3595, %v3727
        %v3729 = vpop.f32.mrf.mxu0
        %v3730 = vadd.f32 %v3597, %v3729
        %v3731 = vpop.f32.mrf.mxu0
        %v3732 = vadd.f32 %v3599, %v3731
        %3733 = vmatprep.mubr.bf16.mxu0 %v2799
        %3734 = vmatmul.mubr.bf16.gmra.mxu0 %v2798
        %v3735 = vpop.f32.mrf.mxu0
        %v3736 = vadd.f32 %v3603, %v3735
        %v3737 = vpop.f32.mrf.mxu0
        %v3738 = vadd.f32 %v3605, %v3737
        %v3739 = vpop.f32.mrf.mxu0
        %v3740 = vadd.f32 %v3607, %v3739
        %v3741 = vpop.f32.mrf.mxu0
        %v3742 = vadd.f32 %v3609, %v3741
        %3743 = vmatprep.mubr.bf16.mxu0 %v2805
        %3744 = vmatmul.mubr.bf16.gmra.mxu0 %v2804
        %v3745 = vpop.f32.mrf.mxu0
        %v3746 = vadd.f32 %v3613, %v3745
        %v3747 = vpop.f32.mrf.mxu0
        %v3748 = vadd.f32 %v3615, %v3747
        %v3749 = vpop.f32.mrf.mxu0
        %v3750 = vadd.f32 %v3617, %v3749
        %v3751 = vpop.f32.mrf.mxu0
        %v3752 = vadd.f32 %v3619, %v3751
        %3753 = vmatprep.mubr.bf16.mxu0 %v2811
        %3754 = vmatmul.mubr.bf16.gmra.mxu0 %v2810
        %v3755 = vpop.f32.mrf.mxu0
        %v3756 = vadd.f32 %v3623, %v3755
        %v3757 = vpop.f32.mrf.mxu0
        %v3758 = vadd.f32 %v3625, %v3757
        %v3759 = vpop.f32.mrf.mxu0
        %v3760 = vadd.f32 %v3627, %v3759
        %v3761 = vpop.f32.mrf.mxu0
        %v3762 = vadd.f32 %v3629, %v3761
        %3763 = vmatprep.mubr.bf16.mxu0 %v2817
        %3764 = vmatmul.mubr.bf16.gmra.mxu0 %v2816
        %v3765 = vpop.f32.mrf.mxu0
        %v3766 = vadd.f32 %v3633, %v3765
        %v3767 = vpop.f32.mrf.mxu0
        %v3768 = vadd.f32 %v3635, %v3767
        %v3769 = vpop.f32.mrf.mxu0
        %v3770 = vadd.f32 %v3637, %v3769
        %v3771 = vpop.f32.mrf.mxu0
        %v3772 = vadd.f32 %v3639, %v3771
        %3773 = vmatprep.mubr.bf16.mxu0 %v2823
        %3774 = vmatmul.mubr.bf16.gmra.mxu0 %v2822
        %v3775 = vpop.f32.mrf.mxu0
        %v3776 = vadd.f32 %v3643, %v3775
        %v3777 = vpop.f32.mrf.mxu0
        %v3778 = vadd.f32 %v3645, %v3777
        %v3779 = vpop.f32.mrf.mxu0
        %v3780 = vadd.f32 %v3647, %v3779
        %v3781 = vpop.f32.mrf.mxu0
        %v3782 = vadd.f32 %v3649, %v3781
        %3783 = vdwg.mxu0
        %3784 = vmatprep.subr.bf16.mxu0 0
        %3785 = vmatpush1.bf16.xpose.msra.mxu0 0
        %3786 = vmatprep.subr.bf16.mxu0 0
        %3787 = vmatpush1.bf16.xpose.msra.mxu0 0
        %3788 = vmatprep.subr.bf16.mxu0 0
        %3789 = vmatpush1.bf16.xpose.msra.mxu0 0
        %3790 = vmatprep.subr.bf16.mxu0 0
        %3791 = vmatpush1.bf16.xpose.msra.mxu0 0
        %3792 = vmatprep.subr.bf16.mxu0 0
        %3793 = vmatpush1.bf16.xpose.msra.mxu0 0
        %3794 = vmatprep.subr.bf16.mxu0 0
        %3795 = vmatpush1.bf16.xpose.msra.mxu0 0
        %3796 = vmatprep.subr.bf16.mxu0 0
        %3797 = vmatpush1.bf16.xpose.msra.mxu0 0
        %3798 = vmatprep.subr.bf16.mxu0 %v3278
        %3799 = vmatpush1.bf16.xpose.msra.mxu0 %v3277
        %3800 = vmatprep.subr.bf16.mxu0 0
        %3801 = vmatpush2.bf16.xpose.msra.mxu0 0
        %3802 = vmatprep.subr.bf16.mxu0 0
        %3803 = vmatpush2.bf16.xpose.msra.mxu0 0
        %3804 = vmatprep.subr.bf16.mxu0 0
        %3805 = vmatpush2.bf16.xpose.msra.mxu0 0
        %3806 = vmatprep.subr.bf16.mxu0 0
        %3807 = vmatpush2.bf16.xpose.msra.mxu0 0
        %3808 = vmatprep.subr.bf16.mxu0 0
        %3809 = vmatpush2.bf16.xpose.msra.mxu0 0
        %3810 = vmatprep.subr.bf16.mxu0 0
        %3811 = vmatpush2.bf16.xpose.msra.mxu0 0
        %3812 = vmatprep.subr.bf16.mxu0 0
        %3813 = vmatpush2.bf16.xpose.msra.mxu0 0
        %3814 = vmatprep.subr.bf16.mxu0 0
        %3815 = vmatpush2.bf16.xpose.msra.mxu0 0
        %3816 = vmatprep.mubr.bf16.mxu0 %v2765
        %3817 = vmatmul.mubr.bf16.gmra.mxu0 %v2764
        %v3818 = vpop.f32.mrf.mxu0
        %v3819 = vadd.f32 0.0, %v3818
        %v3820 = vpop.f32.mrf.mxu0
        %v3821 = vpop.f32.mrf.mxu0
        %v3822 = vadd.f32 0.0, %v3821
        %v3823 = vpop.f32.mrf.mxu0
        %3824 = vmatprep.mubr.bf16.mxu0 %v2771
        %3825 = vmatmul.mubr.bf16.gmra.mxu0 %v2770
        %v3826 = vpop.f32.mrf.mxu0
        %v3827 = vadd.f32 0.0, %v3826
        %v3828 = vpop.f32.mrf.mxu0
        %v3829 = vpop.f32.mrf.mxu0
        %v3830 = vadd.f32 0.0, %v3829
        %v3831 = vpop.f32.mrf.mxu0
        %3832 = vmatprep.mubr.bf16.mxu0 %v2777
        %3833 = vmatmul.mubr.bf16.gmra.mxu0 %v2776
        %v3834 = vpop.f32.mrf.mxu0
        %v3835 = vadd.f32 0.0, %v3834
        %v3836 = vpop.f32.mrf.mxu0
        %v3837 = vpop.f32.mrf.mxu0
        %v3838 = vadd.f32 0.0, %v3837
        %v3839 = vpop.f32.mrf.mxu0
        %3840 = vmatprep.mubr.bf16.mxu0 %v2783
        %3841 = vmatmul.mubr.bf16.gmra.mxu0 %v2782
        %v3842 = vpop.f32.mrf.mxu0
        %v3843 = vadd.f32 0.0, %v3842
        %v3844 = vpop.f32.mrf.mxu0
        %v3845 = vpop.f32.mrf.mxu0
        %v3846 = vadd.f32 0.0, %v3845
        %v3847 = vpop.f32.mrf.mxu0
        %3848 = vmatprep.mubr.bf16.mxu0 %v2789
        %3849 = vmatmul.mubr.bf16.gmra.mxu0 %v2788
        %v3850 = vpop.f32.mrf.mxu0
        %v3851 = vadd.f32 0.0, %v3850
        %v3852 = vpop.f32.mrf.mxu0
        %v3853 = vpop.f32.mrf.mxu0
        %v3854 = vadd.f32 0.0, %v3853
        %v3855 = vpop.f32.mrf.mxu0
        %3856 = vmatprep.mubr.bf16.mxu0 %v2795
        %3857 = vmatmul.mubr.bf16.gmra.mxu0 %v2794
        %v3858 = vpop.f32.mrf.mxu0
        %v3859 = vadd.f32 0.0, %v3858
        %v3860 = vpop.f32.mrf.mxu0
        %v3861 = vpop.f32.mrf.mxu0
        %v3862 = vadd.f32 0.0, %v3861
        %v3863 = vpop.f32.mrf.mxu0
        %3864 = vmatprep.mubr.bf16.mxu0 %v2801
        %3865 = vmatmul.mubr.bf16.gmra.mxu0 %v2800
        %v3866 = vpop.f32.mrf.mxu0
        %v3867 = vadd.f32 0.0, %v3866
        %v3868 = vpop.f32.mrf.mxu0
        %v3869 = vpop.f32.mrf.mxu0
        %v3870 = vadd.f32 0.0, %v3869
        %v3871 = vpop.f32.mrf.mxu0
        %3872 = vmatprep.mubr.bf16.mxu0 %v2807
        %3873 = vmatmul.mubr.bf16.gmra.mxu0 %v2806
        %v3874 = vpop.f32.mrf.mxu0
        %v3875 = vadd.f32 0.0, %v3874
        %v3876 = vpop.f32.mrf.mxu0
        %v3877 = vpop.f32.mrf.mxu0
        %v3878 = vadd.f32 0.0, %v3877
        %v3879 = vpop.f32.mrf.mxu0
        %3880 = vmatprep.mubr.bf16.mxu0 %v2813
        %3881 = vmatmul.mubr.bf16.gmra.mxu0 %v2812
        %v3882 = vpop.f32.mrf.mxu0
        %v3883 = vadd.f32 0.0, %v3882
        %v3884 = vpop.f32.mrf.mxu0
        %v3885 = vpop.f32.mrf.mxu0
        %v3886 = vadd.f32 0.0, %v3885
        %v3887 = vpop.f32.mrf.mxu0
        %3888 = vmatprep.mubr.bf16.mxu0 %v2819
        %3889 = vmatmul.mubr.bf16.gmra.mxu0 %v2818
        %v3890 = vpop.f32.mrf.mxu0
        %v3891 = vadd.f32 0.0, %v3890
        %v3892 = vpop.f32.mrf.mxu0
        %v3893 = vpop.f32.mrf.mxu0
        %v3894 = vadd.f32 0.0, %v3893
        %v3895 = vpop.f32.mrf.mxu0
        %3896 = vdwg.mxu0
        %3897 = vmatprep.subr.bf16.mxu0 0
        %3898 = vmatpush1.bf16.xpose.msra.mxu0 0
        %3899 = vmatprep.subr.bf16.mxu0 0
        %3900 = vmatpush1.bf16.xpose.msra.mxu0 0
        %3901 = vmatprep.subr.bf16.mxu0 0
        %3902 = vmatpush1.bf16.xpose.msra.mxu0 0
        %3903 = vmatprep.subr.bf16.mxu0 0
        %3904 = vmatpush1.bf16.xpose.msra.mxu0 0
        %3905 = vmatprep.subr.bf16.mxu0 0
        %3906 = vmatpush1.bf16.xpose.msra.mxu0 0
        %3907 = vmatprep.subr.bf16.mxu0 0
        %3908 = vmatpush1.bf16.xpose.msra.mxu0 0
        %3909 = vmatprep.subr.bf16.mxu0 0
        %3910 = vmatpush1.bf16.xpose.msra.mxu0 0
        %3911 = vmatprep.subr.bf16.mxu0 %v3280
        %3912 = vmatpush1.bf16.xpose.msra.mxu0 %v3279
        %3913 = vmatprep.subr.bf16.mxu0 0
        %3914 = vmatpush2.bf16.xpose.msra.mxu0 0
        %3915 = vmatprep.subr.bf16.mxu0 0
        %3916 = vmatpush2.bf16.xpose.msra.mxu0 0
        %3917 = vmatprep.subr.bf16.mxu0 0
        %3918 = vmatpush2.bf16.xpose.msra.mxu0 0
        %3919 = vmatprep.subr.bf16.mxu0 0
        %3920 = vmatpush2.bf16.xpose.msra.mxu0 0
        %3921 = vmatprep.subr.bf16.mxu0 0
        %3922 = vmatpush2.bf16.xpose.msra.mxu0 0
        %3923 = vmatprep.subr.bf16.mxu0 0
        %3924 = vmatpush2.bf16.xpose.msra.mxu0 0
        %3925 = vmatprep.subr.bf16.mxu0 0
        %3926 = vmatpush2.bf16.xpose.msra.mxu0 0
        %3927 = vmatprep.subr.bf16.mxu0 0
        %3928 = vmatpush2.bf16.xpose.msra.mxu0 0
        %3929 = vmatprep.mubr.bf16.mxu0 %v2767
        %3930 = vmatmul.mubr.bf16.gmra.mxu0 %v2766
        %v3931 = vpop.f32.mrf.mxu0
        %v3932 = vadd.f32 %v3819, %v3931
        %v3933 = vpop.f32.mrf.mxu0
        %v3934 = vpop.f32.mrf.mxu0
        %v3935 = vadd.f32 %v3822, %v3934
        %v3936 = vpop.f32.mrf.mxu0
        %3937 = vmatprep.mubr.bf16.mxu0 %v2773
        %3938 = vmatmul.mubr.bf16.gmra.mxu0 %v2772
        %v3939 = vpop.f32.mrf.mxu0
        %v3940 = vadd.f32 %v3827, %v3939
        %v3941 = vpop.f32.mrf.mxu0
        %v3942 = vpop.f32.mrf.mxu0
        %v3943 = vadd.f32 %v3830, %v3942
        %v3944 = vpop.f32.mrf.mxu0
        %3945 = vmatprep.mubr.bf16.mxu0 %v2779
        %3946 = vmatmul.mubr.bf16.gmra.mxu0 %v2778
        %v3947 = vpop.f32.mrf.mxu0
        %v3948 = vadd.f32 %v3835, %v3947
        %v3949 = vpop.f32.mrf.mxu0
        %v3950 = vpop.f32.mrf.mxu0
        %v3951 = vadd.f32 %v3838, %v3950
        %v3952 = vpop.f32.mrf.mxu0
        %3953 = vmatprep.mubr.bf16.mxu0 %v2785
        %3954 = vmatmul.mubr.bf16.gmra.mxu0 %v2784
        %v3955 = vpop.f32.mrf.mxu0
        %v3956 = vadd.f32 %v3843, %v3955
        %v3957 = vpop.f32.mrf.mxu0
        %v3958 = vpop.f32.mrf.mxu0
        %v3959 = vadd.f32 %v3846, %v3958
        %v3960 = vpop.f32.mrf.mxu0
        %3961 = vmatprep.mubr.bf16.mxu0 %v2791
        %3962 = vmatmul.mubr.bf16.gmra.mxu0 %v2790
        %v3963 = vpop.f32.mrf.mxu0
        %v3964 = vadd.f32 %v3851, %v3963
        %v3965 = vpop.f32.mrf.mxu0
        %v3966 = vpop.f32.mrf.mxu0
        %v3967 = vadd.f32 %v3854, %v3966
        %v3968 = vpop.f32.mrf.mxu0
        %3969 = vmatprep.mubr.bf16.mxu0 %v2797
        %3970 = vmatmul.mubr.bf16.gmra.mxu0 %v2796
        %v3971 = vpop.f32.mrf.mxu0
        %v3972 = vadd.f32 %v3859, %v3971
        %v3973 = vpop.f32.mrf.mxu0
        %v3974 = vpop.f32.mrf.mxu0
        %v3975 = vadd.f32 %v3862, %v3974
        %v3976 = vpop.f32.mrf.mxu0
        %3977 = vmatprep.mubr.bf16.mxu0 %v2803
        %3978 = vmatmul.mubr.bf16.gmra.mxu0 %v2802
        %v3979 = vpop.f32.mrf.mxu0
        %v3980 = vadd.f32 %v3867, %v3979
        %v3981 = vpop.f32.mrf.mxu0
        %v3982 = vpop.f32.mrf.mxu0
        %v3983 = vadd.f32 %v3870, %v3982
        %v3984 = vpop.f32.mrf.mxu0
        %3985 = vmatprep.mubr.bf16.mxu0 %v2809
        %3986 = vmatmul.mubr.bf16.gmra.mxu0 %v2808
        %v3987 = vpop.f32.mrf.mxu0
        %v3988 = vadd.f32 %v3875, %v3987
        %v3989 = vpop.f32.mrf.mxu0
        %v3990 = vpop.f32.mrf.mxu0
        %v3991 = vadd.f32 %v3878, %v3990
        %v3992 = vpop.f32.mrf.mxu0
        %3993 = vmatprep.mubr.bf16.mxu0 %v2815
        %3994 = vmatmul.mubr.bf16.gmra.mxu0 %v2814
        %v3995 = vpop.f32.mrf.mxu0
        %v3996 = vadd.f32 %v3883, %v3995
        %v3997 = vpop.f32.mrf.mxu0
        %v3998 = vpop.f32.mrf.mxu0
        %v3999 = vadd.f32 %v3886, %v3998
        %v4000 = vpop.f32.mrf.mxu0
        %4001 = vmatprep.mubr.bf16.mxu0 %v2821
        %4002 = vmatmul.mubr.bf16.gmra.mxu0 %v2820
        %v4003 = vpop.f32.mrf.mxu0
        %v4004 = vadd.f32 %v3891, %v4003
        %v4005 = vpop.f32.mrf.mxu0
        %v4006 = vpop.f32.mrf.mxu0
        %v4007 = vadd.f32 %v3894, %v4006
        %v4008 = vpop.f32.mrf.mxu0
        %4009 = vdwg.mxu0
        %4010 = vmatprep.subr.bf16.mxu0 0
        %4011 = vmatpush1.bf16.xpose.msra.mxu0 0
        %4012 = vmatprep.subr.bf16.mxu0 0
        %4013 = vmatpush1.bf16.xpose.msra.mxu0 0
        %4014 = vmatprep.subr.bf16.mxu0 0
        %4015 = vmatpush1.bf16.xpose.msra.mxu0 0
        %4016 = vmatprep.subr.bf16.mxu0 0
        %4017 = vmatpush1.bf16.xpose.msra.mxu0 0
        %4018 = vmatprep.subr.bf16.mxu0 0
        %4019 = vmatpush1.bf16.xpose.msra.mxu0 0
        %4020 = vmatprep.subr.bf16.mxu0 0
        %4021 = vmatpush1.bf16.xpose.msra.mxu0 0
        %4022 = vmatprep.subr.bf16.mxu0 0
        %4023 = vmatpush1.bf16.xpose.msra.mxu0 0
        %4024 = vmatprep.subr.bf16.mxu0 %v3282
        %4025 = vmatpush1.bf16.xpose.msra.mxu0 %v3281
        %4026 = vmatprep.subr.bf16.mxu0 0
        %4027 = vmatpush2.bf16.xpose.msra.mxu0 0
        %4028 = vmatprep.subr.bf16.mxu0 0
        %4029 = vmatpush2.bf16.xpose.msra.mxu0 0
        %4030 = vmatprep.subr.bf16.mxu0 0
        %4031 = vmatpush2.bf16.xpose.msra.mxu0 0
        %4032 = vmatprep.subr.bf16.mxu0 0
        %4033 = vmatpush2.bf16.xpose.msra.mxu0 0
        %4034 = vmatprep.subr.bf16.mxu0 0
        %4035 = vmatpush2.bf16.xpose.msra.mxu0 0
        %4036 = vmatprep.subr.bf16.mxu0 0
        %4037 = vmatpush2.bf16.xpose.msra.mxu0 0
        %4038 = vmatprep.subr.bf16.mxu0 0
        %4039 = vmatpush2.bf16.xpose.msra.mxu0 0
        %4040 = vmatprep.subr.bf16.mxu0 0
        %4041 = vmatpush2.bf16.xpose.msra.mxu0 0
        %4042 = vmatprep.mubr.bf16.mxu0 %v2769
        %4043 = vmatmul.mubr.bf16.gmra.mxu0 %v2768
        %v4044 = vpop.f32.mrf.mxu0
        %v4045 = vadd.f32 %v3932, %v4044
        %v4046 = vpop.f32.mrf.mxu0
        %v4047 = vpop.f32.mrf.mxu0
        %v4048 = vadd.f32 %v3935, %v4047
        %v4049 = vpop.f32.mrf.mxu0
        %4050 = vmatprep.mubr.bf16.mxu0 %v2775
        %4051 = vmatmul.mubr.bf16.gmra.mxu0 %v2774
        %v4052 = vpop.f32.mrf.mxu0
        %v4053 = vadd.f32 %v3940, %v4052
        %v4054 = vpop.f32.mrf.mxu0
        %v4055 = vpop.f32.mrf.mxu0
        %v4056 = vadd.f32 %v3943, %v4055
        %v4057 = vpop.f32.mrf.mxu0
        %4058 = vmatprep.mubr.bf16.mxu0 %v2781
        %4059 = vmatmul.mubr.bf16.gmra.mxu0 %v2780
        %v4060 = vpop.f32.mrf.mxu0
        %v4061 = vadd.f32 %v3948, %v4060
        %v4062 = vpop.f32.mrf.mxu0
        %v4063 = vpop.f32.mrf.mxu0
        %v4064 = vadd.f32 %v3951, %v4063
        %v4065 = vpop.f32.mrf.mxu0
        %4066 = vmatprep.mubr.bf16.mxu0 %v2787
        %4067 = vmatmul.mubr.bf16.gmra.mxu0 %v2786
        %v4068 = vpop.f32.mrf.mxu0
        %v4069 = vadd.f32 %v3956, %v4068
        %v4070 = vpop.f32.mrf.mxu0
        %v4071 = vpop.f32.mrf.mxu0
        %v4072 = vadd.f32 %v3959, %v4071
        %v4073 = vpop.f32.mrf.mxu0
        %4074 = vmatprep.mubr.bf16.mxu0 %v2793
        %4075 = vmatmul.mubr.bf16.gmra.mxu0 %v2792
        %v4076 = vpop.f32.mrf.mxu0
        %v4077 = vadd.f32 %v3964, %v4076
        %v4078 = vpop.f32.mrf.mxu0
        %v4079 = vpop.f32.mrf.mxu0
        %v4080 = vadd.f32 %v3967, %v4079
        %v4081 = vpop.f32.mrf.mxu0
        %4082 = vmatprep.mubr.bf16.mxu0 %v2799
        %4083 = vmatmul.mubr.bf16.gmra.mxu0 %v2798
        %v4084 = vpop.f32.mrf.mxu0
        %v4085 = vadd.f32 %v3972, %v4084
        %v4086 = vpop.f32.mrf.mxu0
        %v4087 = vpop.f32.mrf.mxu0
        %v4088 = vadd.f32 %v3975, %v4087
        %v4089 = vpop.f32.mrf.mxu0
        %4090 = vmatprep.mubr.bf16.mxu0 %v2805
        %4091 = vmatmul.mubr.bf16.gmra.mxu0 %v2804
        %v4092 = vpop.f32.mrf.mxu0
        %v4093 = vadd.f32 %v3980, %v4092
        %v4094 = vpop.f32.mrf.mxu0
        %v4095 = vpop.f32.mrf.mxu0
        %v4096 = vadd.f32 %v3983, %v4095
        %v4097 = vpop.f32.mrf.mxu0
        %4098 = vmatprep.mubr.bf16.mxu0 %v2811
        %4099 = vmatmul.mubr.bf16.gmra.mxu0 %v2810
        %v4100 = vpop.f32.mrf.mxu0
        %v4101 = vadd.f32 %v3988, %v4100
        %v4102 = vpop.f32.mrf.mxu0
        %v4103 = vpop.f32.mrf.mxu0
        %v4104 = vadd.f32 %v3991, %v4103
        %v4105 = vpop.f32.mrf.mxu0
        %4106 = vmatprep.mubr.bf16.mxu0 %v2817
        %4107 = vmatmul.mubr.bf16.gmra.mxu0 %v2816
        %v4108 = vpop.f32.mrf.mxu0
        %v4109 = vadd.f32 %v3996, %v4108
        %v4110 = vpop.f32.mrf.mxu0
        %v4111 = vpop.f32.mrf.mxu0
        %v4112 = vadd.f32 %v3999, %v4111
        %v4113 = vpop.f32.mrf.mxu0
        %4114 = vmatprep.mubr.bf16.mxu0 %v2823
        %4115 = vmatmul.mubr.bf16.gmra.mxu0 %v2822
        %v4116 = vpop.f32.mrf.mxu0
        %v4117 = vadd.f32 %v4004, %v4116
        %v4118 = vpop.f32.mrf.mxu0
        %v4119 = vpop.f32.mrf.mxu0
        %v4120 = vadd.f32 %v4007, %v4119
        %v4121 = vpop.f32.mrf.mxu0
        %4122 = vdwg.mxu0
        %4123 = vst [vmem:[%s251] sm:$0xff] %v3686
        %4124 = vst [vmem:[%s251 + $0x8] sm:$0xff] %v3688
        %4125 = vst.msk [vmem:[%s251 + $0x10] sm:$0xff] %vm1972, %v4045
        %4126 = vst [vmem:[%s251 + $0x18] sm:$0xff] %v3690
        %4127 = vst [vmem:[%s251 + $0x20] sm:$0xff] %v3692
        %4128 = vst.msk [vmem:[%s251 + $0x28] sm:$0xff] %vm1972, %v4048
        %4129 = vst [vmem:[%s251 + $0x30] sm:$0xff] %v3696
        %4130 = vst [vmem:[%s251 + $0x38] sm:$0xff] %v3698
        %4131 = vst.msk [vmem:[%s251 + $0x40] sm:$0xff] %vm1972, %v4053
        %4132 = vst [vmem:[%s251 + $0x48] sm:$0xff] %v3700
        %4133 = vst [vmem:[%s251 + $0x50] sm:$0xff] %v3702
        %4134 = vst.msk [vmem:[%s251 + $0x58] sm:$0xff] %vm1972, %v4056
        %4135 = vst [vmem:[%s251 + $0x60] sm:$0xff] %v3706
        %4136 = vst [vmem:[%s251 + $0x68] sm:$0xff] %v3708
        %4137 = vst.msk [vmem:[%s251 + $0x70] sm:$0xff] %vm1972, %v4061
        %4138 = vst [vmem:[%s251 + $0x78] sm:$0xff] %v3710
        %4139 = vst [vmem:[%s251 + $0x80] sm:$0xff] %v3712
        %4140 = vst.msk [vmem:[%s251 + $0x88] sm:$0xff] %vm1972, %v4064
        %4141 = vst [vmem:[%s251 + $0x90] sm:$0xff] %v3716
        %4142 = vst [vmem:[%s251 + $0x98] sm:$0xff] %v3718
        %4143 = vst.msk [vmem:[%s251 + $0xa0] sm:$0xff] %vm1972, %v4069
        %4144 = vst [vmem:[%s251 + $0xa8] sm:$0xff] %v3720
        %4145 = vst [vmem:[%s251 + $0xb0] sm:$0xff] %v3722
        %4146 = vst.msk [vmem:[%s251 + $0xb8] sm:$0xff] %vm1972, %v4072
        %4147 = vst [vmem:[%s251 + $0xc0] sm:$0xff] %v3726
        %4148 = vst [vmem:[%s251 + $0xc8] sm:$0xff] %v3728
        %4149 = vst.msk [vmem:[%s251 + $0xd0] sm:$0xff] %vm1972, %v4077
        %4150 = vst [vmem:[%s251 + $0xd8] sm:$0xff] %v3730
        %4151 = vst [vmem:[%s251 + $0xe0] sm:$0xff] %v3732
        %4152 = vst.msk [vmem:[%s251 + $0xe8] sm:$0xff] %vm1972, %v4080
        %4153 = vst [vmem:[%s251 + $0xf0] sm:$0xff] %v3736
        %4154 = vst [vmem:[%s251 + $0xf8] sm:$0xff] %v3738
        %4155 = vst.msk [vmem:[%s251 + $0x100] sm:$0xff] %vm1972, %v4085
        %4156 = vst [vmem:[%s251 + $0x108] sm:$0xff] %v3740
        %4157 = vst [vmem:[%s251 + $0x110] sm:$0xff] %v3742
        %4158 = vst.msk [vmem:[%s251 + $0x118] sm:$0xff] %vm1972, %v4088
        %4159 = vst [vmem:[%s251 + $0x120] sm:$0xff] %v3746
        %4160 = vst [vmem:[%s251 + $0x128] sm:$0xff] %v3748
        %4161 = vst.msk [vmem:[%s251 + $0x130] sm:$0xff] %vm1972, %v4093
        %4162 = vst [vmem:[%s251 + $0x138] sm:$0xff] %v3750
        %4163 = vst [vmem:[%s251 + $0x140] sm:$0xff] %v3752
        %4164 = vst.msk [vmem:[%s251 + $0x148] sm:$0xff] %vm1972, %v4096
        %4165 = vst [vmem:[%s251 + $0x150] sm:$0xff] %v3756
        %4166 = vst [vmem:[%s251 + $0x158] sm:$0xff] %v3758
        %4167 = vst.msk [vmem:[%s251 + $0x160] sm:$0xff] %vm1972, %v4101
        %4168 = vst [vmem:[%s251 + $0x168] sm:$0xff] %v3760
        %4169 = vst [vmem:[%s251 + $0x170] sm:$0xff] %v3762
        %4170 = vst.msk [vmem:[%s251 + $0x178] sm:$0xff] %vm1972, %v4104
        %4171 = vst [vmem:[%s251 + $0x180] sm:$0xff] %v3766
        %4172 = vst [vmem:[%s251 + $0x188] sm:$0xff] %v3768
        %4173 = vst.msk [vmem:[%s251 + $0x190] sm:$0xff] %vm1972, %v4109
        %4174 = vst [vmem:[%s251 + $0x198] sm:$0xff] %v3770
        %4175 = vst [vmem:[%s251 + $0x1a0] sm:$0xff] %v3772
        %4176 = vst.msk [vmem:[%s251 + $0x1a8] sm:$0xff] %vm1972, %v4112
        %4177 = vst [vmem:[%s251 + $0x1b0] sm:$0xff] %v3776
        %4178 = vst [vmem:[%s251 + $0x1b8] sm:$0xff] %v3778
        %4179 = vst.msk [vmem:[%s251 + $0x1c0] sm:$0xff] %vm1972, %v4117
        %4180 = vst [vmem:[%s251 + $0x1c8] sm:$0xff] %v3780
        %4181 = vst [vmem:[%s251 + $0x1d0] sm:$0xff] %v3782
        %4182 = vst.msk [vmem:[%s251 + $0x1d8] sm:$0xff] %vm1972, %v4120
        %v4183 = vld [vmem:[%s251] sm:$0xff]
        %v4184 = vld [vmem:[%s251 + $0x8] sm:$0xff]
        %v4185 = vld [vmem:[%s251 + $0x18] sm:$0xff]
        %v4186 = vld [vmem:[%s251 + $0x20] sm:$0xff]
        %v4187 = vld [vmem:[%s251 + $0x28] sm:$0xff]
        %4191 = vrot.lane.b32.xlu0 %v4185, 127
        %v4192 = vpop.permute.xlu0 %4191
        %4193 = vrot.lane.b32.xlu0 %v4186, 127
        %v4194 = vpop.permute.xlu0 %4193
        %4195 = vrot.lane.b32.xlu0 %v4187, 127
        %v4196 = vpop.permute.xlu0 %4195
        %v4197 = vsel %vm2045, %v4192, %v4194
        %v4198 = vsel %vm2045, %v4194, %v4196
        %v4201 = vadd.f32 %v4183, %v4197
        %v4202 = vadd.f32 %v4184, %v4198
        %v4203 = vld [vmem:[%s251 + $0x30] sm:$0xff]
        %v4204 = vld [vmem:[%s251 + $0x38] sm:$0xff]
        %v4205 = vld [vmem:[%s251 + $0x40] sm:$0xff]
        %4209 = vrot.lane.b32.xlu0 %v4203, 126
        %v4210 = vpop.permute.xlu0 %4209
        %4211 = vrot.lane.b32.xlu0 %v4204, 126
        %v4212 = vpop.permute.xlu0 %4211
        %4213 = vrot.lane.b32.xlu0 %v4205, 126
        %v4214 = vpop.permute.xlu0 %4213
        %v4215 = vsel %vm2064, %v4210, %v4212
        %v4216 = vsel %vm2064, %v4212, %v4214
        %v4219 = vadd.f32 %v4201, %v4215
        %v4220 = vadd.f32 %v4202, %v4216
        %v4221 = vld [vmem:[%s251 + $0x48] sm:$0xff]
        %v4222 = vld [vmem:[%s251 + $0x50] sm:$0xff]
        %v4223 = vld [vmem:[%s251 + $0x58] sm:$0xff]
        %4227 = vrot.lane.b32.xlu0 %v4221, 125
        %v4228 = vpop.permute.xlu0 %4227
        %4229 = vrot.lane.b32.xlu0 %v4222, 125
        %v4230 = vpop.permute.xlu0 %4229
        %4231 = vrot.lane.b32.xlu0 %v4223, 125
        %v4232 = vpop.permute.xlu0 %4231
        %v4233 = vsel %vm2083, %v4228, %v4230
        %v4234 = vsel %vm2083, %v4230, %v4232
        %v4237 = vadd.f32 %v4219, %v4233
        %v4238 = vadd.f32 %v4220, %v4234
        %v4239 = vld [vmem:[%s251 + $0x60] sm:$0xff]
        %v4240 = vld [vmem:[%s251 + $0x68] sm:$0xff]
        %v4241 = vld [vmem:[%s251 + $0x70] sm:$0xff]
        %4245 = vrot.lane.b32.xlu0 %v4239, 124
        %v4246 = vpop.permute.xlu0 %4245
        %4247 = vrot.lane.b32.xlu0 %v4240, 124
        %v4248 = vpop.permute.xlu0 %4247
        %4249 = vrot.lane.b32.xlu0 %v4241, 124
        %v4250 = vpop.permute.xlu0 %4249
        %v4251 = vsel %vm2102, %v4246, %v4248
        %v4252 = vsel %vm2102, %v4248, %v4250
        %v4255 = vadd.f32 %v4237, %v4251
        %v4256 = vadd.f32 %v4238, %v4252
        %v4257 = vld [vmem:[%s251 + $0x78] sm:$0xff]
        %v4258 = vld [vmem:[%s251 + $0x80] sm:$0xff]
        %v4259 = vld [vmem:[%s251 + $0x88] sm:$0xff]
        %4263 = vrot.lane.b32.xlu0 %v4257, 123
        %v4264 = vpop.permute.xlu0 %4263
        %4265 = vrot.lane.b32.xlu0 %v4258, 123
        %v4266 = vpop.permute.xlu0 %4265
        %4267 = vrot.lane.b32.xlu0 %v4259, 123
        %v4268 = vpop.permute.xlu0 %4267
        %v4269 = vsel %vm2121, %v4264, %v4266
        %v4270 = vsel %vm2121, %v4266, %v4268
        %v4273 = vadd.f32 %v4255, %v4269
        %v4274 = vadd.f32 %v4256, %v4270
        %v4275 = vld [vmem:[%s251 + $0x90] sm:$0xff]
        %v4276 = vld [vmem:[%s251 + $0x98] sm:$0xff]
        %v4277 = vld [vmem:[%s251 + $0xa0] sm:$0xff]
        %4281 = vrot.lane.b32.xlu0 %v4275, 122
        %v4282 = vpop.permute.xlu0 %4281
        %4283 = vrot.lane.b32.xlu0 %v4276, 122
        %v4284 = vpop.permute.xlu0 %4283
        %4285 = vrot.lane.b32.xlu0 %v4277, 122
        %v4286 = vpop.permute.xlu0 %4285
        %v4287 = vsel %vm2140, %v4282, %v4284
        %v4288 = vsel %vm2140, %v4284, %v4286
        %v4291 = vadd.f32 %v4273, %v4287
        %v4292 = vadd.f32 %v4274, %v4288
        %v4293 = vld [vmem:[%s251 + $0xa8] sm:$0xff]
        %v4294 = vld [vmem:[%s251 + $0xb0] sm:$0xff]
        %v4295 = vld [vmem:[%s251 + $0xb8] sm:$0xff]
        %4299 = vrot.lane.b32.xlu0 %v4293, 121
        %v4300 = vpop.permute.xlu0 %4299
        %4301 = vrot.lane.b32.xlu0 %v4294, 121
        %v4302 = vpop.permute.xlu0 %4301
        %4303 = vrot.lane.b32.xlu0 %v4295, 121
        %v4304 = vpop.permute.xlu0 %4303
        %v4305 = vsel %vm2159, %v4300, %v4302
        %v4306 = vsel %vm2159, %v4302, %v4304
        %v4309 = vadd.f32 %v4291, %v4305
        %v4310 = vadd.f32 %v4292, %v4306
        %v4311 = vld [vmem:[%s251 + $0xc0] sm:$0xff]
        %v4312 = vld [vmem:[%s251 + $0xc8] sm:$0xff]
        %v4313 = vld [vmem:[%s251 + $0xd0] sm:$0xff]
        %4317 = vrot.lane.b32.xlu0 %v4311, 120
        %v4318 = vpop.permute.xlu0 %4317
        %4319 = vrot.lane.b32.xlu0 %v4312, 120
        %v4320 = vpop.permute.xlu0 %4319
        %4321 = vrot.lane.b32.xlu0 %v4313, 120
        %v4322 = vpop.permute.xlu0 %4321
        %v4323 = vsel %vm2178, %v4318, %v4320
        %v4324 = vsel %vm2178, %v4320, %v4322
        %v4327 = vadd.f32 %v4309, %v4323
        %v4328 = vadd.f32 %v4310, %v4324
        %v4329 = vld [vmem:[%s251 + $0xd8] sm:$0xff]
        %v4330 = vld [vmem:[%s251 + $0xe0] sm:$0xff]
        %v4331 = vld [vmem:[%s251 + $0xe8] sm:$0xff]
        %4335 = vrot.lane.b32.xlu0 %v4329, 119
        %v4336 = vpop.permute.xlu0 %4335
        %4337 = vrot.lane.b32.xlu0 %v4330, 119
        %v4338 = vpop.permute.xlu0 %4337
        %4339 = vrot.lane.b32.xlu0 %v4331, 119
        %v4340 = vpop.permute.xlu0 %4339
        %v4341 = vsel %vm2197, %v4336, %v4338
        %v4342 = vsel %vm2197, %v4338, %v4340
        %v4345 = vadd.f32 %v4327, %v4341
        %v4346 = vadd.f32 %v4328, %v4342
        %v4347 = vld [vmem:[%s251 + $0xf0] sm:$0xff]
        %v4348 = vld [vmem:[%s251 + $0xf8] sm:$0xff]
        %v4349 = vld [vmem:[%s251 + $0x100] sm:$0xff]
        %4353 = vrot.lane.b32.xlu0 %v4347, 118
        %v4354 = vpop.permute.xlu0 %4353
        %4355 = vrot.lane.b32.xlu0 %v4348, 118
        %v4356 = vpop.permute.xlu0 %4355
        %4357 = vrot.lane.b32.xlu0 %v4349, 118
        %v4358 = vpop.permute.xlu0 %4357
        %v4359 = vsel %vm2216, %v4354, %v4356
        %v4360 = vsel %vm2216, %v4356, %v4358
        %v4363 = vadd.f32 %v4345, %v4359
        %v4364 = vadd.f32 %v4346, %v4360
        %v4365 = vld [vmem:[%s251 + $0x108] sm:$0xff]
        %v4366 = vld [vmem:[%s251 + $0x110] sm:$0xff]
        %v4367 = vld [vmem:[%s251 + $0x118] sm:$0xff]
        %4371 = vrot.lane.b32.xlu0 %v4365, 117
        %v4372 = vpop.permute.xlu0 %4371
        %4373 = vrot.lane.b32.xlu0 %v4366, 117
        %v4374 = vpop.permute.xlu0 %4373
        %4375 = vrot.lane.b32.xlu0 %v4367, 117
        %v4376 = vpop.permute.xlu0 %4375
        %v4377 = vsel %vm2235, %v4372, %v4374
        %v4378 = vsel %vm2235, %v4374, %v4376
        %v4381 = vadd.f32 %v4363, %v4377
        %v4382 = vadd.f32 %v4364, %v4378
        %v4383 = vld [vmem:[%s251 + $0x120] sm:$0xff]
        %v4384 = vld [vmem:[%s251 + $0x128] sm:$0xff]
        %v4385 = vld [vmem:[%s251 + $0x130] sm:$0xff]
        %4389 = vrot.lane.b32.xlu0 %v4383, 116
        %v4390 = vpop.permute.xlu0 %4389
        %4391 = vrot.lane.b32.xlu0 %v4384, 116
        %v4392 = vpop.permute.xlu0 %4391
        %4393 = vrot.lane.b32.xlu0 %v4385, 116
        %v4394 = vpop.permute.xlu0 %4393
        %v4395 = vsel %vm2254, %v4390, %v4392
        %v4396 = vsel %vm2254, %v4392, %v4394
        %v4399 = vadd.f32 %v4381, %v4395
        %v4400 = vadd.f32 %v4382, %v4396
        %v4401 = vld [vmem:[%s251 + $0x138] sm:$0xff]
        %v4402 = vld [vmem:[%s251 + $0x140] sm:$0xff]
        %v4403 = vld [vmem:[%s251 + $0x148] sm:$0xff]
        %4407 = vrot.lane.b32.xlu0 %v4401, 115
        %v4408 = vpop.permute.xlu0 %4407
        %4409 = vrot.lane.b32.xlu0 %v4402, 115
        %v4410 = vpop.permute.xlu0 %4409
        %4411 = vrot.lane.b32.xlu0 %v4403, 115
        %v4412 = vpop.permute.xlu0 %4411
        %v4413 = vsel %vm2273, %v4408, %v4410
        %v4414 = vsel %vm2273, %v4410, %v4412
        %v4417 = vadd.f32 %v4399, %v4413
        %v4418 = vadd.f32 %v4400, %v4414
        %v4419 = vld [vmem:[%s251 + $0x150] sm:$0xff]
        %v4420 = vld [vmem:[%s251 + $0x158] sm:$0xff]
        %v4421 = vld [vmem:[%s251 + $0x160] sm:$0xff]
        %4425 = vrot.lane.b32.xlu0 %v4419, 114
        %v4426 = vpop.permute.xlu0 %4425
        %4427 = vrot.lane.b32.xlu0 %v4420, 114
        %v4428 = vpop.permute.xlu0 %4427
        %4429 = vrot.lane.b32.xlu0 %v4421, 114
        %v4430 = vpop.permute.xlu0 %4429
        %v4431 = vsel %vm2292, %v4426, %v4428
        %v4432 = vsel %vm2292, %v4428, %v4430
        %v4435 = vadd.f32 %v4417, %v4431
        %v4436 = vadd.f32 %v4418, %v4432
        %v4437 = vld [vmem:[%s251 + $0x168] sm:$0xff]
        %v4438 = vld [vmem:[%s251 + $0x170] sm:$0xff]
        %v4439 = vld [vmem:[%s251 + $0x178] sm:$0xff]
        %4443 = vrot.lane.b32.xlu0 %v4437, 113
        %v4444 = vpop.permute.xlu0 %4443
        %4445 = vrot.lane.b32.xlu0 %v4438, 113
        %v4446 = vpop.permute.xlu0 %4445
        %4447 = vrot.lane.b32.xlu0 %v4439, 113
        %v4448 = vpop.permute.xlu0 %4447
        %v4449 = vsel %vm2311, %v4444, %v4446
        %v4450 = vsel %vm2311, %v4446, %v4448
        %v4453 = vadd.f32 %v4435, %v4449
        %v4454 = vadd.f32 %v4436, %v4450
        %v4455 = vld [vmem:[%s251 + $0x180] sm:$0xff]
        %v4456 = vld [vmem:[%s251 + $0x188] sm:$0xff]
        %v4457 = vld [vmem:[%s251 + $0x190] sm:$0xff]
        %4461 = vrot.lane.b32.xlu0 %v4455, 112
        %v4462 = vpop.permute.xlu0 %4461
        %4463 = vrot.lane.b32.xlu0 %v4456, 112
        %v4464 = vpop.permute.xlu0 %4463
        %4465 = vrot.lane.b32.xlu0 %v4457, 112
        %v4466 = vpop.permute.xlu0 %4465
        %v4467 = vsel %vm2330, %v4462, %v4464
        %v4468 = vsel %vm2330, %v4464, %v4466
        %v4471 = vadd.f32 %v4453, %v4467
        %v4472 = vadd.f32 %v4454, %v4468
        %v4473 = vld [vmem:[%s251 + $0x198] sm:$0xff]
        %v4474 = vld [vmem:[%s251 + $0x1a0] sm:$0xff]
        %v4475 = vld [vmem:[%s251 + $0x1a8] sm:$0xff]
        %4479 = vrot.lane.b32.xlu0 %v4473, 111
        %v4480 = vpop.permute.xlu0 %4479
        %4481 = vrot.lane.b32.xlu0 %v4474, 111
        %v4482 = vpop.permute.xlu0 %4481
        %4483 = vrot.lane.b32.xlu0 %v4475, 111
        %v4484 = vpop.permute.xlu0 %4483
        %v4485 = vsel %vm2349, %v4480, %v4482
        %v4486 = vsel %vm2349, %v4482, %v4484
        %v4489 = vadd.f32 %v4471, %v4485
        %v4490 = vadd.f32 %v4472, %v4486
        %v4491 = vld [vmem:[%s251 + $0x1b0] sm:$0xff]
        %v4492 = vld [vmem:[%s251 + $0x1b8] sm:$0xff]
        %v4493 = vld [vmem:[%s251 + $0x1c0] sm:$0xff]
        %4497 = vrot.lane.b32.xlu0 %v4491, 110
        %v4498 = vpop.permute.xlu0 %4497
        %4499 = vrot.lane.b32.xlu0 %v4492, 110
        %v4500 = vpop.permute.xlu0 %4499
        %4501 = vrot.lane.b32.xlu0 %v4493, 110
        %v4502 = vpop.permute.xlu0 %4501
        %v4503 = vsel %vm2368, %v4498, %v4500
        %v4504 = vsel %vm2368, %v4500, %v4502
        %v4507 = vadd.f32 %v4489, %v4503
        %v4508 = vadd.f32 %v4490, %v4504
        %v4509 = vld [vmem:[%s251 + $0x1c8] sm:$0xff]
        %v4510 = vld [vmem:[%s251 + $0x1d0] sm:$0xff]
        %v4511 = vld [vmem:[%s251 + $0x1d8] sm:$0xff]
        %4515 = vrot.lane.b32.xlu0 %v4509, 109
        %v4516 = vpop.permute.xlu0 %4515
        %4517 = vrot.lane.b32.xlu0 %v4510, 109
        %v4518 = vpop.permute.xlu0 %4517
        %4519 = vrot.lane.b32.xlu0 %v4511, 109
        %v4520 = vpop.permute.xlu0 %4519
        %v4521 = vsel %vm2387, %v4516, %v4518
        %v4522 = vsel %vm2387, %v4518, %v4520
        %v4525 = vadd.f32 %v4507, %v4521
        %v4526 = vadd.f32 %v4508, %v4522
        %v4527 = vld [vmem:[%s2] sm:$0xff]
        %4529 = vset.pattern.permute.xlu0 0
        %4530 = vperm.xlu0 %4529, %v4527
        %v4531 = vpop.permute.xlu0 %4530
        %v4533 = vadd.f32 %v4525, %v4531
        %v4534 = vadd.f32 %v4526, %v4531
        %v4535 = vmax.f32 %v4533, 0.0
        %v4536 = vmax.f32 %v4534, 0.0
        %4539 = vrot.lane.b32.xlu0 %v4535, 127
        %v4540 = vpop.permute.xlu0 %4539
        %4541 = vrot.lane.b32.xlu0 %v4536, 127
        %v4542 = vpop.permute.xlu0 %4541
        %v4543 = vsel %vm2045, %v4540, %v4542
        %v4546 = vmax.f32 %v4535, %v4543
        %v4547 = vmax.f32 %v4536, %v4542
        %4548 = vrot.lane.b32.xlu0 %v4535, 126
        %v4549 = vpop.permute.xlu0 %4548
        %4550 = vrot.lane.b32.xlu0 %v4536, 126
        %v4551 = vpop.permute.xlu0 %4550
        %v4552 = vsel %vm2064, %v4549, %v4551
        %v4555 = vmax.f32 %v4546, %v4552
        %v4556 = vmax.f32 %v4547, %v4551
        %v4557 = vld [vmem:[%s1] sm:$0xff]
        %v4558 = vld [vmem:[%s1 + $0x8] sm:$0xff]
        %v4559 = vld [vmem:[%s1 + $0x10] sm:$0xff]
        %v4560 = vld [vmem:[%s1 + $0x18] sm:$0xff]
        %v4561 = vld [vmem:[%s1 + $0x20] sm:$0xff]
        %v4562 = vld [vmem:[%s1 + $0x28] sm:$0xff]
        %v4563 = vld [vmem:[%s1 + $0x30] sm:$0xff]
        %v4564 = vld [vmem:[%s1 + $0x38] sm:$0xff]
        %v4565 = vld [vmem:[%s1 + $0x40] sm:$0xff]
        %v4566 = vld [vmem:[%s1 + $0x48] sm:$0xff]
        %v4567 = vld [vmem:[%s1 + $0x50] sm:$0xff]
        %v4568 = vld [vmem:[%s1 + $0x58] sm:$0xff]
        %v4569 = vld [vmem:[%s1 + $0x60] sm:$0xff]
        %v4570 = vld [vmem:[%s1 + $0x68] sm:$0xff]
        %v4571 = vld [vmem:[%s1 + $0x70] sm:$0xff]
        %v4572 = vld [vmem:[%s1 + $0x78] sm:$0xff]
        %v4573 = vld [vmem:[%s1 + $0x80] sm:$0xff]
        %v4574 = vld [vmem:[%s1 + $0x88] sm:$0xff]
        %v4575 = vld [vmem:[%s1 + $0x90] sm:$0xff]
        %v4576 = vld [vmem:[%s1 + $0x98] sm:$0xff]
        %v4577 = vld [vmem:[%s1 + $0xa0] sm:$0xff]
        %v4578 = vld [vmem:[%s1 + $0xa8] sm:$0xff]
        %v4579 = vld [vmem:[%s1 + $0xb0] sm:$0xff]
        %v4580 = vld [vmem:[%s1 + $0xb8] sm:$0xff]
        %v4581 = vld [vmem:[%s1 + $0xc0] sm:$0xff]
        %v4582 = vld [vmem:[%s1 + $0xc8] sm:$0xff]
        %v4583 = vld [vmem:[%s1 + $0xd0] sm:$0xff]
        %v4584 = vld [vmem:[%s1 + $0xd8] sm:$0xff]
        %v4585 = vld [vmem:[%s1 + $0xe0] sm:$0xff]
        %v4586 = vld [vmem:[%s1 + $0xe8] sm:$0xff]
        %v4587 = vld [vmem:[%s1 + $0xf0] sm:$0xff]
        %v4588 = vld [vmem:[%s1 + $0xf8] sm:$0xff]
        %v4589 = vld [vmem:[%s1 + $0x100] sm:$0xff]
        %v4590 = vld [vmem:[%s1 + $0x108] sm:$0xff]
        %v4591 = vld [vmem:[%s1 + $0x110] sm:$0xff]
        %v4592 = vld [vmem:[%s1 + $0x118] sm:$0xff]
        %v4593 = vld [vmem:[%s1 + $0x120] sm:$0xff]
        %v4594 = vld [vmem:[%s1 + $0x128] sm:$0xff]
        %v4595 = vld [vmem:[%s1 + $0x130] sm:$0xff]
        %v4596 = vld [vmem:[%s1 + $0x138] sm:$0xff]
        %v4597 = vld [vmem:[%s1 + $0x140] sm:$0xff]
        %v4598 = vld [vmem:[%s1 + $0x148] sm:$0xff]
        %v4599 = vld [vmem:[%s1 + $0x150] sm:$0xff]
        %v4600 = vld [vmem:[%s1 + $0x158] sm:$0xff]
        %v4601 = vld [vmem:[%s1 + $0x160] sm:$0xff]
        %v4602 = vld [vmem:[%s1 + $0x168] sm:$0xff]
        %v4603 = vld [vmem:[%s1 + $0x170] sm:$0xff]
        %v4604 = vld [vmem:[%s1 + $0x178] sm:$0xff]
        %v4605 = vld [vmem:[%s1 + $0x180] sm:$0xff]
        %v4606 = vld [vmem:[%s1 + $0x188] sm:$0xff]
        %v4607 = vld [vmem:[%s1 + $0x190] sm:$0xff]
        %v4608 = vld [vmem:[%s1 + $0x198] sm:$0xff]
        %v4609 = vld [vmem:[%s1 + $0x1a0] sm:$0xff]
        %v4610 = vld [vmem:[%s1 + $0x1a8] sm:$0xff]
        %v4611 = vld [vmem:[%s1 + $0x1b0] sm:$0xff]
        %v4612 = vld [vmem:[%s1 + $0x1b8] sm:$0xff]
        %v4613 = vld [vmem:[%s1 + $0x1c0] sm:$0xff]
        %v4614 = vld [vmem:[%s1 + $0x1c8] sm:$0xff]
        %v4615 = vld [vmem:[%s1 + $0x1d0] sm:$0xff]
        %v4616 = vld [vmem:[%s1 + $0x1d8] sm:$0xff]
        %s4617 = scalar_lea.vmem %s226, 1584
        %v4618 = vld [vmem:[%s4617] sm:$0xff]
        %v4619 = vld [vmem:[%s4617 + $0x8] sm:$0xff]
        %v4620 = vld [vmem:[%s4617 + $0x10] sm:$0xff]
        %v4621 = vld [vmem:[%s4617 + $0x18] sm:$0xff]
        %v4622 = vld [vmem:[%s4617 + $0x20] sm:$0xff]
        %v4623 = vld [vmem:[%s4617 + $0x28] sm:$0xff]
        %v4624 = vld [vmem:[%s4617 + $0x30] sm:$0xff]
        %v4625 = vld [vmem:[%s4617 + $0x38] sm:$0xff]
        %v4626 = vld [vmem:[%s4617 + $0x40] sm:$0xff]
        %v4627 = vld [vmem:[%s4617 + $0x48] sm:$0xff]
        %v4628 = vld [vmem:[%s4617 + $0x50] sm:$0xff]
        %v4629 = vld [vmem:[%s4617 + $0x58] sm:$0xff]
        %v4630 = vld [vmem:[%s4617 + $0x60] sm:$0xff]
        %v4631 = vld [vmem:[%s4617 + $0x68] sm:$0xff]
        %v4632 = vld [vmem:[%s4617 + $0x70] sm:$0xff]
        %v4633 = vld [vmem:[%s4617 + $0x78] sm:$0xff]
        %v4634 = vld [vmem:[%s4617 + $0x80] sm:$0xff]
        %v4635 = vld [vmem:[%s4617 + $0x88] sm:$0xff]
        %v4636 = vld [vmem:[%s4617 + $0x90] sm:$0xff]
        %v4637 = vld [vmem:[%s4617 + $0x98] sm:$0xff]
        %v4638 = vld [vmem:[%s4617 + $0xa0] sm:$0xff]
        %v4639 = vld [vmem:[%s4617 + $0xa8] sm:$0xff]
        %v4640 = vld [vmem:[%s4617 + $0xb0] sm:$0xff]
        %v4641 = vld [vmem:[%s4617 + $0xb8] sm:$0xff]
        %v4642 = vld [vmem:[%s4617 + $0xc0] sm:$0xff]
        %v4643 = vld [vmem:[%s4617 + $0xc8] sm:$0xff]
        %v4644 = vld [vmem:[%s4617 + $0xd0] sm:$0xff]
        %v4645 = vld [vmem:[%s4617 + $0xd8] sm:$0xff]
        %v4646 = vld [vmem:[%s4617 + $0xe0] sm:$0xff]
        %v4647 = vld [vmem:[%s4617 + $0xe8] sm:$0xff]
        %v4648 = vld [vmem:[%s4617 + $0xf0] sm:$0xff]
        %v4649 = vld [vmem:[%s4617 + $0xf8] sm:$0xff]
        %v4650 = vld [vmem:[%s4617 + $0x100] sm:$0xff]
        %v4651 = vld [vmem:[%s4617 + $0x108] sm:$0xff]
        %v4652 = vld [vmem:[%s4617 + $0x110] sm:$0xff]
        %v4653 = vld [vmem:[%s4617 + $0x118] sm:$0xff]
        %v4654 = vld [vmem:[%s4617 + $0x120] sm:$0xff]
        %v4655 = vld [vmem:[%s4617 + $0x128] sm:$0xff]
        %v4656 = vld [vmem:[%s4617 + $0x130] sm:$0xff]
        %v4657 = vld [vmem:[%s4617 + $0x138] sm:$0xff]
        %v4658 = vld [vmem:[%s4617 + $0x140] sm:$0xff]
        %v4659 = vld [vmem:[%s4617 + $0x148] sm:$0xff]
        %v4660 = vld [vmem:[%s4617 + $0x150] sm:$0xff]
        %v4661 = vld [vmem:[%s4617 + $0x158] sm:$0xff]
        %v4662 = vld [vmem:[%s4617 + $0x160] sm:$0xff]
        %v4663 = vld [vmem:[%s4617 + $0x168] sm:$0xff]
        %v4664 = vld [vmem:[%s4617 + $0x170] sm:$0xff]
        %v4665 = vld [vmem:[%s4617 + $0x178] sm:$0xff]
        %v4666 = vld [vmem:[%s4617 + $0x180] sm:$0xff]
        %v4667 = vld [vmem:[%s4617 + $0x188] sm:$0xff]
        %v4668 = vld [vmem:[%s4617 + $0x190] sm:$0xff]
        %v4669 = vld [vmem:[%s4617 + $0x198] sm:$0xff]
        %v4670 = vld [vmem:[%s4617 + $0x1a0] sm:$0xff]
        %v4671 = vld [vmem:[%s4617 + $0x1a8] sm:$0xff]
        %v4672 = vld [vmem:[%s4617 + $0x1b0] sm:$0xff]
        %v4673 = vld [vmem:[%s4617 + $0x1b8] sm:$0xff]
        %v4674 = vld [vmem:[%s4617 + $0x1c0] sm:$0xff]
        %v4675 = vld [vmem:[%s4617 + $0x1c8] sm:$0xff]
        %v4676 = vld [vmem:[%s4617 + $0x1d0] sm:$0xff]
        %v4677 = vld [vmem:[%s4617 + $0x1d8] sm:$0xff]
        %v4678 = vld [vmem:[%s4617 + $0x1e0] sm:$0xff]
        %v4679 = vld [vmem:[%s4617 + $0x1e8] sm:$0xff]
        %v4680 = vld [vmem:[%s4617 + $0x1f0] sm:$0xff]
        %v4681 = vld [vmem:[%s4617 + $0x1f8] sm:$0xff]
        %v4682 = vld [vmem:[%s4617 + $0x200] sm:$0xff]
        %v4683 = vld [vmem:[%s4617 + $0x208] sm:$0xff]
        %v4684 = vld [vmem:[%s4617 + $0x210] sm:$0xff]
        %v4685 = vld [vmem:[%s4617 + $0x218] sm:$0xff]
        %v4686 = vld [vmem:[%s4617 + $0x220] sm:$0xff]
        %v4687 = vld [vmem:[%s4617 + $0x228] sm:$0xff]
        %v4688 = vld [vmem:[%s4617 + $0x230] sm:$0xff]
        %v4689 = vld [vmem:[%s4617 + $0x238] sm:$0xff]
        %v4690 = vld [vmem:[%s4617 + $0x240] sm:$0xff]
        %v4691 = vld [vmem:[%s4617 + $0x248] sm:$0xff]
        %v4692 = vld [vmem:[%s4617 + $0x250] sm:$0xff]
        %v4693 = vld [vmem:[%s4617 + $0x258] sm:$0xff]
        %v4694 = vld [vmem:[%s4617 + $0x260] sm:$0xff]
        %v4695 = vld [vmem:[%s4617 + $0x268] sm:$0xff]
        %v4696 = vld [vmem:[%s4617 + $0x270] sm:$0xff]
        %v4697 = vld [vmem:[%s4617 + $0x278] sm:$0xff]
        %v4698 = vld [vmem:[%s4617 + $0x280] sm:$0xff]
        %v4699 = vld [vmem:[%s4617 + $0x288] sm:$0xff]
        %v4700 = vld [vmem:[%s4617 + $0x290] sm:$0xff]
        %v4701 = vld [vmem:[%s4617 + $0x298] sm:$0xff]
        %v4702 = vld [vmem:[%s4617 + $0x2a0] sm:$0xff]
        %v4703 = vld [vmem:[%s4617 + $0x2a8] sm:$0xff]
        %v4704 = vld [vmem:[%s4617 + $0x2b0] sm:$0xff]
        %v4705 = vld [vmem:[%s4617 + $0x2b8] sm:$0xff]
        %v4706 = vld [vmem:[%s4617 + $0x2c0] sm:$0xff]
        %v4707 = vld [vmem:[%s4617 + $0x2c8] sm:$0xff]
        %v4708 = vld [vmem:[%s4617 + $0x2d0] sm:$0xff]
        %v4709 = vld [vmem:[%s4617 + $0x2d8] sm:$0xff]
        %v4710 = vld [vmem:[%s4617 + $0x2e0] sm:$0xff]
        %v4711 = vld [vmem:[%s4617 + $0x2e8] sm:$0xff]
        %v4712 = vld [vmem:[%s4617 + $0x2f0] sm:$0xff]
        %v4713 = vld [vmem:[%s4617 + $0x2f8] sm:$0xff]
        %v4714 = vld [vmem:[%s4617 + $0x300] sm:$0x33]
        %v4715 = vld [vmem:[%s4617 + $0x308] sm:$0x33]
        %v4716 = vld [vmem:[%s4617 + $0x310] sm:$0x33]
        %v4777 = vunpack.c.l.b16 %v4557
        %v4778 = vunpack.c.h.b16 %v4557
        %v4779 = vunpack.c.l.b16 %v4558
        %v4780 = vunpack.c.h.b16 %v4558
        %v4781 = vunpack.c.l.b16 %v4559
        %v4782 = vunpack.c.h.b16 %v4559
        %v4783 = vunpack.c.l.b16 %v4560
        %v4784 = vunpack.c.h.b16 %v4560
        %v4785 = vunpack.c.l.b16 %v4561
        %v4786 = vunpack.c.h.b16 %v4561
        %v4787 = vunpack.c.l.b16 %v4562
        %v4788 = vunpack.c.h.b16 %v4562
        %v4789 = vunpack.c.l.b16 %v4563
        %v4790 = vunpack.c.h.b16 %v4563
        %v4791 = vunpack.c.l.b16 %v4564
        %v4792 = vunpack.c.h.b16 %v4564
        %v4793 = vunpack.c.l.b16 %v4565
        %v4794 = vunpack.c.h.b16 %v4565
        %v4795 = vunpack.c.l.b16 %v4566
        %v4796 = vunpack.c.h.b16 %v4566
        %v4797 = vunpack.c.l.b16 %v4567
        %v4798 = vunpack.c.h.b16 %v4567
        %v4799 = vunpack.c.l.b16 %v4568
        %v4800 = vunpack.c.h.b16 %v4568
        %v4801 = vunpack.c.l.b16 %v4569
        %v4802 = vunpack.c.h.b16 %v4569
        %v4803 = vunpack.c.l.b16 %v4570
        %v4804 = vunpack.c.h.b16 %v4570
        %v4805 = vunpack.c.l.b16 %v4571
        %v4806 = vunpack.c.h.b16 %v4571
        %v4807 = vunpack.c.l.b16 %v4572
        %v4808 = vunpack.c.h.b16 %v4572
        %v4809 = vunpack.c.l.b16 %v4573
        %v4810 = vunpack.c.h.b16 %v4573
        %v4811 = vunpack.c.l.b16 %v4574
        %v4812 = vunpack.c.h.b16 %v4574
        %v4813 = vunpack.c.l.b16 %v4575
        %v4814 = vunpack.c.h.b16 %v4575
        %v4815 = vunpack.c.l.b16 %v4576
        %v4816 = vunpack.c.h.b16 %v4576
        %v4817 = vunpack.c.l.b16 %v4577
        %v4818 = vunpack.c.h.b16 %v4577
        %v4819 = vunpack.c.l.b16 %v4578
        %v4820 = vunpack.c.h.b16 %v4578
        %v4821 = vunpack.c.l.b16 %v4579
        %v4822 = vunpack.c.h.b16 %v4579
        %v4823 = vunpack.c.l.b16 %v4580
        %v4824 = vunpack.c.h.b16 %v4580
        %v4825 = vunpack.c.l.b16 %v4581
        %v4826 = vunpack.c.h.b16 %v4581
        %v4827 = vunpack.c.l.b16 %v4582
        %v4828 = vunpack.c.h.b16 %v4582
        %v4829 = vunpack.c.l.b16 %v4583
        %v4830 = vunpack.c.h.b16 %v4583
        %v4831 = vunpack.c.l.b16 %v4584
        %v4832 = vunpack.c.h.b16 %v4584
        %v4833 = vunpack.c.l.b16 %v4585
        %v4834 = vunpack.c.h.b16 %v4585
        %v4835 = vunpack.c.l.b16 %v4586
        %v4836 = vunpack.c.h.b16 %v4586
        %v4837 = vunpack.c.l.b16 %v4587
        %v4838 = vunpack.c.h.b16 %v4587
        %v4839 = vunpack.c.l.b16 %v4588
        %v4840 = vunpack.c.h.b16 %v4588
        %v4841 = vunpack.c.l.b16 %v4589
        %v4842 = vunpack.c.h.b16 %v4589
        %v4843 = vunpack.c.l.b16 %v4590
        %v4844 = vunpack.c.h.b16 %v4590
        %v4845 = vunpack.c.l.b16 %v4591
        %v4846 = vunpack.c.h.b16 %v4591
        %v4847 = vunpack.c.l.b16 %v4592
        %v4848 = vunpack.c.h.b16 %v4592
        %v4849 = vunpack.c.l.b16 %v4593
        %v4850 = vunpack.c.h.b16 %v4593
        %v4851 = vunpack.c.l.b16 %v4594
        %v4852 = vunpack.c.h.b16 %v4594
        %v4853 = vunpack.c.l.b16 %v4595
        %v4854 = vunpack.c.h.b16 %v4595
        %v4855 = vunpack.c.l.b16 %v4596
        %v4856 = vunpack.c.h.b16 %v4596
        %v4857 = vunpack.c.l.b16 %v4597
        %v4858 = vunpack.c.h.b16 %v4597
        %v4859 = vunpack.c.l.b16 %v4598
        %v4860 = vunpack.c.h.b16 %v4598
        %v4861 = vunpack.c.l.b16 %v4599
        %v4862 = vunpack.c.h.b16 %v4599
        %v4863 = vunpack.c.l.b16 %v4600
        %v4864 = vunpack.c.h.b16 %v4600
        %v4865 = vunpack.c.l.b16 %v4601
        %v4866 = vunpack.c.h.b16 %v4601
        %v4867 = vunpack.c.l.b16 %v4602
        %v4868 = vunpack.c.h.b16 %v4602
        %v4869 = vunpack.c.l.b16 %v4603
        %v4870 = vunpack.c.h.b16 %v4603
        %v4871 = vunpack.c.l.b16 %v4604
        %v4872 = vunpack.c.h.b16 %v4604
        %v4873 = vunpack.c.l.b16 %v4605
        %v4874 = vunpack.c.h.b16 %v4605
        %v4875 = vunpack.c.l.b16 %v4606
        %v4876 = vunpack.c.h.b16 %v4606
        %v4877 = vunpack.c.l.b16 %v4607
        %v4878 = vunpack.c.h.b16 %v4607
        %v4879 = vunpack.c.l.b16 %v4608
        %v4880 = vunpack.c.h.b16 %v4608
        %v4881 = vunpack.c.l.b16 %v4609
        %v4882 = vunpack.c.h.b16 %v4609
        %v4883 = vunpack.c.l.b16 %v4610
        %v4884 = vunpack.c.h.b16 %v4610
        %v4885 = vunpack.c.l.b16 %v4611
        %v4886 = vunpack.c.h.b16 %v4611
        %v4887 = vunpack.c.l.b16 %v4612
        %v4888 = vunpack.c.h.b16 %v4612
        %v4889 = vunpack.c.l.b16 %v4613
        %v4890 = vunpack.c.h.b16 %v4613
        %v4891 = vunpack.c.l.b16 %v4614
        %v4892 = vunpack.c.h.b16 %v4614
        %v4893 = vunpack.c.l.b16 %v4615
        %v4894 = vunpack.c.h.b16 %v4615
        %v4895 = vunpack.c.l.b16 %v4616
        %v4896 = vunpack.c.h.b16 %v4616
        %v4897 = vpack.c.b16 %v4783, %v4777
        %v4898 = vpack.c.b16 %v4784, %v4778
        %v4899 = vpack.c.b16 %v4785, %v4779
        %v4900 = vpack.c.b16 %v4786, %v4780
        %v4901 = vpack.c.b16 %v4787, %v4781
        %v4902 = vpack.c.b16 %v4788, %v4782
        %v4903 = vpack.c.b16 %v4795, %v4789
        %v4904 = vpack.c.b16 %v4796, %v4790
        %v4905 = vpack.c.b16 %v4797, %v4791
        %v4906 = vpack.c.b16 %v4798, %v4792
        %v4907 = vpack.c.b16 %v4799, %v4793
        %v4908 = vpack.c.b16 %v4800, %v4794
        %v4909 = vpack.c.b16 %v4807, %v4801
        %v4910 = vpack.c.b16 %v4808, %v4802
        %v4911 = vpack.c.b16 %v4809, %v4803
        %v4912 = vpack.c.b16 %v4810, %v4804
        %v4913 = vpack.c.b16 %v4811, %v4805
        %v4914 = vpack.c.b16 %v4812, %v4806
        %v4915 = vpack.c.b16 %v4819, %v4813
        %v4916 = vpack.c.b16 %v4820, %v4814
        %v4917 = vpack.c.b16 %v4821, %v4815
        %v4918 = vpack.c.b16 %v4822, %v4816
        %v4919 = vpack.c.b16 %v4823, %v4817
        %v4920 = vpack.c.b16 %v4824, %v4818
        %v4921 = vpack.c.b16 %v4831, %v4825
        %v4922 = vpack.c.b16 %v4832, %v4826
        %v4923 = vpack.c.b16 %v4833, %v4827
        %v4924 = vpack.c.b16 %v4834, %v4828
        %v4925 = vpack.c.b16 %v4835, %v4829
        %v4926 = vpack.c.b16 %v4836, %v4830
        %v4927 = vpack.c.b16 %v4843, %v4837
        %v4928 = vpack.c.b16 %v4844, %v4838
        %v4929 = vpack.c.b16 %v4845, %v4839
        %v4930 = vpack.c.b16 %v4846, %v4840
        %v4931 = vpack.c.b16 %v4847, %v4841
        %v4932 = vpack.c.b16 %v4848, %v4842
        %v4933 = vpack.c.b16 %v4855, %v4849
        %v4934 = vpack.c.b16 %v4856, %v4850
        %v4935 = vpack.c.b16 %v4857, %v4851
        %v4936 = vpack.c.b16 %v4858, %v4852
        %v4937 = vpack.c.b16 %v4859, %v4853
        %v4938 = vpack.c.b16 %v4860, %v4854
        %v4939 = vpack.c.b16 %v4867, %v4861
        %v4940 = vpack.c.b16 %v4868, %v4862
        %v4941 = vpack.c.b16 %v4869, %v4863
        %v4942 = vpack.c.b16 %v4870, %v4864
        %v4943 = vpack.c.b16 %v4871, %v4865
        %v4944 = vpack.c.b16 %v4872, %v4866
        %v4945 = vpack.c.b16 %v4879, %v4873
        %v4946 = vpack.c.b16 %v4880, %v4874
        %v4947 = vpack.c.b16 %v4881, %v4875
        %v4948 = vpack.c.b16 %v4882, %v4876
        %v4949 = vpack.c.b16 %v4883, %v4877
        %v4950 = vpack.c.b16 %v4884, %v4878
        %v4951 = vpack.c.b16 %v4891, %v4885
        %v4952 = vpack.c.b16 %v4892, %v4886
        %v4953 = vpack.c.b16 %v4893, %v4887
        %v4954 = vpack.c.b16 %v4894, %v4888
        %v4955 = vpack.c.b16 %v4895, %v4889
        %v4956 = vpack.c.b16 %v4896, %v4890
        %v5116 = vunpack.c.l.b16 %v4618
        %v5117 = vunpack.c.h.b16 %v4618
        %v5118 = vunpack.c.l.b16 %v4619
        %v5119 = vunpack.c.h.b16 %v4619
        %v5120 = vunpack.c.l.b16 %v4620
        %v5121 = vunpack.c.h.b16 %v4620
        %v5122 = vunpack.c.l.b16 %v4621
        %v5123 = vunpack.c.h.b16 %v4621
        %v5124 = vunpack.c.l.b16 %v4622
        %v5125 = vunpack.c.h.b16 %v4622
        %v5126 = vunpack.c.l.b16 %v4623
        %v5127 = vunpack.c.h.b16 %v4623
        %v5128 = vunpack.c.l.b16 %v4624
        %v5129 = vunpack.c.h.b16 %v4624
        %v5130 = vunpack.c.l.b16 %v4625
        %v5131 = vunpack.c.h.b16 %v4625
        %v5132 = vunpack.c.l.b16 %v4626
        %v5133 = vunpack.c.h.b16 %v4626
        %v5134 = vunpack.c.l.b16 %v4627
        %v5135 = vunpack.c.h.b16 %v4627
        %v5136 = vunpack.c.l.b16 %v4628
        %v5137 = vunpack.c.h.b16 %v4628
        %v5138 = vunpack.c.l.b16 %v4629
        %v5139 = vunpack.c.h.b16 %v4629
        %v5140 = vunpack.c.l.b16 %v4630
        %v5141 = vunpack.c.h.b16 %v4630
        %v5142 = vunpack.c.l.b16 %v4631
        %v5143 = vunpack.c.h.b16 %v4631
        %v5144 = vunpack.c.l.b16 %v4632
        %v5145 = vunpack.c.h.b16 %v4632
        %v5146 = vunpack.c.l.b16 %v4633
        %v5147 = vunpack.c.h.b16 %v4633
        %v5148 = vunpack.c.l.b16 %v4634
        %v5149 = vunpack.c.h.b16 %v4634
        %v5150 = vunpack.c.l.b16 %v4635
        %v5151 = vunpack.c.h.b16 %v4635
        %v5152 = vunpack.c.l.b16 %v4636
        %v5153 = vunpack.c.h.b16 %v4636
        %v5154 = vunpack.c.l.b16 %v4637
        %v5155 = vunpack.c.h.b16 %v4637
        %v5156 = vunpack.c.l.b16 %v4638
        %v5157 = vunpack.c.h.b16 %v4638
        %v5158 = vunpack.c.l.b16 %v4639
        %v5159 = vunpack.c.h.b16 %v4639
        %v5160 = vunpack.c.l.b16 %v4640
        %v5161 = vunpack.c.h.b16 %v4640
        %v5162 = vunpack.c.l.b16 %v4641
        %v5163 = vunpack.c.h.b16 %v4641
        %v5164 = vunpack.c.l.b16 %v4642
        %v5165 = vunpack.c.h.b16 %v4642
        %v5166 = vunpack.c.l.b16 %v4643
        %v5167 = vunpack.c.h.b16 %v4643
        %v5168 = vunpack.c.l.b16 %v4644
        %v5169 = vunpack.c.h.b16 %v4644
        %v5170 = vunpack.c.l.b16 %v4645
        %v5171 = vunpack.c.h.b16 %v4645
        %v5172 = vunpack.c.l.b16 %v4646
        %v5173 = vunpack.c.h.b16 %v4646
        %v5174 = vunpack.c.l.b16 %v4647
        %v5175 = vunpack.c.h.b16 %v4647
        %v5176 = vunpack.c.l.b16 %v4648
        %v5177 = vunpack.c.h.b16 %v4648
        %v5178 = vunpack.c.l.b16 %v4649
        %v5179 = vunpack.c.h.b16 %v4649
        %v5180 = vunpack.c.l.b16 %v4650
        %v5181 = vunpack.c.h.b16 %v4650
        %v5182 = vunpack.c.l.b16 %v4651
        %v5183 = vunpack.c.h.b16 %v4651
        %v5184 = vunpack.c.l.b16 %v4652
        %v5185 = vunpack.c.h.b16 %v4652
        %v5186 = vunpack.c.l.b16 %v4653
        %v5187 = vunpack.c.h.b16 %v4653
        %v5188 = vunpack.c.l.b16 %v4654
        %v5189 = vunpack.c.h.b16 %v4654
        %v5190 = vunpack.c.l.b16 %v4655
        %v5191 = vunpack.c.h.b16 %v4655
        %v5192 = vunpack.c.l.b16 %v4656
        %v5193 = vunpack.c.h.b16 %v4656
        %v5194 = vunpack.c.l.b16 %v4657
        %v5195 = vunpack.c.h.b16 %v4657
        %v5196 = vunpack.c.l.b16 %v4658
        %v5197 = vunpack.c.h.b16 %v4658
        %v5198 = vunpack.c.l.b16 %v4659
        %v5199 = vunpack.c.h.b16 %v4659
        %v5200 = vunpack.c.l.b16 %v4660
        %v5201 = vunpack.c.h.b16 %v4660
        %v5202 = vunpack.c.l.b16 %v4661
        %v5203 = vunpack.c.h.b16 %v4661
        %v5204 = vunpack.c.l.b16 %v4662
        %v5205 = vunpack.c.h.b16 %v4662
        %v5206 = vunpack.c.l.b16 %v4663
        %v5207 = vunpack.c.h.b16 %v4663
        %v5208 = vunpack.c.l.b16 %v4664
        %v5209 = vunpack.c.h.b16 %v4664
        %v5210 = vunpack.c.l.b16 %v4665
        %v5211 = vunpack.c.h.b16 %v4665
        %v5212 = vunpack.c.l.b16 %v4666
        %v5213 = vunpack.c.h.b16 %v4666
        %v5214 = vunpack.c.l.b16 %v4667
        %v5215 = vunpack.c.h.b16 %v4667
        %v5216 = vunpack.c.l.b16 %v4668
        %v5217 = vunpack.c.h.b16 %v4668
        %v5218 = vunpack.c.l.b16 %v4669
        %v5219 = vunpack.c.h.b16 %v4669
        %v5220 = vunpack.c.l.b16 %v4670
        %v5221 = vunpack.c.h.b16 %v4670
        %v5222 = vunpack.c.l.b16 %v4671
        %v5223 = vunpack.c.h.b16 %v4671
        %v5224 = vunpack.c.l.b16 %v4672
        %v5225 = vunpack.c.h.b16 %v4672
        %v5226 = vunpack.c.l.b16 %v4673
        %v5227 = vunpack.c.h.b16 %v4673
        %v5228 = vunpack.c.l.b16 %v4674
        %v5229 = vunpack.c.h.b16 %v4674
        %v5230 = vunpack.c.l.b16 %v4675
        %v5231 = vunpack.c.h.b16 %v4675
        %v5232 = vunpack.c.l.b16 %v4676
        %v5233 = vunpack.c.h.b16 %v4676
        %v5234 = vunpack.c.l.b16 %v4677
        %v5235 = vunpack.c.h.b16 %v4677
        %v5236 = vunpack.c.l.b16 %v4678
        %v5237 = vunpack.c.h.b16 %v4678
        %v5238 = vunpack.c.l.b16 %v4679
        %v5239 = vunpack.c.h.b16 %v4679
        %v5240 = vunpack.c.l.b16 %v4680
        %v5241 = vunpack.c.h.b16 %v4680
        %v5242 = vunpack.c.l.b16 %v4681
        %v5243 = vunpack.c.h.b16 %v4681
        %v5244 = vunpack.c.l.b16 %v4682
        %v5245 = vunpack.c.h.b16 %v4682
        %v5246 = vunpack.c.l.b16 %v4683
        %v5247 = vunpack.c.h.b16 %v4683
        %v5248 = vunpack.c.l.b16 %v4684
        %v5249 = vunpack.c.h.b16 %v4684
        %v5250 = vunpack.c.l.b16 %v4685
        %v5251 = vunpack.c.h.b16 %v4685
        %v5252 = vunpack.c.l.b16 %v4686
        %v5253 = vunpack.c.h.b16 %v4686
        %v5254 = vunpack.c.l.b16 %v4687
        %v5255 = vunpack.c.h.b16 %v4687
        %v5256 = vunpack.c.l.b16 %v4688
        %v5257 = vunpack.c.h.b16 %v4688
        %v5258 = vunpack.c.l.b16 %v4689
        %v5259 = vunpack.c.h.b16 %v4689
        %v5260 = vunpack.c.l.b16 %v4690
        %v5261 = vunpack.c.h.b16 %v4690
        %v5262 = vunpack.c.l.b16 %v4691
        %v5263 = vunpack.c.h.b16 %v4691
        %v5264 = vunpack.c.l.b16 %v4692
        %v5265 = vunpack.c.h.b16 %v4692
        %v5266 = vunpack.c.l.b16 %v4693
        %v5267 = vunpack.c.h.b16 %v4693
        %v5268 = vunpack.c.l.b16 %v4694
        %v5269 = vunpack.c.h.b16 %v4694
        %v5270 = vunpack.c.l.b16 %v4695
        %v5271 = vunpack.c.h.b16 %v4695
        %v5272 = vunpack.c.l.b16 %v4696
        %v5273 = vunpack.c.h.b16 %v4696
        %v5274 = vunpack.c.l.b16 %v4697
        %v5275 = vunpack.c.h.b16 %v4697
        %v5276 = vunpack.c.l.b16 %v4698
        %v5277 = vunpack.c.h.b16 %v4698
        %v5278 = vunpack.c.l.b16 %v4699
        %v5279 = vunpack.c.h.b16 %v4699
        %v5280 = vunpack.c.l.b16 %v4700
        %v5281 = vunpack.c.h.b16 %v4700
        %v5282 = vunpack.c.l.b16 %v4701
        %v5283 = vunpack.c.h.b16 %v4701
        %v5284 = vunpack.c.l.b16 %v4702
        %v5285 = vunpack.c.h.b16 %v4702
        %v5286 = vunpack.c.l.b16 %v4703
        %v5287 = vunpack.c.h.b16 %v4703
        %v5288 = vunpack.c.l.b16 %v4704
        %v5289 = vunpack.c.h.b16 %v4704
        %v5290 = vunpack.c.l.b16 %v4705
        %v5291 = vunpack.c.h.b16 %v4705
        %v5292 = vunpack.c.l.b16 %v4706
        %v5293 = vunpack.c.h.b16 %v4706
        %v5294 = vunpack.c.l.b16 %v4707
        %v5295 = vunpack.c.h.b16 %v4707
        %v5296 = vunpack.c.l.b16 %v4708
        %v5297 = vunpack.c.h.b16 %v4708
        %v5298 = vunpack.c.l.b16 %v4709
        %v5299 = vunpack.c.h.b16 %v4709
        %v5300 = vunpack.c.l.b16 %v4710
        %v5301 = vunpack.c.h.b16 %v4710
        %v5302 = vunpack.c.l.b16 %v4711
        %v5303 = vunpack.c.h.b16 %v4711
        %v5304 = vunpack.c.l.b16 %v4712
        %v5305 = vunpack.c.h.b16 %v4712
        %v5306 = vunpack.c.l.b16 %v4713
        %v5307 = vunpack.c.h.b16 %v4713
        %v5308 = vunpack.c.l.b16 %v4714
        %v5309 = vunpack.c.h.b16 %v4714
        %v5310 = vunpack.c.l.b16 %v4715
        %v5311 = vunpack.c.h.b16 %v4715
        %v5312 = vunpack.c.l.b16 %v4716
        %v5313 = vunpack.c.h.b16 %v4716
        %v5314 = vpack.c.b16 %v5122, %v5116
        %v5315 = vpack.c.b16 %v5123, %v5117
        %v5316 = vpack.c.b16 %v5124, %v5118
        %v5317 = vpack.c.b16 %v5125, %v5119
        %v5318 = vpack.c.b16 %v5126, %v5120
        %v5319 = vpack.c.b16 %v5127, %v5121
        %v5320 = vpack.c.b16 %v5134, %v5128
        %v5321 = vpack.c.b16 %v5135, %v5129
        %v5322 = vpack.c.b16 %v5136, %v5130
        %v5323 = vpack.c.b16 %v5137, %v5131
        %v5324 = vpack.c.b16 %v5138, %v5132
        %v5325 = vpack.c.b16 %v5139, %v5133
        %v5326 = vpack.c.b16 %v5146, %v5140
        %v5327 = vpack.c.b16 %v5147, %v5141
        %v5328 = vpack.c.b16 %v5148, %v5142
        %v5329 = vpack.c.b16 %v5149, %v5143
        %v5330 = vpack.c.b16 %v5150, %v5144
        %v5331 = vpack.c.b16 %v5151, %v5145
        %v5332 = vpack.c.b16 %v5158, %v5152
        %v5333 = vpack.c.b16 %v5159, %v5153
        %v5334 = vpack.c.b16 %v5160, %v5154
        %v5335 = vpack.c.b16 %v5161, %v5155
        %v5336 = vpack.c.b16 %v5162, %v5156
        %v5337 = vpack.c.b16 %v5163, %v5157
        %v5338 = vpack.c.b16 %v5170, %v5164
        %v5339 = vpack.c.b16 %v5171, %v5165
        %v5340 = vpack.c.b16 %v5172, %v5166
        %v5341 = vpack.c.b16 %v5173, %v5167
        %v5342 = vpack.c.b16 %v5174, %v5168
        %v5343 = vpack.c.b16 %v5175, %v5169
        %v5344 = vpack.c.b16 %v5182, %v5176
        %v5345 = vpack.c.b16 %v5183, %v5177
        %v5346 = vpack.c.b16 %v5184, %v5178
        %v5347 = vpack.c.b16 %v5185, %v5179
        %v5348 = vpack.c.b16 %v5186, %v5180
        %v5349 = vpack.c.b16 %v5187, %v5181
        %v5350 = vpack.c.b16 %v5194, %v5188
        %v5351 = vpack.c.b16 %v5195, %v5189
        %v5352 = vpack.c.b16 %v5196, %v5190
        %v5353 = vpack.c.b16 %v5197, %v5191
        %v5354 = vpack.c.b16 %v5198, %v5192
        %v5355 = vpack.c.b16 %v5199, %v5193
        %v5356 = vpack.c.b16 %v5206, %v5200
        %v5357 = vpack.c.b16 %v5207, %v5201
        %v5358 = vpack.c.b16 %v5208, %v5202
        %v5359 = vpack.c.b16 %v5209, %v5203
        %v5360 = vpack.c.b16 %v5210, %v5204
        %v5361 = vpack.c.b16 %v5211, %v5205
        %v5362 = vpack.c.b16 %v5218, %v5212
        %v5363 = vpack.c.b16 %v5219, %v5213
        %v5364 = vpack.c.b16 %v5220, %v5214
        %v5365 = vpack.c.b16 %v5221, %v5215
        %v5366 = vpack.c.b16 %v5222, %v5216
        %v5367 = vpack.c.b16 %v5223, %v5217
        %v5368 = vpack.c.b16 %v5230, %v5224
        %v5369 = vpack.c.b16 %v5231, %v5225
        %v5370 = vpack.c.b16 %v5232, %v5226
        %v5371 = vpack.c.b16 %v5233, %v5227
        %v5372 = vpack.c.b16 %v5234, %v5228
        %v5373 = vpack.c.b16 %v5235, %v5229
        %v5374 = vpack.c.b16 %v5242, %v5236
        %v5375 = vpack.c.b16 %v5243, %v5237
        %v5376 = vpack.c.b16 %v5244, %v5238
        %v5377 = vpack.c.b16 %v5245, %v5239
        %v5378 = vpack.c.b16 %v5246, %v5240
        %v5379 = vpack.c.b16 %v5247, %v5241
        %v5380 = vpack.c.b16 %v5254, %v5248
        %v5381 = vpack.c.b16 %v5255, %v5249
        %v5382 = vpack.c.b16 %v5256, %v5250
        %v5383 = vpack.c.b16 %v5257, %v5251
        %v5384 = vpack.c.b16 %v5258, %v5252
        %v5385 = vpack.c.b16 %v5259, %v5253
        %v5386 = vpack.c.b16 %v5266, %v5260
        %v5387 = vpack.c.b16 %v5267, %v5261
        %v5388 = vpack.c.b16 %v5268, %v5262
        %v5389 = vpack.c.b16 %v5269, %v5263
        %v5390 = vpack.c.b16 %v5270, %v5264
        %v5391 = vpack.c.b16 %v5271, %v5265
        %v5392 = vpack.c.b16 %v5278, %v5272
        %v5393 = vpack.c.b16 %v5279, %v5273
        %v5394 = vpack.c.b16 %v5280, %v5274
        %v5395 = vpack.c.b16 %v5281, %v5275
        %v5396 = vpack.c.b16 %v5282, %v5276
        %v5397 = vpack.c.b16 %v5283, %v5277
        %v5398 = vpack.c.b16 %v5290, %v5284
        %v5399 = vpack.c.b16 %v5291, %v5285
        %v5400 = vpack.c.b16 %v5292, %v5286
        %v5401 = vpack.c.b16 %v5293, %v5287
        %v5402 = vpack.c.b16 %v5294, %v5288
        %v5403 = vpack.c.b16 %v5295, %v5289
        %v5404 = vpack.c.b16 %v5302, %v5296
        %v5405 = vpack.c.b16 %v5303, %v5297
        %v5406 = vpack.c.b16 %v5304, %v5298
        %v5407 = vpack.c.b16 %v5305, %v5299
        %v5408 = vpack.c.b16 %v5306, %v5300
        %v5409 = vpack.c.b16 %v5307, %v5301
        %v5410 = vpack.c.b16 %v5308, %v5308
        %v5411 = vpack.c.b16 %v5309, %v5309
        %v5412 = vpack.c.b16 %v5310, %v5310
        %v5413 = vpack.c.b16 %v5311, %v5311
        %v5414 = vpack.c.b16 %v5312, %v5312
        %v5415 = vpack.c.b16 %v5313, %v5313
        %5518 = vmatprep.subr.bf16.mxu0 %v5357
        %5519 = vmatpush1.bf16.xpose.msra.mxu0 %v5356
        %5520 = vmatprep.subr.bf16.mxu0 %v5351
        %5521 = vmatpush1.bf16.xpose.msra.mxu0 %v5350
        %5522 = vmatprep.subr.bf16.mxu0 %v5345
        %5523 = vmatpush1.bf16.xpose.msra.mxu0 %v5344
        %5524 = vmatprep.subr.bf16.mxu0 %v5339
        %5525 = vmatpush1.bf16.xpose.msra.mxu0 %v5338
        %5526 = vmatprep.subr.bf16.mxu0 %v5333
        %5527 = vmatpush1.bf16.xpose.msra.mxu0 %v5332
        %5528 = vmatprep.subr.bf16.mxu0 %v5327
        %5529 = vmatpush1.bf16.xpose.msra.mxu0 %v5326
        %5530 = vmatprep.subr.bf16.mxu0 %v5321
        %5531 = vmatpush1.bf16.xpose.msra.mxu0 %v5320
        %5532 = vmatprep.subr.bf16.mxu0 %v5315
        %5533 = vmatpush1.bf16.xpose.msra.mxu0 %v5314
        %5534 = vmatprep.subr.bf16.mxu0 %v5405
        %5535 = vmatpush2.bf16.xpose.msra.mxu0 %v5404
        %5536 = vmatprep.subr.bf16.mxu0 %v5399
        %5537 = vmatpush2.bf16.xpose.msra.mxu0 %v5398
        %5538 = vmatprep.subr.bf16.mxu0 %v5393
        %5539 = vmatpush2.bf16.xpose.msra.mxu0 %v5392
        %5540 = vmatprep.subr.bf16.mxu0 %v5387
        %5541 = vmatpush2.bf16.xpose.msra.mxu0 %v5386
        %5542 = vmatprep.subr.bf16.mxu0 %v5381
        %5543 = vmatpush2.bf16.xpose.msra.mxu0 %v5380
        %5544 = vmatprep.subr.bf16.mxu0 %v5375
        %5545 = vmatpush2.bf16.xpose.msra.mxu0 %v5374
        %5546 = vmatprep.subr.bf16.mxu0 %v5369
        %5547 = vmatpush2.bf16.xpose.msra.mxu0 %v5368
        %5548 = vmatprep.subr.bf16.mxu0 %v5363
        %5549 = vmatpush2.bf16.xpose.msra.mxu0 %v5362
        %5550 = vmatprep.mubr.bf16.mxu0 %v4898
        %5551 = vmatmul.mubr.bf16.gmra.mxu0 %v4897
        %v5552 = vpop.f32.mrf.mxu0
        %v5553 = vadd.f32 0.0, %v5552
        %v5554 = vpop.f32.mrf.mxu0
        %v5555 = vadd.f32 0.0, %v5554
        %v5556 = vpop.f32.mrf.mxu0
        %v5557 = vadd.f32 0.0, %v5556
        %v5558 = vpop.f32.mrf.mxu0
        %v5559 = vadd.f32 0.0, %v5558
        %5560 = vmatprep.mubr.bf16.mxu0 %v4904
        %5561 = vmatmul.mubr.bf16.gmra.mxu0 %v4903
        %v5562 = vpop.f32.mrf.mxu0
        %v5563 = vadd.f32 0.0, %v5562
        %v5564 = vpop.f32.mrf.mxu0
        %v5565 = vadd.f32 0.0, %v5564
        %v5566 = vpop.f32.mrf.mxu0
        %v5567 = vadd.f32 0.0, %v5566
        %v5568 = vpop.f32.mrf.mxu0
        %v5569 = vadd.f32 0.0, %v5568
        %5570 = vmatprep.mubr.bf16.mxu0 %v4910
        %5571 = vmatmul.mubr.bf16.gmra.mxu0 %v4909
        %v5572 = vpop.f32.mrf.mxu0
        %v5573 = vadd.f32 0.0, %v5572
        %v5574 = vpop.f32.mrf.mxu0
        %v5575 = vadd.f32 0.0, %v5574
        %v5576 = vpop.f32.mrf.mxu0
        %v5577 = vadd.f32 0.0, %v5576
        %v5578 = vpop.f32.mrf.mxu0
        %v5579 = vadd.f32 0.0, %v5578
        %5580 = vmatprep.mubr.bf16.mxu0 %v4916
        %5581 = vmatmul.mubr.bf16.gmra.mxu0 %v4915
        %v5582 = vpop.f32.mrf.mxu0
        %v5583 = vadd.f32 0.0, %v5582
        %v5584 = vpop.f32.mrf.mxu0
        %v5585 = vadd.f32 0.0, %v5584
        %v5586 = vpop.f32.mrf.mxu0
        %v5587 = vadd.f32 0.0, %v5586
        %v5588 = vpop.f32.mrf.mxu0
        %v5589 = vadd.f32 0.0, %v5588
        %5590 = vmatprep.mubr.bf16.mxu0 %v4922
        %5591 = vmatmul.mubr.bf16.gmra.mxu0 %v4921
        %v5592 = vpop.f32.mrf.mxu0
        %v5593 = vadd.f32 0.0, %v5592
        %v5594 = vpop.f32.mrf.mxu0
        %v5595 = vadd.f32 0.0, %v5594
        %v5596 = vpop.f32.mrf.mxu0
        %v5597 = vadd.f32 0.0, %v5596
        %v5598 = vpop.f32.mrf.mxu0
        %v5599 = vadd.f32 0.0, %v5598
        %5600 = vmatprep.mubr.bf16.mxu0 %v4928
        %5601 = vmatmul.mubr.bf16.gmra.mxu0 %v4927
        %v5602 = vpop.f32.mrf.mxu0
        %v5603 = vadd.f32 0.0, %v5602
        %v5604 = vpop.f32.mrf.mxu0
        %v5605 = vadd.f32 0.0, %v5604
        %v5606 = vpop.f32.mrf.mxu0
        %v5607 = vadd.f32 0.0, %v5606
        %v5608 = vpop.f32.mrf.mxu0
        %v5609 = vadd.f32 0.0, %v5608
        %5610 = vmatprep.mubr.bf16.mxu0 %v4934
        %5611 = vmatmul.mubr.bf16.gmra.mxu0 %v4933
        %v5612 = vpop.f32.mrf.mxu0
        %v5613 = vadd.f32 0.0, %v5612
        %v5614 = vpop.f32.mrf.mxu0
        %v5615 = vadd.f32 0.0, %v5614
        %v5616 = vpop.f32.mrf.mxu0
        %v5617 = vadd.f32 0.0, %v5616
        %v5618 = vpop.f32.mrf.mxu0
        %v5619 = vadd.f32 0.0, %v5618
        %5620 = vmatprep.mubr.bf16.mxu0 %v4940
        %5621 = vmatmul.mubr.bf16.gmra.mxu0 %v4939
        %v5622 = vpop.f32.mrf.mxu0
        %v5623 = vadd.f32 0.0, %v5622
        %v5624 = vpop.f32.mrf.mxu0
        %v5625 = vadd.f32 0.0, %v5624
        %v5626 = vpop.f32.mrf.mxu0
        %v5627 = vadd.f32 0.0, %v5626
        %v5628 = vpop.f32.mrf.mxu0
        %v5629 = vadd.f32 0.0, %v5628
        %5630 = vmatprep.mubr.bf16.mxu0 %v4946
        %5631 = vmatmul.mubr.bf16.gmra.mxu0 %v4945
        %v5632 = vpop.f32.mrf.mxu0
        %v5633 = vadd.f32 0.0, %v5632
        %v5634 = vpop.f32.mrf.mxu0
        %v5635 = vadd.f32 0.0, %v5634
        %v5636 = vpop.f32.mrf.mxu0
        %v5637 = vadd.f32 0.0, %v5636
        %v5638 = vpop.f32.mrf.mxu0
        %v5639 = vadd.f32 0.0, %v5638
        %5640 = vmatprep.mubr.bf16.mxu0 %v4952
        %5641 = vmatmul.mubr.bf16.gmra.mxu0 %v4951
        %v5642 = vpop.f32.mrf.mxu0
        %v5643 = vadd.f32 0.0, %v5642
        %v5644 = vpop.f32.mrf.mxu0
        %v5645 = vadd.f32 0.0, %v5644
        %v5646 = vpop.f32.mrf.mxu0
        %v5647 = vadd.f32 0.0, %v5646
        %v5648 = vpop.f32.mrf.mxu0
        %v5649 = vadd.f32 0.0, %v5648
        %5650 = vdwg.mxu0
        %5651 = vmatprep.subr.bf16.mxu0 %v5359
        %5652 = vmatpush1.bf16.xpose.msra.mxu0 %v5358
        %5653 = vmatprep.subr.bf16.mxu0 %v5353
        %5654 = vmatpush1.bf16.xpose.msra.mxu0 %v5352
        %5655 = vmatprep.subr.bf16.mxu0 %v5347
        %5656 = vmatpush1.bf16.xpose.msra.mxu0 %v5346
        %5657 = vmatprep.subr.bf16.mxu0 %v5341
        %5658 = vmatpush1.bf16.xpose.msra.mxu0 %v5340
        %5659 = vmatprep.subr.bf16.mxu0 %v5335
        %5660 = vmatpush1.bf16.xpose.msra.mxu0 %v5334
        %5661 = vmatprep.subr.bf16.mxu0 %v5329
        %5662 = vmatpush1.bf16.xpose.msra.mxu0 %v5328
        %5663 = vmatprep.subr.bf16.mxu0 %v5323
        %5664 = vmatpush1.bf16.xpose.msra.mxu0 %v5322
        %5665 = vmatprep.subr.bf16.mxu0 %v5317
        %5666 = vmatpush1.bf16.xpose.msra.mxu0 %v5316
        %5667 = vmatprep.subr.bf16.mxu0 %v5407
        %5668 = vmatpush2.bf16.xpose.msra.mxu0 %v5406
        %5669 = vmatprep.subr.bf16.mxu0 %v5401
        %5670 = vmatpush2.bf16.xpose.msra.mxu0 %v5400
        %5671 = vmatprep.subr.bf16.mxu0 %v5395
        %5672 = vmatpush2.bf16.xpose.msra.mxu0 %v5394
        %5673 = vmatprep.subr.bf16.mxu0 %v5389
        %5674 = vmatpush2.bf16.xpose.msra.mxu0 %v5388
        %5675 = vmatprep.subr.bf16.mxu0 %v5383
        %5676 = vmatpush2.bf16.xpose.msra.mxu0 %v5382
        %5677 = vmatprep.subr.bf16.mxu0 %v5377
        %5678 = vmatpush2.bf16.xpose.msra.mxu0 %v5376
        %5679 = vmatprep.subr.bf16.mxu0 %v5371
        %5680 = vmatpush2.bf16.xpose.msra.mxu0 %v5370
        %5681 = vmatprep.subr.bf16.mxu0 %v5365
        %5682 = vmatpush2.bf16.xpose.msra.mxu0 %v5364
        %5683 = vmatprep.mubr.bf16.mxu0 %v4900
        %5684 = vmatmul.mubr.bf16.gmra.mxu0 %v4899
        %v5685 = vpop.f32.mrf.mxu0
        %v5686 = vadd.f32 %v5553, %v5685
        %v5687 = vpop.f32.mrf.mxu0
        %v5688 = vadd.f32 %v5555, %v5687
        %v5689 = vpop.f32.mrf.mxu0
        %v5690 = vadd.f32 %v5557, %v5689
        %v5691 = vpop.f32.mrf.mxu0
        %v5692 = vadd.f32 %v5559, %v5691
        %5693 = vmatprep.mubr.bf16.mxu0 %v4906
        %5694 = vmatmul.mubr.bf16.gmra.mxu0 %v4905
        %v5695 = vpop.f32.mrf.mxu0
        %v5696 = vadd.f32 %v5563, %v5695
        %v5697 = vpop.f32.mrf.mxu0
        %v5698 = vadd.f32 %v5565, %v5697
        %v5699 = vpop.f32.mrf.mxu0
        %v5700 = vadd.f32 %v5567, %v5699
        %v5701 = vpop.f32.mrf.mxu0
        %v5702 = vadd.f32 %v5569, %v5701
        %5703 = vmatprep.mubr.bf16.mxu0 %v4912
        %5704 = vmatmul.mubr.bf16.gmra.mxu0 %v4911
        %v5705 = vpop.f32.mrf.mxu0
        %v5706 = vadd.f32 %v5573, %v5705
        %v5707 = vpop.f32.mrf.mxu0
        %v5708 = vadd.f32 %v5575, %v5707
        %v5709 = vpop.f32.mrf.mxu0
        %v5710 = vadd.f32 %v5577, %v5709
        %v5711 = vpop.f32.mrf.mxu0
        %v5712 = vadd.f32 %v5579, %v5711
        %5713 = vmatprep.mubr.bf16.mxu0 %v4918
        %5714 = vmatmul.mubr.bf16.gmra.mxu0 %v4917
        %v5715 = vpop.f32.mrf.mxu0
        %v5716 = vadd.f32 %v5583, %v5715
        %v5717 = vpop.f32.mrf.mxu0
        %v5718 = vadd.f32 %v5585, %v5717
        %v5719 = vpop.f32.mrf.mxu0
        %v5720 = vadd.f32 %v5587, %v5719
        %v5721 = vpop.f32.mrf.mxu0
        %v5722 = vadd.f32 %v5589, %v5721
        %5723 = vmatprep.mubr.bf16.mxu0 %v4924
        %5724 = vmatmul.mubr.bf16.gmra.mxu0 %v4923
        %v5725 = vpop.f32.mrf.mxu0
        %v5726 = vadd.f32 %v5593, %v5725
        %v5727 = vpop.f32.mrf.mxu0
        %v5728 = vadd.f32 %v5595, %v5727
        %v5729 = vpop.f32.mrf.mxu0
        %v5730 = vadd.f32 %v5597, %v5729
        %v5731 = vpop.f32.mrf.mxu0
        %v5732 = vadd.f32 %v5599, %v5731
        %5733 = vmatprep.mubr.bf16.mxu0 %v4930
        %5734 = vmatmul.mubr.bf16.gmra.mxu0 %v4929
        %v5735 = vpop.f32.mrf.mxu0
        %v5736 = vadd.f32 %v5603, %v5735
        %v5737 = vpop.f32.mrf.mxu0
        %v5738 = vadd.f32 %v5605, %v5737
        %v5739 = vpop.f32.mrf.mxu0
        %v5740 = vadd.f32 %v5607, %v5739
        %v5741 = vpop.f32.mrf.mxu0
        %v5742 = vadd.f32 %v5609, %v5741
        %5743 = vmatprep.mubr.bf16.mxu0 %v4936
        %5744 = vmatmul.mubr.bf16.gmra.mxu0 %v4935
        %v5745 = vpop.f32.mrf.mxu0
        %v5746 = vadd.f32 %v5613, %v5745
        %v5747 = vpop.f32.mrf.mxu0
        %v5748 = vadd.f32 %v5615, %v5747
        %v5749 = vpop.f32.mrf.mxu0
        %v5750 = vadd.f32 %v5617, %v5749
        %v5751 = vpop.f32.mrf.mxu0
        %v5752 = vadd.f32 %v5619, %v5751
        %5753 = vmatprep.mubr.bf16.mxu0 %v4942
        %5754 = vmatmul.mubr.bf16.gmra.mxu0 %v4941
        %v5755 = vpop.f32.mrf.mxu0
        %v5756 = vadd.f32 %v5623, %v5755
        %v5757 = vpop.f32.mrf.mxu0
        %v5758 = vadd.f32 %v5625, %v5757
        %v5759 = vpop.f32.mrf.mxu0
        %v5760 = vadd.f32 %v5627, %v5759
        %v5761 = vpop.f32.mrf.mxu0
        %v5762 = vadd.f32 %v5629, %v5761
        %5763 = vmatprep.mubr.bf16.mxu0 %v4948
        %5764 = vmatmul.mubr.bf16.gmra.mxu0 %v4947
        %v5765 = vpop.f32.mrf.mxu0
        %v5766 = vadd.f32 %v5633, %v5765
        %v5767 = vpop.f32.mrf.mxu0
        %v5768 = vadd.f32 %v5635, %v5767
        %v5769 = vpop.f32.mrf.mxu0
        %v5770 = vadd.f32 %v5637, %v5769
        %v5771 = vpop.f32.mrf.mxu0
        %v5772 = vadd.f32 %v5639, %v5771
        %5773 = vmatprep.mubr.bf16.mxu0 %v4954
        %5774 = vmatmul.mubr.bf16.gmra.mxu0 %v4953
        %v5775 = vpop.f32.mrf.mxu0
        %v5776 = vadd.f32 %v5643, %v5775
        %v5777 = vpop.f32.mrf.mxu0
        %v5778 = vadd.f32 %v5645, %v5777
        %v5779 = vpop.f32.mrf.mxu0
        %v5780 = vadd.f32 %v5647, %v5779
        %v5781 = vpop.f32.mrf.mxu0
        %v5782 = vadd.f32 %v5649, %v5781
        %5783 = vdwg.mxu0
        %5784 = vmatprep.subr.bf16.mxu0 %v5361
        %5785 = vmatpush1.bf16.xpose.msra.mxu0 %v5360
        %5786 = vmatprep.subr.bf16.mxu0 %v5355
        %5787 = vmatpush1.bf16.xpose.msra.mxu0 %v5354
        %5788 = vmatprep.subr.bf16.mxu0 %v5349
        %5789 = vmatpush1.bf16.xpose.msra.mxu0 %v5348
        %5790 = vmatprep.subr.bf16.mxu0 %v5343
        %5791 = vmatpush1.bf16.xpose.msra.mxu0 %v5342
        %5792 = vmatprep.subr.bf16.mxu0 %v5337
        %5793 = vmatpush1.bf16.xpose.msra.mxu0 %v5336
        %5794 = vmatprep.subr.bf16.mxu0 %v5331
        %5795 = vmatpush1.bf16.xpose.msra.mxu0 %v5330
        %5796 = vmatprep.subr.bf16.mxu0 %v5325
        %5797 = vmatpush1.bf16.xpose.msra.mxu0 %v5324
        %5798 = vmatprep.subr.bf16.mxu0 %v5319
        %5799 = vmatpush1.bf16.xpose.msra.mxu0 %v5318
        %5800 = vmatprep.subr.bf16.mxu0 %v5409
        %5801 = vmatpush2.bf16.xpose.msra.mxu0 %v5408
        %5802 = vmatprep.subr.bf16.mxu0 %v5403
        %5803 = vmatpush2.bf16.xpose.msra.mxu0 %v5402
        %5804 = vmatprep.subr.bf16.mxu0 %v5397
        %5805 = vmatpush2.bf16.xpose.msra.mxu0 %v5396
        %5806 = vmatprep.subr.bf16.mxu0 %v5391
        %5807 = vmatpush2.bf16.xpose.msra.mxu0 %v5390
        %5808 = vmatprep.subr.bf16.mxu0 %v5385
        %5809 = vmatpush2.bf16.xpose.msra.mxu0 %v5384
        %5810 = vmatprep.subr.bf16.mxu0 %v5379
        %5811 = vmatpush2.bf16.xpose.msra.mxu0 %v5378
        %5812 = vmatprep.subr.bf16.mxu0 %v5373
        %5813 = vmatpush2.bf16.xpose.msra.mxu0 %v5372
        %5814 = vmatprep.subr.bf16.mxu0 %v5367
        %5815 = vmatpush2.bf16.xpose.msra.mxu0 %v5366
        %5816 = vmatprep.mubr.bf16.mxu0 %v4902
        %5817 = vmatmul.mubr.bf16.gmra.mxu0 %v4901
        %v5818 = vpop.f32.mrf.mxu0
        %v5819 = vadd.f32 %v5686, %v5818
        %v5820 = vpop.f32.mrf.mxu0
        %v5821 = vadd.f32 %v5688, %v5820
        %v5822 = vpop.f32.mrf.mxu0
        %v5823 = vadd.f32 %v5690, %v5822
        %v5824 = vpop.f32.mrf.mxu0
        %v5825 = vadd.f32 %v5692, %v5824
        %5826 = vmatprep.mubr.bf16.mxu0 %v4908
        %5827 = vmatmul.mubr.bf16.gmra.mxu0 %v4907
        %v5828 = vpop.f32.mrf.mxu0
        %v5829 = vadd.f32 %v5696, %v5828
        %v5830 = vpop.f32.mrf.mxu0
        %v5831 = vadd.f32 %v5698, %v5830
        %v5832 = vpop.f32.mrf.mxu0
        %v5833 = vadd.f32 %v5700, %v5832
        %v5834 = vpop.f32.mrf.mxu0
        %v5835 = vadd.f32 %v5702, %v5834
        %5836 = vmatprep.mubr.bf16.mxu0 %v4914
        %5837 = vmatmul.mubr.bf16.gmra.mxu0 %v4913
        %v5838 = vpop.f32.mrf.mxu0
        %v5839 = vadd.f32 %v5706, %v5838
        %v5840 = vpop.f32.mrf.mxu0
        %v5841 = vadd.f32 %v5708, %v5840
        %v5842 = vpop.f32.mrf.mxu0
        %v5843 = vadd.f32 %v5710, %v5842
        %v5844 = vpop.f32.mrf.mxu0
        %v5845 = vadd.f32 %v5712, %v5844
        %5846 = vmatprep.mubr.bf16.mxu0 %v4920
        %5847 = vmatmul.mubr.bf16.gmra.mxu0 %v4919
        %v5848 = vpop.f32.mrf.mxu0
        %v5849 = vadd.f32 %v5716, %v5848
        %v5850 = vpop.f32.mrf.mxu0
        %v5851 = vadd.f32 %v5718, %v5850
        %v5852 = vpop.f32.mrf.mxu0
        %v5853 = vadd.f32 %v5720, %v5852
        %v5854 = vpop.f32.mrf.mxu0
        %v5855 = vadd.f32 %v5722, %v5854
        %5856 = vmatprep.mubr.bf16.mxu0 %v4926
        %5857 = vmatmul.mubr.bf16.gmra.mxu0 %v4925
        %v5858 = vpop.f32.mrf.mxu0
        %v5859 = vadd.f32 %v5726, %v5858
        %v5860 = vpop.f32.mrf.mxu0
        %v5861 = vadd.f32 %v5728, %v5860
        %v5862 = vpop.f32.mrf.mxu0
        %v5863 = vadd.f32 %v5730, %v5862
        %v5864 = vpop.f32.mrf.mxu0
        %v5865 = vadd.f32 %v5732, %v5864
        %5866 = vmatprep.mubr.bf16.mxu0 %v4932
        %5867 = vmatmul.mubr.bf16.gmra.mxu0 %v4931
        %v5868 = vpop.f32.mrf.mxu0
        %v5869 = vadd.f32 %v5736, %v5868
        %v5870 = vpop.f32.mrf.mxu0
        %v5871 = vadd.f32 %v5738, %v5870
        %v5872 = vpop.f32.mrf.mxu0
        %v5873 = vadd.f32 %v5740, %v5872
        %v5874 = vpop.f32.mrf.mxu0
        %v5875 = vadd.f32 %v5742, %v5874
        %5876 = vmatprep.mubr.bf16.mxu0 %v4938
        %5877 = vmatmul.mubr.bf16.gmra.mxu0 %v4937
        %v5878 = vpop.f32.mrf.mxu0
        %v5879 = vadd.f32 %v5746, %v5878
        %v5880 = vpop.f32.mrf.mxu0
        %v5881 = vadd.f32 %v5748, %v5880
        %v5882 = vpop.f32.mrf.mxu0
        %v5883 = vadd.f32 %v5750, %v5882
        %v5884 = vpop.f32.mrf.mxu0
        %v5885 = vadd.f32 %v5752, %v5884
        %5886 = vmatprep.mubr.bf16.mxu0 %v4944
        %5887 = vmatmul.mubr.bf16.gmra.mxu0 %v4943
        %v5888 = vpop.f32.mrf.mxu0
        %v5889 = vadd.f32 %v5756, %v5888
        %v5890 = vpop.f32.mrf.mxu0
        %v5891 = vadd.f32 %v5758, %v5890
        %v5892 = vpop.f32.mrf.mxu0
        %v5893 = vadd.f32 %v5760, %v5892
        %v5894 = vpop.f32.mrf.mxu0
        %v5895 = vadd.f32 %v5762, %v5894
        %5896 = vmatprep.mubr.bf16.mxu0 %v4950
        %5897 = vmatmul.mubr.bf16.gmra.mxu0 %v4949
        %v5898 = vpop.f32.mrf.mxu0
        %v5899 = vadd.f32 %v5766, %v5898
        %v5900 = vpop.f32.mrf.mxu0
        %v5901 = vadd.f32 %v5768, %v5900
        %v5902 = vpop.f32.mrf.mxu0
        %v5903 = vadd.f32 %v5770, %v5902
        %v5904 = vpop.f32.mrf.mxu0
        %v5905 = vadd.f32 %v5772, %v5904
        %5906 = vmatprep.mubr.bf16.mxu0 %v4956
        %5907 = vmatmul.mubr.bf16.gmra.mxu0 %v4955
        %v5908 = vpop.f32.mrf.mxu0
        %v5909 = vadd.f32 %v5776, %v5908
        %v5910 = vpop.f32.mrf.mxu0
        %v5911 = vadd.f32 %v5778, %v5910
        %v5912 = vpop.f32.mrf.mxu0
        %v5913 = vadd.f32 %v5780, %v5912
        %v5914 = vpop.f32.mrf.mxu0
        %v5915 = vadd.f32 %v5782, %v5914
        %5916 = vdwg.mxu0
        %5917 = vmatprep.subr.bf16.mxu0 0
        %5918 = vmatpush1.bf16.xpose.msra.mxu0 0
        %5919 = vmatprep.subr.bf16.mxu0 0
        %5920 = vmatpush1.bf16.xpose.msra.mxu0 0
        %5921 = vmatprep.subr.bf16.mxu0 0
        %5922 = vmatpush1.bf16.xpose.msra.mxu0 0
        %5923 = vmatprep.subr.bf16.mxu0 0
        %5924 = vmatpush1.bf16.xpose.msra.mxu0 0
        %5925 = vmatprep.subr.bf16.mxu0 0
        %5926 = vmatpush1.bf16.xpose.msra.mxu0 0
        %5927 = vmatprep.subr.bf16.mxu0 0
        %5928 = vmatpush1.bf16.xpose.msra.mxu0 0
        %5929 = vmatprep.subr.bf16.mxu0 0
        %5930 = vmatpush1.bf16.xpose.msra.mxu0 0
        %5931 = vmatprep.subr.bf16.mxu0 %v5411
        %5932 = vmatpush1.bf16.xpose.msra.mxu0 %v5410
        %5933 = vmatprep.subr.bf16.mxu0 0
        %5934 = vmatpush2.bf16.xpose.msra.mxu0 0
        %5935 = vmatprep.subr.bf16.mxu0 0
        %5936 = vmatpush2.bf16.xpose.msra.mxu0 0
        %5937 = vmatprep.subr.bf16.mxu0 0
        %5938 = vmatpush2.bf16.xpose.msra.mxu0 0
        %5939 = vmatprep.subr.bf16.mxu0 0
        %5940 = vmatpush2.bf16.xpose.msra.mxu0 0
        %5941 = vmatprep.subr.bf16.mxu0 0
        %5942 = vmatpush2.bf16.xpose.msra.mxu0 0
        %5943 = vmatprep.subr.bf16.mxu0 0
        %5944 = vmatpush2.bf16.xpose.msra.mxu0 0
        %5945 = vmatprep.subr.bf16.mxu0 0
        %5946 = vmatpush2.bf16.xpose.msra.mxu0 0
        %5947 = vmatprep.subr.bf16.mxu0 0
        %5948 = vmatpush2.bf16.xpose.msra.mxu0 0
        %5949 = vmatprep.mubr.bf16.mxu0 %v4898
        %5950 = vmatmul.mubr.bf16.gmra.mxu0 %v4897
        %v5951 = vpop.f32.mrf.mxu0
        %v5952 = vadd.f32 0.0, %v5951
        %v5953 = vpop.f32.mrf.mxu0
        %v5954 = vpop.f32.mrf.mxu0
        %v5955 = vadd.f32 0.0, %v5954
        %v5956 = vpop.f32.mrf.mxu0
        %5957 = vmatprep.mubr.bf16.mxu0 %v4904
        %5958 = vmatmul.mubr.bf16.gmra.mxu0 %v4903
        %v5959 = vpop.f32.mrf.mxu0
        %v5960 = vadd.f32 0.0, %v5959
        %v5961 = vpop.f32.mrf.mxu0
        %v5962 = vpop.f32.mrf.mxu0
        %v5963 = vadd.f32 0.0, %v5962
        %v5964 = vpop.f32.mrf.mxu0
        %5965 = vmatprep.mubr.bf16.mxu0 %v4910
        %5966 = vmatmul.mubr.bf16.gmra.mxu0 %v4909
        %v5967 = vpop.f32.mrf.mxu0
        %v5968 = vadd.f32 0.0, %v5967
        %v5969 = vpop.f32.mrf.mxu0
        %v5970 = vpop.f32.mrf.mxu0
        %v5971 = vadd.f32 0.0, %v5970
        %v5972 = vpop.f32.mrf.mxu0
        %5973 = vmatprep.mubr.bf16.mxu0 %v4916
        %5974 = vmatmul.mubr.bf16.gmra.mxu0 %v4915
        %v5975 = vpop.f32.mrf.mxu0
        %v5976 = vadd.f32 0.0, %v5975
        %v5977 = vpop.f32.mrf.mxu0
        %v5978 = vpop.f32.mrf.mxu0
        %v5979 = vadd.f32 0.0, %v5978
        %v5980 = vpop.f32.mrf.mxu0
        %5981 = vmatprep.mubr.bf16.mxu0 %v4922
        %5982 = vmatmul.mubr.bf16.gmra.mxu0 %v4921
        %v5983 = vpop.f32.mrf.mxu0
        %v5984 = vadd.f32 0.0, %v5983
        %v5985 = vpop.f32.mrf.mxu0
        %v5986 = vpop.f32.mrf.mxu0
        %v5987 = vadd.f32 0.0, %v5986
        %v5988 = vpop.f32.mrf.mxu0
        %5989 = vmatprep.mubr.bf16.mxu0 %v4928
        %5990 = vmatmul.mubr.bf16.gmra.mxu0 %v4927
        %v5991 = vpop.f32.mrf.mxu0
        %v5992 = vadd.f32 0.0, %v5991
        %v5993 = vpop.f32.mrf.mxu0
        %v5994 = vpop.f32.mrf.mxu0
        %v5995 = vadd.f32 0.0, %v5994
        %v5996 = vpop.f32.mrf.mxu0
        %5997 = vmatprep.mubr.bf16.mxu0 %v4934
        %5998 = vmatmul.mubr.bf16.gmra.mxu0 %v4933
        %v5999 = vpop.f32.mrf.mxu0
        %v6000 = vadd.f32 0.0, %v5999
        %v6001 = vpop.f32.mrf.mxu0
        %v6002 = vpop.f32.mrf.mxu0
        %v6003 = vadd.f32 0.0, %v6002
        %v6004 = vpop.f32.mrf.mxu0
        %6005 = vmatprep.mubr.bf16.mxu0 %v4940
        %6006 = vmatmul.mubr.bf16.gmra.mxu0 %v4939
        %v6007 = vpop.f32.mrf.mxu0
        %v6008 = vadd.f32 0.0, %v6007
        %v6009 = vpop.f32.mrf.mxu0
        %v6010 = vpop.f32.mrf.mxu0
        %v6011 = vadd.f32 0.0, %v6010
        %v6012 = vpop.f32.mrf.mxu0
        %6013 = vmatprep.mubr.bf16.mxu0 %v4946
        %6014 = vmatmul.mubr.bf16.gmra.mxu0 %v4945
        %v6015 = vpop.f32.mrf.mxu0
        %v6016 = vadd.f32 0.0, %v6015
        %v6017 = vpop.f32.mrf.mxu0
        %v6018 = vpop.f32.mrf.mxu0
        %v6019 = vadd.f32 0.0, %v6018
        %v6020 = vpop.f32.mrf.mxu0
        %6021 = vmatprep.mubr.bf16.mxu0 %v4952
        %6022 = vmatmul.mubr.bf16.gmra.mxu0 %v4951
        %v6023 = vpop.f32.mrf.mxu0
        %v6024 = vadd.f32 0.0, %v6023
        %v6025 = vpop.f32.mrf.mxu0
        %v6026 = vpop.f32.mrf.mxu0
        %v6027 = vadd.f32 0.0, %v6026
        %v6028 = vpop.f32.mrf.mxu0
        %6029 = vdwg.mxu0
        %6030 = vmatprep.subr.bf16.mxu0 0
        %6031 = vmatpush1.bf16.xpose.msra.mxu0 0
        %6032 = vmatprep.subr.bf16.mxu0 0
        %6033 = vmatpush1.bf16.xpose.msra.mxu0 0
        %6034 = vmatprep.subr.bf16.mxu0 0
        %6035 = vmatpush1.bf16.xpose.msra.mxu0 0
        %6036 = vmatprep.subr.bf16.mxu0 0
        %6037 = vmatpush1.bf16.xpose.msra.mxu0 0
        %6038 = vmatprep.subr.bf16.mxu0 0
        %6039 = vmatpush1.bf16.xpose.msra.mxu0 0
        %6040 = vmatprep.subr.bf16.mxu0 0
        %6041 = vmatpush1.bf16.xpose.msra.mxu0 0
        %6042 = vmatprep.subr.bf16.mxu0 0
        %6043 = vmatpush1.bf16.xpose.msra.mxu0 0
        %6044 = vmatprep.subr.bf16.mxu0 %v5413
        %6045 = vmatpush1.bf16.xpose.msra.mxu0 %v5412
        %6046 = vmatprep.subr.bf16.mxu0 0
        %6047 = vmatpush2.bf16.xpose.msra.mxu0 0
        %6048 = vmatprep.subr.bf16.mxu0 0
        %6049 = vmatpush2.bf16.xpose.msra.mxu0 0
        %6050 = vmatprep.subr.bf16.mxu0 0
        %6051 = vmatpush2.bf16.xpose.msra.mxu0 0
        %6052 = vmatprep.subr.bf16.mxu0 0
        %6053 = vmatpush2.bf16.xpose.msra.mxu0 0
        %6054 = vmatprep.subr.bf16.mxu0 0
        %6055 = vmatpush2.bf16.xpose.msra.mxu0 0
        %6056 = vmatprep.subr.bf16.mxu0 0
        %6057 = vmatpush2.bf16.xpose.msra.mxu0 0
        %6058 = vmatprep.subr.bf16.mxu0 0
        %6059 = vmatpush2.bf16.xpose.msra.mxu0 0
        %6060 = vmatprep.subr.bf16.mxu0 0
        %6061 = vmatpush2.bf16.xpose.msra.mxu0 0
        %6062 = vmatprep.mubr.bf16.mxu0 %v4900
        %6063 = vmatmul.mubr.bf16.gmra.mxu0 %v4899
        %v6064 = vpop.f32.mrf.mxu0
        %v6065 = vadd.f32 %v5952, %v6064
        %v6066 = vpop.f32.mrf.mxu0
        %v6067 = vpop.f32.mrf.mxu0
        %v6068 = vadd.f32 %v5955, %v6067
        %v6069 = vpop.f32.mrf.mxu0
        %6070 = vmatprep.mubr.bf16.mxu0 %v4906
        %6071 = vmatmul.mubr.bf16.gmra.mxu0 %v4905
        %v6072 = vpop.f32.mrf.mxu0
        %v6073 = vadd.f32 %v5960, %v6072
        %v6074 = vpop.f32.mrf.mxu0
        %v6075 = vpop.f32.mrf.mxu0
        %v6076 = vadd.f32 %v5963, %v6075
        %v6077 = vpop.f32.mrf.mxu0
        %6078 = vmatprep.mubr.bf16.mxu0 %v4912
        %6079 = vmatmul.mubr.bf16.gmra.mxu0 %v4911
        %v6080 = vpop.f32.mrf.mxu0
        %v6081 = vadd.f32 %v5968, %v6080
        %v6082 = vpop.f32.mrf.mxu0
        %v6083 = vpop.f32.mrf.mxu0
        %v6084 = vadd.f32 %v5971, %v6083
        %v6085 = vpop.f32.mrf.mxu0
        %6086 = vmatprep.mubr.bf16.mxu0 %v4918
        %6087 = vmatmul.mubr.bf16.gmra.mxu0 %v4917
        %v6088 = vpop.f32.mrf.mxu0
        %v6089 = vadd.f32 %v5976, %v6088
        %v6090 = vpop.f32.mrf.mxu0
        %v6091 = vpop.f32.mrf.mxu0
        %v6092 = vadd.f32 %v5979, %v6091
        %v6093 = vpop.f32.mrf.mxu0
        %6094 = vmatprep.mubr.bf16.mxu0 %v4924
        %6095 = vmatmul.mubr.bf16.gmra.mxu0 %v4923
        %v6096 = vpop.f32.mrf.mxu0
        %v6097 = vadd.f32 %v5984, %v6096
        %v6098 = vpop.f32.mrf.mxu0
        %v6099 = vpop.f32.mrf.mxu0
        %v6100 = vadd.f32 %v5987, %v6099
        %v6101 = vpop.f32.mrf.mxu0
        %6102 = vmatprep.mubr.bf16.mxu0 %v4930
        %6103 = vmatmul.mubr.bf16.gmra.mxu0 %v4929
        %v6104 = vpop.f32.mrf.mxu0
        %v6105 = vadd.f32 %v5992, %v6104
        %v6106 = vpop.f32.mrf.mxu0
        %v6107 = vpop.f32.mrf.mxu0
        %v6108 = vadd.f32 %v5995, %v6107
        %v6109 = vpop.f32.mrf.mxu0
        %6110 = vmatprep.mubr.bf16.mxu0 %v4936
        %6111 = vmatmul.mubr.bf16.gmra.mxu0 %v4935
        %v6112 = vpop.f32.mrf.mxu0
        %v6113 = vadd.f32 %v6000, %v6112
        %v6114 = vpop.f32.mrf.mxu0
        %v6115 = vpop.f32.mrf.mxu0
        %v6116 = vadd.f32 %v6003, %v6115
        %v6117 = vpop.f32.mrf.mxu0
        %6118 = vmatprep.mubr.bf16.mxu0 %v4942
        %6119 = vmatmul.mubr.bf16.gmra.mxu0 %v4941
        %v6120 = vpop.f32.mrf.mxu0
        %v6121 = vadd.f32 %v6008, %v6120
        %v6122 = vpop.f32.mrf.mxu0
        %v6123 = vpop.f32.mrf.mxu0
        %v6124 = vadd.f32 %v6011, %v6123
        %v6125 = vpop.f32.mrf.mxu0
        %6126 = vmatprep.mubr.bf16.mxu0 %v4948
        %6127 = vmatmul.mubr.bf16.gmra.mxu0 %v4947
        %v6128 = vpop.f32.mrf.mxu0
        %v6129 = vadd.f32 %v6016, %v6128
        %v6130 = vpop.f32.mrf.mxu0
        %v6131 = vpop.f32.mrf.mxu0
        %v6132 = vadd.f32 %v6019, %v6131
        %v6133 = vpop.f32.mrf.mxu0
        %6134 = vmatprep.mubr.bf16.mxu0 %v4954
        %6135 = vmatmul.mubr.bf16.gmra.mxu0 %v4953
        %v6136 = vpop.f32.mrf.mxu0
        %v6137 = vadd.f32 %v6024, %v6136
        %v6138 = vpop.f32.mrf.mxu0
        %v6139 = vpop.f32.mrf.mxu0
        %v6140 = vadd.f32 %v6027, %v6139
        %v6141 = vpop.f32.mrf.mxu0
        %6142 = vdwg.mxu0
        %6143 = vmatprep.subr.bf16.mxu0 0
        %6144 = vmatpush1.bf16.xpose.msra.mxu0 0
        %6145 = vmatprep.subr.bf16.mxu0 0
        %6146 = vmatpush1.bf16.xpose.msra.mxu0 0
        %6147 = vmatprep.subr.bf16.mxu0 0
        %6148 = vmatpush1.bf16.xpose.msra.mxu0 0
        %6149 = vmatprep.subr.bf16.mxu0 0
        %6150 = vmatpush1.bf16.xpose.msra.mxu0 0
        %6151 = vmatprep.subr.bf16.mxu0 0
        %6152 = vmatpush1.bf16.xpose.msra.mxu0 0
        %6153 = vmatprep.subr.bf16.mxu0 0
        %6154 = vmatpush1.bf16.xpose.msra.mxu0 0
        %6155 = vmatprep.subr.bf16.mxu0 0
        %6156 = vmatpush1.bf16.xpose.msra.mxu0 0
        %6157 = vmatprep.subr.bf16.mxu0 %v5415
        %6158 = vmatpush1.bf16.xpose.msra.mxu0 %v5414
        %6159 = vmatprep.subr.bf16.mxu0 0
        %6160 = vmatpush2.bf16.xpose.msra.mxu0 0
        %6161 = vmatprep.subr.bf16.mxu0 0
        %6162 = vmatpush2.bf16.xpose.msra.mxu0 0
        %6163 = vmatprep.subr.bf16.mxu0 0
        %6164 = vmatpush2.bf16.xpose.msra.mxu0 0
        %6165 = vmatprep.subr.bf16.mxu0 0
        %6166 = vmatpush2.bf16.xpose.msra.mxu0 0
        %6167 = vmatprep.subr.bf16.mxu0 0
        %6168 = vmatpush2.bf16.xpose.msra.mxu0 0
        %6169 = vmatprep.subr.bf16.mxu0 0
        %6170 = vmatpush2.bf16.xpose.msra.mxu0 0
        %6171 = vmatprep.subr.bf16.mxu0 0
        %6172 = vmatpush2.bf16.xpose.msra.mxu0 0
        %6173 = vmatprep.subr.bf16.mxu0 0
        %6174 = vmatpush2.bf16.xpose.msra.mxu0 0
        %6175 = vmatprep.mubr.bf16.mxu0 %v4902
        %6176 = vmatmul.mubr.bf16.gmra.mxu0 %v4901
        %v6177 = vpop.f32.mrf.mxu0
        %v6178 = vadd.f32 %v6065, %v6177
        %v6179 = vpop.f32.mrf.mxu0
        %v6180 = vpop.f32.mrf.mxu0
        %v6181 = vadd.f32 %v6068, %v6180
        %v6182 = vpop.f32.mrf.mxu0
        %6183 = vmatprep.mubr.bf16.mxu0 %v4908
        %6184 = vmatmul.mubr.bf16.gmra.mxu0 %v4907
        %v6185 = vpop.f32.mrf.mxu0
        %v6186 = vadd.f32 %v6073, %v6185
        %v6187 = vpop.f32.mrf.mxu0
        %v6188 = vpop.f32.mrf.mxu0
        %v6189 = vadd.f32 %v6076, %v6188
        %v6190 = vpop.f32.mrf.mxu0
        %6191 = vmatprep.mubr.bf16.mxu0 %v4914
        %6192 = vmatmul.mubr.bf16.gmra.mxu0 %v4913
        %v6193 = vpop.f32.mrf.mxu0
        %v6194 = vadd.f32 %v6081, %v6193
        %v6195 = vpop.f32.mrf.mxu0
        %v6196 = vpop.f32.mrf.mxu0
        %v6197 = vadd.f32 %v6084, %v6196
        %v6198 = vpop.f32.mrf.mxu0
        %6199 = vmatprep.mubr.bf16.mxu0 %v4920
        %6200 = vmatmul.mubr.bf16.gmra.mxu0 %v4919
        %v6201 = vpop.f32.mrf.mxu0
        %v6202 = vadd.f32 %v6089, %v6201
        %v6203 = vpop.f32.mrf.mxu0
        %v6204 = vpop.f32.mrf.mxu0
        %v6205 = vadd.f32 %v6092, %v6204
        %v6206 = vpop.f32.mrf.mxu0
        %6207 = vmatprep.mubr.bf16.mxu0 %v4926
        %6208 = vmatmul.mubr.bf16.gmra.mxu0 %v4925
        %v6209 = vpop.f32.mrf.mxu0
        %v6210 = vadd.f32 %v6097, %v6209
        %v6211 = vpop.f32.mrf.mxu0
        %v6212 = vpop.f32.mrf.mxu0
        %v6213 = vadd.f32 %v6100, %v6212
        %v6214 = vpop.f32.mrf.mxu0
        %6215 = vmatprep.mubr.bf16.mxu0 %v4932
        %6216 = vmatmul.mubr.bf16.gmra.mxu0 %v4931
        %v6217 = vpop.f32.mrf.mxu0
        %v6218 = vadd.f32 %v6105, %v6217
        %v6219 = vpop.f32.mrf.mxu0
        %v6220 = vpop.f32.mrf.mxu0
        %v6221 = vadd.f32 %v6108, %v6220
        %v6222 = vpop.f32.mrf.mxu0
        %6223 = vmatprep.mubr.bf16.mxu0 %v4938
        %6224 = vmatmul.mubr.bf16.gmra.mxu0 %v4937
        %v6225 = vpop.f32.mrf.mxu0
        %v6226 = vadd.f32 %v6113, %v6225
        %v6227 = vpop.f32.mrf.mxu0
        %v6228 = vpop.f32.mrf.mxu0
        %v6229 = vadd.f32 %v6116, %v6228
        %v6230 = vpop.f32.mrf.mxu0
        %6231 = vmatprep.mubr.bf16.mxu0 %v4944
        %6232 = vmatmul.mubr.bf16.gmra.mxu0 %v4943
        %v6233 = vpop.f32.mrf.mxu0
        %v6234 = vadd.f32 %v6121, %v6233
        %v6235 = vpop.f32.mrf.mxu0
        %v6236 = vpop.f32.mrf.mxu0
        %v6237 = vadd.f32 %v6124, %v6236
        %v6238 = vpop.f32.mrf.mxu0
        %6239 = vmatprep.mubr.bf16.mxu0 %v4950
        %6240 = vmatmul.mubr.bf16.gmra.mxu0 %v4949
        %v6241 = vpop.f32.mrf.mxu0
        %v6242 = vadd.f32 %v6129, %v6241
        %v6243 = vpop.f32.mrf.mxu0
        %v6244 = vpop.f32.mrf.mxu0
        %v6245 = vadd.f32 %v6132, %v6244
        %v6246 = vpop.f32.mrf.mxu0
        %6247 = vmatprep.mubr.bf16.mxu0 %v4956
        %6248 = vmatmul.mubr.bf16.gmra.mxu0 %v4955
        %v6249 = vpop.f32.mrf.mxu0
        %v6250 = vadd.f32 %v6137, %v6249
        %v6251 = vpop.f32.mrf.mxu0
        %v6252 = vpop.f32.mrf.mxu0
        %v6253 = vadd.f32 %v6140, %v6252
        %v6254 = vpop.f32.mrf.mxu0
        %6255 = vdwg.mxu0
        %6256 = vst [vmem:[#allocation2] sm:$0xff] %v5819
        %6257 = vst [vmem:[#allocation2 + $0x8] sm:$0xff] %v5821
        %6258 = vst.msk [vmem:[#allocation2 + $0x10] sm:$0xff] %vm1972, %v6178
        %6259 = vst [vmem:[#allocation2 + $0x18] sm:$0xff] %v5823
        %6260 = vst [vmem:[#allocation2 + $0x20] sm:$0xff] %v5825
        %6261 = vst.msk [vmem:[#allocation2 + $0x28] sm:$0xff] %vm1972, %v6181
        %6262 = vst [vmem:[#allocation2 + $0x30] sm:$0xff] %v5829
        %6263 = vst [vmem:[#allocation2 + $0x38] sm:$0xff] %v5831
        %6264 = vst.msk [vmem:[#allocation2 + $0x40] sm:$0xff] %vm1972, %v6186
        %6265 = vst [vmem:[#allocation2 + $0x48] sm:$0xff] %v5833
        %6266 = vst [vmem:[#allocation2 + $0x50] sm:$0xff] %v5835
        %6267 = vst.msk [vmem:[#allocation2 + $0x58] sm:$0xff] %vm1972, %v6189
        %6268 = vst [vmem:[#allocation2 + $0x60] sm:$0xff] %v5839
        %6269 = vst [vmem:[#allocation2 + $0x68] sm:$0xff] %v5841
        %6270 = vst.msk [vmem:[#allocation2 + $0x70] sm:$0xff] %vm1972, %v6194
        %6271 = vst [vmem:[#allocation2 + $0x78] sm:$0xff] %v5843
        %6272 = vst [vmem:[#allocation2 + $0x80] sm:$0xff] %v5845
        %6273 = vst.msk [vmem:[#allocation2 + $0x88] sm:$0xff] %vm1972, %v6197
        %6274 = vst [vmem:[#allocation2 + $0x90] sm:$0xff] %v5849
        %6275 = vst [vmem:[#allocation2 + $0x98] sm:$0xff] %v5851
        %6276 = vst.msk [vmem:[#allocation2 + $0xa0] sm:$0xff] %vm1972, %v6202
        %6277 = vst [vmem:[#allocation2 + $0xa8] sm:$0xff] %v5853
        %6278 = vst [vmem:[#allocation2 + $0xb0] sm:$0xff] %v5855
        %6279 = vst.msk [vmem:[#allocation2 + $0xb8] sm:$0xff] %vm1972, %v6205
        %6280 = vst [vmem:[#allocation2 + $0xc0] sm:$0xff] %v5859
        %6281 = vst [vmem:[#allocation2 + $0xc8] sm:$0xff] %v5861
        %6282 = vst.msk [vmem:[#allocation2 + $0xd0] sm:$0xff] %vm1972, %v6210
        %6283 = vst [vmem:[#allocation2 + $0xd8] sm:$0xff] %v5863
        %6284 = vst [vmem:[#allocation2 + $0xe0] sm:$0xff] %v5865
        %6285 = vst.msk [vmem:[#allocation2 + $0xe8] sm:$0xff] %vm1972, %v6213
        %6286 = vst [vmem:[#allocation2 + $0xf0] sm:$0xff] %v5869
        %6287 = vst [vmem:[#allocation2 + $0xf8] sm:$0xff] %v5871
        %6288 = vst.msk [vmem:[#allocation2 + $0x100] sm:$0xff] %vm1972, %v6218
        %6289 = vst [vmem:[#allocation2 + $0x108] sm:$0xff] %v5873
        %6290 = vst [vmem:[#allocation2 + $0x110] sm:$0xff] %v5875
        %6291 = vst.msk [vmem:[#allocation2 + $0x118] sm:$0xff] %vm1972, %v6221
        %6292 = vst [vmem:[#allocation2 + $0x120] sm:$0xff] %v5879
        %6293 = vst [vmem:[#allocation2 + $0x128] sm:$0xff] %v5881
        %6294 = vst.msk [vmem:[#allocation2 + $0x130] sm:$0xff] %vm1972, %v6226
        %6295 = vst [vmem:[#allocation2 + $0x138] sm:$0xff] %v5883
        %6296 = vst [vmem:[#allocation2 + $0x140] sm:$0xff] %v5885
        %6297 = vst.msk [vmem:[#allocation2 + $0x148] sm:$0xff] %vm1972, %v6229
        %6298 = vst [vmem:[#allocation2 + $0x150] sm:$0xff] %v5889
        %6299 = vst [vmem:[#allocation2 + $0x158] sm:$0xff] %v5891
        %6300 = vst.msk [vmem:[#allocation2 + $0x160] sm:$0xff] %vm1972, %v6234
        %6301 = vst [vmem:[#allocation2 + $0x168] sm:$0xff] %v5893
        %6302 = vst [vmem:[#allocation2 + $0x170] sm:$0xff] %v5895
        %6303 = vst.msk [vmem:[#allocation2 + $0x178] sm:$0xff] %vm1972, %v6237
        %6304 = vst [vmem:[#allocation2 + $0x180] sm:$0xff] %v5899
        %6305 = vst [vmem:[#allocation2 + $0x188] sm:$0xff] %v5901
        %6306 = vst.msk [vmem:[#allocation2 + $0x190] sm:$0xff] %vm1972, %v6242
        %6307 = vst [vmem:[#allocation2 + $0x198] sm:$0xff] %v5903
        %6308 = vst [vmem:[#allocation2 + $0x1a0] sm:$0xff] %v5905
        %6309 = vst.msk [vmem:[#allocation2 + $0x1a8] sm:$0xff] %vm1972, %v6245
        %6310 = vst [vmem:[#allocation2 + $0x1b0] sm:$0xff] %v5909
        %6311 = vst [vmem:[#allocation2 + $0x1b8] sm:$0xff] %v5911
        %6312 = vst.msk [vmem:[#allocation2 + $0x1c0] sm:$0xff] %vm1972, %v6250
        %6313 = vst [vmem:[#allocation2 + $0x1c8] sm:$0xff] %v5913
        %6314 = vst [vmem:[#allocation2 + $0x1d0] sm:$0xff] %v5915
        %6315 = vst.msk [vmem:[#allocation2 + $0x1d8] sm:$0xff] %vm1972, %v6253
        %v6316 = vld [vmem:[#allocation2] sm:$0xff]
        %v6317 = vld [vmem:[#allocation2 + $0x8] sm:$0xff]
        %v6318 = vld [vmem:[#allocation2 + $0x18] sm:$0xff]
        %v6319 = vld [vmem:[#allocation2 + $0x20] sm:$0xff]
        %v6320 = vld [vmem:[#allocation2 + $0x28] sm:$0xff]
        %6324 = vrot.lane.b32.xlu0 %v6318, 127
        %v6325 = vpop.permute.xlu0 %6324
        %6326 = vrot.lane.b32.xlu0 %v6319, 127
        %v6327 = vpop.permute.xlu0 %6326
        %6328 = vrot.lane.b32.xlu0 %v6320, 127
        %v6329 = vpop.permute.xlu0 %6328
        %v6330 = vsel %vm2045, %v6325, %v6327
        %v6331 = vsel %vm2045, %v6327, %v6329
        %v6334 = vadd.f32 %v6316, %v6330
        %v6335 = vadd.f32 %v6317, %v6331
        %v6336 = vld [vmem:[#allocation2 + $0x30] sm:$0xff]
        %v6337 = vld [vmem:[#allocation2 + $0x38] sm:$0xff]
        %v6338 = vld [vmem:[#allocation2 + $0x40] sm:$0xff]
        %6342 = vrot.lane.b32.xlu0 %v6336, 126
        %v6343 = vpop.permute.xlu0 %6342
        %6344 = vrot.lane.b32.xlu0 %v6337, 126
        %v6345 = vpop.permute.xlu0 %6344
        %6346 = vrot.lane.b32.xlu0 %v6338, 126
        %v6347 = vpop.permute.xlu0 %6346
        %v6348 = vsel %vm2064, %v6343, %v6345
        %v6349 = vsel %vm2064, %v6345, %v6347
        %v6352 = vadd.f32 %v6334, %v6348
        %v6353 = vadd.f32 %v6335, %v6349
        %v6354 = vld [vmem:[#allocation2 + $0x48] sm:$0xff]
        %v6355 = vld [vmem:[#allocation2 + $0x50] sm:$0xff]
        %v6356 = vld [vmem:[#allocation2 + $0x58] sm:$0xff]
        %6360 = vrot.lane.b32.xlu0 %v6354, 125
        %v6361 = vpop.permute.xlu0 %6360
        %6362 = vrot.lane.b32.xlu0 %v6355, 125
        %v6363 = vpop.permute.xlu0 %6362
        %6364 = vrot.lane.b32.xlu0 %v6356, 125
        %v6365 = vpop.permute.xlu0 %6364
        %v6366 = vsel %vm2083, %v6361, %v6363
        %v6367 = vsel %vm2083, %v6363, %v6365
        %v6370 = vadd.f32 %v6352, %v6366
        %v6371 = vadd.f32 %v6353, %v6367
        %v6372 = vld [vmem:[#allocation2 + $0x60] sm:$0xff]
        %v6373 = vld [vmem:[#allocation2 + $0x68] sm:$0xff]
        %v6374 = vld [vmem:[#allocation2 + $0x70] sm:$0xff]
        %6378 = vrot.lane.b32.xlu0 %v6372, 124
        %v6379 = vpop.permute.xlu0 %6378
        %6380 = vrot.lane.b32.xlu0 %v6373, 124
        %v6381 = vpop.permute.xlu0 %6380
        %6382 = vrot.lane.b32.xlu0 %v6374, 124
        %v6383 = vpop.permute.xlu0 %6382
        %v6384 = vsel %vm2102, %v6379, %v6381
        %v6385 = vsel %vm2102, %v6381, %v6383
        %v6388 = vadd.f32 %v6370, %v6384
        %v6389 = vadd.f32 %v6371, %v6385
        %v6390 = vld [vmem:[#allocation2 + $0x78] sm:$0xff]
        %v6391 = vld [vmem:[#allocation2 + $0x80] sm:$0xff]
        %v6392 = vld [vmem:[#allocation2 + $0x88] sm:$0xff]
        %6396 = vrot.lane.b32.xlu0 %v6390, 123
        %v6397 = vpop.permute.xlu0 %6396
        %6398 = vrot.lane.b32.xlu0 %v6391, 123
        %v6399 = vpop.permute.xlu0 %6398
        %6400 = vrot.lane.b32.xlu0 %v6392, 123
        %v6401 = vpop.permute.xlu0 %6400
        %v6402 = vsel %vm2121, %v6397, %v6399
        %v6403 = vsel %vm2121, %v6399, %v6401
        %v6406 = vadd.f32 %v6388, %v6402
        %v6407 = vadd.f32 %v6389, %v6403
        %v6408 = vld [vmem:[#allocation2 + $0x90] sm:$0xff]
        %v6409 = vld [vmem:[#allocation2 + $0x98] sm:$0xff]
        %v6410 = vld [vmem:[#allocation2 + $0xa0] sm:$0xff]
        %6414 = vrot.lane.b32.xlu0 %v6408, 122
        %v6415 = vpop.permute.xlu0 %6414
        %6416 = vrot.lane.b32.xlu0 %v6409, 122
        %v6417 = vpop.permute.xlu0 %6416
        %6418 = vrot.lane.b32.xlu0 %v6410, 122
        %v6419 = vpop.permute.xlu0 %6418
        %v6420 = vsel %vm2140, %v6415, %v6417
        %v6421 = vsel %vm2140, %v6417, %v6419
        %v6424 = vadd.f32 %v6406, %v6420
        %v6425 = vadd.f32 %v6407, %v6421
        %v6426 = vld [vmem:[#allocation2 + $0xa8] sm:$0xff]
        %v6427 = vld [vmem:[#allocation2 + $0xb0] sm:$0xff]
        %v6428 = vld [vmem:[#allocation2 + $0xb8] sm:$0xff]
        %6432 = vrot.lane.b32.xlu0 %v6426, 121
        %v6433 = vpop.permute.xlu0 %6432
        %6434 = vrot.lane.b32.xlu0 %v6427, 121
        %v6435 = vpop.permute.xlu0 %6434
        %6436 = vrot.lane.b32.xlu0 %v6428, 121
        %v6437 = vpop.permute.xlu0 %6436
        %v6438 = vsel %vm2159, %v6433, %v6435
        %v6439 = vsel %vm2159, %v6435, %v6437
        %v6442 = vadd.f32 %v6424, %v6438
        %v6443 = vadd.f32 %v6425, %v6439
        %v6444 = vld [vmem:[#allocation2 + $0xc0] sm:$0xff]
        %v6445 = vld [vmem:[#allocation2 + $0xc8] sm:$0xff]
        %v6446 = vld [vmem:[#allocation2 + $0xd0] sm:$0xff]
        %6450 = vrot.lane.b32.xlu0 %v6444, 120
        %v6451 = vpop.permute.xlu0 %6450
        %6452 = vrot.lane.b32.xlu0 %v6445, 120
        %v6453 = vpop.permute.xlu0 %6452
        %6454 = vrot.lane.b32.xlu0 %v6446, 120
        %v6455 = vpop.permute.xlu0 %6454
        %v6456 = vsel %vm2178, %v6451, %v6453
        %v6457 = vsel %vm2178, %v6453, %v6455
        %v6460 = vadd.f32 %v6442, %v6456
        %v6461 = vadd.f32 %v6443, %v6457
        %v6462 = vld [vmem:[#allocation2 + $0xd8] sm:$0xff]
        %v6463 = vld [vmem:[#allocation2 + $0xe0] sm:$0xff]
        %v6464 = vld [vmem:[#allocation2 + $0xe8] sm:$0xff]
        %6468 = vrot.lane.b32.xlu0 %v6462, 119
        %v6469 = vpop.permute.xlu0 %6468
        %6470 = vrot.lane.b32.xlu0 %v6463, 119
        %v6471 = vpop.permute.xlu0 %6470
        %6472 = vrot.lane.b32.xlu0 %v6464, 119
        %v6473 = vpop.permute.xlu0 %6472
        %v6474 = vsel %vm2197, %v6469, %v6471
        %v6475 = vsel %vm2197, %v6471, %v6473
        %v6478 = vadd.f32 %v6460, %v6474
        %v6479 = vadd.f32 %v6461, %v6475
        %v6480 = vld [vmem:[#allocation2 + $0xf0] sm:$0xff]
        %v6481 = vld [vmem:[#allocation2 + $0xf8] sm:$0xff]
        %v6482 = vld [vmem:[#allocation2 + $0x100] sm:$0xff]
        %6486 = vrot.lane.b32.xlu0 %v6480, 118
        %v6487 = vpop.permute.xlu0 %6486
        %6488 = vrot.lane.b32.xlu0 %v6481, 118
        %v6489 = vpop.permute.xlu0 %6488
        %6490 = vrot.lane.b32.xlu0 %v6482, 118
        %v6491 = vpop.permute.xlu0 %6490
        %v6492 = vsel %vm2216, %v6487, %v6489
        %v6493 = vsel %vm2216, %v6489, %v6491
        %v6496 = vadd.f32 %v6478, %v6492
        %v6497 = vadd.f32 %v6479, %v6493
        %v6498 = vld [vmem:[#allocation2 + $0x108] sm:$0xff]
        %v6499 = vld [vmem:[#allocation2 + $0x110] sm:$0xff]
        %v6500 = vld [vmem:[#allocation2 + $0x118] sm:$0xff]
        %6504 = vrot.lane.b32.xlu0 %v6498, 117
        %v6505 = vpop.permute.xlu0 %6504
        %6506 = vrot.lane.b32.xlu0 %v6499, 117
        %v6507 = vpop.permute.xlu0 %6506
        %6508 = vrot.lane.b32.xlu0 %v6500, 117
        %v6509 = vpop.permute.xlu0 %6508
        %v6510 = vsel %vm2235, %v6505, %v6507
        %v6511 = vsel %vm2235, %v6507, %v6509
        %v6514 = vadd.f32 %v6496, %v6510
        %v6515 = vadd.f32 %v6497, %v6511
        %v6516 = vld [vmem:[#allocation2 + $0x120] sm:$0xff]
        %v6517 = vld [vmem:[#allocation2 + $0x128] sm:$0xff]
        %v6518 = vld [vmem:[#allocation2 + $0x130] sm:$0xff]
        %6522 = vrot.lane.b32.xlu0 %v6516, 116
        %v6523 = vpop.permute.xlu0 %6522
        %6524 = vrot.lane.b32.xlu0 %v6517, 116
        %v6525 = vpop.permute.xlu0 %6524
        %6526 = vrot.lane.b32.xlu0 %v6518, 116
        %v6527 = vpop.permute.xlu0 %6526
        %v6528 = vsel %vm2254, %v6523, %v6525
        %v6529 = vsel %vm2254, %v6525, %v6527
        %v6532 = vadd.f32 %v6514, %v6528
        %v6533 = vadd.f32 %v6515, %v6529
        %v6534 = vld [vmem:[#allocation2 + $0x138] sm:$0xff]
        %v6535 = vld [vmem:[#allocation2 + $0x140] sm:$0xff]
        %v6536 = vld [vmem:[#allocation2 + $0x148] sm:$0xff]
        %6540 = vrot.lane.b32.xlu0 %v6534, 115
        %v6541 = vpop.permute.xlu0 %6540
        %6542 = vrot.lane.b32.xlu0 %v6535, 115
        %v6543 = vpop.permute.xlu0 %6542
        %6544 = vrot.lane.b32.xlu0 %v6536, 115
        %v6545 = vpop.permute.xlu0 %6544
        %v6546 = vsel %vm2273, %v6541, %v6543
        %v6547 = vsel %vm2273, %v6543, %v6545
        %v6550 = vadd.f32 %v6532, %v6546
        %v6551 = vadd.f32 %v6533, %v6547
        %v6552 = vld [vmem:[#allocation2 + $0x150] sm:$0xff]
        %v6553 = vld [vmem:[#allocation2 + $0x158] sm:$0xff]
        %v6554 = vld [vmem:[#allocation2 + $0x160] sm:$0xff]
        %6558 = vrot.lane.b32.xlu0 %v6552, 114
        %v6559 = vpop.permute.xlu0 %6558
        %6560 = vrot.lane.b32.xlu0 %v6553, 114
        %v6561 = vpop.permute.xlu0 %6560
        %6562 = vrot.lane.b32.xlu0 %v6554, 114
        %v6563 = vpop.permute.xlu0 %6562
        %v6564 = vsel %vm2292, %v6559, %v6561
        %v6565 = vsel %vm2292, %v6561, %v6563
        %v6568 = vadd.f32 %v6550, %v6564
        %v6569 = vadd.f32 %v6551, %v6565
        %v6570 = vld [vmem:[#allocation2 + $0x168] sm:$0xff]
        %v6571 = vld [vmem:[#allocation2 + $0x170] sm:$0xff]
        %v6572 = vld [vmem:[#allocation2 + $0x178] sm:$0xff]
        %6576 = vrot.lane.b32.xlu0 %v6570, 113
        %v6577 = vpop.permute.xlu0 %6576
        %6578 = vrot.lane.b32.xlu0 %v6571, 113
        %v6579 = vpop.permute.xlu0 %6578
        %6580 = vrot.lane.b32.xlu0 %v6572, 113
        %v6581 = vpop.permute.xlu0 %6580
        %v6582 = vsel %vm2311, %v6577, %v6579
        %v6583 = vsel %vm2311, %v6579, %v6581
        %v6586 = vadd.f32 %v6568, %v6582
        %v6587 = vadd.f32 %v6569, %v6583
        %v6588 = vld [vmem:[#allocation2 + $0x180] sm:$0xff]
        %v6589 = vld [vmem:[#allocation2 + $0x188] sm:$0xff]
        %v6590 = vld [vmem:[#allocation2 + $0x190] sm:$0xff]
        %6594 = vrot.lane.b32.xlu0 %v6588, 112
        %v6595 = vpop.permute.xlu0 %6594
        %6596 = vrot.lane.b32.xlu0 %v6589, 112
        %v6597 = vpop.permute.xlu0 %6596
        %6598 = vrot.lane.b32.xlu0 %v6590, 112
        %v6599 = vpop.permute.xlu0 %6598
        %v6600 = vsel %vm2330, %v6595, %v6597
        %v6601 = vsel %vm2330, %v6597, %v6599
        %v6604 = vadd.f32 %v6586, %v6600
        %v6605 = vadd.f32 %v6587, %v6601
        %v6606 = vld [vmem:[#allocation2 + $0x198] sm:$0xff]
        %v6607 = vld [vmem:[#allocation2 + $0x1a0] sm:$0xff]
        %v6608 = vld [vmem:[#allocation2 + $0x1a8] sm:$0xff]
        %6612 = vrot.lane.b32.xlu0 %v6606, 111
        %v6613 = vpop.permute.xlu0 %6612
        %6614 = vrot.lane.b32.xlu0 %v6607, 111
        %v6615 = vpop.permute.xlu0 %6614
        %6616 = vrot.lane.b32.xlu0 %v6608, 111
        %v6617 = vpop.permute.xlu0 %6616
        %v6618 = vsel %vm2349, %v6613, %v6615
        %v6619 = vsel %vm2349, %v6615, %v6617
        %v6622 = vadd.f32 %v6604, %v6618
        %v6623 = vadd.f32 %v6605, %v6619
        %v6624 = vld [vmem:[#allocation2 + $0x1b0] sm:$0xff]
        %v6625 = vld [vmem:[#allocation2 + $0x1b8] sm:$0xff]
        %v6626 = vld [vmem:[#allocation2 + $0x1c0] sm:$0xff]
        %6630 = vrot.lane.b32.xlu0 %v6624, 110
        %v6631 = vpop.permute.xlu0 %6630
        %6632 = vrot.lane.b32.xlu0 %v6625, 110
        %v6633 = vpop.permute.xlu0 %6632
        %6634 = vrot.lane.b32.xlu0 %v6626, 110
        %v6635 = vpop.permute.xlu0 %6634
        %v6636 = vsel %vm2368, %v6631, %v6633
        %v6637 = vsel %vm2368, %v6633, %v6635
        %v6640 = vadd.f32 %v6622, %v6636
        %v6641 = vadd.f32 %v6623, %v6637
        %v6642 = vld [vmem:[#allocation2 + $0x1c8] sm:$0xff]
        %v6643 = vld [vmem:[#allocation2 + $0x1d0] sm:$0xff]
        %v6644 = vld [vmem:[#allocation2 + $0x1d8] sm:$0xff]
        %6648 = vrot.lane.b32.xlu0 %v6642, 109
        %v6649 = vpop.permute.xlu0 %6648
        %6650 = vrot.lane.b32.xlu0 %v6643, 109
        %v6651 = vpop.permute.xlu0 %6650
        %6652 = vrot.lane.b32.xlu0 %v6644, 109
        %v6653 = vpop.permute.xlu0 %6652
        %v6654 = vsel %vm2387, %v6649, %v6651
        %v6655 = vsel %vm2387, %v6651, %v6653
        %v6658 = vadd.f32 %v6640, %v6654
        %v6659 = vadd.f32 %v6641, %v6655
        %v6660 = vld [vmem:[%s2] sm:$0xff]
        %6662 = vset.pattern.permute.xlu0 0
        %6663 = vperm.xlu0 %6662, %v6660
        %v6664 = vpop.permute.xlu0 %6663
        %v6666 = vadd.f32 %v6658, %v6664
        %v6667 = vadd.f32 %v6659, %v6664
        %v6668 = vmax.f32 %v6666, 0.0
        %v6669 = vmax.f32 %v6667, 0.0
        %6672 = vrot.lane.b32.xlu0 %v6668, 127
        %v6673 = vpop.permute.xlu0 %6672
        %6674 = vrot.lane.b32.xlu0 %v6669, 127
        %v6675 = vpop.permute.xlu0 %6674
        %v6676 = vsel %vm2045, %v6673, %v6675
        %v6679 = vmax.f32 %v6668, %v6676
        %v6680 = vmax.f32 %v6669, %v6675
        %6681 = vrot.lane.b32.xlu0 %v6668, 126
        %v6682 = vpop.permute.xlu0 %6681
        %6683 = vrot.lane.b32.xlu0 %v6669, 126
        %v6684 = vpop.permute.xlu0 %6683
        %v6685 = vsel %vm2064, %v6682, %v6684
        %v6688 = vmax.f32 %v6679, %v6685
        %v6689 = vmax.f32 %v6680, %v6684
        %v6690 = vld [vmem:[%s1] sm:$0xff]
        %v6691 = vld [vmem:[%s1 + $0x8] sm:$0xff]
        %v6692 = vld [vmem:[%s1 + $0x10] sm:$0xff]
        %v6693 = vld [vmem:[%s1 + $0x18] sm:$0xff]
        %v6694 = vld [vmem:[%s1 + $0x20] sm:$0xff]
        %v6695 = vld [vmem:[%s1 + $0x28] sm:$0xff]
        %v6696 = vld [vmem:[%s1 + $0x30] sm:$0xff]
        %v6697 = vld [vmem:[%s1 + $0x38] sm:$0xff]
        %v6698 = vld [vmem:[%s1 + $0x40] sm:$0xff]
        %v6699 = vld [vmem:[%s1 + $0x48] sm:$0xff]
        %v6700 = vld [vmem:[%s1 + $0x50] sm:$0xff]
        %v6701 = vld [vmem:[%s1 + $0x58] sm:$0xff]
        %v6702 = vld [vmem:[%s1 + $0x60] sm:$0xff]
        %v6703 = vld [vmem:[%s1 + $0x68] sm:$0xff]
        %v6704 = vld [vmem:[%s1 + $0x70] sm:$0xff]
        %v6705 = vld [vmem:[%s1 + $0x78] sm:$0xff]
        %v6706 = vld [vmem:[%s1 + $0x80] sm:$0xff]
        %v6707 = vld [vmem:[%s1 + $0x88] sm:$0xff]
        %v6708 = vld [vmem:[%s1 + $0x90] sm:$0xff]
        %v6709 = vld [vmem:[%s1 + $0x98] sm:$0xff]
        %v6710 = vld [vmem:[%s1 + $0xa0] sm:$0xff]
        %v6711 = vld [vmem:[%s1 + $0xa8] sm:$0xff]
        %v6712 = vld [vmem:[%s1 + $0xb0] sm:$0xff]
        %v6713 = vld [vmem:[%s1 + $0xb8] sm:$0xff]
        %v6714 = vld [vmem:[%s1 + $0xc0] sm:$0xff]
        %v6715 = vld [vmem:[%s1 + $0xc8] sm:$0xff]
        %v6716 = vld [vmem:[%s1 + $0xd0] sm:$0xff]
        %v6717 = vld [vmem:[%s1 + $0xd8] sm:$0xff]
        %v6718 = vld [vmem:[%s1 + $0xe0] sm:$0xff]
        %v6719 = vld [vmem:[%s1 + $0xe8] sm:$0xff]
        %v6720 = vld [vmem:[%s1 + $0xf0] sm:$0xff]
        %v6721 = vld [vmem:[%s1 + $0xf8] sm:$0xff]
        %v6722 = vld [vmem:[%s1 + $0x100] sm:$0xff]
        %v6723 = vld [vmem:[%s1 + $0x108] sm:$0xff]
        %v6724 = vld [vmem:[%s1 + $0x110] sm:$0xff]
        %v6725 = vld [vmem:[%s1 + $0x118] sm:$0xff]
        %v6726 = vld [vmem:[%s1 + $0x120] sm:$0xff]
        %v6727 = vld [vmem:[%s1 + $0x128] sm:$0xff]
        %v6728 = vld [vmem:[%s1 + $0x130] sm:$0xff]
        %v6729 = vld [vmem:[%s1 + $0x138] sm:$0xff]
        %v6730 = vld [vmem:[%s1 + $0x140] sm:$0xff]
        %v6731 = vld [vmem:[%s1 + $0x148] sm:$0xff]
        %v6732 = vld [vmem:[%s1 + $0x150] sm:$0xff]
        %v6733 = vld [vmem:[%s1 + $0x158] sm:$0xff]
        %v6734 = vld [vmem:[%s1 + $0x160] sm:$0xff]
        %v6735 = vld [vmem:[%s1 + $0x168] sm:$0xff]
        %v6736 = vld [vmem:[%s1 + $0x170] sm:$0xff]
        %v6737 = vld [vmem:[%s1 + $0x178] sm:$0xff]
        %v6738 = vld [vmem:[%s1 + $0x180] sm:$0xff]
        %v6739 = vld [vmem:[%s1 + $0x188] sm:$0xff]
        %v6740 = vld [vmem:[%s1 + $0x190] sm:$0xff]
        %v6741 = vld [vmem:[%s1 + $0x198] sm:$0xff]
        %v6742 = vld [vmem:[%s1 + $0x1a0] sm:$0xff]
        %v6743 = vld [vmem:[%s1 + $0x1a8] sm:$0xff]
        %v6744 = vld [vmem:[%s1 + $0x1b0] sm:$0xff]
        %v6745 = vld [vmem:[%s1 + $0x1b8] sm:$0xff]
        %v6746 = vld [vmem:[%s1 + $0x1c0] sm:$0xff]
        %v6747 = vld [vmem:[%s1 + $0x1c8] sm:$0xff]
        %v6748 = vld [vmem:[%s1 + $0x1d0] sm:$0xff]
        %v6749 = vld [vmem:[%s1 + $0x1d8] sm:$0xff]
        %s6750 = scalar_lea.vmem %s226, 2376
        %v6751 = vld [vmem:[%s6750] sm:$0xff]
        %v6752 = vld [vmem:[%s6750 + $0x8] sm:$0xff]
        %v6753 = vld [vmem:[%s6750 + $0x10] sm:$0xff]
        %v6754 = vld [vmem:[%s6750 + $0x18] sm:$0xff]
        %v6755 = vld [vmem:[%s6750 + $0x20] sm:$0xff]
        %v6756 = vld [vmem:[%s6750 + $0x28] sm:$0xff]
        %v6757 = vld [vmem:[%s6750 + $0x30] sm:$0xff]
        %v6758 = vld [vmem:[%s6750 + $0x38] sm:$0xff]
        %v6759 = vld [vmem:[%s6750 + $0x40] sm:$0xff]
        %v6760 = vld [vmem:[%s6750 + $0x48] sm:$0xff]
        %v6761 = vld [vmem:[%s6750 + $0x50] sm:$0xff]
        %v6762 = vld [vmem:[%s6750 + $0x58] sm:$0xff]
        %v6763 = vld [vmem:[%s6750 + $0x60] sm:$0xff]
        %v6764 = vld [vmem:[%s6750 + $0x68] sm:$0xff]
        %v6765 = vld [vmem:[%s6750 + $0x70] sm:$0xff]
        %v6766 = vld [vmem:[%s6750 + $0x78] sm:$0xff]
        %v6767 = vld [vmem:[%s6750 + $0x80] sm:$0xff]
        %v6768 = vld [vmem:[%s6750 + $0x88] sm:$0xff]
        %v6769 = vld [vmem:[%s6750 + $0x90] sm:$0xff]
        %v6770 = vld [vmem:[%s6750 + $0x98] sm:$0xff]
        %v6771 = vld [vmem:[%s6750 + $0xa0] sm:$0xff]
        %v6772 = vld [vmem:[%s6750 + $0xa8] sm:$0xff]
        %v6773 = vld [vmem:[%s6750 + $0xb0] sm:$0xff]
        %v6774 = vld [vmem:[%s6750 + $0xb8] sm:$0xff]
        %v6775 = vld [vmem:[%s6750 + $0xc0] sm:$0xff]
        %v6776 = vld [vmem:[%s6750 + $0xc8] sm:$0xff]
        %v6777 = vld [vmem:[%s6750 + $0xd0] sm:$0xff]
        %v6778 = vld [vmem:[%s6750 + $0xd8] sm:$0xff]
        %v6779 = vld [vmem:[%s6750 + $0xe0] sm:$0xff]
        %v6780 = vld [vmem:[%s6750 + $0xe8] sm:$0xff]
        %v6781 = vld [vmem:[%s6750 + $0xf0] sm:$0xff]
        %v6782 = vld [vmem:[%s6750 + $0xf8] sm:$0xff]
        %v6783 = vld [vmem:[%s6750 + $0x100] sm:$0xff]
        %v6784 = vld [vmem:[%s6750 + $0x108] sm:$0xff]
        %v6785 = vld [vmem:[%s6750 + $0x110] sm:$0xff]
        %v6786 = vld [vmem:[%s6750 + $0x118] sm:$0xff]
        %v6787 = vld [vmem:[%s6750 + $0x120] sm:$0xff]
        %v6788 = vld [vmem:[%s6750 + $0x128] sm:$0xff]
        %v6789 = vld [vmem:[%s6750 + $0x130] sm:$0xff]
        %v6790 = vld [vmem:[%s6750 + $0x138] sm:$0xff]
        %v6791 = vld [vmem:[%s6750 + $0x140] sm:$0xff]
        %v6792 = vld [vmem:[%s6750 + $0x148] sm:$0xff]
        %v6793 = vld [vmem:[%s6750 + $0x150] sm:$0xff]
        %v6794 = vld [vmem:[%s6750 + $0x158] sm:$0xff]
        %v6795 = vld [vmem:[%s6750 + $0x160] sm:$0xff]
        %v6796 = vld [vmem:[%s6750 + $0x168] sm:$0xff]
        %v6797 = vld [vmem:[%s6750 + $0x170] sm:$0xff]
        %v6798 = vld [vmem:[%s6750 + $0x178] sm:$0xff]
        %v6799 = vld [vmem:[%s6750 + $0x180] sm:$0xff]
        %v6800 = vld [vmem:[%s6750 + $0x188] sm:$0xff]
        %v6801 = vld [vmem:[%s6750 + $0x190] sm:$0xff]
        %v6802 = vld [vmem:[%s6750 + $0x198] sm:$0xff]
        %v6803 = vld [vmem:[%s6750 + $0x1a0] sm:$0xff]
        %v6804 = vld [vmem:[%s6750 + $0x1a8] sm:$0xff]
        %v6805 = vld [vmem:[%s6750 + $0x1b0] sm:$0xff]
        %v6806 = vld [vmem:[%s6750 + $0x1b8] sm:$0xff]
        %v6807 = vld [vmem:[%s6750 + $0x1c0] sm:$0xff]
        %v6808 = vld [vmem:[%s6750 + $0x1c8] sm:$0xff]
        %v6809 = vld [vmem:[%s6750 + $0x1d0] sm:$0xff]
        %v6810 = vld [vmem:[%s6750 + $0x1d8] sm:$0xff]
        %v6811 = vld [vmem:[%s6750 + $0x1e0] sm:$0xff]
        %v6812 = vld [vmem:[%s6750 + $0x1e8] sm:$0xff]
        %v6813 = vld [vmem:[%s6750 + $0x1f0] sm:$0xff]
        %v6814 = vld [vmem:[%s6750 + $0x1f8] sm:$0xff]
        %v6815 = vld [vmem:[%s6750 + $0x200] sm:$0xff]
        %v6816 = vld [vmem:[%s6750 + $0x208] sm:$0xff]
        %v6817 = vld [vmem:[%s6750 + $0x210] sm:$0xff]
        %v6818 = vld [vmem:[%s6750 + $0x218] sm:$0xff]
        %v6819 = vld [vmem:[%s6750 + $0x220] sm:$0xff]
        %v6820 = vld [vmem:[%s6750 + $0x228] sm:$0xff]
        %v6821 = vld [vmem:[%s6750 + $0x230] sm:$0xff]
        %v6822 = vld [vmem:[%s6750 + $0x238] sm:$0xff]
        %v6823 = vld [vmem:[%s6750 + $0x240] sm:$0xff]
        %v6824 = vld [vmem:[%s6750 + $0x248] sm:$0xff]
        %v6825 = vld [vmem:[%s6750 + $0x250] sm:$0xff]
        %v6826 = vld [vmem:[%s6750 + $0x258] sm:$0xff]
        %v6827 = vld [vmem:[%s6750 + $0x260] sm:$0xff]
        %v6828 = vld [vmem:[%s6750 + $0x268] sm:$0xff]
        %v6829 = vld [vmem:[%s6750 + $0x270] sm:$0xff]
        %v6830 = vld [vmem:[%s6750 + $0x278] sm:$0xff]
        %v6831 = vld [vmem:[%s6750 + $0x280] sm:$0xff]
        %v6832 = vld [vmem:[%s6750 + $0x288] sm:$0xff]
        %v6833 = vld [vmem:[%s6750 + $0x290] sm:$0xff]
        %v6834 = vld [vmem:[%s6750 + $0x298] sm:$0xff]
        %v6835 = vld [vmem:[%s6750 + $0x2a0] sm:$0xff]
        %v6836 = vld [vmem:[%s6750 + $0x2a8] sm:$0xff]
        %v6837 = vld [vmem:[%s6750 + $0x2b0] sm:$0xff]
        %v6838 = vld [vmem:[%s6750 + $0x2b8] sm:$0xff]
        %v6839 = vld [vmem:[%s6750 + $0x2c0] sm:$0xff]
        %v6840 = vld [vmem:[%s6750 + $0x2c8] sm:$0xff]
        %v6841 = vld [vmem:[%s6750 + $0x2d0] sm:$0xff]
        %v6842 = vld [vmem:[%s6750 + $0x2d8] sm:$0xff]
        %v6843 = vld [vmem:[%s6750 + $0x2e0] sm:$0xff]
        %v6844 = vld [vmem:[%s6750 + $0x2e8] sm:$0xff]
        %v6845 = vld [vmem:[%s6750 + $0x2f0] sm:$0xff]
        %v6846 = vld [vmem:[%s6750 + $0x2f8] sm:$0xff]
        %v6847 = vld [vmem:[%s6750 + $0x300] sm:$0x33]
        %v6848 = vld [vmem:[%s6750 + $0x308] sm:$0x33]
        %v6849 = vld [vmem:[%s6750 + $0x310] sm:$0x33]
        %v6910 = vunpack.c.l.b16 %v6690
        %v6911 = vunpack.c.h.b16 %v6690
        %v6912 = vunpack.c.l.b16 %v6691
        %v6913 = vunpack.c.h.b16 %v6691
        %v6914 = vunpack.c.l.b16 %v6692
        %v6915 = vunpack.c.h.b16 %v6692
        %v6916 = vunpack.c.l.b16 %v6693
        %v6917 = vunpack.c.h.b16 %v6693
        %v6918 = vunpack.c.l.b16 %v6694
        %v6919 = vunpack.c.h.b16 %v6694
        %v6920 = vunpack.c.l.b16 %v6695
        %v6921 = vunpack.c.h.b16 %v6695
        %v6922 = vunpack.c.l.b16 %v6696
        %v6923 = vunpack.c.h.b16 %v6696
        %v6924 = vunpack.c.l.b16 %v6697
        %v6925 = vunpack.c.h.b16 %v6697
        %v6926 = vunpack.c.l.b16 %v6698
        %v6927 = vunpack.c.h.b16 %v6698
        %v6928 = vunpack.c.l.b16 %v6699
        %v6929 = vunpack.c.h.b16 %v6699
        %v6930 = vunpack.c.l.b16 %v6700
        %v6931 = vunpack.c.h.b16 %v6700
        %v6932 = vunpack.c.l.b16 %v6701
        %v6933 = vunpack.c.h.b16 %v6701
        %v6934 = vunpack.c.l.b16 %v6702
        %v6935 = vunpack.c.h.b16 %v6702
        %v6936 = vunpack.c.l.b16 %v6703
        %v6937 = vunpack.c.h.b16 %v6703
        %v6938 = vunpack.c.l.b16 %v6704
        %v6939 = vunpack.c.h.b16 %v6704
        %v6940 = vunpack.c.l.b16 %v6705
        %v6941 = vunpack.c.h.b16 %v6705
        %v6942 = vunpack.c.l.b16 %v6706
        %v6943 = vunpack.c.h.b16 %v6706
        %v6944 = vunpack.c.l.b16 %v6707
        %v6945 = vunpack.c.h.b16 %v6707
        %v6946 = vunpack.c.l.b16 %v6708
        %v6947 = vunpack.c.h.b16 %v6708
        %v6948 = vunpack.c.l.b16 %v6709
        %v6949 = vunpack.c.h.b16 %v6709
        %v6950 = vunpack.c.l.b16 %v6710
        %v6951 = vunpack.c.h.b16 %v6710
        %v6952 = vunpack.c.l.b16 %v6711
        %v6953 = vunpack.c.h.b16 %v6711
        %v6954 = vunpack.c.l.b16 %v6712
        %v6955 = vunpack.c.h.b16 %v6712
        %v6956 = vunpack.c.l.b16 %v6713
        %v6957 = vunpack.c.h.b16 %v6713
        %v6958 = vunpack.c.l.b16 %v6714
        %v6959 = vunpack.c.h.b16 %v6714
        %v6960 = vunpack.c.l.b16 %v6715
        %v6961 = vunpack.c.h.b16 %v6715
        %v6962 = vunpack.c.l.b16 %v6716
        %v6963 = vunpack.c.h.b16 %v6716
        %v6964 = vunpack.c.l.b16 %v6717
        %v6965 = vunpack.c.h.b16 %v6717
        %v6966 = vunpack.c.l.b16 %v6718
        %v6967 = vunpack.c.h.b16 %v6718
        %v6968 = vunpack.c.l.b16 %v6719
        %v6969 = vunpack.c.h.b16 %v6719
        %v6970 = vunpack.c.l.b16 %v6720
        %v6971 = vunpack.c.h.b16 %v6720
        %v6972 = vunpack.c.l.b16 %v6721
        %v6973 = vunpack.c.h.b16 %v6721
        %v6974 = vunpack.c.l.b16 %v6722
        %v6975 = vunpack.c.h.b16 %v6722
        %v6976 = vunpack.c.l.b16 %v6723
        %v6977 = vunpack.c.h.b16 %v6723
        %v6978 = vunpack.c.l.b16 %v6724
        %v6979 = vunpack.c.h.b16 %v6724
        %v6980 = vunpack.c.l.b16 %v6725
        %v6981 = vunpack.c.h.b16 %v6725
        %v6982 = vunpack.c.l.b16 %v6726
        %v6983 = vunpack.c.h.b16 %v6726
        %v6984 = vunpack.c.l.b16 %v6727
        %v6985 = vunpack.c.h.b16 %v6727
        %v6986 = vunpack.c.l.b16 %v6728
        %v6987 = vunpack.c.h.b16 %v6728
        %v6988 = vunpack.c.l.b16 %v6729
        %v6989 = vunpack.c.h.b16 %v6729
        %v6990 = vunpack.c.l.b16 %v6730
        %v6991 = vunpack.c.h.b16 %v6730
        %v6992 = vunpack.c.l.b16 %v6731
        %v6993 = vunpack.c.h.b16 %v6731
        %v6994 = vunpack.c.l.b16 %v6732
        %v6995 = vunpack.c.h.b16 %v6732
        %v6996 = vunpack.c.l.b16 %v6733
        %v6997 = vunpack.c.h.b16 %v6733
        %v6998 = vunpack.c.l.b16 %v6734
        %v6999 = vunpack.c.h.b16 %v6734
        %v7000 = vunpack.c.l.b16 %v6735
        %v7001 = vunpack.c.h.b16 %v6735
        %v7002 = vunpack.c.l.b16 %v6736
        %v7003 = vunpack.c.h.b16 %v6736
        %v7004 = vunpack.c.l.b16 %v6737
        %v7005 = vunpack.c.h.b16 %v6737
        %v7006 = vunpack.c.l.b16 %v6738
        %v7007 = vunpack.c.h.b16 %v6738
        %v7008 = vunpack.c.l.b16 %v6739
        %v7009 = vunpack.c.h.b16 %v6739
        %v7010 = vunpack.c.l.b16 %v6740
        %v7011 = vunpack.c.h.b16 %v6740
        %v7012 = vunpack.c.l.b16 %v6741
        %v7013 = vunpack.c.h.b16 %v6741
        %v7014 = vunpack.c.l.b16 %v6742
        %v7015 = vunpack.c.h.b16 %v6742
        %v7016 = vunpack.c.l.b16 %v6743
        %v7017 = vunpack.c.h.b16 %v6743
        %v7018 = vunpack.c.l.b16 %v6744
        %v7019 = vunpack.c.h.b16 %v6744
        %v7020 = vunpack.c.l.b16 %v6745
        %v7021 = vunpack.c.h.b16 %v6745
        %v7022 = vunpack.c.l.b16 %v6746
        %v7023 = vunpack.c.h.b16 %v6746
        %v7024 = vunpack.c.l.b16 %v6747
        %v7025 = vunpack.c.h.b16 %v6747
        %v7026 = vunpack.c.l.b16 %v6748
        %v7027 = vunpack.c.h.b16 %v6748
        %v7028 = vunpack.c.l.b16 %v6749
        %v7029 = vunpack.c.h.b16 %v6749
        %v7030 = vpack.c.b16 %v6916, %v6910
        %v7031 = vpack.c.b16 %v6917, %v6911
        %v7032 = vpack.c.b16 %v6918, %v6912
        %v7033 = vpack.c.b16 %v6919, %v6913
        %v7034 = vpack.c.b16 %v6920, %v6914
        %v7035 = vpack.c.b16 %v6921, %v6915
        %v7036 = vpack.c.b16 %v6928, %v6922
        %v7037 = vpack.c.b16 %v6929, %v6923
        %v7038 = vpack.c.b16 %v6930, %v6924
        %v7039 = vpack.c.b16 %v6931, %v6925
        %v7040 = vpack.c.b16 %v6932, %v6926
        %v7041 = vpack.c.b16 %v6933, %v6927
        %v7042 = vpack.c.b16 %v6940, %v6934
        %v7043 = vpack.c.b16 %v6941, %v6935
        %v7044 = vpack.c.b16 %v6942, %v6936
        %v7045 = vpack.c.b16 %v6943, %v6937
        %v7046 = vpack.c.b16 %v6944, %v6938
        %v7047 = vpack.c.b16 %v6945, %v6939
        %v7048 = vpack.c.b16 %v6952, %v6946
        %v7049 = vpack.c.b16 %v6953, %v6947
        %v7050 = vpack.c.b16 %v6954, %v6948
        %v7051 = vpack.c.b16 %v6955, %v6949
        %v7052 = vpack.c.b16 %v6956, %v6950
        %v7053 = vpack.c.b16 %v6957, %v6951
        %v7054 = vpack.c.b16 %v6964, %v6958
        %v7055 = vpack.c.b16 %v6965, %v6959
        %v7056 = vpack.c.b16 %v6966, %v6960
        %v7057 = vpack.c.b16 %v6967, %v6961
        %v7058 = vpack.c.b16 %v6968, %v6962
        %v7059 = vpack.c.b16 %v6969, %v6963
        %v7060 = vpack.c.b16 %v6976, %v6970
        %v7061 = vpack.c.b16 %v6977, %v6971
        %v7062 = vpack.c.b16 %v6978, %v6972
        %v7063 = vpack.c.b16 %v6979, %v6973
        %v7064 = vpack.c.b16 %v6980, %v6974
        %v7065 = vpack.c.b16 %v6981, %v6975
        %v7066 = vpack.c.b16 %v6988, %v6982
        %v7067 = vpack.c.b16 %v6989, %v6983
        %v7068 = vpack.c.b16 %v6990, %v6984
        %v7069 = vpack.c.b16 %v6991, %v6985
        %v7070 = vpack.c.b16 %v6992, %v6986
        %v7071 = vpack.c.b16 %v6993, %v6987
        %v7072 = vpack.c.b16 %v7000, %v6994
        %v7073 = vpack.c.b16 %v7001, %v6995
        %v7074 = vpack.c.b16 %v7002, %v6996
        %v7075 = vpack.c.b16 %v7003, %v6997
        %v7076 = vpack.c.b16 %v7004, %v6998
        %v7077 = vpack.c.b16 %v7005, %v6999
        %v7078 = vpack.c.b16 %v7012, %v7006
        %v7079 = vpack.c.b16 %v7013, %v7007
        %v7080 = vpack.c.b16 %v7014, %v7008
        %v7081 = vpack.c.b16 %v7015, %v7009
        %v7082 = vpack.c.b16 %v7016, %v7010
        %v7083 = vpack.c.b16 %v7017, %v7011
        %v7084 = vpack.c.b16 %v7024, %v7018
        %v7085 = vpack.c.b16 %v7025, %v7019
        %v7086 = vpack.c.b16 %v7026, %v7020
        %v7087 = vpack.c.b16 %v7027, %v7021
        %v7088 = vpack.c.b16 %v7028, %v7022
        %v7089 = vpack.c.b16 %v7029, %v7023
        %v7249 = vunpack.c.l.b16 %v6751
        %v7250 = vunpack.c.h.b16 %v6751
        %v7251 = vunpack.c.l.b16 %v6752
        %v7252 = vunpack.c.h.b16 %v6752
        %v7253 = vunpack.c.l.b16 %v6753
        %v7254 = vunpack.c.h.b16 %v6753
        %v7255 = vunpack.c.l.b16 %v6754
        %v7256 = vunpack.c.h.b16 %v6754
        %v7257 = vunpack.c.l.b16 %v6755
        %v7258 = vunpack.c.h.b16 %v6755
        %v7259 = vunpack.c.l.b16 %v6756
        %v7260 = vunpack.c.h.b16 %v6756
        %v7261 = vunpack.c.l.b16 %v6757
        %v7262 = vunpack.c.h.b16 %v6757
        %v7263 = vunpack.c.l.b16 %v6758
        %v7264 = vunpack.c.h.b16 %v6758
        %v7265 = vunpack.c.l.b16 %v6759
        %v7266 = vunpack.c.h.b16 %v6759
        %v7267 = vunpack.c.l.b16 %v6760
        %v7268 = vunpack.c.h.b16 %v6760
        %v7269 = vunpack.c.l.b16 %v6761
        %v7270 = vunpack.c.h.b16 %v6761
        %v7271 = vunpack.c.l.b16 %v6762
        %v7272 = vunpack.c.h.b16 %v6762
        %v7273 = vunpack.c.l.b16 %v6763
        %v7274 = vunpack.c.h.b16 %v6763
        %v7275 = vunpack.c.l.b16 %v6764
        %v7276 = vunpack.c.h.b16 %v6764
        %v7277 = vunpack.c.l.b16 %v6765
        %v7278 = vunpack.c.h.b16 %v6765
        %v7279 = vunpack.c.l.b16 %v6766
        %v7280 = vunpack.c.h.b16 %v6766
        %v7281 = vunpack.c.l.b16 %v6767
        %v7282 = vunpack.c.h.b16 %v6767
        %v7283 = vunpack.c.l.b16 %v6768
        %v7284 = vunpack.c.h.b16 %v6768
        %v7285 = vunpack.c.l.b16 %v6769
        %v7286 = vunpack.c.h.b16 %v6769
        %v7287 = vunpack.c.l.b16 %v6770
        %v7288 = vunpack.c.h.b16 %v6770
        %v7289 = vunpack.c.l.b16 %v6771
        %v7290 = vunpack.c.h.b16 %v6771
        %v7291 = vunpack.c.l.b16 %v6772
        %v7292 = vunpack.c.h.b16 %v6772
        %v7293 = vunpack.c.l.b16 %v6773
        %v7294 = vunpack.c.h.b16 %v6773
        %v7295 = vunpack.c.l.b16 %v6774
        %v7296 = vunpack.c.h.b16 %v6774
        %v7297 = vunpack.c.l.b16 %v6775
        %v7298 = vunpack.c.h.b16 %v6775
        %v7299 = vunpack.c.l.b16 %v6776
        %v7300 = vunpack.c.h.b16 %v6776
        %v7301 = vunpack.c.l.b16 %v6777
        %v7302 = vunpack.c.h.b16 %v6777
        %v7303 = vunpack.c.l.b16 %v6778
        %v7304 = vunpack.c.h.b16 %v6778
        %v7305 = vunpack.c.l.b16 %v6779
        %v7306 = vunpack.c.h.b16 %v6779
        %v7307 = vunpack.c.l.b16 %v6780
        %v7308 = vunpack.c.h.b16 %v6780
        %v7309 = vunpack.c.l.b16 %v6781
        %v7310 = vunpack.c.h.b16 %v6781
        %v7311 = vunpack.c.l.b16 %v6782
        %v7312 = vunpack.c.h.b16 %v6782
        %v7313 = vunpack.c.l.b16 %v6783
        %v7314 = vunpack.c.h.b16 %v6783
        %v7315 = vunpack.c.l.b16 %v6784
        %v7316 = vunpack.c.h.b16 %v6784
        %v7317 = vunpack.c.l.b16 %v6785
        %v7318 = vunpack.c.h.b16 %v6785
        %v7319 = vunpack.c.l.b16 %v6786
        %v7320 = vunpack.c.h.b16 %v6786
        %v7321 = vunpack.c.l.b16 %v6787
        %v7322 = vunpack.c.h.b16 %v6787
        %v7323 = vunpack.c.l.b16 %v6788
        %v7324 = vunpack.c.h.b16 %v6788
        %v7325 = vunpack.c.l.b16 %v6789
        %v7326 = vunpack.c.h.b16 %v6789
        %v7327 = vunpack.c.l.b16 %v6790
        %v7328 = vunpack.c.h.b16 %v6790
        %v7329 = vunpack.c.l.b16 %v6791
        %v7330 = vunpack.c.h.b16 %v6791
        %v7331 = vunpack.c.l.b16 %v6792
        %v7332 = vunpack.c.h.b16 %v6792
        %v7333 = vunpack.c.l.b16 %v6793
        %v7334 = vunpack.c.h.b16 %v6793
        %v7335 = vunpack.c.l.b16 %v6794
        %v7336 = vunpack.c.h.b16 %v6794
        %v7337 = vunpack.c.l.b16 %v6795
        %v7338 = vunpack.c.h.b16 %v6795
        %v7339 = vunpack.c.l.b16 %v6796
        %v7340 = vunpack.c.h.b16 %v6796
        %v7341 = vunpack.c.l.b16 %v6797
        %v7342 = vunpack.c.h.b16 %v6797
        %v7343 = vunpack.c.l.b16 %v6798
        %v7344 = vunpack.c.h.b16 %v6798
        %v7345 = vunpack.c.l.b16 %v6799
        %v7346 = vunpack.c.h.b16 %v6799
        %v7347 = vunpack.c.l.b16 %v6800
        %v7348 = vunpack.c.h.b16 %v6800
        %v7349 = vunpack.c.l.b16 %v6801
        %v7350 = vunpack.c.h.b16 %v6801
        %v7351 = vunpack.c.l.b16 %v6802
        %v7352 = vunpack.c.h.b16 %v6802
        %v7353 = vunpack.c.l.b16 %v6803
        %v7354 = vunpack.c.h.b16 %v6803
        %v7355 = vunpack.c.l.b16 %v6804
        %v7356 = vunpack.c.h.b16 %v6804
        %v7357 = vunpack.c.l.b16 %v6805
        %v7358 = vunpack.c.h.b16 %v6805
        %v7359 = vunpack.c.l.b16 %v6806
        %v7360 = vunpack.c.h.b16 %v6806
        %v7361 = vunpack.c.l.b16 %v6807
        %v7362 = vunpack.c.h.b16 %v6807
        %v7363 = vunpack.c.l.b16 %v6808
        %v7364 = vunpack.c.h.b16 %v6808
        %v7365 = vunpack.c.l.b16 %v6809
        %v7366 = vunpack.c.h.b16 %v6809
        %v7367 = vunpack.c.l.b16 %v6810
        %v7368 = vunpack.c.h.b16 %v6810
        %v7369 = vunpack.c.l.b16 %v6811
        %v7370 = vunpack.c.h.b16 %v6811
        %v7371 = vunpack.c.l.b16 %v6812
        %v7372 = vunpack.c.h.b16 %v6812
        %v7373 = vunpack.c.l.b16 %v6813
        %v7374 = vunpack.c.h.b16 %v6813
        %v7375 = vunpack.c.l.b16 %v6814
        %v7376 = vunpack.c.h.b16 %v6814
        %v7377 = vunpack.c.l.b16 %v6815
        %v7378 = vunpack.c.h.b16 %v6815
        %v7379 = vunpack.c.l.b16 %v6816
        %v7380 = vunpack.c.h.b16 %v6816
        %v7381 = vunpack.c.l.b16 %v6817
        %v7382 = vunpack.c.h.b16 %v6817
        %v7383 = vunpack.c.l.b16 %v6818
        %v7384 = vunpack.c.h.b16 %v6818
        %v7385 = vunpack.c.l.b16 %v6819
        %v7386 = vunpack.c.h.b16 %v6819
        %v7387 = vunpack.c.l.b16 %v6820
        %v7388 = vunpack.c.h.b16 %v6820
        %v7389 = vunpack.c.l.b16 %v6821
        %v7390 = vunpack.c.h.b16 %v6821
        %v7391 = vunpack.c.l.b16 %v6822
        %v7392 = vunpack.c.h.b16 %v6822
        %v7393 = vunpack.c.l.b16 %v6823
        %v7394 = vunpack.c.h.b16 %v6823
        %v7395 = vunpack.c.l.b16 %v6824
        %v7396 = vunpack.c.h.b16 %v6824
        %v7397 = vunpack.c.l.b16 %v6825
        %v7398 = vunpack.c.h.b16 %v6825
        %v7399 = vunpack.c.l.b16 %v6826
        %v7400 = vunpack.c.h.b16 %v6826
        %v7401 = vunpack.c.l.b16 %v6827
        %v7402 = vunpack.c.h.b16 %v6827
        %v7403 = vunpack.c.l.b16 %v6828
        %v7404 = vunpack.c.h.b16 %v6828
        %v7405 = vunpack.c.l.b16 %v6829
        %v7406 = vunpack.c.h.b16 %v6829
        %v7407 = vunpack.c.l.b16 %v6830
        %v7408 = vunpack.c.h.b16 %v6830
        %v7409 = vunpack.c.l.b16 %v6831
        %v7410 = vunpack.c.h.b16 %v6831
        %v7411 = vunpack.c.l.b16 %v6832
        %v7412 = vunpack.c.h.b16 %v6832
        %v7413 = vunpack.c.l.b16 %v6833
        %v7414 = vunpack.c.h.b16 %v6833
        %v7415 = vunpack.c.l.b16 %v6834
        %v7416 = vunpack.c.h.b16 %v6834
        %v7417 = vunpack.c.l.b16 %v6835
        %v7418 = vunpack.c.h.b16 %v6835
        %v7419 = vunpack.c.l.b16 %v6836
        %v7420 = vunpack.c.h.b16 %v6836
        %v7421 = vunpack.c.l.b16 %v6837
        %v7422 = vunpack.c.h.b16 %v6837
        %v7423 = vunpack.c.l.b16 %v6838
        %v7424 = vunpack.c.h.b16 %v6838
        %v7425 = vunpack.c.l.b16 %v6839
        %v7426 = vunpack.c.h.b16 %v6839
        %v7427 = vunpack.c.l.b16 %v6840
        %v7428 = vunpack.c.h.b16 %v6840
        %v7429 = vunpack.c.l.b16 %v6841
        %v7430 = vunpack.c.h.b16 %v6841
        %v7431 = vunpack.c.l.b16 %v6842
        %v7432 = vunpack.c.h.b16 %v6842
        %v7433 = vunpack.c.l.b16 %v6843
        %v7434 = vunpack.c.h.b16 %v6843
        %v7435 = vunpack.c.l.b16 %v6844
        %v7436 = vunpack.c.h.b16 %v6844
        %v7437 = vunpack.c.l.b16 %v6845
        %v7438 = vunpack.c.h.b16 %v6845
        %v7439 = vunpack.c.l.b16 %v6846
        %v7440 = vunpack.c.h.b16 %v6846
        %v7441 = vunpack.c.l.b16 %v6847
        %v7442 = vunpack.c.h.b16 %v6847
        %v7443 = vunpack.c.l.b16 %v6848
        %v7444 = vunpack.c.h.b16 %v6848
        %v7445 = vunpack.c.l.b16 %v6849
        %v7446 = vunpack.c.h.b16 %v6849
        %v7447 = vpack.c.b16 %v7255, %v7249
        %v7448 = vpack.c.b16 %v7256, %v7250
        %v7449 = vpack.c.b16 %v7257, %v7251
        %v7450 = vpack.c.b16 %v7258, %v7252
        %v7451 = vpack.c.b16 %v7259, %v7253
        %v7452 = vpack.c.b16 %v7260, %v7254
        %v7453 = vpack.c.b16 %v7267, %v7261
        %v7454 = vpack.c.b16 %v7268, %v7262
        %v7455 = vpack.c.b16 %v7269, %v7263
        %v7456 = vpack.c.b16 %v7270, %v7264
        %v7457 = vpack.c.b16 %v7271, %v7265
        %v7458 = vpack.c.b16 %v7272, %v7266
        %v7459 = vpack.c.b16 %v7279, %v7273
        %v7460 = vpack.c.b16 %v7280, %v7274
        %v7461 = vpack.c.b16 %v7281, %v7275
        %v7462 = vpack.c.b16 %v7282, %v7276
        %v7463 = vpack.c.b16 %v7283, %v7277
        %v7464 = vpack.c.b16 %v7284, %v7278
        %v7465 = vpack.c.b16 %v7291, %v7285
        %v7466 = vpack.c.b16 %v7292, %v7286
        %v7467 = vpack.c.b16 %v7293, %v7287
        %v7468 = vpack.c.b16 %v7294, %v7288
        %v7469 = vpack.c.b16 %v7295, %v7289
        %v7470 = vpack.c.b16 %v7296, %v7290
        %v7471 = vpack.c.b16 %v7303, %v7297
        %v7472 = vpack.c.b16 %v7304, %v7298
        %v7473 = vpack.c.b16 %v7305, %v7299
        %v7474 = vpack.c.b16 %v7306, %v7300
        %v7475 = vpack.c.b16 %v7307, %v7301
        %v7476 = vpack.c.b16 %v7308, %v7302
        %v7477 = vpack.c.b16 %v7315, %v7309
        %v7478 = vpack.c.b16 %v7316, %v7310
        %v7479 = vpack.c.b16 %v7317, %v7311
        %v7480 = vpack.c.b16 %v7318, %v7312
        %v7481 = vpack.c.b16 %v7319, %v7313
        %v7482 = vpack.c.b16 %v7320, %v7314
        %v7483 = vpack.c.b16 %v7327, %v7321
        %v7484 = vpack.c.b16 %v7328, %v7322
        %v7485 = vpack.c.b16 %v7329, %v7323
        %v7486 = vpack.c.b16 %v7330, %v7324
        %v7487 = vpack.c.b16 %v7331, %v7325
        %v7488 = vpack.c.b16 %v7332, %v7326
        %v7489 = vpack.c.b16 %v7339, %v7333
        %v7490 = vpack.c.b16 %v7340, %v7334
        %v7491 = vpack.c.b16 %v7341, %v7335
        %v7492 = vpack.c.b16 %v7342, %v7336
        %v7493 = vpack.c.b16 %v7343, %v7337
        %v7494 = vpack.c.b16 %v7344, %v7338
        %v7495 = vpack.c.b16 %v7351, %v7345
        %v7496 = vpack.c.b16 %v7352, %v7346
        %v7497 = vpack.c.b16 %v7353, %v7347
        %v7498 = vpack.c.b16 %v7354, %v7348
        %v7499 = vpack.c.b16 %v7355, %v7349
        %v7500 = vpack.c.b16 %v7356, %v7350
        %v7501 = vpack.c.b16 %v7363, %v7357
        %v7502 = vpack.c.b16 %v7364, %v7358
        %v7503 = vpack.c.b16 %v7365, %v7359
        %v7504 = vpack.c.b16 %v7366, %v7360
        %v7505 = vpack.c.b16 %v7367, %v7361
        %v7506 = vpack.c.b16 %v7368, %v7362
        %v7507 = vpack.c.b16 %v7375, %v7369
        %v7508 = vpack.c.b16 %v7376, %v7370
        %v7509 = vpack.c.b16 %v7377, %v7371
        %v7510 = vpack.c.b16 %v7378, %v7372
        %v7511 = vpack.c.b16 %v7379, %v7373
        %v7512 = vpack.c.b16 %v7380, %v7374
        %v7513 = vpack.c.b16 %v7387, %v7381
        %v7514 = vpack.c.b16 %v7388, %v7382
        %v7515 = vpack.c.b16 %v7389, %v7383
        %v7516 = vpack.c.b16 %v7390, %v7384
        %v7517 = vpack.c.b16 %v7391, %v7385
        %v7518 = vpack.c.b16 %v7392, %v7386
        %v7519 = vpack.c.b16 %v7399, %v7393
        %v7520 = vpack.c.b16 %v7400, %v7394
        %v7521 = vpack.c.b16 %v7401, %v7395
        %v7522 = vpack.c.b16 %v7402, %v7396
        %v7523 = vpack.c.b16 %v7403, %v7397
        %v7524 = vpack.c.b16 %v7404, %v7398
        %v7525 = vpack.c.b16 %v7411, %v7405
        %v7526 = vpack.c.b16 %v7412, %v7406
        %v7527 = vpack.c.b16 %v7413, %v7407
        %v7528 = vpack.c.b16 %v7414, %v7408
        %v7529 = vpack.c.b16 %v7415, %v7409
        %v7530 = vpack.c.b16 %v7416, %v7410
        %v7531 = vpack.c.b16 %v7423, %v7417
        %v7532 = vpack.c.b16 %v7424, %v7418
        %v7533 = vpack.c.b16 %v7425, %v7419
        %v7534 = vpack.c.b16 %v7426, %v7420
        %v7535 = vpack.c.b16 %v7427, %v7421
        %v7536 = vpack.c.b16 %v7428, %v7422
        %v7537 = vpack.c.b16 %v7435, %v7429
        %v7538 = vpack.c.b16 %v7436, %v7430
        %v7539 = vpack.c.b16 %v7437, %v7431
        %v7540 = vpack.c.b16 %v7438, %v7432
        %v7541 = vpack.c.b16 %v7439, %v7433
        %v7542 = vpack.c.b16 %v7440, %v7434
        %v7543 = vpack.c.b16 %v7441, %v7441
        %v7544 = vpack.c.b16 %v7442, %v7442
        %v7545 = vpack.c.b16 %v7443, %v7443
        %v7546 = vpack.c.b16 %v7444, %v7444
        %v7547 = vpack.c.b16 %v7445, %v7445
        %v7548 = vpack.c.b16 %v7446, %v7446
        %7651 = vmatprep.subr.bf16.mxu0 %v7490
        %7652 = vmatpush1.bf16.xpose.msra.mxu0 %v7489
        %7653 = vmatprep.subr.bf16.mxu0 %v7484
        %7654 = vmatpush1.bf16.xpose.msra.mxu0 %v7483
        %7655 = vmatprep.subr.bf16.mxu0 %v7478
        %7656 = vmatpush1.bf16.xpose.msra.mxu0 %v7477
        %7657 = vmatprep.subr.bf16.mxu0 %v7472
        %7658 = vmatpush1.bf16.xpose.msra.mxu0 %v7471
        %7659 = vmatprep.subr.bf16.mxu0 %v7466
        %7660 = vmatpush1.bf16.xpose.msra.mxu0 %v7465
        %7661 = vmatprep.subr.bf16.mxu0 %v7460
        %7662 = vmatpush1.bf16.xpose.msra.mxu0 %v7459
        %7663 = vmatprep.subr.bf16.mxu0 %v7454
        %7664 = vmatpush1.bf16.xpose.msra.mxu0 %v7453
        %7665 = vmatprep.subr.bf16.mxu0 %v7448
        %7666 = vmatpush1.bf16.xpose.msra.mxu0 %v7447
        %7667 = vmatprep.subr.bf16.mxu0 %v7538
        %7668 = vmatpush2.bf16.xpose.msra.mxu0 %v7537
        %7669 = vmatprep.subr.bf16.mxu0 %v7532
        %7670 = vmatpush2.bf16.xpose.msra.mxu0 %v7531
        %7671 = vmatprep.subr.bf16.mxu0 %v7526
        %7672 = vmatpush2.bf16.xpose.msra.mxu0 %v7525
        %7673 = vmatprep.subr.bf16.mxu0 %v7520
        %7674 = vmatpush2.bf16.xpose.msra.mxu0 %v7519
        %7675 = vmatprep.subr.bf16.mxu0 %v7514
        %7676 = vmatpush2.bf16.xpose.msra.mxu0 %v7513
        %7677 = vmatprep.subr.bf16.mxu0 %v7508
        %7678 = vmatpush2.bf16.xpose.msra.mxu0 %v7507
        %7679 = vmatprep.subr.bf16.mxu0 %v7502
        %7680 = vmatpush2.bf16.xpose.msra.mxu0 %v7501
        %7681 = vmatprep.subr.bf16.mxu0 %v7496
        %7682 = vmatpush2.bf16.xpose.msra.mxu0 %v7495
        %7683 = vmatprep.mubr.bf16.mxu0 %v7031
        %7684 = vmatmul.mubr.bf16.gmra.mxu0 %v7030
        %v7685 = vpop.f32.mrf.mxu0
        %v7686 = vadd.f32 0.0, %v7685
        %v7687 = vpop.f32.mrf.mxu0
        %v7688 = vadd.f32 0.0, %v7687
        %v7689 = vpop.f32.mrf.mxu0
        %v7690 = vadd.f32 0.0, %v7689
        %v7691 = vpop.f32.mrf.mxu0
        %v7692 = vadd.f32 0.0, %v7691
        %7693 = vmatprep.mubr.bf16.mxu0 %v7037
        %7694 = vmatmul.mubr.bf16.gmra.mxu0 %v7036
        %v7695 = vpop.f32.mrf.mxu0
        %v7696 = vadd.f32 0.0, %v7695
        %v7697 = vpop.f32.mrf.mxu0
        %v7698 = vadd.f32 0.0, %v7697
        %v7699 = vpop.f32.mrf.mxu0
        %v7700 = vadd.f32 0.0, %v7699
        %v7701 = vpop.f32.mrf.mxu0
        %v7702 = vadd.f32 0.0, %v7701
        %7703 = vmatprep.mubr.bf16.mxu0 %v7043
        %7704 = vmatmul.mubr.bf16.gmra.mxu0 %v7042
        %v7705 = vpop.f32.mrf.mxu0
        %v7706 = vadd.f32 0.0, %v7705
        %v7707 = vpop.f32.mrf.mxu0
        %v7708 = vadd.f32 0.0, %v7707
        %v7709 = vpop.f32.mrf.mxu0
        %v7710 = vadd.f32 0.0, %v7709
        %v7711 = vpop.f32.mrf.mxu0
        %v7712 = vadd.f32 0.0, %v7711
        %7713 = vmatprep.mubr.bf16.mxu0 %v7049
        %7714 = vmatmul.mubr.bf16.gmra.mxu0 %v7048
        %v7715 = vpop.f32.mrf.mxu0
        %v7716 = vadd.f32 0.0, %v7715
        %v7717 = vpop.f32.mrf.mxu0
        %v7718 = vadd.f32 0.0, %v7717
        %v7719 = vpop.f32.mrf.mxu0
        %v7720 = vadd.f32 0.0, %v7719
        %v7721 = vpop.f32.mrf.mxu0
        %v7722 = vadd.f32 0.0, %v7721
        %7723 = vmatprep.mubr.bf16.mxu0 %v7055
        %7724 = vmatmul.mubr.bf16.gmra.mxu0 %v7054
        %v7725 = vpop.f32.mrf.mxu0
        %v7726 = vadd.f32 0.0, %v7725
        %v7727 = vpop.f32.mrf.mxu0
        %v7728 = vadd.f32 0.0, %v7727
        %v7729 = vpop.f32.mrf.mxu0
        %v7730 = vadd.f32 0.0, %v7729
        %v7731 = vpop.f32.mrf.mxu0
        %v7732 = vadd.f32 0.0, %v7731
        %7733 = vmatprep.mubr.bf16.mxu0 %v7061
        %7734 = vmatmul.mubr.bf16.gmra.mxu0 %v7060
        %v7735 = vpop.f32.mrf.mxu0
        %v7736 = vadd.f32 0.0, %v7735
        %v7737 = vpop.f32.mrf.mxu0
        %v7738 = vadd.f32 0.0, %v7737
        %v7739 = vpop.f32.mrf.mxu0
        %v7740 = vadd.f32 0.0, %v7739
        %v7741 = vpop.f32.mrf.mxu0
        %v7742 = vadd.f32 0.0, %v7741
        %7743 = vmatprep.mubr.bf16.mxu0 %v7067
        %7744 = vmatmul.mubr.bf16.gmra.mxu0 %v7066
        %v7745 = vpop.f32.mrf.mxu0
        %v7746 = vadd.f32 0.0, %v7745
        %v7747 = vpop.f32.mrf.mxu0
        %v7748 = vadd.f32 0.0, %v7747
        %v7749 = vpop.f32.mrf.mxu0
        %v7750 = vadd.f32 0.0, %v7749
        %v7751 = vpop.f32.mrf.mxu0
        %v7752 = vadd.f32 0.0, %v7751
        %7753 = vmatprep.mubr.bf16.mxu0 %v7073
        %7754 = vmatmul.mubr.bf16.gmra.mxu0 %v7072
        %v7755 = vpop.f32.mrf.mxu0
        %v7756 = vadd.f32 0.0, %v7755
        %v7757 = vpop.f32.mrf.mxu0
        %v7758 = vadd.f32 0.0, %v7757
        %v7759 = vpop.f32.mrf.mxu0
        %v7760 = vadd.f32 0.0, %v7759
        %v7761 = vpop.f32.mrf.mxu0
        %v7762 = vadd.f32 0.0, %v7761
        %7763 = vmatprep.mubr.bf16.mxu0 %v7079
        %7764 = vmatmul.mubr.bf16.gmra.mxu0 %v7078
        %v7765 = vpop.f32.mrf.mxu0
        %v7766 = vadd.f32 0.0, %v7765
        %v7767 = vpop.f32.mrf.mxu0
        %v7768 = vadd.f32 0.0, %v7767
        %v7769 = vpop.f32.mrf.mxu0
        %v7770 = vadd.f32 0.0, %v7769
        %v7771 = vpop.f32.mrf.mxu0
        %v7772 = vadd.f32 0.0, %v7771
        %7773 = vmatprep.mubr.bf16.mxu0 %v7085
        %7774 = vmatmul.mubr.bf16.gmra.mxu0 %v7084
        %v7775 = vpop.f32.mrf.mxu0
        %v7776 = vadd.f32 0.0, %v7775
        %v7777 = vpop.f32.mrf.mxu0
        %v7778 = vadd.f32 0.0, %v7777
        %v7779 = vpop.f32.mrf.mxu0
        %v7780 = vadd.f32 0.0, %v7779
        %v7781 = vpop.f32.mrf.mxu0
        %v7782 = vadd.f32 0.0, %v7781
        %7783 = vdwg.mxu0
        %7784 = vmatprep.subr.bf16.mxu0 %v7492
        %7785 = vmatpush1.bf16.xpose.msra.mxu0 %v7491
        %7786 = vmatprep.subr.bf16.mxu0 %v7486
        %7787 = vmatpush1.bf16.xpose.msra.mxu0 %v7485
        %7788 = vmatprep.subr.bf16.mxu0 %v7480
        %7789 = vmatpush1.bf16.xpose.msra.mxu0 %v7479
        %7790 = vmatprep.subr.bf16.mxu0 %v7474
        %7791 = vmatpush1.bf16.xpose.msra.mxu0 %v7473
        %7792 = vmatprep.subr.bf16.mxu0 %v7468
        %7793 = vmatpush1.bf16.xpose.msra.mxu0 %v7467
        %7794 = vmatprep.subr.bf16.mxu0 %v7462
        %7795 = vmatpush1.bf16.xpose.msra.mxu0 %v7461
        %7796 = vmatprep.subr.bf16.mxu0 %v7456
        %7797 = vmatpush1.bf16.xpose.msra.mxu0 %v7455
        %7798 = vmatprep.subr.bf16.mxu0 %v7450
        %7799 = vmatpush1.bf16.xpose.msra.mxu0 %v7449
        %7800 = vmatprep.subr.bf16.mxu0 %v7540
        %7801 = vmatpush2.bf16.xpose.msra.mxu0 %v7539
        %7802 = vmatprep.subr.bf16.mxu0 %v7534
        %7803 = vmatpush2.bf16.xpose.msra.mxu0 %v7533
        %7804 = vmatprep.subr.bf16.mxu0 %v7528
        %7805 = vmatpush2.bf16.xpose.msra.mxu0 %v7527
        %7806 = vmatprep.subr.bf16.mxu0 %v7522
        %7807 = vmatpush2.bf16.xpose.msra.mxu0 %v7521
        %7808 = vmatprep.subr.bf16.mxu0 %v7516
        %7809 = vmatpush2.bf16.xpose.msra.mxu0 %v7515
        %7810 = vmatprep.subr.bf16.mxu0 %v7510
        %7811 = vmatpush2.bf16.xpose.msra.mxu0 %v7509
        %7812 = vmatprep.subr.bf16.mxu0 %v7504
        %7813 = vmatpush2.bf16.xpose.msra.mxu0 %v7503
        %7814 = vmatprep.subr.bf16.mxu0 %v7498
        %7815 = vmatpush2.bf16.xpose.msra.mxu0 %v7497
        %7816 = vmatprep.mubr.bf16.mxu0 %v7033
        %7817 = vmatmul.mubr.bf16.gmra.mxu0 %v7032
        %v7818 = vpop.f32.mrf.mxu0
        %v7819 = vadd.f32 %v7686, %v7818
        %v7820 = vpop.f32.mrf.mxu0
        %v7821 = vadd.f32 %v7688, %v7820
        %v7822 = vpop.f32.mrf.mxu0
        %v7823 = vadd.f32 %v7690, %v7822
        %v7824 = vpop.f32.mrf.mxu0
        %v7825 = vadd.f32 %v7692, %v7824
        %7826 = vmatprep.mubr.bf16.mxu0 %v7039
        %7827 = vmatmul.mubr.bf16.gmra.mxu0 %v7038
        %v7828 = vpop.f32.mrf.mxu0
        %v7829 = vadd.f32 %v7696, %v7828
        %v7830 = vpop.f32.mrf.mxu0
        %v7831 = vadd.f32 %v7698, %v7830
        %v7832 = vpop.f32.mrf.mxu0
        %v7833 = vadd.f32 %v7700, %v7832
        %v7834 = vpop.f32.mrf.mxu0
        %v7835 = vadd.f32 %v7702, %v7834
        %7836 = vmatprep.mubr.bf16.mxu0 %v7045
        %7837 = vmatmul.mubr.bf16.gmra.mxu0 %v7044
        %v7838 = vpop.f32.mrf.mxu0
        %v7839 = vadd.f32 %v7706, %v7838
        %v7840 = vpop.f32.mrf.mxu0
        %v7841 = vadd.f32 %v7708, %v7840
        %v7842 = vpop.f32.mrf.mxu0
        %v7843 = vadd.f32 %v7710, %v7842
        %v7844 = vpop.f32.mrf.mxu0
        %v7845 = vadd.f32 %v7712, %v7844
        %7846 = vmatprep.mubr.bf16.mxu0 %v7051
        %7847 = vmatmul.mubr.bf16.gmra.mxu0 %v7050
        %v7848 = vpop.f32.mrf.mxu0
        %v7849 = vadd.f32 %v7716, %v7848
        %v7850 = vpop.f32.mrf.mxu0
        %v7851 = vadd.f32 %v7718, %v7850
        %v7852 = vpop.f32.mrf.mxu0
        %v7853 = vadd.f32 %v7720, %v7852
        %v7854 = vpop.f32.mrf.mxu0
        %v7855 = vadd.f32 %v7722, %v7854
        %7856 = vmatprep.mubr.bf16.mxu0 %v7057
        %7857 = vmatmul.mubr.bf16.gmra.mxu0 %v7056
        %v7858 = vpop.f32.mrf.mxu0
        %v7859 = vadd.f32 %v7726, %v7858
        %v7860 = vpop.f32.mrf.mxu0
        %v7861 = vadd.f32 %v7728, %v7860
        %v7862 = vpop.f32.mrf.mxu0
        %v7863 = vadd.f32 %v7730, %v7862
        %v7864 = vpop.f32.mrf.mxu0
        %v7865 = vadd.f32 %v7732, %v7864
        %7866 = vmatprep.mubr.bf16.mxu0 %v7063
        %7867 = vmatmul.mubr.bf16.gmra.mxu0 %v7062
        %v7868 = vpop.f32.mrf.mxu0
        %v7869 = vadd.f32 %v7736, %v7868
        %v7870 = vpop.f32.mrf.mxu0
        %v7871 = vadd.f32 %v7738, %v7870
        %v7872 = vpop.f32.mrf.mxu0
        %v7873 = vadd.f32 %v7740, %v7872
        %v7874 = vpop.f32.mrf.mxu0
        %v7875 = vadd.f32 %v7742, %v7874
        %7876 = vmatprep.mubr.bf16.mxu0 %v7069
        %7877 = vmatmul.mubr.bf16.gmra.mxu0 %v7068
        %v7878 = vpop.f32.mrf.mxu0
        %v7879 = vadd.f32 %v7746, %v7878
        %v7880 = vpop.f32.mrf.mxu0
        %v7881 = vadd.f32 %v7748, %v7880
        %v7882 = vpop.f32.mrf.mxu0
        %v7883 = vadd.f32 %v7750, %v7882
        %v7884 = vpop.f32.mrf.mxu0
        %v7885 = vadd.f32 %v7752, %v7884
        %7886 = vmatprep.mubr.bf16.mxu0 %v7075
        %7887 = vmatmul.mubr.bf16.gmra.mxu0 %v7074
        %v7888 = vpop.f32.mrf.mxu0
        %v7889 = vadd.f32 %v7756, %v7888
        %v7890 = vpop.f32.mrf.mxu0
        %v7891 = vadd.f32 %v7758, %v7890
        %v7892 = vpop.f32.mrf.mxu0
        %v7893 = vadd.f32 %v7760, %v7892
        %v7894 = vpop.f32.mrf.mxu0
        %v7895 = vadd.f32 %v7762, %v7894
        %7896 = vmatprep.mubr.bf16.mxu0 %v7081
        %7897 = vmatmul.mubr.bf16.gmra.mxu0 %v7080
        %v7898 = vpop.f32.mrf.mxu0
        %v7899 = vadd.f32 %v7766, %v7898
        %v7900 = vpop.f32.mrf.mxu0
        %v7901 = vadd.f32 %v7768, %v7900
        %v7902 = vpop.f32.mrf.mxu0
        %v7903 = vadd.f32 %v7770, %v7902
        %v7904 = vpop.f32.mrf.mxu0
        %v7905 = vadd.f32 %v7772, %v7904
        %7906 = vmatprep.mubr.bf16.mxu0 %v7087
        %7907 = vmatmul.mubr.bf16.gmra.mxu0 %v7086
        %v7908 = vpop.f32.mrf.mxu0
        %v7909 = vadd.f32 %v7776, %v7908
        %v7910 = vpop.f32.mrf.mxu0
        %v7911 = vadd.f32 %v7778, %v7910
        %v7912 = vpop.f32.mrf.mxu0
        %v7913 = vadd.f32 %v7780, %v7912
        %v7914 = vpop.f32.mrf.mxu0
        %v7915 = vadd.f32 %v7782, %v7914
        %7916 = vdwg.mxu0
        %7917 = vmatprep.subr.bf16.mxu0 %v7494
        %7918 = vmatpush1.bf16.xpose.msra.mxu0 %v7493
        %7919 = vmatprep.subr.bf16.mxu0 %v7488
        %7920 = vmatpush1.bf16.xpose.msra.mxu0 %v7487
        %7921 = vmatprep.subr.bf16.mxu0 %v7482
        %7922 = vmatpush1.bf16.xpose.msra.mxu0 %v7481
        %7923 = vmatprep.subr.bf16.mxu0 %v7476
        %7924 = vmatpush1.bf16.xpose.msra.mxu0 %v7475
        %7925 = vmatprep.subr.bf16.mxu0 %v7470
        %7926 = vmatpush1.bf16.xpose.msra.mxu0 %v7469
        %7927 = vmatprep.subr.bf16.mxu0 %v7464
        %7928 = vmatpush1.bf16.xpose.msra.mxu0 %v7463
        %7929 = vmatprep.subr.bf16.mxu0 %v7458
        %7930 = vmatpush1.bf16.xpose.msra.mxu0 %v7457
        %7931 = vmatprep.subr.bf16.mxu0 %v7452
        %7932 = vmatpush1.bf16.xpose.msra.mxu0 %v7451
        %7933 = vmatprep.subr.bf16.mxu0 %v7542
        %7934 = vmatpush2.bf16.xpose.msra.mxu0 %v7541
        %7935 = vmatprep.subr.bf16.mxu0 %v7536
        %7936 = vmatpush2.bf16.xpose.msra.mxu0 %v7535
        %7937 = vmatprep.subr.bf16.mxu0 %v7530
        %7938 = vmatpush2.bf16.xpose.msra.mxu0 %v7529
        %7939 = vmatprep.subr.bf16.mxu0 %v7524
        %7940 = vmatpush2.bf16.xpose.msra.mxu0 %v7523
        %7941 = vmatprep.subr.bf16.mxu0 %v7518
        %7942 = vmatpush2.bf16.xpose.msra.mxu0 %v7517
        %7943 = vmatprep.subr.bf16.mxu0 %v7512
        %7944 = vmatpush2.bf16.xpose.msra.mxu0 %v7511
        %7945 = vmatprep.subr.bf16.mxu0 %v7506
        %7946 = vmatpush2.bf16.xpose.msra.mxu0 %v7505
        %7947 = vmatprep.subr.bf16.mxu0 %v7500
        %7948 = vmatpush2.bf16.xpose.msra.mxu0 %v7499
        %7949 = vmatprep.mubr.bf16.mxu0 %v7035
        %7950 = vmatmul.mubr.bf16.gmra.mxu0 %v7034
        %v7951 = vpop.f32.mrf.mxu0
        %v7952 = vadd.f32 %v7819, %v7951
        %v7953 = vpop.f32.mrf.mxu0
        %v7954 = vadd.f32 %v7821, %v7953
        %v7955 = vpop.f32.mrf.mxu0
        %v7956 = vadd.f32 %v7823, %v7955
        %v7957 = vpop.f32.mrf.mxu0
        %v7958 = vadd.f32 %v7825, %v7957
        %7959 = vmatprep.mubr.bf16.mxu0 %v7041
        %7960 = vmatmul.mubr.bf16.gmra.mxu0 %v7040
        %v7961 = vpop.f32.mrf.mxu0
        %v7962 = vadd.f32 %v7829, %v7961
        %v7963 = vpop.f32.mrf.mxu0
        %v7964 = vadd.f32 %v7831, %v7963
        %v7965 = vpop.f32.mrf.mxu0
        %v7966 = vadd.f32 %v7833, %v7965
        %v7967 = vpop.f32.mrf.mxu0
        %v7968 = vadd.f32 %v7835, %v7967
        %7969 = vmatprep.mubr.bf16.mxu0 %v7047
        %7970 = vmatmul.mubr.bf16.gmra.mxu0 %v7046
        %v7971 = vpop.f32.mrf.mxu0
        %v7972 = vadd.f32 %v7839, %v7971
        %v7973 = vpop.f32.mrf.mxu0
        %v7974 = vadd.f32 %v7841, %v7973
        %v7975 = vpop.f32.mrf.mxu0
        %v7976 = vadd.f32 %v7843, %v7975
        %v7977 = vpop.f32.mrf.mxu0
        %v7978 = vadd.f32 %v7845, %v7977
        %7979 = vmatprep.mubr.bf16.mxu0 %v7053
        %7980 = vmatmul.mubr.bf16.gmra.mxu0 %v7052
        %v7981 = vpop.f32.mrf.mxu0
        %v7982 = vadd.f32 %v7849, %v7981
        %v7983 = vpop.f32.mrf.mxu0
        %v7984 = vadd.f32 %v7851, %v7983
        %v7985 = vpop.f32.mrf.mxu0
        %v7986 = vadd.f32 %v7853, %v7985
        %v7987 = vpop.f32.mrf.mxu0
        %v7988 = vadd.f32 %v7855, %v7987
        %7989 = vmatprep.mubr.bf16.mxu0 %v7059
        %7990 = vmatmul.mubr.bf16.gmra.mxu0 %v7058
        %v7991 = vpop.f32.mrf.mxu0
        %v7992 = vadd.f32 %v7859, %v7991
        %v7993 = vpop.f32.mrf.mxu0
        %v7994 = vadd.f32 %v7861, %v7993
        %v7995 = vpop.f32.mrf.mxu0
        %v7996 = vadd.f32 %v7863, %v7995
        %v7997 = vpop.f32.mrf.mxu0
        %v7998 = vadd.f32 %v7865, %v7997
        %7999 = vmatprep.mubr.bf16.mxu0 %v7065
        %8000 = vmatmul.mubr.bf16.gmra.mxu0 %v7064
        %v8001 = vpop.f32.mrf.mxu0
        %v8002 = vadd.f32 %v7869, %v8001
        %v8003 = vpop.f32.mrf.mxu0
        %v8004 = vadd.f32 %v7871, %v8003
        %v8005 = vpop.f32.mrf.mxu0
        %v8006 = vadd.f32 %v7873, %v8005
        %v8007 = vpop.f32.mrf.mxu0
        %v8008 = vadd.f32 %v7875, %v8007
        %8009 = vmatprep.mubr.bf16.mxu0 %v7071
        %8010 = vmatmul.mubr.bf16.gmra.mxu0 %v7070
        %v8011 = vpop.f32.mrf.mxu0
        %v8012 = vadd.f32 %v7879, %v8011
        %v8013 = vpop.f32.mrf.mxu0
        %v8014 = vadd.f32 %v7881, %v8013
        %v8015 = vpop.f32.mrf.mxu0
        %v8016 = vadd.f32 %v7883, %v8015
        %v8017 = vpop.f32.mrf.mxu0
        %v8018 = vadd.f32 %v7885, %v8017
        %8019 = vmatprep.mubr.bf16.mxu0 %v7077
        %8020 = vmatmul.mubr.bf16.gmra.mxu0 %v7076
        %v8021 = vpop.f32.mrf.mxu0
        %v8022 = vadd.f32 %v7889, %v8021
        %v8023 = vpop.f32.mrf.mxu0
        %v8024 = vadd.f32 %v7891, %v8023
        %v8025 = vpop.f32.mrf.mxu0
        %v8026 = vadd.f32 %v7893, %v8025
        %v8027 = vpop.f32.mrf.mxu0
        %v8028 = vadd.f32 %v7895, %v8027
        %8029 = vmatprep.mubr.bf16.mxu0 %v7083
        %8030 = vmatmul.mubr.bf16.gmra.mxu0 %v7082
        %v8031 = vpop.f32.mrf.mxu0
        %v8032 = vadd.f32 %v7899, %v8031
        %v8033 = vpop.f32.mrf.mxu0
        %v8034 = vadd.f32 %v7901, %v8033
        %v8035 = vpop.f32.mrf.mxu0
        %v8036 = vadd.f32 %v7903, %v8035
        %v8037 = vpop.f32.mrf.mxu0
        %v8038 = vadd.f32 %v7905, %v8037
        %8039 = vmatprep.mubr.bf16.mxu0 %v7089
        %8040 = vmatmul.mubr.bf16.gmra.mxu0 %v7088
        %v8041 = vpop.f32.mrf.mxu0
        %v8042 = vadd.f32 %v7909, %v8041
        %v8043 = vpop.f32.mrf.mxu0
        %v8044 = vadd.f32 %v7911, %v8043
        %v8045 = vpop.f32.mrf.mxu0
        %v8046 = vadd.f32 %v7913, %v8045
        %v8047 = vpop.f32.mrf.mxu0
        %v8048 = vadd.f32 %v7915, %v8047
        %8049 = vdwg.mxu0
        %8050 = vmatprep.subr.bf16.mxu0 0
        %8051 = vmatpush1.bf16.xpose.msra.mxu0 0
        %8052 = vmatprep.subr.bf16.mxu0 0
        %8053 = vmatpush1.bf16.xpose.msra.mxu0 0
        %8054 = vmatprep.subr.bf16.mxu0 0
        %8055 = vmatpush1.bf16.xpose.msra.mxu0 0
        %8056 = vmatprep.subr.bf16.mxu0 0
        %8057 = vmatpush1.bf16.xpose.msra.mxu0 0
        %8058 = vmatprep.subr.bf16.mxu0 0
        %8059 = vmatpush1.bf16.xpose.msra.mxu0 0
        %8060 = vmatprep.subr.bf16.mxu0 0
        %8061 = vmatpush1.bf16.xpose.msra.mxu0 0
        %8062 = vmatprep.subr.bf16.mxu0 0
        %8063 = vmatpush1.bf16.xpose.msra.mxu0 0
        %8064 = vmatprep.subr.bf16.mxu0 %v7544
        %8065 = vmatpush1.bf16.xpose.msra.mxu0 %v7543
        %8066 = vmatprep.subr.bf16.mxu0 0
        %8067 = vmatpush2.bf16.xpose.msra.mxu0 0
        %8068 = vmatprep.subr.bf16.mxu0 0
        %8069 = vmatpush2.bf16.xpose.msra.mxu0 0
        %8070 = vmatprep.subr.bf16.mxu0 0
        %8071 = vmatpush2.bf16.xpose.msra.mxu0 0
        %8072 = vmatprep.subr.bf16.mxu0 0
        %8073 = vmatpush2.bf16.xpose.msra.mxu0 0
        %8074 = vmatprep.subr.bf16.mxu0 0
        %8075 = vmatpush2.bf16.xpose.msra.mxu0 0
        %8076 = vmatprep.subr.bf16.mxu0 0
        %8077 = vmatpush2.bf16.xpose.msra.mxu0 0
        %8078 = vmatprep.subr.bf16.mxu0 0
        %8079 = vmatpush2.bf16.xpose.msra.mxu0 0
        %8080 = vmatprep.subr.bf16.mxu0 0
        %8081 = vmatpush2.bf16.xpose.msra.mxu0 0
        %8082 = vmatprep.mubr.bf16.mxu0 %v7031
        %8083 = vmatmul.mubr.bf16.gmra.mxu0 %v7030
        %v8084 = vpop.f32.mrf.mxu0
        %v8085 = vadd.f32 0.0, %v8084
        %v8086 = vpop.f32.mrf.mxu0
        %v8087 = vpop.f32.mrf.mxu0
        %v8088 = vadd.f32 0.0, %v8087
        %v8089 = vpop.f32.mrf.mxu0
        %8090 = vmatprep.mubr.bf16.mxu0 %v7037
        %8091 = vmatmul.mubr.bf16.gmra.mxu0 %v7036
        %v8092 = vpop.f32.mrf.mxu0
        %v8093 = vadd.f32 0.0, %v8092
        %v8094 = vpop.f32.mrf.mxu0
        %v8095 = vpop.f32.mrf.mxu0
        %v8096 = vadd.f32 0.0, %v8095
        %v8097 = vpop.f32.mrf.mxu0
        %8098 = vmatprep.mubr.bf16.mxu0 %v7043
        %8099 = vmatmul.mubr.bf16.gmra.mxu0 %v7042
        %v8100 = vpop.f32.mrf.mxu0
        %v8101 = vadd.f32 0.0, %v8100
        %v8102 = vpop.f32.mrf.mxu0
        %v8103 = vpop.f32.mrf.mxu0
        %v8104 = vadd.f32 0.0, %v8103
        %v8105 = vpop.f32.mrf.mxu0
        %8106 = vmatprep.mubr.bf16.mxu0 %v7049
        %8107 = vmatmul.mubr.bf16.gmra.mxu0 %v7048
        %v8108 = vpop.f32.mrf.mxu0
        %v8109 = vadd.f32 0.0, %v8108
        %v8110 = vpop.f32.mrf.mxu0
        %v8111 = vpop.f32.mrf.mxu0
        %v8112 = vadd.f32 0.0, %v8111
        %v8113 = vpop.f32.mrf.mxu0
        %8114 = vmatprep.mubr.bf16.mxu0 %v7055
        %8115 = vmatmul.mubr.bf16.gmra.mxu0 %v7054
        %v8116 = vpop.f32.mrf.mxu0
        %v8117 = vadd.f32 0.0, %v8116
        %v8118 = vpop.f32.mrf.mxu0
        %v8119 = vpop.f32.mrf.mxu0
        %v8120 = vadd.f32 0.0, %v8119
        %v8121 = vpop.f32.mrf.mxu0
        %8122 = vmatprep.mubr.bf16.mxu0 %v7061
        %8123 = vmatmul.mubr.bf16.gmra.mxu0 %v7060
        %v8124 = vpop.f32.mrf.mxu0
        %v8125 = vadd.f32 0.0, %v8124
        %v8126 = vpop.f32.mrf.mxu0
        %v8127 = vpop.f32.mrf.mxu0
        %v8128 = vadd.f32 0.0, %v8127
        %v8129 = vpop.f32.mrf.mxu0
        %8130 = vmatprep.mubr.bf16.mxu0 %v7067
        %8131 = vmatmul.mubr.bf16.gmra.mxu0 %v7066
        %v8132 = vpop.f32.mrf.mxu0
        %v8133 = vadd.f32 0.0, %v8132
        %v8134 = vpop.f32.mrf.mxu0
        %v8135 = vpop.f32.mrf.mxu0
        %v8136 = vadd.f32 0.0, %v8135
        %v8137 = vpop.f32.mrf.mxu0
        %8138 = vmatprep.mubr.bf16.mxu0 %v7073
        %8139 = vmatmul.mubr.bf16.gmra.mxu0 %v7072
        %v8140 = vpop.f32.mrf.mxu0
        %v8141 = vadd.f32 0.0, %v8140
        %v8142 = vpop.f32.mrf.mxu0
        %v8143 = vpop.f32.mrf.mxu0
        %v8144 = vadd.f32 0.0, %v8143
        %v8145 = vpop.f32.mrf.mxu0
        %8146 = vmatprep.mubr.bf16.mxu0 %v7079
        %8147 = vmatmul.mubr.bf16.gmra.mxu0 %v7078
        %v8148 = vpop.f32.mrf.mxu0
        %v8149 = vadd.f32 0.0, %v8148
        %v8150 = vpop.f32.mrf.mxu0
        %v8151 = vpop.f32.mrf.mxu0
        %v8152 = vadd.f32 0.0, %v8151
        %v8153 = vpop.f32.mrf.mxu0
        %8154 = vmatprep.mubr.bf16.mxu0 %v7085
        %8155 = vmatmul.mubr.bf16.gmra.mxu0 %v7084
        %v8156 = vpop.f32.mrf.mxu0
        %v8157 = vadd.f32 0.0, %v8156
        %v8158 = vpop.f32.mrf.mxu0
        %v8159 = vpop.f32.mrf.mxu0
        %v8160 = vadd.f32 0.0, %v8159
        %v8161 = vpop.f32.mrf.mxu0
        %8162 = vdwg.mxu0
        %8163 = vmatprep.subr.bf16.mxu0 0
        %8164 = vmatpush1.bf16.xpose.msra.mxu0 0
        %8165 = vmatprep.subr.bf16.mxu0 0
        %8166 = vmatpush1.bf16.xpose.msra.mxu0 0
        %8167 = vmatprep.subr.bf16.mxu0 0
        %8168 = vmatpush1.bf16.xpose.msra.mxu0 0
        %8169 = vmatprep.subr.bf16.mxu0 0
        %8170 = vmatpush1.bf16.xpose.msra.mxu0 0
        %8171 = vmatprep.subr.bf16.mxu0 0
        %8172 = vmatpush1.bf16.xpose.msra.mxu0 0
        %8173 = vmatprep.subr.bf16.mxu0 0
        %8174 = vmatpush1.bf16.xpose.msra.mxu0 0
        %8175 = vmatprep.subr.bf16.mxu0 0
        %8176 = vmatpush1.bf16.xpose.msra.mxu0 0
        %8177 = vmatprep.subr.bf16.mxu0 %v7546
        %8178 = vmatpush1.bf16.xpose.msra.mxu0 %v7545
        %8179 = vmatprep.subr.bf16.mxu0 0
        %8180 = vmatpush2.bf16.xpose.msra.mxu0 0
        %8181 = vmatprep.subr.bf16.mxu0 0
        %8182 = vmatpush2.bf16.xpose.msra.mxu0 0
        %8183 = vmatprep.subr.bf16.mxu0 0
        %8184 = vmatpush2.bf16.xpose.msra.mxu0 0
        %8185 = vmatprep.subr.bf16.mxu0 0
        %8186 = vmatpush2.bf16.xpose.msra.mxu0 0
        %8187 = vmatprep.subr.bf16.mxu0 0
        %8188 = vmatpush2.bf16.xpose.msra.mxu0 0
        %8189 = vmatprep.subr.bf16.mxu0 0
        %8190 = vmatpush2.bf16.xpose.msra.mxu0 0
        %8191 = vmatprep.subr.bf16.mxu0 0
        %8192 = vmatpush2.bf16.xpose.msra.mxu0 0
        %8193 = vmatprep.subr.bf16.mxu0 0
        %8194 = vmatpush2.bf16.xpose.msra.mxu0 0
        %8195 = vmatprep.mubr.bf16.mxu0 %v7033
        %8196 = vmatmul.mubr.bf16.gmra.mxu0 %v7032
        %v8197 = vpop.f32.mrf.mxu0
        %v8198 = vadd.f32 %v8085, %v8197
        %v8199 = vpop.f32.mrf.mxu0
        %v8200 = vpop.f32.mrf.mxu0
        %v8201 = vadd.f32 %v8088, %v8200
        %v8202 = vpop.f32.mrf.mxu0
        %8203 = vmatprep.mubr.bf16.mxu0 %v7039
        %8204 = vmatmul.mubr.bf16.gmra.mxu0 %v7038
        %v8205 = vpop.f32.mrf.mxu0
        %v8206 = vadd.f32 %v8093, %v8205
        %v8207 = vpop.f32.mrf.mxu0
        %v8208 = vpop.f32.mrf.mxu0
        %v8209 = vadd.f32 %v8096, %v8208
        %v8210 = vpop.f32.mrf.mxu0
        %8211 = vmatprep.mubr.bf16.mxu0 %v7045
        %8212 = vmatmul.mubr.bf16.gmra.mxu0 %v7044
        %v8213 = vpop.f32.mrf.mxu0
        %v8214 = vadd.f32 %v8101, %v8213
        %v8215 = vpop.f32.mrf.mxu0
        %v8216 = vpop.f32.mrf.mxu0
        %v8217 = vadd.f32 %v8104, %v8216
        %v8218 = vpop.f32.mrf.mxu0
        %8219 = vmatprep.mubr.bf16.mxu0 %v7051
        %8220 = vmatmul.mubr.bf16.gmra.mxu0 %v7050
        %v8221 = vpop.f32.mrf.mxu0
        %v8222 = vadd.f32 %v8109, %v8221
        %v8223 = vpop.f32.mrf.mxu0
        %v8224 = vpop.f32.mrf.mxu0
        %v8225 = vadd.f32 %v8112, %v8224
        %v8226 = vpop.f32.mrf.mxu0
        %8227 = vmatprep.mubr.bf16.mxu0 %v7057
        %8228 = vmatmul.mubr.bf16.gmra.mxu0 %v7056
        %v8229 = vpop.f32.mrf.mxu0
        %v8230 = vadd.f32 %v8117, %v8229
        %v8231 = vpop.f32.mrf.mxu0
        %v8232 = vpop.f32.mrf.mxu0
        %v8233 = vadd.f32 %v8120, %v8232
        %v8234 = vpop.f32.mrf.mxu0
        %8235 = vmatprep.mubr.bf16.mxu0 %v7063
        %8236 = vmatmul.mubr.bf16.gmra.mxu0 %v7062
        %v8237 = vpop.f32.mrf.mxu0
        %v8238 = vadd.f32 %v8125, %v8237
        %v8239 = vpop.f32.mrf.mxu0
        %v8240 = vpop.f32.mrf.mxu0
        %v8241 = vadd.f32 %v8128, %v8240
        %v8242 = vpop.f32.mrf.mxu0
        %8243 = vmatprep.mubr.bf16.mxu0 %v7069
        %8244 = vmatmul.mubr.bf16.gmra.mxu0 %v7068
        %v8245 = vpop.f32.mrf.mxu0
        %v8246 = vadd.f32 %v8133, %v8245
        %v8247 = vpop.f32.mrf.mxu0
        %v8248 = vpop.f32.mrf.mxu0
        %v8249 = vadd.f32 %v8136, %v8248
        %v8250 = vpop.f32.mrf.mxu0
        %8251 = vmatprep.mubr.bf16.mxu0 %v7075
        %8252 = vmatmul.mubr.bf16.gmra.mxu0 %v7074
        %v8253 = vpop.f32.mrf.mxu0
        %v8254 = vadd.f32 %v8141, %v8253
        %v8255 = vpop.f32.mrf.mxu0
        %v8256 = vpop.f32.mrf.mxu0
        %v8257 = vadd.f32 %v8144, %v8256
        %v8258 = vpop.f32.mrf.mxu0
        %8259 = vmatprep.mubr.bf16.mxu0 %v7081
        %8260 = vmatmul.mubr.bf16.gmra.mxu0 %v7080
        %v8261 = vpop.f32.mrf.mxu0
        %v8262 = vadd.f32 %v8149, %v8261
        %v8263 = vpop.f32.mrf.mxu0
        %v8264 = vpop.f32.mrf.mxu0
        %v8265 = vadd.f32 %v8152, %v8264
        %v8266 = vpop.f32.mrf.mxu0
        %8267 = vmatprep.mubr.bf16.mxu0 %v7087
        %8268 = vmatmul.mubr.bf16.gmra.mxu0 %v7086
        %v8269 = vpop.f32.mrf.mxu0
        %v8270 = vadd.f32 %v8157, %v8269
        %v8271 = vpop.f32.mrf.mxu0
        %v8272 = vpop.f32.mrf.mxu0
        %v8273 = vadd.f32 %v8160, %v8272
        %v8274 = vpop.f32.mrf.mxu0
        %8275 = vdwg.mxu0
        %8276 = vmatprep.subr.bf16.mxu0 0
        %8277 = vmatpush1.bf16.xpose.msra.mxu0 0
        %8278 = vmatprep.subr.bf16.mxu0 0
        %8279 = vmatpush1.bf16.xpose.msra.mxu0 0
        %8280 = vmatprep.subr.bf16.mxu0 0
        %8281 = vmatpush1.bf16.xpose.msra.mxu0 0
        %8282 = vmatprep.subr.bf16.mxu0 0
        %8283 = vmatpush1.bf16.xpose.msra.mxu0 0
        %8284 = vmatprep.subr.bf16.mxu0 0
        %8285 = vmatpush1.bf16.xpose.msra.mxu0 0
        %8286 = vmatprep.subr.bf16.mxu0 0
        %8287 = vmatpush1.bf16.xpose.msra.mxu0 0
        %8288 = vmatprep.subr.bf16.mxu0 0
        %8289 = vmatpush1.bf16.xpose.msra.mxu0 0
        %8290 = vmatprep.subr.bf16.mxu0 %v7548
        %8291 = vmatpush1.bf16.xpose.msra.mxu0 %v7547
        %8292 = vmatprep.subr.bf16.mxu0 0
        %8293 = vmatpush2.bf16.xpose.msra.mxu0 0
        %8294 = vmatprep.subr.bf16.mxu0 0
        %8295 = vmatpush2.bf16.xpose.msra.mxu0 0
        %8296 = vmatprep.subr.bf16.mxu0 0
        %8297 = vmatpush2.bf16.xpose.msra.mxu0 0
        %8298 = vmatprep.subr.bf16.mxu0 0
        %8299 = vmatpush2.bf16.xpose.msra.mxu0 0
        %8300 = vmatprep.subr.bf16.mxu0 0
        %8301 = vmatpush2.bf16.xpose.msra.mxu0 0
        %8302 = vmatprep.subr.bf16.mxu0 0
        %8303 = vmatpush2.bf16.xpose.msra.mxu0 0
        %8304 = vmatprep.subr.bf16.mxu0 0
        %8305 = vmatpush2.bf16.xpose.msra.mxu0 0
        %8306 = vmatprep.subr.bf16.mxu0 0
        %8307 = vmatpush2.bf16.xpose.msra.mxu0 0
        %8308 = vmatprep.mubr.bf16.mxu0 %v7035
        %8309 = vmatmul.mubr.bf16.gmra.mxu0 %v7034
        %v8310 = vpop.f32.mrf.mxu0
        %v8311 = vadd.f32 %v8198, %v8310
        %v8312 = vpop.f32.mrf.mxu0
        %v8313 = vpop.f32.mrf.mxu0
        %v8314 = vadd.f32 %v8201, %v8313
        %v8315 = vpop.f32.mrf.mxu0
        %8316 = vmatprep.mubr.bf16.mxu0 %v7041
        %8317 = vmatmul.mubr.bf16.gmra.mxu0 %v7040
        %v8318 = vpop.f32.mrf.mxu0
        %v8319 = vadd.f32 %v8206, %v8318
        %v8320 = vpop.f32.mrf.mxu0
        %v8321 = vpop.f32.mrf.mxu0
        %v8322 = vadd.f32 %v8209, %v8321
        %v8323 = vpop.f32.mrf.mxu0
        %8324 = vmatprep.mubr.bf16.mxu0 %v7047
        %8325 = vmatmul.mubr.bf16.gmra.mxu0 %v7046
        %v8326 = vpop.f32.mrf.mxu0
        %v8327 = vadd.f32 %v8214, %v8326
        %v8328 = vpop.f32.mrf.mxu0
        %v8329 = vpop.f32.mrf.mxu0
        %v8330 = vadd.f32 %v8217, %v8329
        %v8331 = vpop.f32.mrf.mxu0
        %8332 = vmatprep.mubr.bf16.mxu0 %v7053
        %8333 = vmatmul.mubr.bf16.gmra.mxu0 %v7052
        %v8334 = vpop.f32.mrf.mxu0
        %v8335 = vadd.f32 %v8222, %v8334
        %v8336 = vpop.f32.mrf.mxu0
        %v8337 = vpop.f32.mrf.mxu0
        %v8338 = vadd.f32 %v8225, %v8337
        %v8339 = vpop.f32.mrf.mxu0
        %8340 = vmatprep.mubr.bf16.mxu0 %v7059
        %8341 = vmatmul.mubr.bf16.gmra.mxu0 %v7058
        %v8342 = vpop.f32.mrf.mxu0
        %v8343 = vadd.f32 %v8230, %v8342
        %v8344 = vpop.f32.mrf.mxu0
        %v8345 = vpop.f32.mrf.mxu0
        %v8346 = vadd.f32 %v8233, %v8345
        %v8347 = vpop.f32.mrf.mxu0
        %8348 = vmatprep.mubr.bf16.mxu0 %v7065
        %8349 = vmatmul.mubr.bf16.gmra.mxu0 %v7064
        %v8350 = vpop.f32.mrf.mxu0
        %v8351 = vadd.f32 %v8238, %v8350
        %v8352 = vpop.f32.mrf.mxu0
        %v8353 = vpop.f32.mrf.mxu0
        %v8354 = vadd.f32 %v8241, %v8353
        %v8355 = vpop.f32.mrf.mxu0
        %8356 = vmatprep.mubr.bf16.mxu0 %v7071
        %8357 = vmatmul.mubr.bf16.gmra.mxu0 %v7070
        %v8358 = vpop.f32.mrf.mxu0
        %v8359 = vadd.f32 %v8246, %v8358
        %v8360 = vpop.f32.mrf.mxu0
        %v8361 = vpop.f32.mrf.mxu0
        %v8362 = vadd.f32 %v8249, %v8361
        %v8363 = vpop.f32.mrf.mxu0
        %8364 = vmatprep.mubr.bf16.mxu0 %v7077
        %8365 = vmatmul.mubr.bf16.gmra.mxu0 %v7076
        %v8366 = vpop.f32.mrf.mxu0
        %v8367 = vadd.f32 %v8254, %v8366
        %v8368 = vpop.f32.mrf.mxu0
        %v8369 = vpop.f32.mrf.mxu0
        %v8370 = vadd.f32 %v8257, %v8369
        %v8371 = vpop.f32.mrf.mxu0
        %8372 = vmatprep.mubr.bf16.mxu0 %v7083
        %8373 = vmatmul.mubr.bf16.gmra.mxu0 %v7082
        %v8374 = vpop.f32.mrf.mxu0
        %v8375 = vadd.f32 %v8262, %v8374
        %v8376 = vpop.f32.mrf.mxu0
        %v8377 = vpop.f32.mrf.mxu0
        %v8378 = vadd.f32 %v8265, %v8377
        %v8379 = vpop.f32.mrf.mxu0
        %8380 = vmatprep.mubr.bf16.mxu0 %v7089
        %8381 = vmatmul.mubr.bf16.gmra.mxu0 %v7088
        %v8382 = vpop.f32.mrf.mxu0
        %v8383 = vadd.f32 %v8270, %v8382
        %v8384 = vpop.f32.mrf.mxu0
        %v8385 = vpop.f32.mrf.mxu0
        %v8386 = vadd.f32 %v8273, %v8385
        %v8387 = vpop.f32.mrf.mxu0
        %8388 = vdwg.mxu0
        %8389 = vst [vmem:[%s251] sm:$0xff] %v7952
        %8390 = vst [vmem:[%s251 + $0x8] sm:$0xff] %v7954
        %8391 = vst.msk [vmem:[%s251 + $0x10] sm:$0xff] %vm1972, %v8311
        %8392 = vst [vmem:[%s251 + $0x18] sm:$0xff] %v7956
        %8393 = vst [vmem:[%s251 + $0x20] sm:$0xff] %v7958
        %8394 = vst.msk [vmem:[%s251 + $0x28] sm:$0xff] %vm1972, %v8314
        %8395 = vst [vmem:[%s251 + $0x30] sm:$0xff] %v7962
        %8396 = vst [vmem:[%s251 + $0x38] sm:$0xff] %v7964
        %8397 = vst.msk [vmem:[%s251 + $0x40] sm:$0xff] %vm1972, %v8319
        %8398 = vst [vmem:[%s251 + $0x48] sm:$0xff] %v7966
        %8399 = vst [vmem:[%s251 + $0x50] sm:$0xff] %v7968
        %8400 = vst.msk [vmem:[%s251 + $0x58] sm:$0xff] %vm1972, %v8322
        %8401 = vst [vmem:[%s251 + $0x60] sm:$0xff] %v7972
        %8402 = vst [vmem:[%s251 + $0x68] sm:$0xff] %v7974
        %8403 = vst.msk [vmem:[%s251 + $0x70] sm:$0xff] %vm1972, %v8327
        %8404 = vst [vmem:[%s251 + $0x78] sm:$0xff] %v7976
        %8405 = vst [vmem:[%s251 + $0x80] sm:$0xff] %v7978
        %8406 = vst.msk [vmem:[%s251 + $0x88] sm:$0xff] %vm1972, %v8330
        %8407 = vst [vmem:[%s251 + $0x90] sm:$0xff] %v7982
        %8408 = vst [vmem:[%s251 + $0x98] sm:$0xff] %v7984
        %8409 = vst.msk [vmem:[%s251 + $0xa0] sm:$0xff] %vm1972, %v8335
        %8410 = vst [vmem:[%s251 + $0xa8] sm:$0xff] %v7986
        %8411 = vst [vmem:[%s251 + $0xb0] sm:$0xff] %v7988
        %8412 = vst.msk [vmem:[%s251 + $0xb8] sm:$0xff] %vm1972, %v8338
        %8413 = vst [vmem:[%s251 + $0xc0] sm:$0xff] %v7992
        %8414 = vst [vmem:[%s251 + $0xc8] sm:$0xff] %v7994
        %8415 = vst.msk [vmem:[%s251 + $0xd0] sm:$0xff] %vm1972, %v8343
        %8416 = vst [vmem:[%s251 + $0xd8] sm:$0xff] %v7996
        %8417 = vst [vmem:[%s251 + $0xe0] sm:$0xff] %v7998
        %8418 = vst.msk [vmem:[%s251 + $0xe8] sm:$0xff] %vm1972, %v8346
        %8419 = vst [vmem:[%s251 + $0xf0] sm:$0xff] %v8002
        %8420 = vst [vmem:[%s251 + $0xf8] sm:$0xff] %v8004
        %8421 = vst.msk [vmem:[%s251 + $0x100] sm:$0xff] %vm1972, %v8351
        %8422 = vst [vmem:[%s251 + $0x108] sm:$0xff] %v8006
        %8423 = vst [vmem:[%s251 + $0x110] sm:$0xff] %v8008
        %8424 = vst.msk [vmem:[%s251 + $0x118] sm:$0xff] %vm1972, %v8354
        %8425 = vst [vmem:[%s251 + $0x120] sm:$0xff] %v8012
        %8426 = vst [vmem:[%s251 + $0x128] sm:$0xff] %v8014
        %8427 = vst.msk [vmem:[%s251 + $0x130] sm:$0xff] %vm1972, %v8359
        %8428 = vst [vmem:[%s251 + $0x138] sm:$0xff] %v8016
        %8429 = vst [vmem:[%s251 + $0x140] sm:$0xff] %v8018
        %8430 = vst.msk [vmem:[%s251 + $0x148] sm:$0xff] %vm1972, %v8362
        %8431 = vst [vmem:[%s251 + $0x150] sm:$0xff] %v8022
        %8432 = vst [vmem:[%s251 + $0x158] sm:$0xff] %v8024
        %8433 = vst.msk [vmem:[%s251 + $0x160] sm:$0xff] %vm1972, %v8367
        %8434 = vst [vmem:[%s251 + $0x168] sm:$0xff] %v8026
        %8435 = vst [vmem:[%s251 + $0x170] sm:$0xff] %v8028
        %8436 = vst.msk [vmem:[%s251 + $0x178] sm:$0xff] %vm1972, %v8370
        %8437 = vst [vmem:[%s251 + $0x180] sm:$0xff] %v8032
        %8438 = vst [vmem:[%s251 + $0x188] sm:$0xff] %v8034
        %8439 = vst.msk [vmem:[%s251 + $0x190] sm:$0xff] %vm1972, %v8375
        %8440 = vst [vmem:[%s251 + $0x198] sm:$0xff] %v8036
        %8441 = vst [vmem:[%s251 + $0x1a0] sm:$0xff] %v8038
        %8442 = vst.msk [vmem:[%s251 + $0x1a8] sm:$0xff] %vm1972, %v8378
        %8443 = vst [vmem:[%s251 + $0x1b0] sm:$0xff] %v8042
        %8444 = vst [vmem:[%s251 + $0x1b8] sm:$0xff] %v8044
        %8445 = vst.msk [vmem:[%s251 + $0x1c0] sm:$0xff] %vm1972, %v8383
        %8446 = vst [vmem:[%s251 + $0x1c8] sm:$0xff] %v8046
        %8447 = vst [vmem:[%s251 + $0x1d0] sm:$0xff] %v8048
        %8448 = vst.msk [vmem:[%s251 + $0x1d8] sm:$0xff] %vm1972, %v8386
        %v8449 = vld [vmem:[%s251] sm:$0xff]
        %v8450 = vld [vmem:[%s251 + $0x8] sm:$0xff]
        %v8451 = vld [vmem:[%s251 + $0x18] sm:$0xff]
        %v8452 = vld [vmem:[%s251 + $0x20] sm:$0xff]
        %v8453 = vld [vmem:[%s251 + $0x28] sm:$0xff]
        %8457 = vrot.lane.b32.xlu0 %v8451, 127
        %v8458 = vpop.permute.xlu0 %8457
        %8459 = vrot.lane.b32.xlu0 %v8452, 127
        %v8460 = vpop.permute.xlu0 %8459
        %8461 = vrot.lane.b32.xlu0 %v8453, 127
        %v8462 = vpop.permute.xlu0 %8461
        %v8463 = vsel %vm2045, %v8458, %v8460
        %v8464 = vsel %vm2045, %v8460, %v8462
        %v8467 = vadd.f32 %v8449, %v8463
        %v8468 = vadd.f32 %v8450, %v8464
        %v8469 = vld [vmem:[%s251 + $0x30] sm:$0xff]
        %v8470 = vld [vmem:[%s251 + $0x38] sm:$0xff]
        %v8471 = vld [vmem:[%s251 + $0x40] sm:$0xff]
        %8475 = vrot.lane.b32.xlu0 %v8469, 126
        %v8476 = vpop.permute.xlu0 %8475
        %8477 = vrot.lane.b32.xlu0 %v8470, 126
        %v8478 = vpop.permute.xlu0 %8477
        %8479 = vrot.lane.b32.xlu0 %v8471, 126
        %v8480 = vpop.permute.xlu0 %8479
        %v8481 = vsel %vm2064, %v8476, %v8478
        %v8482 = vsel %vm2064, %v8478, %v8480
        %v8485 = vadd.f32 %v8467, %v8481
        %v8486 = vadd.f32 %v8468, %v8482
        %v8487 = vld [vmem:[%s251 + $0x48] sm:$0xff]
        %v8488 = vld [vmem:[%s251 + $0x50] sm:$0xff]
        %v8489 = vld [vmem:[%s251 + $0x58] sm:$0xff]
        %8493 = vrot.lane.b32.xlu0 %v8487, 125
        %v8494 = vpop.permute.xlu0 %8493
        %8495 = vrot.lane.b32.xlu0 %v8488, 125
        %v8496 = vpop.permute.xlu0 %8495
        %8497 = vrot.lane.b32.xlu0 %v8489, 125
        %v8498 = vpop.permute.xlu0 %8497
        %v8499 = vsel %vm2083, %v8494, %v8496
        %v8500 = vsel %vm2083, %v8496, %v8498
        %v8503 = vadd.f32 %v8485, %v8499
        %v8504 = vadd.f32 %v8486, %v8500
        %v8505 = vld [vmem:[%s251 + $0x60] sm:$0xff]
        %v8506 = vld [vmem:[%s251 + $0x68] sm:$0xff]
        %v8507 = vld [vmem:[%s251 + $0x70] sm:$0xff]
        %8511 = vrot.lane.b32.xlu0 %v8505, 124
        %v8512 = vpop.permute.xlu0 %8511
        %8513 = vrot.lane.b32.xlu0 %v8506, 124
        %v8514 = vpop.permute.xlu0 %8513
        %8515 = vrot.lane.b32.xlu0 %v8507, 124
        %v8516 = vpop.permute.xlu0 %8515
        %v8517 = vsel %vm2102, %v8512, %v8514
        %v8518 = vsel %vm2102, %v8514, %v8516
        %v8521 = vadd.f32 %v8503, %v8517
        %v8522 = vadd.f32 %v8504, %v8518
        %v8523 = vld [vmem:[%s251 + $0x78] sm:$0xff]
        %v8524 = vld [vmem:[%s251 + $0x80] sm:$0xff]
        %v8525 = vld [vmem:[%s251 + $0x88] sm:$0xff]
        %8529 = vrot.lane.b32.xlu0 %v8523, 123
        %v8530 = vpop.permute.xlu0 %8529
        %8531 = vrot.lane.b32.xlu0 %v8524, 123
        %v8532 = vpop.permute.xlu0 %8531
        %8533 = vrot.lane.b32.xlu0 %v8525, 123
        %v8534 = vpop.permute.xlu0 %8533
        %v8535 = vsel %vm2121, %v8530, %v8532
        %v8536 = vsel %vm2121, %v8532, %v8534
        %v8539 = vadd.f32 %v8521, %v8535
        %v8540 = vadd.f32 %v8522, %v8536
        %v8541 = vld [vmem:[%s251 + $0x90] sm:$0xff]
        %v8542 = vld [vmem:[%s251 + $0x98] sm:$0xff]
        %v8543 = vld [vmem:[%s251 + $0xa0] sm:$0xff]
        %8547 = vrot.lane.b32.xlu0 %v8541, 122
        %v8548 = vpop.permute.xlu0 %8547
        %8549 = vrot.lane.b32.xlu0 %v8542, 122
        %v8550 = vpop.permute.xlu0 %8549
        %8551 = vrot.lane.b32.xlu0 %v8543, 122
        %v8552 = vpop.permute.xlu0 %8551
        %v8553 = vsel %vm2140, %v8548, %v8550
        %v8554 = vsel %vm2140, %v8550, %v8552
        %v8557 = vadd.f32 %v8539, %v8553
        %v8558 = vadd.f32 %v8540, %v8554
        %v8559 = vld [vmem:[%s251 + $0xa8] sm:$0xff]
        %v8560 = vld [vmem:[%s251 + $0xb0] sm:$0xff]
        %v8561 = vld [vmem:[%s251 + $0xb8] sm:$0xff]
        %8565 = vrot.lane.b32.xlu0 %v8559, 121
        %v8566 = vpop.permute.xlu0 %8565
        %8567 = vrot.lane.b32.xlu0 %v8560, 121
        %v8568 = vpop.permute.xlu0 %8567
        %8569 = vrot.lane.b32.xlu0 %v8561, 121
        %v8570 = vpop.permute.xlu0 %8569
        %v8571 = vsel %vm2159, %v8566, %v8568
        %v8572 = vsel %vm2159, %v8568, %v8570
        %v8575 = vadd.f32 %v8557, %v8571
        %v8576 = vadd.f32 %v8558, %v8572
        %v8577 = vld [vmem:[%s251 + $0xc0] sm:$0xff]
        %v8578 = vld [vmem:[%s251 + $0xc8] sm:$0xff]
        %v8579 = vld [vmem:[%s251 + $0xd0] sm:$0xff]
        %8583 = vrot.lane.b32.xlu0 %v8577, 120
        %v8584 = vpop.permute.xlu0 %8583
        %8585 = vrot.lane.b32.xlu0 %v8578, 120
        %v8586 = vpop.permute.xlu0 %8585
        %8587 = vrot.lane.b32.xlu0 %v8579, 120
        %v8588 = vpop.permute.xlu0 %8587
        %v8589 = vsel %vm2178, %v8584, %v8586
        %v8590 = vsel %vm2178, %v8586, %v8588
        %v8593 = vadd.f32 %v8575, %v8589
        %v8594 = vadd.f32 %v8576, %v8590
        %v8595 = vld [vmem:[%s251 + $0xd8] sm:$0xff]
        %v8596 = vld [vmem:[%s251 + $0xe0] sm:$0xff]
        %v8597 = vld [vmem:[%s251 + $0xe8] sm:$0xff]
        %8601 = vrot.lane.b32.xlu0 %v8595, 119
        %v8602 = vpop.permute.xlu0 %8601
        %8603 = vrot.lane.b32.xlu0 %v8596, 119
        %v8604 = vpop.permute.xlu0 %8603
        %8605 = vrot.lane.b32.xlu0 %v8597, 119
        %v8606 = vpop.permute.xlu0 %8605
        %v8607 = vsel %vm2197, %v8602, %v8604
        %v8608 = vsel %vm2197, %v8604, %v8606
        %v8611 = vadd.f32 %v8593, %v8607
        %v8612 = vadd.f32 %v8594, %v8608
        %v8613 = vld [vmem:[%s251 + $0xf0] sm:$0xff]
        %v8614 = vld [vmem:[%s251 + $0xf8] sm:$0xff]
        %v8615 = vld [vmem:[%s251 + $0x100] sm:$0xff]
        %8619 = vrot.lane.b32.xlu0 %v8613, 118
        %v8620 = vpop.permute.xlu0 %8619
        %8621 = vrot.lane.b32.xlu0 %v8614, 118
        %v8622 = vpop.permute.xlu0 %8621
        %8623 = vrot.lane.b32.xlu0 %v8615, 118
        %v8624 = vpop.permute.xlu0 %8623
        %v8625 = vsel %vm2216, %v8620, %v8622
        %v8626 = vsel %vm2216, %v8622, %v8624
        %v8629 = vadd.f32 %v8611, %v8625
        %v8630 = vadd.f32 %v8612, %v8626
        %v8631 = vld [vmem:[%s251 + $0x108] sm:$0xff]
        %v8632 = vld [vmem:[%s251 + $0x110] sm:$0xff]
        %v8633 = vld [vmem:[%s251 + $0x118] sm:$0xff]
        %8637 = vrot.lane.b32.xlu0 %v8631, 117
        %v8638 = vpop.permute.xlu0 %8637
        %8639 = vrot.lane.b32.xlu0 %v8632, 117
        %v8640 = vpop.permute.xlu0 %8639
        %8641 = vrot.lane.b32.xlu0 %v8633, 117
        %v8642 = vpop.permute.xlu0 %8641
        %v8643 = vsel %vm2235, %v8638, %v8640
        %v8644 = vsel %vm2235, %v8640, %v8642
        %v8647 = vadd.f32 %v8629, %v8643
        %v8648 = vadd.f32 %v8630, %v8644
        %v8649 = vld [vmem:[%s251 + $0x120] sm:$0xff]
        %v8650 = vld [vmem:[%s251 + $0x128] sm:$0xff]
        %v8651 = vld [vmem:[%s251 + $0x130] sm:$0xff]
        %8655 = vrot.lane.b32.xlu0 %v8649, 116
        %v8656 = vpop.permute.xlu0 %8655
        %8657 = vrot.lane.b32.xlu0 %v8650, 116
        %v8658 = vpop.permute.xlu0 %8657
        %8659 = vrot.lane.b32.xlu0 %v8651, 116
        %v8660 = vpop.permute.xlu0 %8659
        %v8661 = vsel %vm2254, %v8656, %v8658
        %v8662 = vsel %vm2254, %v8658, %v8660
        %v8665 = vadd.f32 %v8647, %v8661
        %v8666 = vadd.f32 %v8648, %v8662
        %v8667 = vld [vmem:[%s251 + $0x138] sm:$0xff]
        %v8668 = vld [vmem:[%s251 + $0x140] sm:$0xff]
        %v8669 = vld [vmem:[%s251 + $0x148] sm:$0xff]
        %8673 = vrot.lane.b32.xlu0 %v8667, 115
        %v8674 = vpop.permute.xlu0 %8673
        %8675 = vrot.lane.b32.xlu0 %v8668, 115
        %v8676 = vpop.permute.xlu0 %8675
        %8677 = vrot.lane.b32.xlu0 %v8669, 115
        %v8678 = vpop.permute.xlu0 %8677
        %v8679 = vsel %vm2273, %v8674, %v8676
        %v8680 = vsel %vm2273, %v8676, %v8678
        %v8683 = vadd.f32 %v8665, %v8679
        %v8684 = vadd.f32 %v8666, %v8680
        %v8685 = vld [vmem:[%s251 + $0x150] sm:$0xff]
        %v8686 = vld [vmem:[%s251 + $0x158] sm:$0xff]
        %v8687 = vld [vmem:[%s251 + $0x160] sm:$0xff]
        %8691 = vrot.lane.b32.xlu0 %v8685, 114
        %v8692 = vpop.permute.xlu0 %8691
        %8693 = vrot.lane.b32.xlu0 %v8686, 114
        %v8694 = vpop.permute.xlu0 %8693
        %8695 = vrot.lane.b32.xlu0 %v8687, 114
        %v8696 = vpop.permute.xlu0 %8695
        %v8697 = vsel %vm2292, %v8692, %v8694
        %v8698 = vsel %vm2292, %v8694, %v8696
        %v8701 = vadd.f32 %v8683, %v8697
        %v8702 = vadd.f32 %v8684, %v8698
        %v8703 = vld [vmem:[%s251 + $0x168] sm:$0xff]
        %v8704 = vld [vmem:[%s251 + $0x170] sm:$0xff]
        %v8705 = vld [vmem:[%s251 + $0x178] sm:$0xff]
        %8709 = vrot.lane.b32.xlu0 %v8703, 113
        %v8710 = vpop.permute.xlu0 %8709
        %8711 = vrot.lane.b32.xlu0 %v8704, 113
        %v8712 = vpop.permute.xlu0 %8711
        %8713 = vrot.lane.b32.xlu0 %v8705, 113
        %v8714 = vpop.permute.xlu0 %8713
        %v8715 = vsel %vm2311, %v8710, %v8712
        %v8716 = vsel %vm2311, %v8712, %v8714
        %v8719 = vadd.f32 %v8701, %v8715
        %v8720 = vadd.f32 %v8702, %v8716
        %v8721 = vld [vmem:[%s251 + $0x180] sm:$0xff]
        %v8722 = vld [vmem:[%s251 + $0x188] sm:$0xff]
        %v8723 = vld [vmem:[%s251 + $0x190] sm:$0xff]
        %8727 = vrot.lane.b32.xlu0 %v8721, 112
        %v8728 = vpop.permute.xlu0 %8727
        %8729 = vrot.lane.b32.xlu0 %v8722, 112
        %v8730 = vpop.permute.xlu0 %8729
        %8731 = vrot.lane.b32.xlu0 %v8723, 112
        %v8732 = vpop.permute.xlu0 %8731
        %v8733 = vsel %vm2330, %v8728, %v8730
        %v8734 = vsel %vm2330, %v8730, %v8732
        %v8737 = vadd.f32 %v8719, %v8733
        %v8738 = vadd.f32 %v8720, %v8734
        %v8739 = vld [vmem:[%s251 + $0x198] sm:$0xff]
        %v8740 = vld [vmem:[%s251 + $0x1a0] sm:$0xff]
        %v8741 = vld [vmem:[%s251 + $0x1a8] sm:$0xff]
        %8745 = vrot.lane.b32.xlu0 %v8739, 111
        %v8746 = vpop.permute.xlu0 %8745
        %8747 = vrot.lane.b32.xlu0 %v8740, 111
        %v8748 = vpop.permute.xlu0 %8747
        %8749 = vrot.lane.b32.xlu0 %v8741, 111
        %v8750 = vpop.permute.xlu0 %8749
        %v8751 = vsel %vm2349, %v8746, %v8748
        %v8752 = vsel %vm2349, %v8748, %v8750
        %v8755 = vadd.f32 %v8737, %v8751
        %v8756 = vadd.f32 %v8738, %v8752
        %v8757 = vld [vmem:[%s251 + $0x1b0] sm:$0xff]
        %v8758 = vld [vmem:[%s251 + $0x1b8] sm:$0xff]
        %v8759 = vld [vmem:[%s251 + $0x1c0] sm:$0xff]
        %8763 = vrot.lane.b32.xlu0 %v8757, 110
        %v8764 = vpop.permute.xlu0 %8763
        %8765 = vrot.lane.b32.xlu0 %v8758, 110
        %v8766 = vpop.permute.xlu0 %8765
        %8767 = vrot.lane.b32.xlu0 %v8759, 110
        %v8768 = vpop.permute.xlu0 %8767
        %v8769 = vsel %vm2368, %v8764, %v8766
        %v8770 = vsel %vm2368, %v8766, %v8768
        %v8773 = vadd.f32 %v8755, %v8769
        %v8774 = vadd.f32 %v8756, %v8770
        %v8775 = vld [vmem:[%s251 + $0x1c8] sm:$0xff]
        %v8776 = vld [vmem:[%s251 + $0x1d0] sm:$0xff]
        %v8777 = vld [vmem:[%s251 + $0x1d8] sm:$0xff]
        %8781 = vrot.lane.b32.xlu0 %v8775, 109
        %v8782 = vpop.permute.xlu0 %8781
        %8783 = vrot.lane.b32.xlu0 %v8776, 109
        %v8784 = vpop.permute.xlu0 %8783
        %8785 = vrot.lane.b32.xlu0 %v8777, 109
        %v8786 = vpop.permute.xlu0 %8785
        %v8787 = vsel %vm2387, %v8782, %v8784
        %v8788 = vsel %vm2387, %v8784, %v8786
        %v8791 = vadd.f32 %v8773, %v8787
        %v8792 = vadd.f32 %v8774, %v8788
        %v8793 = vld [vmem:[%s2] sm:$0xff]
        %8795 = vset.pattern.permute.xlu0 0
        %8796 = vperm.xlu0 %8795, %v8793
        %v8797 = vpop.permute.xlu0 %8796
        %v8799 = vadd.f32 %v8791, %v8797
        %v8800 = vadd.f32 %v8792, %v8797
        %v8801 = vmax.f32 %v8799, 0.0
        %v8802 = vmax.f32 %v8800, 0.0
        %8805 = vrot.lane.b32.xlu0 %v8801, 127
        %v8806 = vpop.permute.xlu0 %8805
        %8807 = vrot.lane.b32.xlu0 %v8802, 127
        %v8808 = vpop.permute.xlu0 %8807
        %v8809 = vsel %vm2045, %v8806, %v8808
        %v8812 = vmax.f32 %v8801, %v8809
        %v8813 = vmax.f32 %v8802, %v8808
        %8814 = vrot.lane.b32.xlu0 %v8801, 126
        %v8815 = vpop.permute.xlu0 %8814
        %8816 = vrot.lane.b32.xlu0 %v8802, 126
        %v8817 = vpop.permute.xlu0 %8816
        %v8818 = vsel %vm2064, %v8815, %v8817
        %v8821 = vmax.f32 %v8812, %v8818
        %v8822 = vmax.f32 %v8813, %v8817
        %v8823 = vld [vmem:[%s3] sm:$0xff]
        %v8824 = vld [vmem:[%s3 + $0x8] sm:$0xff]
        %v8825 = vld [vmem:[%s3 + $0x10] sm:$0xff]
        %v8826 = vld [vmem:[%s3 + $0x18] sm:$0xff]
        %v8827 = vld [vmem:[%s3 + $0x20] sm:$0xff]
        %v8828 = vld [vmem:[%s3 + $0x28] sm:$0xff]
        %v8829 = vld [vmem:[%s3 + $0x30] sm:$0xff]
        %v8830 = vld [vmem:[%s3 + $0x38] sm:$0xff]
        %v8831 = vld [vmem:[%s3 + $0x40] sm:$0xff]
        %v8832 = vld [vmem:[%s3 + $0x48] sm:$0xff]
        %v8833 = vld [vmem:[%s3 + $0x50] sm:$0xff]
        %v8834 = vld [vmem:[%s3 + $0x58] sm:$0xff]
        %v8835 = vld [vmem:[%s3 + $0x60] sm:$0xff]
        %v8836 = vld [vmem:[%s3 + $0x68] sm:$0xff]
        %v8837 = vld [vmem:[%s3 + $0x70] sm:$0xff]
        %v8838 = vld [vmem:[%s3 + $0x78] sm:$0xff]
        %v8839 = vld [vmem:[%s3 + $0x80] sm:$0xff]
        %v8840 = vld [vmem:[%s3 + $0x88] sm:$0xff]
        %v8841 = vld [vmem:[%s3 + $0x90] sm:$0xff]
        %v8842 = vld [vmem:[%s3 + $0x98] sm:$0xff]
        %v8843 = vld [vmem:[%s3 + $0xa0] sm:$0xff]
        %v8844 = vld [vmem:[%s3 + $0xa8] sm:$0xff]
        %v8845 = vld [vmem:[%s3 + $0xb0] sm:$0xff]
        %v8846 = vld [vmem:[%s3 + $0xb8] sm:$0xff]
        %v8847 = vld [vmem:[%s3 + $0xc0] sm:$0xff]
        %v8848 = vld [vmem:[%s3 + $0xc8] sm:$0xff]
        %v8849 = vld [vmem:[%s3 + $0xd0] sm:$0xff]
        %v8850 = vld [vmem:[%s3 + $0xd8] sm:$0xff]
        %v8851 = vld [vmem:[%s3 + $0xe0] sm:$0xff]
        %v8852 = vld [vmem:[%s3 + $0xe8] sm:$0xff]
        %v8853 = vld [vmem:[%s3 + $0xf0] sm:$0xff]
        %v8854 = vld [vmem:[%s3 + $0xf8] sm:$0xff]
        %v8855 = vld [vmem:[%s3 + $0x100] sm:$0xff]
        %v8856 = vld [vmem:[%s3 + $0x108] sm:$0xff]
        %v8857 = vld [vmem:[%s3 + $0x110] sm:$0xff]
        %v8858 = vld [vmem:[%s3 + $0x118] sm:$0xff]
        %v8859 = vld [vmem:[%s3 + $0x120] sm:$0xff]
        %v8860 = vld [vmem:[%s3 + $0x128] sm:$0xff]
        %v8861 = vld [vmem:[%s3 + $0x130] sm:$0xff]
        %v8862 = vld [vmem:[%s3 + $0x138] sm:$0xff]
        %v8863 = vld [vmem:[%s3 + $0x140] sm:$0xff]
        %v8864 = vld [vmem:[%s3 + $0x148] sm:$0xff]
        %v8865 = vld [vmem:[%s3 + $0x150] sm:$0xff]
        %v8866 = vld [vmem:[%s3 + $0x158] sm:$0xff]
        %v8867 = vld [vmem:[%s3 + $0x160] sm:$0xff]
        %v8868 = vld [vmem:[%s3 + $0x168] sm:$0xff]
        %v8869 = vld [vmem:[%s3 + $0x170] sm:$0xff]
        %v8870 = vld [vmem:[%s3 + $0x178] sm:$0xff]
        %v8871 = vld [vmem:[%s3 + $0x180] sm:$0xff]
        %v8872 = vld [vmem:[%s3 + $0x188] sm:$0xff]
        %v8873 = vld [vmem:[%s3 + $0x190] sm:$0xff]
        %v8874 = vld [vmem:[%s3 + $0x198] sm:$0xff]
        %v8875 = vld [vmem:[%s3 + $0x1a0] sm:$0xff]
        %v8876 = vld [vmem:[%s3 + $0x1a8] sm:$0xff]
        %v8877 = vld [vmem:[%s3 + $0x1b0] sm:$0xff]
        %v8878 = vld [vmem:[%s3 + $0x1b8] sm:$0xff]
        %v8879 = vld [vmem:[%s3 + $0x1c0] sm:$0xff]
        %v8880 = vld [vmem:[%s3 + $0x1c8] sm:$0xff]
        %v8881 = vld [vmem:[%s3 + $0x1d0] sm:$0xff]
        %v8882 = vld [vmem:[%s3 + $0x1d8] sm:$0xff]
        %v8883 = vld [vmem:[%s3 + $0x1e0] sm:$0xff]
        %v8884 = vld [vmem:[%s3 + $0x1e8] sm:$0xff]
        %v8885 = vld [vmem:[%s3 + $0x1f0] sm:$0xff]
        %v8886 = vld [vmem:[%s3 + $0x1f8] sm:$0xff]
        %v8887 = vld [vmem:[%s3 + $0x200] sm:$0xff]
        %v8888 = vld [vmem:[%s3 + $0x208] sm:$0xff]
        %v8889 = vld [vmem:[%s3 + $0x210] sm:$0xff]
        %v8890 = vld [vmem:[%s3 + $0x218] sm:$0xff]
        %v8891 = vld [vmem:[%s3 + $0x220] sm:$0xff]
        %v8892 = vld [vmem:[%s3 + $0x228] sm:$0xff]
        %v8893 = vld [vmem:[%s3 + $0x230] sm:$0xff]
        %v8894 = vld [vmem:[%s3 + $0x238] sm:$0xff]
        %v8895 = vld [vmem:[%s3 + $0x240] sm:$0xff]
        %v8896 = vld [vmem:[%s3 + $0x248] sm:$0xff]
        %v8897 = vld [vmem:[%s3 + $0x250] sm:$0xff]
        %v8898 = vld [vmem:[%s3 + $0x258] sm:$0xff]
        %v8899 = vld [vmem:[%s3 + $0x260] sm:$0xff]
        %v8900 = vld [vmem:[%s3 + $0x268] sm:$0xff]
        %v8901 = vld [vmem:[%s3 + $0x270] sm:$0xff]
        %v8902 = vld [vmem:[%s3 + $0x278] sm:$0xff]
        %v8903 = vld [vmem:[%s3 + $0x280] sm:$0xff]
        %v8904 = vld [vmem:[%s3 + $0x288] sm:$0xff]
        %v8905 = vld [vmem:[%s3 + $0x290] sm:$0xff]
        %v8906 = vld [vmem:[%s3 + $0x298] sm:$0xff]
        %v8907 = vld [vmem:[%s3 + $0x2a0] sm:$0xff]
        %v8908 = vld [vmem:[%s3 + $0x2a8] sm:$0xff]
        %v8909 = vld [vmem:[%s3 + $0x2b0] sm:$0xff]
        %v8910 = vld [vmem:[%s3 + $0x2b8] sm:$0xff]
        %v8911 = vld [vmem:[%s3 + $0x2c0] sm:$0xff]
        %v8912 = vld [vmem:[%s3 + $0x2c8] sm:$0xff]
        %v8913 = vld [vmem:[%s3 + $0x2d0] sm:$0xff]
        %v8914 = vld [vmem:[%s3 + $0x2d8] sm:$0xff]
        %v8915 = vld [vmem:[%s3 + $0x2e0] sm:$0xff]
        %v8916 = vld [vmem:[%s3 + $0x2e8] sm:$0xff]
        %v8917 = vld [vmem:[%s3 + $0x2f0] sm:$0xff]
        %v8918 = vld [vmem:[%s3 + $0x2f8] sm:$0xff]
        %v8919 = vld [vmem:[%s3 + $0x300] sm:$0xff]
        %v8920 = vld [vmem:[%s3 + $0x308] sm:$0xff]
        %v8921 = vld [vmem:[%s3 + $0x310] sm:$0xff]
        %v8922 = vld [vmem:[%s3 + $0x318] sm:$0xff]
        %v8923 = vld [vmem:[%s3 + $0x320] sm:$0xff]
        %v8924 = vld [vmem:[%s3 + $0x328] sm:$0xff]
        %v8925 = vld [vmem:[%s3 + $0x330] sm:$0xff]
        %v8926 = vld [vmem:[%s3 + $0x338] sm:$0xff]
        %v8927 = vld [vmem:[%s3 + $0x340] sm:$0xff]
        %v8928 = vld [vmem:[%s3 + $0x348] sm:$0xff]
        %v8929 = vld [vmem:[%s3 + $0x350] sm:$0xff]
        %v8930 = vld [vmem:[%s3 + $0x358] sm:$0xff]
        %v8931 = vld [vmem:[%s3 + $0x360] sm:$0xff]
        %v8932 = vld [vmem:[%s3 + $0x368] sm:$0xff]
        %v8933 = vld [vmem:[%s3 + $0x370] sm:$0xff]
        %v8934 = vld [vmem:[%s3 + $0x378] sm:$0xff]
        %v8935 = vld [vmem:[%s3 + $0x380] sm:$0xff]
        %v8936 = vld [vmem:[%s3 + $0x388] sm:$0xff]
        %v8937 = vld [vmem:[%s3 + $0x390] sm:$0xff]
        %v8938 = vld [vmem:[%s3 + $0x398] sm:$0xff]
        %v8939 = vld [vmem:[%s3 + $0x3a0] sm:$0xff]
        %v8940 = vld [vmem:[%s3 + $0x3a8] sm:$0xff]
        %v8941 = vld [vmem:[%s3 + $0x3b0] sm:$0xff]
        %v8942 = vld [vmem:[%s3 + $0x3b8] sm:$0xff]
        %v8943 = vld [vmem:[%s3 + $0x3c0] sm:$0xff]
        %v8944 = vld [vmem:[%s3 + $0x3c8] sm:$0xff]
        %v8945 = vld [vmem:[%s3 + $0x3d0] sm:$0xff]
        %v8946 = vld [vmem:[%s3 + $0x3d8] sm:$0xff]
        %v8947 = vld [vmem:[%s3 + $0x3e0] sm:$0x3f]
        %v8948 = vld [vmem:[%s3 + $0x3e8] sm:$0x3f]
        %v8949 = vld [vmem:[%s3 + $0x3f0] sm:$0x3f]
        %v8950 = vld [vmem:[%s3 + $0x3f8] sm:$0x3f]
        %v8952 = vsel %vm2064, %v2423, 0
        %v8955 = vsel %vm2064, %v4556, 0
        %v8958 = vsel %vm2064, %v6689, 0
        %v8961 = vsel %vm2064, %v8822, 0
        %vm8963 = vcmask 1045504
        %v8965 = vsel %vm8963, %v8947, 0
        %v8968 = vsel %vm8963, %v8948, 0
        %v8971 = vsel %vm8963, %v8949, 0
        %v8974 = vsel %vm8963, %v8950, 0
        %8976 = vmatprep.subr.mxu0 %v8884
        %8977 = vmatpush1.msra.mxu0 %v8883
        %8978 = vmatprep.subr.mxu0 %v8880
        %8979 = vmatpush1.msra.mxu0 %v8879
        %8980 = vmatprep.subr.mxu0 %v8876
        %8981 = vmatpush1.msra.mxu0 %v8875
        %8982 = vmatprep.subr.mxu0 %v8872
        %8983 = vmatpush1.msra.mxu0 %v8871
        %8984 = vmatprep.subr.mxu0 %v8868
        %8985 = vmatpush1.msra.mxu0 %v8867
        %8986 = vmatprep.subr.mxu0 %v8864
        %8987 = vmatpush1.msra.mxu0 %v8863
        %8988 = vmatprep.subr.mxu0 %v8860
        %8989 = vmatpush1.msra.mxu0 %v8859
        %8990 = vmatprep.subr.mxu0 %v8856
        %8991 = vmatpush1.msra.mxu0 %v8855
        %8992 = vmatprep.subr.mxu0 %v8852
        %8993 = vmatpush1.msra.mxu0 %v8851
        %8994 = vmatprep.subr.mxu0 %v8848
        %8995 = vmatpush1.msra.mxu0 %v8847
        %8996 = vmatprep.subr.mxu0 %v8844
        %8997 = vmatpush1.msra.mxu0 %v8843
        %8998 = vmatprep.subr.mxu0 %v8840
        %8999 = vmatpush1.msra.mxu0 %v8839
        %9000 = vmatprep.subr.mxu0 %v8836
        %9001 = vmatpush1.msra.mxu0 %v8835
        %9002 = vmatprep.subr.mxu0 %v8832
        %9003 = vmatpush1.msra.mxu0 %v8831
        %9004 = vmatprep.subr.mxu0 %v8828
        %9005 = vmatpush1.msra.mxu0 %v8827
        %9006 = vmatprep.subr.mxu0 %v8824
        %9007 = vmatpush1.msra.mxu0 %v8823
        %9008 = vmatprep.subr.mxu0 %v8968
        %9009 = vmatpush2.msra.mxu0 %v8965
        %9010 = vmatprep.subr.mxu0 %v8944
        %9011 = vmatpush2.msra.mxu0 %v8943
        %9012 = vmatprep.subr.mxu0 %v8940
        %9013 = vmatpush2.msra.mxu0 %v8939
        %9014 = vmatprep.subr.mxu0 %v8936
        %9015 = vmatpush2.msra.mxu0 %v8935
        %9016 = vmatprep.subr.mxu0 %v8932
        %9017 = vmatpush2.msra.mxu0 %v8931
        %9018 = vmatprep.subr.mxu0 %v8928
        %9019 = vmatpush2.msra.mxu0 %v8927
        %9020 = vmatprep.subr.mxu0 %v8924
        %9021 = vmatpush2.msra.mxu0 %v8923
        %9022 = vmatprep.subr.mxu0 %v8920
        %9023 = vmatpush2.msra.mxu0 %v8919
        %9024 = vmatprep.subr.mxu0 %v8916
        %9025 = vmatpush2.msra.mxu0 %v8915
        %9026 = vmatprep.subr.mxu0 %v8912
        %9027 = vmatpush2.msra.mxu0 %v8911
        %9028 = vmatprep.subr.mxu0 %v8908
        %9029 = vmatpush2.msra.mxu0 %v8907
        %9030 = vmatprep.subr.mxu0 %v8904
        %9031 = vmatpush2.msra.mxu0 %v8903
        %9032 = vmatprep.subr.mxu0 %v8900
        %9033 = vmatpush2.msra.mxu0 %v8899
        %9034 = vmatprep.subr.mxu0 %v8896
        %9035 = vmatpush2.msra.mxu0 %v8895
        %9036 = vmatprep.subr.mxu0 %v8892
        %9037 = vmatpush2.msra.mxu0 %v8891
        %9038 = vmatprep.subr.mxu0 %v8888
        %9039 = vmatpush2.msra.mxu0 %v8887
        %9040 = vmatprep.mubr.f32.mxu0 %v8952
        %9041 = vmatmul.mubr.f32.gmra.mxu0 %v2422
        %v9042 = vpop.f32.mrf.mxu0
        %v9043 = vadd.f32 0.0, %v9042
        %v9044 = vpop.f32.mrf.mxu0
        %v9045 = vadd.f32 0.0, %v9044
        %9046 = vmatprep.mubr.f32.mxu0 %v8955
        %9047 = vmatmul.mubr.f32.gmra.mxu0 %v4555
        %v9048 = vpop.f32.mrf.mxu0
        %v9049 = vadd.f32 0.0, %v9048
        %v9050 = vpop.f32.mrf.mxu0
        %v9051 = vadd.f32 0.0, %v9050
        %9052 = vmatprep.mubr.f32.mxu0 %v8958
        %9053 = vmatmul.mubr.f32.gmra.mxu0 %v6688
        %v9054 = vpop.f32.mrf.mxu0
        %v9055 = vadd.f32 0.0, %v9054
        %v9056 = vpop.f32.mrf.mxu0
        %v9057 = vadd.f32 0.0, %v9056
        %9058 = vmatprep.mubr.f32.mxu0 %v8961
        %9059 = vmatmul.mubr.f32.gmra.mxu0 %v8821
        %v9060 = vpop.f32.mrf.mxu0
        %v9061 = vadd.f32 0.0, %v9060
        %v9062 = vpop.f32.mrf.mxu0
        %v9063 = vadd.f32 0.0, %v9062
        %9064 = vdwg.mxu0
        %9065 = vmatprep.subr.mxu0 %v8886
        %9066 = vmatpush1.msra.mxu0 %v8885
        %9067 = vmatprep.subr.mxu0 %v8882
        %9068 = vmatpush1.msra.mxu0 %v8881
        %9069 = vmatprep.subr.mxu0 %v8878
        %9070 = vmatpush1.msra.mxu0 %v8877
        %9071 = vmatprep.subr.mxu0 %v8874
        %9072 = vmatpush1.msra.mxu0 %v8873
        %9073 = vmatprep.subr.mxu0 %v8870
        %9074 = vmatpush1.msra.mxu0 %v8869
        %9075 = vmatprep.subr.mxu0 %v8866
        %9076 = vmatpush1.msra.mxu0 %v8865
        %9077 = vmatprep.subr.mxu0 %v8862
        %9078 = vmatpush1.msra.mxu0 %v8861
        %9079 = vmatprep.subr.mxu0 %v8858
        %9080 = vmatpush1.msra.mxu0 %v8857
        %9081 = vmatprep.subr.mxu0 %v8854
        %9082 = vmatpush1.msra.mxu0 %v8853
        %9083 = vmatprep.subr.mxu0 %v8850
        %9084 = vmatpush1.msra.mxu0 %v8849
        %9085 = vmatprep.subr.mxu0 %v8846
        %9086 = vmatpush1.msra.mxu0 %v8845
        %9087 = vmatprep.subr.mxu0 %v8842
        %9088 = vmatpush1.msra.mxu0 %v8841
        %9089 = vmatprep.subr.mxu0 %v8838
        %9090 = vmatpush1.msra.mxu0 %v8837
        %9091 = vmatprep.subr.mxu0 %v8834
        %9092 = vmatpush1.msra.mxu0 %v8833
        %9093 = vmatprep.subr.mxu0 %v8830
        %9094 = vmatpush1.msra.mxu0 %v8829
        %9095 = vmatprep.subr.mxu0 %v8826
        %9096 = vmatpush1.msra.mxu0 %v8825
        %9097 = vmatprep.subr.mxu0 %v8974
        %9098 = vmatpush2.msra.mxu0 %v8971
        %9099 = vmatprep.subr.mxu0 %v8946
        %9100 = vmatpush2.msra.mxu0 %v8945
        %9101 = vmatprep.subr.mxu0 %v8942
        %9102 = vmatpush2.msra.mxu0 %v8941
        %9103 = vmatprep.subr.mxu0 %v8938
        %9104 = vmatpush2.msra.mxu0 %v8937
        %9105 = vmatprep.subr.mxu0 %v8934
        %9106 = vmatpush2.msra.mxu0 %v8933
        %9107 = vmatprep.subr.mxu0 %v8930
        %9108 = vmatpush2.msra.mxu0 %v8929
        %9109 = vmatprep.subr.mxu0 %v8926
        %9110 = vmatpush2.msra.mxu0 %v8925
        %9111 = vmatprep.subr.mxu0 %v8922
        %9112 = vmatpush2.msra.mxu0 %v8921
        %9113 = vmatprep.subr.mxu0 %v8918
        %9114 = vmatpush2.msra.mxu0 %v8917
        %9115 = vmatprep.subr.mxu0 %v8914
        %9116 = vmatpush2.msra.mxu0 %v8913
        %9117 = vmatprep.subr.mxu0 %v8910
        %9118 = vmatpush2.msra.mxu0 %v8909
        %9119 = vmatprep.subr.mxu0 %v8906
        %9120 = vmatpush2.msra.mxu0 %v8905
        %9121 = vmatprep.subr.mxu0 %v8902
        %9122 = vmatpush2.msra.mxu0 %v8901
        %9123 = vmatprep.subr.mxu0 %v8898
        %9124 = vmatpush2.msra.mxu0 %v8897
        %9125 = vmatprep.subr.mxu0 %v8894
        %9126 = vmatpush2.msra.mxu0 %v8893
        %9127 = vmatprep.subr.mxu0 %v8890
        %9128 = vmatpush2.msra.mxu0 %v8889
        %9129 = vmatprep.mubr.f32.mxu0 %v8952
        %9130 = vmatmul.mubr.f32.gmra.mxu0 %v2422
        %v9131 = vpop.f32.mrf.mxu0
        %v9132 = vadd.f32 0.0, %v9131
        %v9133 = vpop.f32.mrf.mxu0
        %v9134 = vadd.f32 0.0, %v9133
        %9135 = vmatprep.mubr.f32.mxu0 %v8955
        %9136 = vmatmul.mubr.f32.gmra.mxu0 %v4555
        %v9137 = vpop.f32.mrf.mxu0
        %v9138 = vadd.f32 0.0, %v9137
        %v9139 = vpop.f32.mrf.mxu0
        %v9140 = vadd.f32 0.0, %v9139
        %9141 = vmatprep.mubr.f32.mxu0 %v8958
        %9142 = vmatmul.mubr.f32.gmra.mxu0 %v6688
        %v9143 = vpop.f32.mrf.mxu0
        %v9144 = vadd.f32 0.0, %v9143
        %v9145 = vpop.f32.mrf.mxu0
        %v9146 = vadd.f32 0.0, %v9145
        %9147 = vmatprep.mubr.f32.mxu0 %v8961
        %9148 = vmatmul.mubr.f32.gmra.mxu0 %v8821
        %v9149 = vpop.f32.mrf.mxu0
        %v9150 = vadd.f32 0.0, %v9149
        %v9151 = vpop.f32.mrf.mxu0
        %v9152 = vadd.f32 0.0, %v9151
        %9153 = vdwg.mxu0
        %v9154 = vld [vmem:[%s4] sm:$0x1]
        %v9155 = vadd.f32 %v9154, %v9043
        %v9158 = vunpack.c.l.s4 1966171168
        %v9159 = vunpack.c.0.s8 %v9158
        %v9160 = vlaneseq
        %v9161 = vshrl.u32 %v9160, 7
        %v9162 = vsub.s32 %v9159, %v9161
        %v9163 = vrot.slane %v9045, %v9162
        %v9164 = vcombine.high %v9163, %v9163
        %v9166 = vunpack.c.l.s4 1966171168
        %v9167 = vunpack.c.0.s8 %v9166
        %v9168 = vlaneseq
        %v9169 = vshrl.u32 %v9168, 7
        %v9170 = vsub.s32 %v9167, %v9169
        %v9171 = vrot.slane %v9164, %v9170
        %v9173 = vadd.f32 %v9155, %v9171
        %v9176 = vunpack.c.l.s4 1966171168
        %v9177 = vunpack.c.0.s8 %v9176
        %v9178 = vlaneseq
        %v9179 = vshrl.u32 %v9178, 7
        %v9180 = vsub.s32 %v9177, %v9179
        %v9181 = vrot.slane %v9132, %v9180
        %v9183 = vunpack.c.l.s4 1966171168
        %v9184 = vunpack.c.0.s8 %v9183
        %v9185 = vlaneseq
        %v9186 = vshrl.u32 %v9185, 7
        %v9187 = vsub.s32 %v9184, %v9186
        %v9188 = vrot.slane %v9181, %v9187
        %v9189 = vcombine.high %v9188, %v9188
        %v9191 = vadd.f32 %v9173, %v9189
        %v9194 = vunpack.c.l.s4 1966171168
        %v9195 = vunpack.c.0.s8 %v9194
        %v9196 = vlaneseq
        %v9197 = vshrl.u32 %v9196, 7
        %v9198 = vsub.s32 %v9195, %v9197
        %v9199 = vrot.slane %v9134, %v9198
        %v9200 = vcombine.high %v9199, %v9199
        %v9202 = vunpack.c.l.s4 1966171168
        %v9203 = vunpack.c.0.s8 %v9202
        %v9204 = vlaneseq
        %v9205 = vshrl.u32 %v9204, 7
        %v9206 = vsub.s32 %v9203, %v9205
        %v9207 = vrot.slane %v9200, %v9206
        %v9208 = vcombine.high %v9207, %v9207
        %v9210 = vadd.f32 %v9191, %v9208
        %9211 = vst [vmem:[%s220] sm:$0x1] %v9210
        %v9212 = vld [vmem:[%s4] sm:$0x1]
        %v9213 = vadd.f32 %v9212, %v9049
        %v9216 = vunpack.c.l.s4 1966171168
        %v9217 = vunpack.c.0.s8 %v9216
        %v9218 = vlaneseq
        %v9219 = vshrl.u32 %v9218, 7
        %v9220 = vsub.s32 %v9217, %v9219
        %v9221 = vrot.slane %v9051, %v9220
        %v9222 = vcombine.high %v9221, %v9221
        %v9224 = vunpack.c.l.s4 1966171168
        %v9225 = vunpack.c.0.s8 %v9224
        %v9226 = vlaneseq
        %v9227 = vshrl.u32 %v9226, 7
        %v9228 = vsub.s32 %v9225, %v9227
        %v9229 = vrot.slane %v9222, %v9228
        %v9231 = vadd.f32 %v9213, %v9229
        %v9234 = vunpack.c.l.s4 1966171168
        %v9235 = vunpack.c.0.s8 %v9234
        %v9236 = vlaneseq
        %v9237 = vshrl.u32 %v9236, 7
        %v9238 = vsub.s32 %v9235, %v9237
        %v9239 = vrot.slane %v9138, %v9238
        %v9241 = vunpack.c.l.s4 1966171168
        %v9242 = vunpack.c.0.s8 %v9241
        %v9243 = vlaneseq
        %v9244 = vshrl.u32 %v9243, 7
        %v9245 = vsub.s32 %v9242, %v9244
        %v9246 = vrot.slane %v9239, %v9245
        %v9247 = vcombine.high %v9246, %v9246
        %v9249 = vadd.f32 %v9231, %v9247
        %v9252 = vunpack.c.l.s4 1966171168
        %v9253 = vunpack.c.0.s8 %v9252
        %v9254 = vlaneseq
        %v9255 = vshrl.u32 %v9254, 7
        %v9256 = vsub.s32 %v9253, %v9255
        %v9257 = vrot.slane %v9140, %v9256
        %v9258 = vcombine.high %v9257, %v9257
        %v9260 = vunpack.c.l.s4 1966171168
        %v9261 = vunpack.c.0.s8 %v9260
        %v9262 = vlaneseq
        %v9263 = vshrl.u32 %v9262, 7
        %v9264 = vsub.s32 %v9261, %v9263
        %v9265 = vrot.slane %v9258, %v9264
        %v9266 = vcombine.high %v9265, %v9265
        %v9268 = vadd.f32 %v9249, %v9266
        %s9269 = scalar_lea.vmem %s220, 1 [#allocation3]
        %9270 = vst [vmem:[%s9269] sm:$0x1] %v9268
        %v9271 = vld [vmem:[%s4] sm:$0x1]
        %v9272 = vadd.f32 %v9271, %v9055
        %v9275 = vunpack.c.l.s4 1966171168
        %v9276 = vunpack.c.0.s8 %v9275
        %v9277 = vlaneseq
        %v9278 = vshrl.u32 %v9277, 7
        %v9279 = vsub.s32 %v9276, %v9278
        %v9280 = vrot.slane %v9057, %v9279
        %v9281 = vcombine.high %v9280, %v9280
        %v9283 = vunpack.c.l.s4 1966171168
        %v9284 = vunpack.c.0.s8 %v9283
        %v9285 = vlaneseq
        %v9286 = vshrl.u32 %v9285, 7
        %v9287 = vsub.s32 %v9284, %v9286
        %v9288 = vrot.slane %v9281, %v9287
        %v9290 = vadd.f32 %v9272, %v9288
        %v9293 = vunpack.c.l.s4 1966171168
        %v9294 = vunpack.c.0.s8 %v9293
        %v9295 = vlaneseq
        %v9296 = vshrl.u32 %v9295, 7
        %v9297 = vsub.s32 %v9294, %v9296
        %v9298 = vrot.slane %v9144, %v9297
        %v9300 = vunpack.c.l.s4 1966171168
        %v9301 = vunpack.c.0.s8 %v9300
        %v9302 = vlaneseq
        %v9303 = vshrl.u32 %v9302, 7
        %v9304 = vsub.s32 %v9301, %v9303
        %v9305 = vrot.slane %v9298, %v9304
        %v9306 = vcombine.high %v9305, %v9305
        %v9308 = vadd.f32 %v9290, %v9306
        %v9311 = vunpack.c.l.s4 1966171168
        %v9312 = vunpack.c.0.s8 %v9311
        %v9313 = vlaneseq
        %v9314 = vshrl.u32 %v9313, 7
        %v9315 = vsub.s32 %v9312, %v9314
        %v9316 = vrot.slane %v9146, %v9315
        %v9317 = vcombine.high %v9316, %v9316
        %v9319 = vunpack.c.l.s4 1966171168
        %v9320 = vunpack.c.0.s8 %v9319
        %v9321 = vlaneseq
        %v9322 = vshrl.u32 %v9321, 7
        %v9323 = vsub.s32 %v9320, %v9322
        %v9324 = vrot.slane %v9317, %v9323
        %v9325 = vcombine.high %v9324, %v9324
        %v9327 = vadd.f32 %v9308, %v9325
        %s9328 = scalar_lea.vmem %s220, 2 [#allocation3]
        %9329 = vst [vmem:[%s9328] sm:$0x1] %v9327
        %v9330 = vld [vmem:[%s4] sm:$0x1]
        %v9331 = vadd.f32 %v9330, %v9061
        %v9334 = vunpack.c.l.s4 1966171168
        %v9335 = vunpack.c.0.s8 %v9334
        %v9336 = vlaneseq
        %v9337 = vshrl.u32 %v9336, 7
        %v9338 = vsub.s32 %v9335, %v9337
        %v9339 = vrot.slane %v9063, %v9338
        %v9340 = vcombine.high %v9339, %v9339
        %v9342 = vunpack.c.l.s4 1966171168
        %v9343 = vunpack.c.0.s8 %v9342
        %v9344 = vlaneseq
        %v9345 = vshrl.u32 %v9344, 7
        %v9346 = vsub.s32 %v9343, %v9345
        %v9347 = vrot.slane %v9340, %v9346
        %v9349 = vadd.f32 %v9331, %v9347
        %v9352 = vunpack.c.l.s4 1966171168
        %v9353 = vunpack.c.0.s8 %v9352
        %v9354 = vlaneseq
        %v9355 = vshrl.u32 %v9354, 7
        %v9356 = vsub.s32 %v9353, %v9355
        %v9357 = vrot.slane %v9150, %v9356
        %v9359 = vunpack.c.l.s4 1966171168
        %v9360 = vunpack.c.0.s8 %v9359
        %v9361 = vlaneseq
        %v9362 = vshrl.u32 %v9361, 7
        %v9363 = vsub.s32 %v9360, %v9362
        %v9364 = vrot.slane %v9357, %v9363
        %v9365 = vcombine.high %v9364, %v9364
        %v9367 = vadd.f32 %v9349, %v9365
        %v9370 = vunpack.c.l.s4 1966171168
        %v9371 = vunpack.c.0.s8 %v9370
        %v9372 = vlaneseq
        %v9373 = vshrl.u32 %v9372, 7
        %v9374 = vsub.s32 %v9371, %v9373
        %v9375 = vrot.slane %v9152, %v9374
        %v9376 = vcombine.high %v9375, %v9375
        %v9378 = vunpack.c.l.s4 1966171168
        %v9379 = vunpack.c.0.s8 %v9378
        %v9380 = vlaneseq
        %v9381 = vshrl.u32 %v9380, 7
        %v9382 = vsub.s32 %v9379, %v9381
        %v9383 = vrot.slane %v9376, %v9382
        %v9384 = vcombine.high %v9383, %v9383
        %v9386 = vadd.f32 %v9367, %v9384
        %s9387 = scalar_lea.vmem %s220, 3 [#allocation3]
        %9388 = vst [vmem:[%s9387] sm:$0x1] %v9386
        %s9389 = sand.u32 %s137, 1
        %s9390 = scalar_lea.sflag [#allocation4], %s9389
        %s9391 = sand.u32 %s137, 1
        %s9392 = smul.addr %s9391, 4
        %s9393 = scalar_lea.vmem [#allocation3], %s9392
        // Predicated region
        $region41: #{tpu_custom_call.1} parent=39 // pred_check
          %p9394 = pneg %p147
        $region42: #{tpu_custom_call.1} parent=39 // pred_check_branch
          %9396 = sbr.rel (%p9394) target = $region44
        $region43: #{tpu_custom_call.1} parent=39 // pred_region
          %s9397 = smul.u32 4, %s19
          %s9399 = ssub.s32 64, 64
          %9400 = vsyncadd %s9390, %s9399
          %s9401 = smul.addr %s9397, 16
          %s9402 = scalar_lea.hbm %s5, %s9401
          %s9403 = sshll.u32 %s9393, 4
          %s9404 = int_to_ptr.vmem [resolvable:$true] %s9403
          %9409 = dma.vmem_to_hbm [thread:$0]  %s9404, 64, %s9402, %s9390, 16, 16, 1
        $region44: #{tpu_custom_call.1} parent=39 // pred_fallthru
          _
      $region40: #{tpu_custom_call.1} parent=5 // pred_fallthru
        _
      %p9410 = scmp.le.s32.totalorder 2, %s14
      // Predicated region
      $region45: #{tpu_custom_call.1} parent=5 // pred_check
        %p9411 = pneg %p9410
      $region46: #{tpu_custom_call.1} parent=5 // pred_check_branch
        %9413 = sbr.rel (%p9411) target = $region48
      $region47: #{tpu_custom_call.1} parent=5 // pred_region
        %s9414 = ssub.s32 %s14, 2
        // Predicated region
        $region49: #{tpu_custom_call.1} parent=47 // pred_check
          %p9415 = pneg %p153
        $region50: #{tpu_custom_call.1} parent=47 // pred_check_branch
          %9417 = sbr.rel (%p9415) target = $region52
        $region51: #{tpu_custom_call.1} parent=47 // pred_region
          %s9418 = sand.u32 %s138, 1
          %s9419 = scalar_lea.sflag [#allocation4], %s9418
          %s9420 = sand.u32 %s138, 1
          %s9421 = smul.addr %s9420, 4
          %s9422 = scalar_lea.vmem [#allocation3], %s9421
          %9423 = dma.done %s9419, 64
        $region52: #{tpu_custom_call.1} parent=47 // pred_fallthru
          _
      $region48: #{tpu_custom_call.1} parent=5 // pred_fallthru
        _
    $region6: #{tpu_custom_call.1} parent=1 // loop_footer
      %s18 = sadd.s32 1, %s14
    $region7: #{tpu_custom_call.1} parent=1 // loop_footer_branch
      %13 = sbr.rel target = $region3
    $region8: #{tpu_custom_call.1} parent=1 // loop_exit
      _
    %9424 = vsyncpa [#allocation4], 1
    %s9425 = scalar_lea.sflag [#allocation4], 1
    %9426 = vsyncpa %s9425, 1

</llo_original>
